<compile_context>
chip_gen: v7x
topology: tpu7x:2x2x1
jax: 0.10.0
libtpu: 0.0.40
codegen_flags: <defaults>
</compile_context>

<pallas_src>
import jax
import jax.numpy as jnp
from jax.experimental import pallas as pl
from jax.experimental.pallas import tpu as pltpu


# ----------------------------- fused kernel --------------------------------

def _content_loss_kernel(sr_ref, hr_ref, mean_ref, w1_ref, b1_ref, w2_ref, b2_ref,
                         o_ref, xpad_ref, fpad_ref, col_ref):
    # sr_ref / hr_ref : (1, H, W, Cin)  raw images (one batch element)
    # mean_ref        : (1, 1, Cin)     per-channel mean (1/std folded into w1)
    # w1_ref          : (9*Cin, C1)     bf16, normalization scale folded in
    # b1_ref          : (1, C1)         f32
    # w2_ref          : (9*C1, C2)      bf16
    # b2_ref          : (1, C2)         f32
    # o_ref           : (1, 1, 1)       per-image sum(|f(sr) - f(hr)|)
    # xpad_ref        : (H+2, W+2, Cin) f32 VMEM scratch (padded image)
    # fpad_ref        : (H+2, W+2, C1)  f32 VMEM scratch (padded conv1 output)
    # col_ref         : (H*W, 9*C1)     f32 VMEM scratch (im2col staging)
    H, W, Cin = sr_ref.shape[1], sr_ref.shape[2], sr_ref.shape[3]
    C1 = w1_ref.shape[1]

    def conv3x3_relu(pad_ref, cin, w_ref, b_ref):
        # Build the im2col matrix in VMEM, then ONE lane-dense MXU matmul with
        # K = 9*cin (instead of 9 tiny-K dots -> far fewer MXU pushes / pops).
        for kh in range(3):
            for kw in range(3):
                t = kh * 3 + kw
                patch = pad_ref[kh:kh + H, kw:kw + W, :].reshape(H * W, cin)
                col_ref[:, t * cin:(t + 1) * cin] = patch
        col = col_ref[:, :9 * cin].astype(jnp.bfloat16)      # bf16 MXU operands
        y = jnp.dot(col, w_ref[...], preferred_element_type=jnp.float32)
        return jnp.maximum(y + b_ref[...], 0.0)              # (H*W, Cout) f32

    def features(img):
        # img: (H, W, Cin) f32, mean already subtracted (1/std folded into w1),
        # so zero padding is exactly equivalent to padding the normalized image.
        xpad_ref[...] = jnp.zeros_like(xpad_ref)
        xpad_ref[1:H + 1, 1:W + 1, :] = img
        f1 = conv3x3_relu(xpad_ref, Cin, w1_ref, b1_ref)      # (H*W, C1)
        fpad_ref[...] = jnp.zeros_like(fpad_ref)
        fpad_ref[1:H + 1, 1:W + 1, :] = f1.reshape(H, W, C1)
        return conv3x3_relu(fpad_ref, C1, w2_ref, b2_ref)     # (H*W, C2)

    mean = mean_ref[...]                                      # (1, 1, Cin)
    sr_feat = features(sr_ref[0] - mean)
    hr_feat = features(hr_ref[0] - mean)
    l1_sum = jnp.sum(jnp.abs(sr_feat - hr_feat))
    o_ref[...] = jnp.full((1, 1, 1), l1_sum, dtype=jnp.float32)


# ----------------------------- wrapper --------------------------------------

@jax.jit
def content_l1_loss(sr_nhwc, hr_nhwc, mean, w1, b1, w2, b2):
    N, H, W, Cin = sr_nhwc.shape
    C1 = w1.shape[1]
    C2 = w2.shape[1]
    partial = pl.pallas_call(
        _content_loss_kernel,
        out_shape=jax.ShapeDtypeStruct((N, 1, 1), jnp.float32),
        grid=(N,),
        in_specs=[
            pl.BlockSpec((1, H, W, Cin), lambda n: (n, 0, 0, 0)),   # sr
            pl.BlockSpec((1, H, W, Cin), lambda n: (n, 0, 0, 0)),   # hr
            pl.BlockSpec((1, 1, Cin), lambda n: (0, 0, 0)),         # mean
            pl.BlockSpec((9 * Cin, C1), lambda n: (0, 0)),          # w1 (folded)
            pl.BlockSpec((1, C1), lambda n: (0, 0)),                # b1
            pl.BlockSpec((9 * C1, C2), lambda n: (0, 0)),           # w2
            pl.BlockSpec((1, C2), lambda n: (0, 0)),                # b2
        ],
        out_specs=pl.BlockSpec((1, 1, 1), lambda n: (n, 0, 0)),
        scratch_shapes=[
            pltpu.VMEM((H + 2, W + 2, Cin), jnp.float32),   # padded image
            pltpu.VMEM((H + 2, W + 2, C1), jnp.float32),    # padded conv1 output
            pltpu.VMEM((H * W, 9 * C1), jnp.float32),       # im2col staging
        ],
        compiler_params=pltpu.CompilerParams(
            dimension_semantics=("parallel",),              # batch splits over TCs
            vmem_limit_bytes=32 * 1024 * 1024,
        ),
    )(sr_nhwc, hr_nhwc, mean, w1, b1, w2, b2)
    # mean over all feature elements of both-shape (N, H, W, C2) features
    return jnp.sum(partial) / float(N * H * W * C2)


# ----------------------------- module --------------------------------------

class ContentLoss:
    """JAX/Pallas port of the PyTorch ContentLoss module (synthetic VGG weights)."""

    def __init__(self, feature_model_extractor_node: str,
                 feature_model_normalize_mean, feature_model_normalize_std,
                 c1: int = 16, c2: int = 32):
        self.feature_model_extractor_node = feature_model_extractor_node
        mean = jnp.asarray(feature_model_normalize_mean, jnp.float32)
        std = jnp.asarray(feature_model_normalize_std, jnp.float32)
        cin = mean.shape[0]
        self.mean = mean.reshape(1, 1, cin)          # subtracted inside the kernel

        # TODO(synk): pretrained torchvision VGG19 weights have no Pallas
        # equivalent; deterministic synthetic conv weights stand in (frozen).
        k1, k2 = jax.random.split(jax.random.PRNGKey(42))
        w1 = jax.random.normal(k1, (3, 3, cin, c1), jnp.float32) * (2.0 / (9 * cin)) ** 0.5
        w2 = jax.random.normal(k2, (3, 3, c1, c2), jnp.float32) * (2.0 / (9 * c1)) ** 0.5

        # Fold the 1/std normalization scale into conv1 weights (exact fold:
        # mean is subtracted in-kernel before zero padding, so border handling
        # matches conv(pad(normalize(x)))).  Weights as bf16 MXU operands.
        inv_std = (1.0 / std).reshape(1, 1, cin, 1)
        self.w1 = (w1 * inv_std).reshape(9 * cin, c1).astype(jnp.bfloat16)
        self.b1 = jnp.zeros((1, c1), jnp.float32)
        self.w2 = w2.reshape(9 * c1, c2).astype(jnp.bfloat16)
        self.b2 = jnp.zeros((1, c2), jnp.float32)

    def __call__(self, sr_nchw, hr_nchw):
        # PyTorch conv inputs are NCHW -> transpose to NHWC for the kernel.
        sr = jnp.transpose(sr_nchw, (0, 2, 3, 1)).astype(jnp.float32)
        hr = jnp.transpose(hr_nchw, (0, 2, 3, 1)).astype(jnp.float32)
        return content_l1_loss(sr, hr, self.mean, self.w1, self.b1, self.w2, self.b2)


# ----------------------------- main ----------------------------------------

if __name__ == "__main__":
    key = jax.random.PRNGKey(0)
    k_sr, k_hr = jax.random.split(key)
    # Images in [0, 1], NCHW like the PyTorch module expects.
    sr = jax.random.uniform(k_sr, (2, 3, 16, 16), jnp.float32)
    hr = jax.random.uniform(k_hr, (2, 3, 16, 16), jnp.float32)

    loss_fn = ContentLoss(
        feature_model_extractor_node="features.2",
        feature_model_normalize_mean=[0.485, 0.456, 0.406],
        feature_model_normalize_std=[0.229, 0.224, 0.225],
    )
    loss = loss_fn(sr, hr)
    jax.block_until_ready(loss)
    assert loss.shape == () and jnp.isfinite(loss) and loss >= 0.0
    print("KERNEL_OK")
</pallas_src>

<mosaic_0001>
module attributes {stable_mosaic.version = 11 : i64} {
  func.func @_content_loss_kernel(%arg0: i32, %arg1: memref<1x16x16x3xf32, #tpu.memory_space<vmem>>, %arg2: memref<1x16x16x3xf32, #tpu.memory_space<vmem>>, %arg3: memref<1x1x3xf32, #tpu.memory_space<vmem>>, %arg4: memref<27x16xbf16, #tpu.memory_space<vmem>>, %arg5: memref<1x16xf32, #tpu.memory_space<vmem>>, %arg6: memref<144x32xbf16, #tpu.memory_space<vmem>>, %arg7: memref<1x32xf32, #tpu.memory_space<vmem>>, %arg8: memref<1x1x1xf32, #tpu.memory_space<vmem>>, %arg9: memref<18x18x3xf32, #tpu.memory_space<vmem>>, %arg10: memref<18x18x16xf32, #tpu.memory_space<vmem>>, %arg11: memref<256x144xf32, #tpu.memory_space<vmem>>) attributes {dimension_semantics = [#tpu.dimension_semantics<parallel>], iteration_bounds = array<i64: 2>, scalar_prefetch = 0 : i64, scratch_operands = 3 : i64, tpu.core_type = #tpu.core_type<tc>, window_params = [{transform_indices = @transform_0, window_bounds = array<i64: 1, 16, 16, 3>}, {transform_indices = @transform_1, window_bounds = array<i64: 1, 16, 16, 3>}, {pipeline_mode = #tpu.pipeline_mode<synchronous>, transform_indices = @transform_2, window_bounds = array<i64: 1, 1, 3>}, {pipeline_mode = #tpu.pipeline_mode<synchronous>, transform_indices = @transform_3, window_bounds = array<i64: 27, 16>}, {pipeline_mode = #tpu.pipeline_mode<synchronous>, transform_indices = @transform_4, window_bounds = array<i64: 1, 16>}, {pipeline_mode = #tpu.pipeline_mode<synchronous>, transform_indices = @transform_5, window_bounds = array<i64: 144, 32>}, {pipeline_mode = #tpu.pipeline_mode<synchronous>, transform_indices = @transform_6, window_bounds = array<i64: 1, 32>}, {transform_indices = @transform_7, window_bounds = array<i64: 1, 1, 1>}]} {
    %c0 = arith.constant 0 : index
    %c0_0 = arith.constant 0 : index
    %c0_1 = arith.constant 0 : index
    %0 = vector.load %arg3[%c0, %c0_0, %c0_1] : memref<1x1x3xf32, #tpu.memory_space<vmem>>, vector<1x1x3xf32>
    %c0_2 = arith.constant 0 : index
    %c0_3 = arith.constant 0 : index
    %c0_4 = arith.constant 0 : index
    %c0_5 = arith.constant 0 : index
    %1 = vector.load %arg1[%c0_2, %c0_3, %c0_4, %c0_5] : memref<1x16x16x3xf32, #tpu.memory_space<vmem>>, vector<1x16x16x3xf32>
    %2 = vector.shape_cast %1 : vector<1x16x16x3xf32> to vector<16x16x3xf32>
    %3 = vector.broadcast %0 : vector<1x1x3xf32> to vector<16x16x3xf32>
    %4 = arith.subf %2, %3 : vector<16x16x3xf32>
    %cst = arith.constant 0.000000e+00 : f32
    %5 = vector.broadcast %cst : f32 to vector<18x18x3xf32>
    %c0_6 = arith.constant 0 : index
    %c0_7 = arith.constant 0 : index
    %c0_8 = arith.constant 0 : index
    %6 = vector.load %arg9[%c0_6, %c0_7, %c0_8] : memref<18x18x3xf32, #tpu.memory_space<vmem>>, vector<18x18x3xf32>
    tpu.vector_store %arg9[%c0_6, %c0_7, %c0_8], %5 {strides = array<i32>} : memref<18x18x3xf32, #tpu.memory_space<vmem>>, vector<18x18x3xf32>,
    %c1 = arith.constant 1 : index
    %c1_9 = arith.constant 1 : index
    %c0_10 = arith.constant 0 : index
    %7 = vector.load %arg9[%c1, %c1_9, %c0_10] : memref<18x18x3xf32, #tpu.memory_space<vmem>>, vector<16x16x3xf32>
    tpu.vector_store %arg9[%c1, %c1_9, %c0_10], %4 {strides = array<i32>} : memref<18x18x3xf32, #tpu.memory_space<vmem>>, vector<16x16x3xf32>,
    %c0_11 = arith.constant 0 : index
    %c0_12 = arith.constant 0 : index
    %c0_13 = arith.constant 0 : index
    %8 = vector.load %arg9[%c0_11, %c0_12, %c0_13] : memref<18x18x3xf32, #tpu.memory_space<vmem>>, vector<16x16x3xf32>
    %9 = vector.shape_cast %8 : vector<16x16x3xf32> to vector<256x3xf32>
    %c0_14 = arith.constant 0 : index
    %c0_15 = arith.constant 0 : index
    %10 = vector.load %arg11[%c0_14, %c0_15] : memref<256x144xf32, #tpu.memory_space<vmem>>, vector<256x3xf32>
    tpu.vector_store %arg11[%c0_14, %c0_15], %9 {strides = array<i32>} : memref<256x144xf32, #tpu.memory_space<vmem>>, vector<256x3xf32>,
    %c0_16 = arith.constant 0 : index
    %c1_17 = arith.constant 1 : index
    %c0_18 = arith.constant 0 : index
    %11 = vector.load %arg9[%c0_16, %c1_17, %c0_18] : memref<18x18x3xf32, #tpu.memory_space<vmem>>, vector<16x16x3xf32>
    %12 = vector.shape_cast %11 : vector<16x16x3xf32> to vector<256x3xf32>
    %c0_19 = arith.constant 0 : index
    %c3 = arith.constant 3 : index
    %13 = vector.load %arg11[%c0_19, %c3] : memref<256x144xf32, #tpu.memory_space<vmem>>, vector<256x3xf32>
    tpu.vector_store %arg11[%c0_19, %c3], %12 {strides = array<i32>} : memref<256x144xf32, #tpu.memory_space<vmem>>, vector<256x3xf32>,
    %c0_20 = arith.constant 0 : index
    %c2 = arith.constant 2 : index
    %c0_21 = arith.constant 0 : index
    %14 = vector.load %arg9[%c0_20, %c2, %c0_21] : memref<18x18x3xf32, #tpu.memory_space<vmem>>, vector<16x16x3xf32>
    %15 = vector.shape_cast %14 : vector<16x16x3xf32> to vector<256x3xf32>
    %c0_22 = arith.constant 0 : index
    %c6 = arith.constant 6 : index
    %16 = vector.load %arg11[%c0_22, %c6] : memref<256x144xf32, #tpu.memory_space<vmem>>, vector<256x3xf32>
    tpu.vector_store %arg11[%c0_22, %c6], %15 {strides = array<i32>} : memref<256x144xf32, #tpu.memory_space<vmem>>, vector<256x3xf32>,
    %c1_23 = arith.constant 1 : index
    %c0_24 = arith.constant 0 : index
    %c0_25 = arith.constant 0 : index
    %17 = vector.load %arg9[%c1_23, %c0_24, %c0_25] : memref<18x18x3xf32, #tpu.memory_space<vmem>>, vector<16x16x3xf32>
    %18 = vector.shape_cast %17 : vector<16x16x3xf32> to vector<256x3xf32>
    %c0_26 = arith.constant 0 : index
    %c9 = arith.constant 9 : index
    %19 = vector.load %arg11[%c0_26, %c9] : memref<256x144xf32, #tpu.memory_space<vmem>>, vector<256x3xf32>
    tpu.vector_store %arg11[%c0_26, %c9], %18 {strides = array<i32>} : memref<256x144xf32, #tpu.memory_space<vmem>>, vector<256x3xf32>,
    %c1_27 = arith.constant 1 : index
    %c1_28 = arith.constant 1 : index
    %c0_29 = arith.constant 0 : index
    %20 = vector.load %arg9[%c1_27, %c1_28, %c0_29] : memref<18x18x3xf32, #tpu.memory_space<vmem>>, vector<16x16x3xf32>
    %21 = vector.shape_cast %20 : vector<16x16x3xf32> to vector<256x3xf32>
    %c0_30 = arith.constant 0 : index
    %c12 = arith.constant 12 : index
    %22 = vector.load %arg11[%c0_30, %c12] : memref<256x144xf32, #tpu.memory_space<vmem>>, vector<256x3xf32>
    tpu.vector_store %arg11[%c0_30, %c12], %21 {strides = array<i32>} : memref<256x144xf32, #tpu.memory_space<vmem>>, vector<256x3xf32>,
    %c1_31 = arith.constant 1 : index
    %c2_32 = arith.constant 2 : index
    %c0_33 = arith.constant 0 : index
    %23 = vector.load %arg9[%c1_31, %c2_32, %c0_33] : memref<18x18x3xf32, #tpu.memory_space<vmem>>, vector<16x16x3xf32>
    %24 = vector.shape_cast %23 : vector<16x16x3xf32> to vector<256x3xf32>
    %c0_34 = arith.constant 0 : index
    %c15 = arith.constant 15 : index
    %25 = vector.load %arg11[%c0_34, %c15] : memref<256x144xf32, #tpu.memory_space<vmem>>, vector<256x3xf32>
    tpu.vector_store %arg11[%c0_34, %c15], %24 {strides = array<i32>} : memref<256x144xf32, #tpu.memory_space<vmem>>, vector<256x3xf32>,
    %c2_35 = arith.constant 2 : index
    %c0_36 = arith.constant 0 : index
    %c0_37 = arith.constant 0 : index
    %26 = vector.load %arg9[%c2_35, %c0_36, %c0_37] : memref<18x18x3xf32, #tpu.memory_space<vmem>>, vector<16x16x3xf32>
    %27 = vector.shape_cast %26 : vector<16x16x3xf32> to vector<256x3xf32>
    %c0_38 = arith.constant 0 : index
    %c18 = arith.constant 18 : index
    %28 = vector.load %arg11[%c0_38, %c18] : memref<256x144xf32, #tpu.memory_space<vmem>>, vector<256x3xf32>
    tpu.vector_store %arg11[%c0_38, %c18], %27 {strides = array<i32>} : memref<256x144xf32, #tpu.memory_space<vmem>>, vector<256x3xf32>,
    %c2_39 = arith.constant 2 : index
    %c1_40 = arith.constant 1 : index
    %c0_41 = arith.constant 0 : index
    %29 = vector.load %arg9[%c2_39, %c1_40, %c0_41] : memref<18x18x3xf32, #tpu.memory_space<vmem>>, vector<16x16x3xf32>
    %30 = vector.shape_cast %29 : vector<16x16x3xf32> to vector<256x3xf32>
    %c0_42 = arith.constant 0 : index
    %c21 = arith.constant 21 : index
    %31 = vector.load %arg11[%c0_42, %c21] : memref<256x144xf32, #tpu.memory_space<vmem>>, vector<256x3xf32>
    tpu.vector_store %arg11[%c0_42, %c21], %30 {strides = array<i32>} : memref<256x144xf32, #tpu.memory_space<vmem>>, vector<256x3xf32>,
    %c2_43 = arith.constant 2 : index
    %c2_44 = arith.constant 2 : index
    %c0_45 = arith.constant 0 : index
    %32 = vector.load %arg9[%c2_43, %c2_44, %c0_45] : memref<18x18x3xf32, #tpu.memory_space<vmem>>, vector<16x16x3xf32>
    %33 = vector.shape_cast %32 : vector<16x16x3xf32> to vector<256x3xf32>
    %c0_46 = arith.constant 0 : index
    %c24 = arith.constant 24 : index
    %34 = vector.load %arg11[%c0_46, %c24] : memref<256x144xf32, #tpu.memory_space<vmem>>, vector<256x3xf32>
    tpu.vector_store %arg11[%c0_46, %c24], %33 {strides = array<i32>} : memref<256x144xf32, #tpu.memory_space<vmem>>, vector<256x3xf32>,
    %c0_47 = arith.constant 0 : index
    %c0_48 = arith.constant 0 : index
    %35 = vector.load %arg11[%c0_47, %c0_48] : memref<256x144xf32, #tpu.memory_space<vmem>>, vector<256x27xf32>
    %36 = arith.truncf %35 : vector<256x27xf32> to vector<256x27xbf16>
    %c0_49 = arith.constant 0 : index
    %c0_50 = arith.constant 0 : index
    %37 = vector.load %arg4[%c0_49, %c0_50] : memref<27x16xbf16, #tpu.memory_space<vmem>>, vector<27x16xbf16>
    %cst_51 = arith.constant dense<0.000000e+00> : vector<256x16xf32>
    %38 = tpu.matmul %36, %37, %cst_51 {dimension_numbers = #tpu.dot_dimension_numbers<[1], [0], [0], [1], [0, 0, 1, 1], [], []>} : vector<256x27xbf16>, vector<27x16xbf16>, vector<256x16xf32> -> vector<256x16xf32>
    %c0_52 = arith.constant 0 : index
    %c0_53 = arith.constant 0 : index
    %39 = vector.load %arg5[%c0_52, %c0_53] : memref<1x16xf32, #tpu.memory_space<vmem>>, vector<1x16xf32>
    %40 = vector.broadcast %39 : vector<1x16xf32> to vector<256x16xf32>
    %41 = arith.addf %38, %40 : vector<256x16xf32>
    %cst_54 = arith.constant 0.000000e+00 : f32
    %42 = vector.broadcast %cst_54 : f32 to vector<256x16xf32>
    %43 = arith.maximumf %41, %42 : vector<256x16xf32>
    %cst_55 = arith.constant 0.000000e+00 : f32
    %44 = vector.broadcast %cst_55 : f32 to vector<18x18x16xf32>
    %c0_56 = arith.constant 0 : index
    %c0_57 = arith.constant 0 : index
    %c0_58 = arith.constant 0 : index
    %45 = vector.load %arg10[%c0_56, %c0_57, %c0_58] : memref<18x18x16xf32, #tpu.memory_space<vmem>>, vector<18x18x16xf32>
    tpu.vector_store %arg10[%c0_56, %c0_57, %c0_58], %44 {strides = array<i32>} : memref<18x18x16xf32, #tpu.memory_space<vmem>>, vector<18x18x16xf32>,
    %46 = vector.shape_cast %43 : vector<256x16xf32> to vector<16x16x16xf32>
    %c1_59 = arith.constant 1 : index
    %c1_60 = arith.constant 1 : index
    %c0_61 = arith.constant 0 : index
    %47 = vector.load %arg10[%c1_59, %c1_60, %c0_61] : memref<18x18x16xf32, #tpu.memory_space<vmem>>, vector<16x16x16xf32>
    tpu.vector_store %arg10[%c1_59, %c1_60, %c0_61], %46 {strides = array<i32>} : memref<18x18x16xf32, #tpu.memory_space<vmem>>, vector<16x16x16xf32>,
    %c0_62 = arith.constant 0 : index
    %c0_63 = arith.constant 0 : index
    %c0_64 = arith.constant 0 : index
    %48 = vector.load %arg10[%c0_62, %c0_63, %c0_64] : memref<18x18x16xf32, #tpu.memory_space<vmem>>, vector<16x16x16xf32>
    %49 = vector.shape_cast %48 : vector<16x16x16xf32> to vector<256x16xf32>
    %c0_65 = arith.constant 0 : index
    %c0_66 = arith.constant 0 : index
    %50 = vector.load %arg11[%c0_65, %c0_66] : memref<256x144xf32, #tpu.memory_space<vmem>>, vector<256x16xf32>
    tpu.vector_store %arg11[%c0_65, %c0_66], %49 {strides = array<i32>} : memref<256x144xf32, #tpu.memory_space<vmem>>, vector<256x16xf32>,
    %c0_67 = arith.constant 0 : index
    %c1_68 = arith.constant 1 : index
    %c0_69 = arith.constant 0 : index
    %51 = vector.load %arg10[%c0_67, %c1_68, %c0_69] : memref<18x18x16xf32, #tpu.memory_space<vmem>>, vector<16x16x16xf32>
    %52 = vector.shape_cast %51 : vector<16x16x16xf32> to vector<256x16xf32>
    %c0_70 = arith.constant 0 : index
    %c16 = arith.constant 16 : index
    %53 = vector.load %arg11[%c0_70, %c16] : memref<256x144xf32, #tpu.memory_space<vmem>>, vector<256x16xf32>
    tpu.vector_store %arg11[%c0_70, %c16], %52 {strides = array<i32>} : memref<256x144xf32, #tpu.memory_space<vmem>>, vector<256x16xf32>,
    %c0_71 = arith.constant 0 : index
    %c2_72 = arith.constant 2 : index
    %c0_73 = arith.constant 0 : index
    %54 = vector.load %arg10[%c0_71, %c2_72, %c0_73] : memref<18x18x16xf32, #tpu.memory_space<vmem>>, vector<16x16x16xf32>
    %55 = vector.shape_cast %54 : vector<16x16x16xf32> to vector<256x16xf32>
    %c0_74 = arith.constant 0 : index
    %c32 = arith.constant 32 : index
    %56 = vector.load %arg11[%c0_74, %c32] : memref<256x144xf32, #tpu.memory_space<vmem>>, vector<256x16xf32>
    tpu.vector_store %arg11[%c0_74, %c32], %55 {strides = array<i32>} : memref<256x144xf32, #tpu.memory_space<vmem>>, vector<256x16xf32>,
    %c1_75 = arith.constant 1 : index
    %c0_76 = arith.constant 0 : index
    %c0_77 = arith.constant 0 : index
    %57 = vector.load %arg10[%c1_75, %c0_76, %c0_77] : memref<18x18x16xf32, #tpu.memory_space<vmem>>, vector<16x16x16xf32>
    %58 = vector.shape_cast %57 : vector<16x16x16xf32> to vector<256x16xf32>
    %c0_78 = arith.constant 0 : index
    %c48 = arith.constant 48 : index
    %59 = vector.load %arg11[%c0_78, %c48] : memref<256x144xf32, #tpu.memory_space<vmem>>, vector<256x16xf32>
    tpu.vector_store %arg11[%c0_78, %c48], %58 {strides = array<i32>} : memref<256x144xf32, #tpu.memory_space<vmem>>, vector<256x16xf32>,
    %c1_79 = arith.constant 1 : index
    %c1_80 = arith.constant 1 : index
    %c0_81 = arith.constant 0 : index
    %60 = vector.load %arg10[%c1_79, %c1_80, %c0_81] : memref<18x18x16xf32, #tpu.memory_space<vmem>>, vector<16x16x16xf32>
    %61 = vector.shape_cast %60 : vector<16x16x16xf32> to vector<256x16xf32>
    %c0_82 = arith.constant 0 : index
    %c64 = arith.constant 64 : index
    %62 = vector.load %arg11[%c0_82, %c64] : memref<256x144xf32, #tpu.memory_space<vmem>>, vector<256x16xf32>
    tpu.vector_store %arg11[%c0_82, %c64], %61 {strides = array<i32>} : memref<256x144xf32, #tpu.memory_space<vmem>>, vector<256x16xf32>,
    %c1_83 = arith.constant 1 : index
    %c2_84 = arith.constant 2 : index
    %c0_85 = arith.constant 0 : index
    %63 = vector.load %arg10[%c1_83, %c2_84, %c0_85] : memref<18x18x16xf32, #tpu.memory_space<vmem>>, vector<16x16x16xf32>
    %64 = vector.shape_cast %63 : vector<16x16x16xf32> to vector<256x16xf32>
    %c0_86 = arith.constant 0 : index
    %c80 = arith.constant 80 : index
    %65 = vector.load %arg11[%c0_86, %c80] : memref<256x144xf32, #tpu.memory_space<vmem>>, vector<256x16xf32>
    tpu.vector_store %arg11[%c0_86, %c80], %64 {strides = array<i32>} : memref<256x144xf32, #tpu.memory_space<vmem>>, vector<256x16xf32>,
    %c2_87 = arith.constant 2 : index
    %c0_88 = arith.constant 0 : index
    %c0_89 = arith.constant 0 : index
    %66 = vector.load %arg10[%c2_87, %c0_88, %c0_89] : memref<18x18x16xf32, #tpu.memory_space<vmem>>, vector<16x16x16xf32>
    %67 = vector.shape_cast %66 : vector<16x16x16xf32> to vector<256x16xf32>
    %c0_90 = arith.constant 0 : index
    %c96 = arith.constant 96 : index
    %68 = vector.load %arg11[%c0_90, %c96] : memref<256x144xf32, #tpu.memory_space<vmem>>, vector<256x16xf32>
    tpu.vector_store %arg11[%c0_90, %c96], %67 {strides = array<i32>} : memref<256x144xf32, #tpu.memory_space<vmem>>, vector<256x16xf32>,
    %c2_91 = arith.constant 2 : index
    %c1_92 = arith.constant 1 : index
    %c0_93 = arith.constant 0 : index
    %69 = vector.load %arg10[%c2_91, %c1_92, %c0_93] : memref<18x18x16xf32, #tpu.memory_space<vmem>>, vector<16x16x16xf32>
    %70 = vector.shape_cast %69 : vector<16x16x16xf32> to vector<256x16xf32>
    %c0_94 = arith.constant 0 : index
    %c112 = arith.constant 112 : index
    %71 = vector.load %arg11[%c0_94, %c112] : memref<256x144xf32, #tpu.memory_space<vmem>>, vector<256x16xf32>
    tpu.vector_store %arg11[%c0_94, %c112], %70 {strides = array<i32>} : memref<256x144xf32, #tpu.memory_space<vmem>>, vector<256x16xf32>,
    %c2_95 = arith.constant 2 : index
    %c2_96 = arith.constant 2 : index
    %c0_97 = arith.constant 0 : index
    %72 = vector.load %arg10[%c2_95, %c2_96, %c0_97] : memref<18x18x16xf32, #tpu.memory_space<vmem>>, vector<16x16x16xf32>
    %73 = vector.shape_cast %72 : vector<16x16x16xf32> to vector<256x16xf32>
    %c0_98 = arith.constant 0 : index
    %c128 = arith.constant 128 : index
    %74 = vector.load %arg11[%c0_98, %c128] : memref<256x144xf32, #tpu.memory_space<vmem>>, vector<256x16xf32>
    tpu.vector_store %arg11[%c0_98, %c128], %73 {strides = array<i32>} : memref<256x144xf32, #tpu.memory_space<vmem>>, vector<256x16xf32>,
    %c0_99 = arith.constant 0 : index
    %c0_100 = arith.constant 0 : index
    %75 = vector.load %arg11[%c0_99, %c0_100] : memref<256x144xf32, #tpu.memory_space<vmem>>, vector<256x144xf32>
    %76 = arith.truncf %75 : vector<256x144xf32> to vector<256x144xbf16>
    %c0_101 = arith.constant 0 : index
    %c0_102 = arith.constant 0 : index
    %77 = vector.load %arg6[%c0_101, %c0_102] : memref<144x32xbf16, #tpu.memory_space<vmem>>, vector<144x32xbf16>
    %cst_103 = arith.constant dense<0.000000e+00> : vector<256x32xf32>
    %78 = tpu.matmul %76, %77, %cst_103 {dimension_numbers = #tpu.dot_dimension_numbers<[1], [0], [0], [1], [0, 0, 1, 1], [], []>} : vector<256x144xbf16>, vector<144x32xbf16>, vector<256x32xf32> -> vector<256x32xf32>
    %c0_104 = arith.constant 0 : index
    %c0_105 = arith.constant 0 : index
    %79 = vector.load %arg7[%c0_104, %c0_105] : memref<1x32xf32, #tpu.memory_space<vmem>>, vector<1x32xf32>
    %80 = vector.broadcast %79 : vector<1x32xf32> to vector<256x32xf32>
    %81 = arith.addf %78, %80 : vector<256x32xf32>
    %cst_106 = arith.constant 0.000000e+00 : f32
    %82 = vector.broadcast %cst_106 : f32 to vector<256x32xf32>
    %83 = arith.maximumf %81, %82 : vector<256x32xf32>
    %c0_107 = arith.constant 0 : index
    %c0_108 = arith.constant 0 : index
    %c0_109 = arith.constant 0 : index
    %c0_110 = arith.constant 0 : index
    %84 = vector.load %arg2[%c0_107, %c0_108, %c0_109, %c0_110] : memref<1x16x16x3xf32, #tpu.memory_space<vmem>>, vector<1x16x16x3xf32>
    %85 = vector.shape_cast %84 : vector<1x16x16x3xf32> to vector<16x16x3xf32>
    %86 = vector.broadcast %0 : vector<1x1x3xf32> to vector<16x16x3xf32>
    %87 = arith.subf %85, %86 : vector<16x16x3xf32>
    %cst_111 = arith.constant 0.000000e+00 : f32
    %88 = vector.broadcast %cst_111 : f32 to vector<18x18x3xf32>
    %c0_112 = arith.constant 0 : index
    %c0_113 = arith.constant 0 : index
    %c0_114 = arith.constant 0 : index
    %89 = vector.load %arg9[%c0_112, %c0_113, %c0_114] : memref<18x18x3xf32, #tpu.memory_space<vmem>>, vector<18x18x3xf32>
    tpu.vector_store %arg9[%c0_112, %c0_113, %c0_114], %88 {strides = array<i32>} : memref<18x18x3xf32, #tpu.memory_space<vmem>>, vector<18x18x3xf32>,
    %c1_115 = arith.constant 1 : index
    %c1_116 = arith.constant 1 : index
    %c0_117 = arith.constant 0 : index
    %90 = vector.load %arg9[%c1_115, %c1_116, %c0_117] : memref<18x18x3xf32, #tpu.memory_space<vmem>>, vector<16x16x3xf32>
    tpu.vector_store %arg9[%c1_115, %c1_116, %c0_117], %87 {strides = array<i32>} : memref<18x18x3xf32, #tpu.memory_space<vmem>>, vector<16x16x3xf32>,
    %c0_118 = arith.constant 0 : index
    %c0_119 = arith.constant 0 : index
    %c0_120 = arith.constant 0 : index
    %91 = vector.load %arg9[%c0_118, %c0_119, %c0_120] : memref<18x18x3xf32, #tpu.memory_space<vmem>>, vector<16x16x3xf32>
    %92 = vector.shape_cast %91 : vector<16x16x3xf32> to vector<256x3xf32>
    %c0_121 = arith.constant 0 : index
    %c0_122 = arith.constant 0 : index
    %93 = vector.load %arg11[%c0_121, %c0_122] : memref<256x144xf32, #tpu.memory_space<vmem>>, vector<256x3xf32>
    tpu.vector_store %arg11[%c0_121, %c0_122], %92 {strides = array<i32>} : memref<256x144xf32, #tpu.memory_space<vmem>>, vector<256x3xf32>,
    %c0_123 = arith.constant 0 : index
    %c1_124 = arith.constant 1 : index
    %c0_125 = arith.constant 0 : index
    %94 = vector.load %arg9[%c0_123, %c1_124, %c0_125] : memref<18x18x3xf32, #tpu.memory_space<vmem>>, vector<16x16x3xf32>
    %95 = vector.shape_cast %94 : vector<16x16x3xf32> to vector<256x3xf32>
    %c0_126 = arith.constant 0 : index
    %c3_127 = arith.constant 3 : index
    %96 = vector.load %arg11[%c0_126, %c3_127] : memref<256x144xf32, #tpu.memory_space<vmem>>, vector<256x3xf32>
    tpu.vector_store %arg11[%c0_126, %c3_127], %95 {strides = array<i32>} : memref<256x144xf32, #tpu.memory_space<vmem>>, vector<256x3xf32>,
    %c0_128 = arith.constant 0 : index
    %c2_129 = arith.constant 2 : index
    %c0_130 = arith.constant 0 : index
    %97 = vector.load %arg9[%c0_128, %c2_129, %c0_130] : memref<18x18x3xf32, #tpu.memory_space<vmem>>, vector<16x16x3xf32>
    %98 = vector.shape_cast %97 : vector<16x16x3xf32> to vector<256x3xf32>
    %c0_131 = arith.constant 0 : index
    %c6_132 = arith.constant 6 : index
    %99 = vector.load %arg11[%c0_131, %c6_132] : memref<256x144xf32, #tpu.memory_space<vmem>>, vector<256x3xf32>
    tpu.vector_store %arg11[%c0_131, %c6_132], %98 {strides = array<i32>} : memref<256x144xf32, #tpu.memory_space<vmem>>, vector<256x3xf32>,
    %c1_133 = arith.constant 1 : index
    %c0_134 = arith.constant 0 : index
    %c0_135 = arith.constant 0 : index
    %100 = vector.load %arg9[%c1_133, %c0_134, %c0_135] : memref<18x18x3xf32, #tpu.memory_space<vmem>>, vector<16x16x3xf32>
    %101 = vector.shape_cast %100 : vector<16x16x3xf32> to vector<256x3xf32>
    %c0_136 = arith.constant 0 : index
    %c9_137 = arith.constant 9 : index
    %102 = vector.load %arg11[%c0_136, %c9_137] : memref<256x144xf32, #tpu.memory_space<vmem>>, vector<256x3xf32>
    tpu.vector_store %arg11[%c0_136, %c9_137], %101 {strides = array<i32>} : memref<256x144xf32, #tpu.memory_space<vmem>>, vector<256x3xf32>,
    %c1_138 = arith.constant 1 : index
    %c1_139 = arith.constant 1 : index
    %c0_140 = arith.constant 0 : index
    %103 = vector.load %arg9[%c1_138, %c1_139, %c0_140] : memref<18x18x3xf32, #tpu.memory_space<vmem>>, vector<16x16x3xf32>
    %104 = vector.shape_cast %103 : vector<16x16x3xf32> to vector<256x3xf32>
    %c0_141 = arith.constant 0 : index
    %c12_142 = arith.constant 12 : index
    %105 = vector.load %arg11[%c0_141, %c12_142] : memref<256x144xf32, #tpu.memory_space<vmem>>, vector<256x3xf32>
    tpu.vector_store %arg11[%c0_141, %c12_142], %104 {strides = array<i32>} : memref<256x144xf32, #tpu.memory_space<vmem>>, vector<256x3xf32>,
    %c1_143 = arith.constant 1 : index
    %c2_144 = arith.constant 2 : index
    %c0_145 = arith.constant 0 : index
    %106 = vector.load %arg9[%c1_143, %c2_144, %c0_145] : memref<18x18x3xf32, #tpu.memory_space<vmem>>, vector<16x16x3xf32>
    %107 = vector.shape_cast %106 : vector<16x16x3xf32> to vector<256x3xf32>
    %c0_146 = arith.constant 0 : index
    %c15_147 = arith.constant 15 : index
    %108 = vector.load %arg11[%c0_146, %c15_147] : memref<256x144xf32, #tpu.memory_space<vmem>>, vector<256x3xf32>
    tpu.vector_store %arg11[%c0_146, %c15_147], %107 {strides = array<i32>} : memref<256x144xf32, #tpu.memory_space<vmem>>, vector<256x3xf32>,
    %c2_148 = arith.constant 2 : index
    %c0_149 = arith.constant 0 : index
    %c0_150 = arith.constant 0 : index
    %109 = vector.load %arg9[%c2_148, %c0_149, %c0_150] : memref<18x18x3xf32, #tpu.memory_space<vmem>>, vector<16x16x3xf32>
    %110 = vector.shape_cast %109 : vector<16x16x3xf32> to vector<256x3xf32>
    %c0_151 = arith.constant 0 : index
    %c18_152 = arith.constant 18 : index
    %111 = vector.load %arg11[%c0_151, %c18_152] : memref<256x144xf32, #tpu.memory_space<vmem>>, vector<256x3xf32>
    tpu.vector_store %arg11[%c0_151, %c18_152], %110 {strides = array<i32>} : memref<256x144xf32, #tpu.memory_space<vmem>>, vector<256x3xf32>,
    %c2_153 = arith.constant 2 : index
    %c1_154 = arith.constant 1 : index
    %c0_155 = arith.constant 0 : index
    %112 = vector.load %arg9[%c2_153, %c1_154, %c0_155] : memref<18x18x3xf32, #tpu.memory_space<vmem>>, vector<16x16x3xf32>
    %113 = vector.shape_cast %112 : vector<16x16x3xf32> to vector<256x3xf32>
    %c0_156 = arith.constant 0 : index
    %c21_157 = arith.constant 21 : index
    %114 = vector.load %arg11[%c0_156, %c21_157] : memref<256x144xf32, #tpu.memory_space<vmem>>, vector<256x3xf32>
    tpu.vector_store %arg11[%c0_156, %c21_157], %113 {strides = array<i32>} : memref<256x144xf32, #tpu.memory_space<vmem>>, vector<256x3xf32>,
    %c2_158 = arith.constant 2 : index
    %c2_159 = arith.constant 2 : index
    %c0_160 = arith.constant 0 : index
    %115 = vector.load %arg9[%c2_158, %c2_159, %c0_160] : memref<18x18x3xf32, #tpu.memory_space<vmem>>, vector<16x16x3xf32>
    %116 = vector.shape_cast %115 : vector<16x16x3xf32> to vector<256x3xf32>
    %c0_161 = arith.constant 0 : index
    %c24_162 = arith.constant 24 : index
    %117 = vector.load %arg11[%c0_161, %c24_162] : memref<256x144xf32, #tpu.memory_space<vmem>>, vector<256x3xf32>
    tpu.vector_store %arg11[%c0_161, %c24_162], %116 {strides = array<i32>} : memref<256x144xf32, #tpu.memory_space<vmem>>, vector<256x3xf32>,
    %c0_163 = arith.constant 0 : index
    %c0_164 = arith.constant 0 : index
    %118 = vector.load %arg11[%c0_163, %c0_164] : memref<256x144xf32, #tpu.memory_space<vmem>>, vector<256x27xf32>
    %119 = arith.truncf %118 : vector<256x27xf32> to vector<256x27xbf16>
    %c0_165 = arith.constant 0 : index
    %c0_166 = arith.constant 0 : index
    %120 = vector.load %arg4[%c0_165, %c0_166] : memref<27x16xbf16, #tpu.memory_space<vmem>>, vector<27x16xbf16>
    %cst_167 = arith.constant dense<0.000000e+00> : vector<256x16xf32>
    %121 = tpu.matmul %119, %120, %cst_167 {dimension_numbers = #tpu.dot_dimension_numbers<[1], [0], [0], [1], [0, 0, 1, 1], [], []>} : vector<256x27xbf16>, vector<27x16xbf16>, vector<256x16xf32> -> vector<256x16xf32>
    %c0_168 = arith.constant 0 : index
    %c0_169 = arith.constant 0 : index
    %122 = vector.load %arg5[%c0_168, %c0_169] : memref<1x16xf32, #tpu.memory_space<vmem>>, vector<1x16xf32>
    %123 = vector.broadcast %122 : vector<1x16xf32> to vector<256x16xf32>
    %124 = arith.addf %121, %123 : vector<256x16xf32>
    %cst_170 = arith.constant 0.000000e+00 : f32
    %125 = vector.broadcast %cst_170 : f32 to vector<256x16xf32>
    %126 = arith.maximumf %124, %125 : vector<256x16xf32>
    %cst_171 = arith.constant 0.000000e+00 : f32
    %127 = vector.broadcast %cst_171 : f32 to vector<18x18x16xf32>
    %c0_172 = arith.constant 0 : index
    %c0_173 = arith.constant 0 : index
    %c0_174 = arith.constant 0 : index
    %128 = vector.load %arg10[%c0_172, %c0_173, %c0_174] : memref<18x18x16xf32, #tpu.memory_space<vmem>>, vector<18x18x16xf32>
    tpu.vector_store %arg10[%c0_172, %c0_173, %c0_174], %127 {strides = array<i32>} : memref<18x18x16xf32, #tpu.memory_space<vmem>>, vector<18x18x16xf32>,
    %129 = vector.shape_cast %126 : vector<256x16xf32> to vector<16x16x16xf32>
    %c1_175 = arith.constant 1 : index
    %c1_176 = arith.constant 1 : index
    %c0_177 = arith.constant 0 : index
    %130 = vector.load %arg10[%c1_175, %c1_176, %c0_177] : memref<18x18x16xf32, #tpu.memory_space<vmem>>, vector<16x16x16xf32>
    tpu.vector_store %arg10[%c1_175, %c1_176, %c0_177], %129 {strides = array<i32>} : memref<18x18x16xf32, #tpu.memory_space<vmem>>, vector<16x16x16xf32>,
    %c0_178 = arith.constant 0 : index
    %c0_179 = arith.constant 0 : index
    %c0_180 = arith.constant 0 : index
    %131 = vector.load %arg10[%c0_178, %c0_179, %c0_180] : memref<18x18x16xf32, #tpu.memory_space<vmem>>, vector<16x16x16xf32>
    %132 = vector.shape_cast %131 : vector<16x16x16xf32> to vector<256x16xf32>
    %c0_181 = arith.constant 0 : index
    %c0_182 = arith.constant 0 : index
    %133 = vector.load %arg11[%c0_181, %c0_182] : memref<256x144xf32, #tpu.memory_space<vmem>>, vector<256x16xf32>
    tpu.vector_store %arg11[%c0_181, %c0_182], %132 {strides = array<i32>} : memref<256x144xf32, #tpu.memory_space<vmem>>, vector<256x16xf32>,
    %c0_183 = arith.constant 0 : index
    %c1_184 = arith.constant 1 : index
    %c0_185 = arith.constant 0 : index
    %134 = vector.load %arg10[%c0_183, %c1_184, %c0_185] : memref<18x18x16xf32, #tpu.memory_space<vmem>>, vector<16x16x16xf32>
    %135 = vector.shape_cast %134 : vector<16x16x16xf32> to vector<256x16xf32>
    %c0_186 = arith.constant 0 : index
    %c16_187 = arith.constant 16 : index
    %136 = vector.load %arg11[%c0_186, %c16_187] : memref<256x144xf32, #tpu.memory_space<vmem>>, vector<256x16xf32>
    tpu.vector_store %arg11[%c0_186, %c16_187], %135 {strides = array<i32>} : memref<256x144xf32, #tpu.memory_space<vmem>>, vector<256x16xf32>,
    %c0_188 = arith.constant 0 : index
    %c2_189 = arith.constant 2 : index
    %c0_190 = arith.constant 0 : index
    %137 = vector.load %arg10[%c0_188, %c2_189, %c0_190] : memref<18x18x16xf32, #tpu.memory_space<vmem>>, vector<16x16x16xf32>
    %138 = vector.shape_cast %137 : vector<16x16x16xf32> to vector<256x16xf32>
    %c0_191 = arith.constant 0 : index
    %c32_192 = arith.constant 32 : index
    %139 = vector.load %arg11[%c0_191, %c32_192] : memref<256x144xf32, #tpu.memory_space<vmem>>, vector<256x16xf32>
    tpu.vector_store %arg11[%c0_191, %c32_192], %138 {strides = array<i32>} : memref<256x144xf32, #tpu.memory_space<vmem>>, vector<256x16xf32>,
    %c1_193 = arith.constant 1 : index
    %c0_194 = arith.constant 0 : index
    %c0_195 = arith.constant 0 : index
    %140 = vector.load %arg10[%c1_193, %c0_194, %c0_195] : memref<18x18x16xf32, #tpu.memory_space<vmem>>, vector<16x16x16xf32>
    %141 = vector.shape_cast %140 : vector<16x16x16xf32> to vector<256x16xf32>
    %c0_196 = arith.constant 0 : index
    %c48_197 = arith.constant 48 : index
    %142 = vector.load %arg11[%c0_196, %c48_197] : memref<256x144xf32, #tpu.memory_space<vmem>>, vector<256x16xf32>
    tpu.vector_store %arg11[%c0_196, %c48_197], %141 {strides = array<i32>} : memref<256x144xf32, #tpu.memory_space<vmem>>, vector<256x16xf32>,
    %c1_198 = arith.constant 1 : index
    %c1_199 = arith.constant 1 : index
    %c0_200 = arith.constant 0 : index
    %143 = vector.load %arg10[%c1_198, %c1_199, %c0_200] : memref<18x18x16xf32, #tpu.memory_space<vmem>>, vector<16x16x16xf32>
    %144 = vector.shape_cast %143 : vector<16x16x16xf32> to vector<256x16xf32>
    %c0_201 = arith.constant 0 : index
    %c64_202 = arith.constant 64 : index
    %145 = vector.load %arg11[%c0_201, %c64_202] : memref<256x144xf32, #tpu.memory_space<vmem>>, vector<256x16xf32>
    tpu.vector_store %arg11[%c0_201, %c64_202], %144 {strides = array<i32>} : memref<256x144xf32, #tpu.memory_space<vmem>>, vector<256x16xf32>,
    %c1_203 = arith.constant 1 : index
    %c2_204 = arith.constant 2 : index
    %c0_205 = arith.constant 0 : index
    %146 = vector.load %arg10[%c1_203, %c2_204, %c0_205] : memref<18x18x16xf32, #tpu.memory_space<vmem>>, vector<16x16x16xf32>
    %147 = vector.shape_cast %146 : vector<16x16x16xf32> to vector<256x16xf32>
    %c0_206 = arith.constant 0 : index
    %c80_207 = arith.constant 80 : index
    %148 = vector.load %arg11[%c0_206, %c80_207] : memref<256x144xf32, #tpu.memory_space<vmem>>, vector<256x16xf32>
    tpu.vector_store %arg11[%c0_206, %c80_207], %147 {strides = array<i32>} : memref<256x144xf32, #tpu.memory_space<vmem>>, vector<256x16xf32>,
    %c2_208 = arith.constant 2 : index
    %c0_209 = arith.constant 0 : index
    %c0_210 = arith.constant 0 : index
    %149 = vector.load %arg10[%c2_208, %c0_209, %c0_210] : memref<18x18x16xf32, #tpu.memory_space<vmem>>, vector<16x16x16xf32>
    %150 = vector.shape_cast %149 : vector<16x16x16xf32> to vector<256x16xf32>
    %c0_211 = arith.constant 0 : index
    %c96_212 = arith.constant 96 : index
    %151 = vector.load %arg11[%c0_211, %c96_212] : memref<256x144xf32, #tpu.memory_space<vmem>>, vector<256x16xf32>
    tpu.vector_store %arg11[%c0_211, %c96_212], %150 {strides = array<i32>} : memref<256x144xf32, #tpu.memory_space<vmem>>, vector<256x16xf32>,
    %c2_213 = arith.constant 2 : index
    %c1_214 = arith.constant 1 : index
    %c0_215 = arith.constant 0 : index
    %152 = vector.load %arg10[%c2_213, %c1_214, %c0_215] : memref<18x18x16xf32, #tpu.memory_space<vmem>>, vector<16x16x16xf32>
    %153 = vector.shape_cast %152 : vector<16x16x16xf32> to vector<256x16xf32>
    %c0_216 = arith.constant 0 : index
    %c112_217 = arith.constant 112 : index
    %154 = vector.load %arg11[%c0_216, %c112_217] : memref<256x144xf32, #tpu.memory_space<vmem>>, vector<256x16xf32>
    tpu.vector_store %arg11[%c0_216, %c112_217], %153 {strides = array<i32>} : memref<256x144xf32, #tpu.memory_space<vmem>>, vector<256x16xf32>,
    %c2_218 = arith.constant 2 : index
    %c2_219 = arith.constant 2 : index
    %c0_220 = arith.constant 0 : index
    %155 = vector.load %arg10[%c2_218, %c2_219, %c0_220] : memref<18x18x16xf32, #tpu.memory_space<vmem>>, vector<16x16x16xf32>
    %156 = vector.shape_cast %155 : vector<16x16x16xf32> to vector<256x16xf32>
    %c0_221 = arith.constant 0 : index
    %c128_222 = arith.constant 128 : index
    %157 = vector.load %arg11[%c0_221, %c128_222] : memref<256x144xf32, #tpu.memory_space<vmem>>, vector<256x16xf32>
    tpu.vector_store %arg11[%c0_221, %c128_222], %156 {strides = array<i32>} : memref<256x144xf32, #tpu.memory_space<vmem>>, vector<256x16xf32>,
    %c0_223 = arith.constant 0 : index
    %c0_224 = arith.constant 0 : index
    %158 = vector.load %arg11[%c0_223, %c0_224] : memref<256x144xf32, #tpu.memory_space<vmem>>, vector<256x144xf32>
    %159 = arith.truncf %158 : vector<256x144xf32> to vector<256x144xbf16>
    %c0_225 = arith.constant 0 : index
    %c0_226 = arith.constant 0 : index
    %160 = vector.load %arg6[%c0_225, %c0_226] : memref<144x32xbf16, #tpu.memory_space<vmem>>, vector<144x32xbf16>
    %cst_227 = arith.constant dense<0.000000e+00> : vector<256x32xf32>
    %161 = tpu.matmul %159, %160, %cst_227 {dimension_numbers = #tpu.dot_dimension_numbers<[1], [0], [0], [1], [0, 0, 1, 1], [], []>} : vector<256x144xbf16>, vector<144x32xbf16>, vector<256x32xf32> -> vector<256x32xf32>
    %c0_228 = arith.constant 0 : index
    %c0_229 = arith.constant 0 : index
    %162 = vector.load %arg7[%c0_228, %c0_229] : memref<1x32xf32, #tpu.memory_space<vmem>>, vector<1x32xf32>
    %163 = vector.broadcast %162 : vector<1x32xf32> to vector<256x32xf32>
    %164 = arith.addf %161, %163 : vector<256x32xf32>
    %cst_230 = arith.constant 0.000000e+00 : f32
    %165 = vector.broadcast %cst_230 : f32 to vector<256x32xf32>
    %166 = arith.maximumf %164, %165 : vector<256x32xf32>
    %167 = arith.subf %83, %166 : vector<256x32xf32>
    %168 = math.absf %167 : vector<256x32xf32>
    %169 = vector.shape_cast %168 : vector<256x32xf32> to vector<1x256x32xf32>
    %cst_231 = arith.constant dense<0.000000e+00> : vector<1xf32>
    %170 = vector.multi_reduction <add>, %169, %cst_231 [1, 2] : vector<1x256x32xf32> to vector<1xf32>
    %171 = vector.shape_cast %170 : vector<1xf32> to vector<1x1x1xf32>
    %172 = vector.extract %171[0, 0, 0] : f32 from vector<1x1x1xf32>
    %173 = vector.broadcast %172 : f32 to vector<1x1x1xf32>
    %c0_232 = arith.constant 0 : index
    %c0_233 = arith.constant 0 : index
    %c0_234 = arith.constant 0 : index
    %174 = vector.load %arg8[%c0_232, %c0_233, %c0_234] : memref<1x1x1xf32, #tpu.memory_space<vmem>>, vector<1x1x1xf32>
    tpu.vector_store %arg8[%c0_232, %c0_233, %c0_234], %173 {strides = array<i32>} : memref<1x1x1xf32, #tpu.memory_space<vmem>>, vector<1x1x1xf32>,
    return
  }
  func.func @transform_0(%arg0: i32) -> (i32, i32, i32, i32) {
    %c0_i32 = arith.constant 0 : i32
    %c0_i32_0 = arith.constant 0 : i32
    %c0_i32_1 = arith.constant 0 : i32
    %c0_i32_2 = arith.constant 0 : i32
    return %arg0, %c0_i32, %c0_i32_0, %c0_i32_1 : i32, i32, i32, i32
  }
  func.func @transform_1(%arg0: i32) -> (i32, i32, i32, i32) {
    %c0_i32 = arith.constant 0 : i32
    %c0_i32_0 = arith.constant 0 : i32
    %c0_i32_1 = arith.constant 0 : i32
    %c0_i32_2 = arith.constant 0 : i32
    return %arg0, %c0_i32, %c0_i32_0, %c0_i32_1 : i32, i32, i32, i32
  }
  func.func @transform_2(%arg0: i32) -> (i32, i32, i32) {
    %c0_i32 = arith.constant 0 : i32
    %c0_i32_0 = arith.constant 0 : i32
    %c0_i32_1 = arith.constant 0 : i32
    %c0_i32_2 = arith.constant 0 : i32
    return %c0_i32, %c0_i32_0, %c0_i32_1 : i32, i32, i32
  }
  func.func @transform_3(%arg0: i32) -> (i32, i32) {
    %c0_i32 = arith.constant 0 : i32
    %c0_i32_0 = arith.constant 0 : i32
    %c0_i32_1 = arith.constant 0 : i32
    return %c0_i32, %c0_i32_0 : i32, i32
  }
  func.func @transform_4(%arg0: i32) -> (i32, i32) {
    %c0_i32 = arith.constant 0 : i32
    %c0_i32_0 = arith.constant 0 : i32
    %c0_i32_1 = arith.constant 0 : i32
    return %c0_i32, %c0_i32_0 : i32, i32
  }
  func.func @transform_5(%arg0: i32) -> (i32, i32) {
    %c0_i32 = arith.constant 0 : i32
    %c0_i32_0 = arith.constant 0 : i32
    %c0_i32_1 = arith.constant 0 : i32
    return %c0_i32, %c0_i32_0 : i32, i32
  }
  func.func @transform_6(%arg0: i32) -> (i32, i32) {
    %c0_i32 = arith.constant 0 : i32
    %c0_i32_0 = arith.constant 0 : i32
    %c0_i32_1 = arith.constant 0 : i32
    return %c0_i32, %c0_i32_0 : i32, i32
  }
  func.func @transform_7(%arg0: i32) -> (i32, i32, i32) {
    %c0_i32 = arith.constant 0 : i32
    %c0_i32_0 = arith.constant 0 : i32
    %c0_i32_1 = arith.constant 0 : i32
    return %arg0, %c0_i32, %c0_i32_0 : i32, i32, i32
  }
}

</mosaic_0001>

<llo_original>
// kernel: content_l1_loss.1
$region0: #{content_l1_loss.1}
  #allocation0 [shape = 'u32[]', space=smem, size = 0x4, offset = 0x4, fixed_abs, tag = 'smem constant byte address 0x4 - core index']
  #allocation1 [shape = 'u32[144,128]{1,0:T(1,128)}', space=vmem, size = 0x12000, scoped, tag = 'internal scratch']
  #allocation2 [shape = 'f32[18,18,3]{2,1,0:T(8,128)}', space=vmem, size = 0x36000, scoped, tag = 'scratch operand']
  #allocation3 [shape = 'f32[18,18,16]{2,1,0:T(8,128)}', space=vmem, size = 0x36000, scoped, tag = 'scratch operand']
  #allocation4 [shape = 'f32[256,144]{1,0:T(8,128)}', space=vmem, size = 0x40000, scoped, tag = 'scratch operand']
  %s0 = inlined_call_operand.vmem [shape: f32[2,16,16,3], index: 0, kind: input, shape index: {}]
  %s1 = inlined_call_operand.vmem [shape: f32[2,16,16,3], index: 1, kind: input, shape index: {}]
  %s2 = inlined_call_operand.vmem [shape: f32[1,1,3], index: 2, kind: input, shape index: {}]
  %s3 = inlined_call_operand.vmem [shape: bf16[27,16], index: 3, kind: input, shape index: {}]
  %s4 = inlined_call_operand.vmem [shape: f32[1,16], index: 4, kind: input, shape index: {}]
  %s5 = inlined_call_operand.vmem [shape: bf16[144,32], index: 5, kind: input, shape index: {}]
  %s6 = inlined_call_operand.vmem [shape: f32[1,32], index: 6, kind: input, shape index: {}]
  %s7 = inlined_call_operand.vmem [shape: f32[2,1,1], index: 7, kind: output, shape index: {}]
  %s8 = sld [smem:[#allocation0]]
  $region61: #{content_l1_loss.1} parent=0
    _
  %s10 = ssub.s32 1, %s8
  %s11 = scalar_select 0, %s10, %s8
  loop: start=0, step=1, limit=4
  $region2: #{content_l1_loss.1} parent=0 // loop_pre_header
    _
  $region3: #{content_l1_loss.1} parent=0 // loop_header
    %s13 = sphi 0, %s17
    %p14 = scmp.ge.s32.totalorder %s13, 4
    %s23 = sphi 0, %s25
    %s26 = sphi 0, %s23
    %s27 = sphi 0, %s26
    %s43 = sphi 0, %s27
    %s49 = sphi 0, %s51
    %s52 = sphi 0, %s49
    %s53 = sphi 0, %s52
    %s69 = sphi 0, %s53
    %s73 = sphi 0, %s73
    %s75 = sphi 0, %s73
    %s76 = sphi 0, %s75
    %s90 = sphi 0, %s76
    %s94 = sphi 0, %s94
    %s96 = sphi 0, %s94
    %s97 = sphi 0, %s96
    %s111 = sphi 0, %s97
    %s115 = sphi 0, %s115
    %s117 = sphi 0, %s115
    %s118 = sphi 0, %s117
    %s132 = sphi 0, %s118
    %s136 = sphi 0, %s136
    %s138 = sphi 0, %s136
    %s139 = sphi 0, %s138
    %s153 = sphi 0, %s139
    %s157 = sphi 0, %s157
    %s159 = sphi 0, %s157
    %s160 = sphi 0, %s159
    %s174 = sphi 0, %s160
    %s180 = sphi 0, %s182
    %s183 = sphi 0, %s180
    %s184 = sphi 0, %s183
    %s200 = sphi 0, %s184
  $region4: #{content_l1_loss.1} parent=0 // loop_header_branch
    %16 = sbr.rel (%p14) target = $region8
  $region5: #{content_l1_loss.1} parent=0 // loop_body
    %s18 = ssub.s32 %s13, 1
    %s19 = ssub.s32 %s13, 2
    %s20 = sadd.s32 %s13, 1
    %s21 = ssub.s32 %s13, %s20
    %p22 = scmp.eq.s32.totalorder %s21, 0
    %s24 = sadd.s32 %s23, 1
    %s25 = scalar_select %p22, %s23, %s24
    %p28 = pneg %p22
    %p29 = scmp.eq.s32.totalorder %s13, 1
    %p30 = por %p28, %p29
    %p31 = scmp.ne.s32.totalorder %s23, %s26
    %p32 = scmp.eq.s32.totalorder %s13, 0
    %p33 = por %p31, %p32
    %p34 = scmp.ne.s32.totalorder %s23, %s26
    %p35 = scmp.eq.s32.totalorder %s18, 1
    %p36 = por %p34, %p35
    %p37 = scmp.ne.s32.totalorder %s26, %s27
    %p38 = scmp.eq.s32.totalorder %s18, 0
    %p39 = por %p37, %p38
    %p40 = scmp.ne.s32.totalorder %s26, %s27
    %p41 = scmp.eq.s32.totalorder %s19, 1
    %p42 = por %p40, %p41
    %p44 = scmp.ne.s32.totalorder %s27, %s43
    %p45 = scmp.eq.s32.totalorder %s19, 0
    %p46 = por %p44, %p45
    %s47 = ssub.s32 %s13, %s20
    %p48 = scmp.eq.s32.totalorder %s47, 0
    %s50 = sadd.s32 %s49, 1
    %s51 = scalar_select %p48, %s49, %s50
    %p54 = pneg %p48
    %p55 = scmp.eq.s32.totalorder %s13, 1
    %p56 = por %p54, %p55
    %p57 = scmp.ne.s32.totalorder %s49, %s52
    %p58 = scmp.eq.s32.totalorder %s13, 0
    %p59 = por %p57, %p58
    %p60 = scmp.ne.s32.totalorder %s49, %s52
    %p61 = scmp.eq.s32.totalorder %s18, 1
    %p62 = por %p60, %p61
    %p63 = scmp.ne.s32.totalorder %s52, %s53
    %p64 = scmp.eq.s32.totalorder %s18, 0
    %p65 = por %p63, %p64
    %p66 = scmp.ne.s32.totalorder %s52, %s53
    %p67 = scmp.eq.s32.totalorder %s19, 1
    %p68 = por %p66, %p67
    %p70 = scmp.ne.s32.totalorder %s53, %s69
    %p71 = scmp.eq.s32.totalorder %s19, 0
    %p72 = por %p70, %p71
    %s74 = sadd.s32 %s73, 1
    %p77 = scmp.eq.s32.totalorder %s13, 1
    %p78 = scmp.ne.s32.totalorder %s73, %s75
    %p79 = scmp.eq.s32.totalorder %s13, 0
    %p80 = por %p78, %p79
    %p81 = scmp.ne.s32.totalorder %s73, %s75
    %p82 = scmp.eq.s32.totalorder %s18, 1
    %p83 = por %p81, %p82
    %p84 = scmp.ne.s32.totalorder %s75, %s76
    %p85 = scmp.eq.s32.totalorder %s18, 0
    %p86 = por %p84, %p85
    %p87 = scmp.ne.s32.totalorder %s75, %s76
    %p88 = scmp.eq.s32.totalorder %s19, 1
    %p89 = por %p87, %p88
    %p91 = scmp.ne.s32.totalorder %s76, %s90
    %p92 = scmp.eq.s32.totalorder %s19, 0
    %p93 = por %p91, %p92
    %s95 = sadd.s32 %s94, 1
    %p98 = scmp.eq.s32.totalorder %s13, 1
    %p99 = scmp.ne.s32.totalorder %s94, %s96
    %p100 = scmp.eq.s32.totalorder %s13, 0
    %p101 = por %p99, %p100
    %p102 = scmp.ne.s32.totalorder %s94, %s96
    %p103 = scmp.eq.s32.totalorder %s18, 1
    %p104 = por %p102, %p103
    %p105 = scmp.ne.s32.totalorder %s96, %s97
    %p106 = scmp.eq.s32.totalorder %s18, 0
    %p107 = por %p105, %p106
    %p108 = scmp.ne.s32.totalorder %s96, %s97
    %p109 = scmp.eq.s32.totalorder %s19, 1
    %p110 = por %p108, %p109
    %p112 = scmp.ne.s32.totalorder %s97, %s111
    %p113 = scmp.eq.s32.totalorder %s19, 0
    %p114 = por %p112, %p113
    %s116 = sadd.s32 %s115, 1
    %p119 = scmp.eq.s32.totalorder %s13, 1
    %p120 = scmp.ne.s32.totalorder %s115, %s117
    %p121 = scmp.eq.s32.totalorder %s13, 0
    %p122 = por %p120, %p121
    %p123 = scmp.ne.s32.totalorder %s115, %s117
    %p124 = scmp.eq.s32.totalorder %s18, 1
    %p125 = por %p123, %p124
    %p126 = scmp.ne.s32.totalorder %s117, %s118
    %p127 = scmp.eq.s32.totalorder %s18, 0
    %p128 = por %p126, %p127
    %p129 = scmp.ne.s32.totalorder %s117, %s118
    %p130 = scmp.eq.s32.totalorder %s19, 1
    %p131 = por %p129, %p130
    %p133 = scmp.ne.s32.totalorder %s118, %s132
    %p134 = scmp.eq.s32.totalorder %s19, 0
    %p135 = por %p133, %p134
    %s137 = sadd.s32 %s136, 1
    %p140 = scmp.eq.s32.totalorder %s13, 1
    %p141 = scmp.ne.s32.totalorder %s136, %s138
    %p142 = scmp.eq.s32.totalorder %s13, 0
    %p143 = por %p141, %p142
    %p144 = scmp.ne.s32.totalorder %s136, %s138
    %p145 = scmp.eq.s32.totalorder %s18, 1
    %p146 = por %p144, %p145
    %p147 = scmp.ne.s32.totalorder %s138, %s139
    %p148 = scmp.eq.s32.totalorder %s18, 0
    %p149 = por %p147, %p148
    %p150 = scmp.ne.s32.totalorder %s138, %s139
    %p151 = scmp.eq.s32.totalorder %s19, 1
    %p152 = por %p150, %p151
    %p154 = scmp.ne.s32.totalorder %s139, %s153
    %p155 = scmp.eq.s32.totalorder %s19, 0
    %p156 = por %p154, %p155
    %s158 = sadd.s32 %s157, 1
    %p161 = scmp.eq.s32.totalorder %s13, 1
    %p162 = scmp.ne.s32.totalorder %s157, %s159
    %p163 = scmp.eq.s32.totalorder %s13, 0
    %p164 = por %p162, %p163
    %p165 = scmp.ne.s32.totalorder %s157, %s159
    %p166 = scmp.eq.s32.totalorder %s18, 1
    %p167 = por %p165, %p166
    %p168 = scmp.ne.s32.totalorder %s159, %s160
    %p169 = scmp.eq.s32.totalorder %s18, 0
    %p170 = por %p168, %p169
    %p171 = scmp.ne.s32.totalorder %s159, %s160
    %p172 = scmp.eq.s32.totalorder %s19, 1
    %p173 = por %p171, %p172
    %p175 = scmp.ne.s32.totalorder %s160, %s174
    %p176 = scmp.eq.s32.totalorder %s19, 0
    %p177 = por %p175, %p176
    %s178 = ssub.s32 %s13, %s20
    %p179 = scmp.eq.s32.totalorder %s178, 0
    %s181 = sadd.s32 %s180, 1
    %s182 = scalar_select %p179, %s180, %s181
    %p185 = pneg %p179
    %p186 = scmp.eq.s32.totalorder %s13, 1
    %p187 = por %p185, %p186
    %p188 = scmp.ne.s32.totalorder %s180, %s183
    %p189 = scmp.eq.s32.totalorder %s13, 0
    %p190 = por %p188, %p189
    %p191 = scmp.ne.s32.totalorder %s180, %s183
    %p192 = scmp.eq.s32.totalorder %s18, 1
    %p193 = por %p191, %p192
    %p194 = scmp.ne.s32.totalorder %s183, %s184
    %p195 = scmp.eq.s32.totalorder %s18, 0
    %p196 = por %p194, %p195
    %p197 = scmp.ne.s32.totalorder %s183, %s184
    %p198 = scmp.eq.s32.totalorder %s19, 1
    %p199 = por %p197, %p198
    %p201 = scmp.ne.s32.totalorder %s184, %s200
    %p202 = scmp.eq.s32.totalorder %s19, 0
    %p203 = por %p201, %p202
    %p204 = scmp.le.s32.totalorder 1, %s13
    %p205 = scmp.lt.s32.totalorder %s13, 3
    %p206 = pnand %p204, %p205
    %p207 = pneg %p206
    // Predicated region
    $region9: #{content_l1_loss.1} parent=5 // pred_check
      _
    $region10: #{content_l1_loss.1} parent=5 // pred_check_branch
      %209 = sbr.rel (%p206) target = $region12
    $region11: #{content_l1_loss.1} parent=5 // pred_region
      %s210 = ssub.s32 %s13, 1
      // Predicated region
      $region13: #{content_l1_loss.1} parent=11 // pred_check
        %p211 = pneg %p86
      $region14: #{content_l1_loss.1} parent=11 // pred_check_branch
        %213 = sbr.rel (%p211) target = $region16
      $region15: #{content_l1_loss.1} parent=11 // pred_region
        _
      $region16: #{content_l1_loss.1} parent=11 // pred_fallthru
        _
      // Predicated region
      $region17: #{content_l1_loss.1} parent=11 // pred_check
        %p214 = pneg %p107
      $region18: #{content_l1_loss.1} parent=11 // pred_check_branch
        %216 = sbr.rel (%p214) target = $region20
      $region19: #{content_l1_loss.1} parent=11 // pred_region
        _
      $region20: #{content_l1_loss.1} parent=11 // pred_fallthru
        _
      // Predicated region
      $region21: #{content_l1_loss.1} parent=11 // pred_check
        %p217 = pneg %p128
      $region22: #{content_l1_loss.1} parent=11 // pred_check_branch
        %219 = sbr.rel (%p217) target = $region24
      $region23: #{content_l1_loss.1} parent=11 // pred_region
        _
      $region24: #{content_l1_loss.1} parent=11 // pred_fallthru
        _
      // Predicated region
      $region25: #{content_l1_loss.1} parent=11 // pred_check
        %p220 = pneg %p149
      $region26: #{content_l1_loss.1} parent=11 // pred_check_branch
        %222 = sbr.rel (%p220) target = $region28
      $region27: #{content_l1_loss.1} parent=11 // pred_region
        _
      $region28: #{content_l1_loss.1} parent=11 // pred_fallthru
        _
      // Predicated region
      $region29: #{content_l1_loss.1} parent=11 // pred_check
        %p223 = pneg %p170
      $region30: #{content_l1_loss.1} parent=11 // pred_check_branch
        %225 = sbr.rel (%p223) target = $region32
      $region31: #{content_l1_loss.1} parent=11 // pred_region
        _
      $region32: #{content_l1_loss.1} parent=11 // pred_fallthru
        _
    $region12: #{content_l1_loss.1} parent=5 // pred_fallthru
      _
    %p226 = scmp.lt.s32.totalorder %s13, 2
    // Predicated region
    $region33: #{content_l1_loss.1} parent=5 // pred_check
      %p227 = pneg %p226
    $region34: #{content_l1_loss.1} parent=5 // pred_check_branch
      %229 = sbr.rel (%p227) target = $region36
    $region35: #{content_l1_loss.1} parent=5 // pred_region
      // Predicated region
      $region37: #{content_l1_loss.1} parent=35 // pred_check
        %p230 = pneg %p33
      $region38: #{content_l1_loss.1} parent=35 // pred_check_branch
        %232 = sbr.rel (%p230) target = $region40
      $region39: #{content_l1_loss.1} parent=35 // pred_region
        %p233 = scmp.lt.s32.totalorder %s13, 1
        %s234 = scalar_select %p233, %s13, 1
        %s235 = smul.addr %s234, 32
        %s236 = smul.addr %s235, 8
        %s237 = scalar_lea.vmem %s0, %s236
      $region40: #{content_l1_loss.1} parent=35 // pred_fallthru
        _
      // Predicated region
      $region41: #{content_l1_loss.1} parent=35 // pred_check
        %p238 = pneg %p59
      $region42: #{content_l1_loss.1} parent=35 // pred_check_branch
        %240 = sbr.rel (%p238) target = $region44
      $region43: #{content_l1_loss.1} parent=35 // pred_region
        %p241 = scmp.lt.s32.totalorder %s13, 1
        %s242 = scalar_select %p241, %s13, 1
        %s243 = smul.addr %s242, 32
        %s244 = smul.addr %s243, 8
        %s245 = scalar_lea.vmem %s1, %s244
      $region44: #{content_l1_loss.1} parent=35 // pred_fallthru
        _
    $region36: #{content_l1_loss.1} parent=5 // pred_fallthru
      _
    %p246 = scmp.le.s32.totalorder 1, %s13
    %p247 = scmp.lt.s32.totalorder %s13, 3
    %p248 = pnand %p246, %p247
    %p249 = pneg %p248
    // Predicated region
    $region45: #{content_l1_loss.1} parent=5 // pred_check
      _
    $region46: #{content_l1_loss.1} parent=5 // pred_check_branch
      %251 = sbr.rel (%p248) target = $region48
    $region47: #{content_l1_loss.1} parent=5 // pred_region
      %s252 = ssub.s32 %s13, 1
      %p253 = scmp.lt.s32.totalorder %s18, 1
      %s254 = scalar_select %p253, %s18, 1
      %s255 = smul.addr %s254, 32
      %s256 = smul.addr %s255, 8
      %s257 = scalar_lea.vmem %s0, %s256
      %p258 = pneg %p39
      %p259 = pneg %p36
      %p260 = scmp.lt.s32.totalorder %s18, 1
      %s261 = scalar_select %p260, %s18, 1
      %s262 = smul.addr %s261, 32
      %s263 = smul.addr %s262, 8
      %s264 = scalar_lea.vmem %s1, %s263
      %p265 = pneg %p65
      %p266 = pneg %p62
      %p267 = pneg %p86
      %p268 = pneg %p83
      %p269 = pneg %p107
      %p270 = pneg %p104
      %p271 = pneg %p128
      %p272 = pneg %p125
      %p273 = pneg %p149
      %p274 = pneg %p146
      %p275 = pneg %p170
      %p276 = pneg %p167
      %p277 = pneg %p196
      %p278 = pneg %p193
      %p279 = scmp.lt.s32.totalorder %s18, 1
      %s280 = scalar_select %p279, %s18, 1
      %s281 = scalar_lea.vmem %s7, %s280
      %p282 = scmp.lt.s32.totalorder %s18, 1
      %s283 = scalar_select %p282, %s18, 1
      %s284 = smul.addr %s283, 32
      %s285 = smul.addr %s284, 8
      %s286 = scalar_lea.vmem %s0, %s285
      %p287 = scmp.lt.s32.totalorder %s18, 1
      %s288 = scalar_select %p287, %s18, 1
      %s289 = smul.addr %s288, 32
      %s290 = smul.addr %s289, 8
      %s291 = scalar_lea.vmem %s1, %s290
      %p292 = scmp.lt.s32.totalorder %s18, 1
      %s293 = scalar_select %p292, %s18, 1
      %s294 = scalar_lea.vmem %s7, %s293
      %v296 = vld [vmem:[%s2] sm:$0x1]
      %v297 = vld [vmem:[%s286] sm:$0xff]
      %v298 = vld [vmem:[%s286 + $0x8] sm:$0xff]
      %v299 = vld [vmem:[%s286 + $0x10] sm:$0xff]
      %v300 = vld [vmem:[%s286 + $0x18] sm:$0xff]
      %v301 = vld [vmem:[%s286 + $0x20] sm:$0xff]
      %v302 = vld [vmem:[%s286 + $0x28] sm:$0xff]
      %v303 = vld [vmem:[%s286 + $0x30] sm:$0xff]
      %v304 = vld [vmem:[%s286 + $0x38] sm:$0xff]
      %v305 = vld [vmem:[%s286 + $0x40] sm:$0xff]
      %v306 = vld [vmem:[%s286 + $0x48] sm:$0xff]
      %v307 = vld [vmem:[%s286 + $0x50] sm:$0xff]
      %v308 = vld [vmem:[%s286 + $0x58] sm:$0xff]
      %v309 = vld [vmem:[%s286 + $0x60] sm:$0xff]
      %v310 = vld [vmem:[%s286 + $0x68] sm:$0xff]
      %v311 = vld [vmem:[%s286 + $0x70] sm:$0xff]
      %v312 = vld [vmem:[%s286 + $0x78] sm:$0xff]
      %v313 = vld [vmem:[%s286 + $0x80] sm:$0xff]
      %v314 = vld [vmem:[%s286 + $0x88] sm:$0xff]
      %v315 = vld [vmem:[%s286 + $0x90] sm:$0xff]
      %v316 = vld [vmem:[%s286 + $0x98] sm:$0xff]
      %v317 = vld [vmem:[%s286 + $0xa0] sm:$0xff]
      %v318 = vld [vmem:[%s286 + $0xa8] sm:$0xff]
      %v319 = vld [vmem:[%s286 + $0xb0] sm:$0xff]
      %v320 = vld [vmem:[%s286 + $0xb8] sm:$0xff]
      %v321 = vld [vmem:[%s286 + $0xc0] sm:$0xff]
      %v322 = vld [vmem:[%s286 + $0xc8] sm:$0xff]
      %v323 = vld [vmem:[%s286 + $0xd0] sm:$0xff]
      %v324 = vld [vmem:[%s286 + $0xd8] sm:$0xff]
      %v325 = vld [vmem:[%s286 + $0xe0] sm:$0xff]
      %v326 = vld [vmem:[%s286 + $0xe8] sm:$0xff]
      %v327 = vld [vmem:[%s286 + $0xf0] sm:$0xff]
      %v328 = vld [vmem:[%s286 + $0xf8] sm:$0xff]
      %v330 = vlaneseq
      %v331 = vshrl.u32 %v330, 7
      %v332 = vsub.s32 0, %v331
      %v333 = vrot.slane %v296, %v332
      %v335 = vsub.f32 %v297, %v333
      %v336 = vsub.f32 %v298, %v333
      %v337 = vsub.f32 %v299, %v333
      %v338 = vsub.f32 %v300, %v333
      %v339 = vsub.f32 %v301, %v333
      %v340 = vsub.f32 %v302, %v333
      %v341 = vsub.f32 %v303, %v333
      %v342 = vsub.f32 %v304, %v333
      %v343 = vsub.f32 %v305, %v333
      %v344 = vsub.f32 %v306, %v333
      %v345 = vsub.f32 %v307, %v333
      %v346 = vsub.f32 %v308, %v333
      %v347 = vsub.f32 %v309, %v333
      %v348 = vsub.f32 %v310, %v333
      %v349 = vsub.f32 %v311, %v333
      %v350 = vsub.f32 %v312, %v333
      %v351 = vsub.f32 %v313, %v333
      %v352 = vsub.f32 %v314, %v333
      %v353 = vsub.f32 %v315, %v333
      %v354 = vsub.f32 %v316, %v333
      %v355 = vsub.f32 %v317, %v333
      %v356 = vsub.f32 %v318, %v333
      %v357 = vsub.f32 %v319, %v333
      %v358 = vsub.f32 %v320, %v333
      %v359 = vsub.f32 %v321, %v333
      %v360 = vsub.f32 %v322, %v333
      %v361 = vsub.f32 %v323, %v333
      %v362 = vsub.f32 %v324, %v333
      %v363 = vsub.f32 %v325, %v333
      %v364 = vsub.f32 %v326, %v333
      %v365 = vsub.f32 %v327, %v333
      %v366 = vsub.f32 %v328, %v333
      %vm367 = vcmask 23552
      %368 = vst.msk [vmem:[#allocation2] sm:$0xff] %vm367, 0.0
      %369 = vst.msk [vmem:[#allocation2 + $0x8] sm:$0xff] %vm367, 0.0
      %vm370 = vcmask 17408
      %371 = vst.msk [vmem:[#allocation2 + $0x10] sm:$0x3] %vm370, 0.0
      %372 = vst.msk [vmem:[#allocation2 + $0x18] sm:$0xff] %vm367, 0.0
      %373 = vst.msk [vmem:[#allocation2 + $0x20] sm:$0xff] %vm367, 0.0
      %374 = vst.msk [vmem:[#allocation2 + $0x28] sm:$0x3] %vm370, 0.0
      %375 = vst.msk [vmem:[#allocation2 + $0x30] sm:$0xff] %vm367, 0.0
      %376 = vst.msk [vmem:[#allocation2 + $0x38] sm:$0xff] %vm367, 0.0
      %377 = vst.msk [vmem:[#allocation2 + $0x40] sm:$0x3] %vm370, 0.0
      %378 = vst.msk [vmem:[#allocation2 + $0x48] sm:$0xff] %vm367, 0.0
      %379 = vst.msk [vmem:[#allocation2 + $0x50] sm:$0xff] %vm367, 0.0
      %380 = vst.msk [vmem:[#allocation2 + $0x58] sm:$0x3] %vm370, 0.0
      %381 = vst.msk [vmem:[#allocation2 + $0x60] sm:$0xff] %vm367, 0.0
      %382 = vst.msk [vmem:[#allocation2 + $0x68] sm:$0xff] %vm367, 0.0
      %383 = vst.msk [vmem:[#allocation2 + $0x70] sm:$0x3] %vm370, 0.0
      %384 = vst.msk [vmem:[#allocation2 + $0x78] sm:$0xff] %vm367, 0.0
      %385 = vst.msk [vmem:[#allocation2 + $0x80] sm:$0xff] %vm367, 0.0
      %386 = vst.msk [vmem:[#allocation2 + $0x88] sm:$0x3] %vm370, 0.0
      %387 = vst.msk [vmem:[#allocation2 + $0x90] sm:$0xff] %vm367, 0.0
      %388 = vst.msk [vmem:[#allocation2 + $0x98] sm:$0xff] %vm367, 0.0
      %389 = vst.msk [vmem:[#allocation2 + $0xa0] sm:$0x3] %vm370, 0.0
      %390 = vst.msk [vmem:[#allocation2 + $0xa8] sm:$0xff] %vm367, 0.0
      %391 = vst.msk [vmem:[#allocation2 + $0xb0] sm:$0xff] %vm367, 0.0
      %392 = vst.msk [vmem:[#allocation2 + $0xb8] sm:$0x3] %vm370, 0.0
      %393 = vst.msk [vmem:[#allocation2 + $0xc0] sm:$0xff] %vm367, 0.0
      %394 = vst.msk [vmem:[#allocation2 + $0xc8] sm:$0xff] %vm367, 0.0
      %395 = vst.msk [vmem:[#allocation2 + $0xd0] sm:$0x3] %vm370, 0.0
      %396 = vst.msk [vmem:[#allocation2 + $0xd8] sm:$0xff] %vm367, 0.0
      %397 = vst.msk [vmem:[#allocation2 + $0xe0] sm:$0xff] %vm367, 0.0
      %398 = vst.msk [vmem:[#allocation2 + $0xe8] sm:$0x3] %vm370, 0.0
      %399 = vst.msk [vmem:[#allocation2 + $0xf0] sm:$0xff] %vm367, 0.0
      %400 = vst.msk [vmem:[#allocation2 + $0xf8] sm:$0xff] %vm367, 0.0
      %401 = vst.msk [vmem:[#allocation2 + $0x100] sm:$0x3] %vm370, 0.0
      %402 = vst.msk [vmem:[#allocation2 + $0x108] sm:$0xff] %vm367, 0.0
      %403 = vst.msk [vmem:[#allocation2 + $0x110] sm:$0xff] %vm367, 0.0
      %404 = vst.msk [vmem:[#allocation2 + $0x118] sm:$0x3] %vm370, 0.0
      %405 = vst.msk [vmem:[#allocation2 + $0x120] sm:$0xff] %vm367, 0.0
      %406 = vst.msk [vmem:[#allocation2 + $0x128] sm:$0xff] %vm367, 0.0
      %407 = vst.msk [vmem:[#allocation2 + $0x130] sm:$0x3] %vm370, 0.0
      %408 = vst.msk [vmem:[#allocation2 + $0x138] sm:$0xff] %vm367, 0.0
      %409 = vst.msk [vmem:[#allocation2 + $0x140] sm:$0xff] %vm367, 0.0
      %410 = vst.msk [vmem:[#allocation2 + $0x148] sm:$0x3] %vm370, 0.0
      %411 = vst.msk [vmem:[#allocation2 + $0x150] sm:$0xff] %vm367, 0.0
      %412 = vst.msk [vmem:[#allocation2 + $0x158] sm:$0xff] %vm367, 0.0
      %413 = vst.msk [vmem:[#allocation2 + $0x160] sm:$0x3] %vm370, 0.0
      %414 = vst.msk [vmem:[#allocation2 + $0x168] sm:$0xff] %vm367, 0.0
      %415 = vst.msk [vmem:[#allocation2 + $0x170] sm:$0xff] %vm367, 0.0
      %416 = vst.msk [vmem:[#allocation2 + $0x178] sm:$0x3] %vm370, 0.0
      %417 = vst.msk [vmem:[#allocation2 + $0x180] sm:$0xff] %vm367, 0.0
      %418 = vst.msk [vmem:[#allocation2 + $0x188] sm:$0xff] %vm367, 0.0
      %419 = vst.msk [vmem:[#allocation2 + $0x190] sm:$0x3] %vm370, 0.0
      %420 = vst.msk [vmem:[#allocation2 + $0x198] sm:$0xff] %vm367, 0.0
      %421 = vst.msk [vmem:[#allocation2 + $0x1a0] sm:$0xff] %vm367, 0.0
      %422 = vst.msk [vmem:[#allocation2 + $0x1a8] sm:$0x3] %vm370, 0.0
      %s423 = scalar_lea.vmem [#allocation2], 24
      %424 = vst.msk [vmem:[%s423 + $0x1] sm:$0xff] %vm367, %v335
      %425 = vst.msk [vmem:[%s423 + $0x9] sm:$0xff] %vm367, %v336
      %426 = vst.msk [vmem:[%s423 + $0x19] sm:$0xff] %vm367, %v337
      %427 = vst.msk [vmem:[%s423 + $0x21] sm:$0xff] %vm367, %v338
      %428 = vst.msk [vmem:[%s423 + $0x31] sm:$0xff] %vm367, %v339
      %429 = vst.msk [vmem:[%s423 + $0x39] sm:$0xff] %vm367, %v340
      %430 = vst.msk [vmem:[%s423 + $0x49] sm:$0xff] %vm367, %v341
      %431 = vst.msk [vmem:[%s423 + $0x51] sm:$0xff] %vm367, %v342
      %432 = vst.msk [vmem:[%s423 + $0x61] sm:$0xff] %vm367, %v343
      %433 = vst.msk [vmem:[%s423 + $0x69] sm:$0xff] %vm367, %v344
      %434 = vst.msk [vmem:[%s423 + $0x79] sm:$0xff] %vm367, %v345
      %435 = vst.msk [vmem:[%s423 + $0x81] sm:$0xff] %vm367, %v346
      %436 = vst.msk [vmem:[%s423 + $0x91] sm:$0xff] %vm367, %v347
      %437 = vst.msk [vmem:[%s423 + $0x99] sm:$0xff] %vm367, %v348
      %438 = vst.msk [vmem:[%s423 + $0xa9] sm:$0xff] %vm367, %v349
      %439 = vst.msk [vmem:[%s423 + $0xb1] sm:$0xff] %vm367, %v350
      %440 = vst.msk [vmem:[%s423 + $0xc1] sm:$0xff] %vm367, %v351
      %441 = vst.msk [vmem:[%s423 + $0xc9] sm:$0xff] %vm367, %v352
      %442 = vst.msk [vmem:[%s423 + $0xd9] sm:$0xff] %vm367, %v353
      %443 = vst.msk [vmem:[%s423 + $0xe1] sm:$0xff] %vm367, %v354
      %444 = vst.msk [vmem:[%s423 + $0xf1] sm:$0xff] %vm367, %v355
      %445 = vst.msk [vmem:[%s423 + $0xf9] sm:$0xff] %vm367, %v356
      %446 = vst.msk [vmem:[%s423 + $0x109] sm:$0xff] %vm367, %v357
      %447 = vst.msk [vmem:[%s423 + $0x111] sm:$0xff] %vm367, %v358
      %448 = vst.msk [vmem:[%s423 + $0x121] sm:$0xff] %vm367, %v359
      %449 = vst.msk [vmem:[%s423 + $0x129] sm:$0xff] %vm367, %v360
      %450 = vst.msk [vmem:[%s423 + $0x139] sm:$0xff] %vm367, %v361
      %451 = vst.msk [vmem:[%s423 + $0x141] sm:$0xff] %vm367, %v362
      %452 = vst.msk [vmem:[%s423 + $0x151] sm:$0xff] %vm367, %v363
      %453 = vst.msk [vmem:[%s423 + $0x159] sm:$0xff] %vm367, %v364
      %454 = vst.msk [vmem:[%s423 + $0x169] sm:$0xff] %vm367, %v365
      %455 = vst.msk [vmem:[%s423 + $0x171] sm:$0xff] %vm367, %v366
      %v456 = vld [vmem:[#allocation2] sm:$0xff]
      %v457 = vld [vmem:[#allocation2 + $0x8] sm:$0xff]
      %v458 = vld [vmem:[#allocation2 + $0x18] sm:$0xff]
      %v459 = vld [vmem:[#allocation2 + $0x20] sm:$0xff]
      %v460 = vld [vmem:[#allocation2 + $0x30] sm:$0xff]
      %v461 = vld [vmem:[#allocation2 + $0x38] sm:$0xff]
      %v462 = vld [vmem:[#allocation2 + $0x48] sm:$0xff]
      %v463 = vld [vmem:[#allocation2 + $0x50] sm:$0xff]
      %v464 = vld [vmem:[#allocation2 + $0x60] sm:$0xff]
      %v465 = vld [vmem:[#allocation2 + $0x68] sm:$0xff]
      %v466 = vld [vmem:[#allocation2 + $0x78] sm:$0xff]
      %v467 = vld [vmem:[#allocation2 + $0x80] sm:$0xff]
      %v468 = vld [vmem:[#allocation2 + $0x90] sm:$0xff]
      %v469 = vld [vmem:[#allocation2 + $0x98] sm:$0xff]
      %v470 = vld [vmem:[#allocation2 + $0xa8] sm:$0xff]
      %v471 = vld [vmem:[#allocation2 + $0xb0] sm:$0xff]
      %v472 = vld [vmem:[#allocation2 + $0xc0] sm:$0xff]
      %v473 = vld [vmem:[#allocation2 + $0xc8] sm:$0xff]
      %v474 = vld [vmem:[#allocation2 + $0xd8] sm:$0xff]
      %v475 = vld [vmem:[#allocation2 + $0xe0] sm:$0xff]
      %v476 = vld [vmem:[#allocation2 + $0xf0] sm:$0xff]
      %v477 = vld [vmem:[#allocation2 + $0xf8] sm:$0xff]
      %v478 = vld [vmem:[#allocation2 + $0x108] sm:$0xff]
      %v479 = vld [vmem:[#allocation2 + $0x110] sm:$0xff]
      %v480 = vld [vmem:[#allocation2 + $0x120] sm:$0xff]
      %v481 = vld [vmem:[#allocation2 + $0x128] sm:$0xff]
      %v482 = vld [vmem:[#allocation2 + $0x138] sm:$0xff]
      %v483 = vld [vmem:[#allocation2 + $0x140] sm:$0xff]
      %v484 = vld [vmem:[#allocation2 + $0x150] sm:$0xff]
      %v485 = vld [vmem:[#allocation2 + $0x158] sm:$0xff]
      %v486 = vld [vmem:[#allocation2 + $0x168] sm:$0xff]
      %v487 = vld [vmem:[#allocation2 + $0x170] sm:$0xff]
      %488 = vst.msk [vmem:[#allocation4] sm:$0xff] %vm367, %v456
      %489 = vst.msk [vmem:[#allocation4 + $0x10] sm:$0xff] %vm367, %v457
      %490 = vst.msk [vmem:[#allocation4 + $0x20] sm:$0xff] %vm367, %v458
      %491 = vst.msk [vmem:[#allocation4 + $0x30] sm:$0xff] %vm367, %v459
      %492 = vst.msk [vmem:[#allocation4 + $0x40] sm:$0xff] %vm367, %v460
      %493 = vst.msk [vmem:[#allocation4 + $0x50] sm:$0xff] %vm367, %v461
      %494 = vst.msk [vmem:[#allocation4 + $0x60] sm:$0xff] %vm367, %v462
      %495 = vst.msk [vmem:[#allocation4 + $0x70] sm:$0xff] %vm367, %v463
      %496 = vst.msk [vmem:[#allocation4 + $0x80] sm:$0xff] %vm367, %v464
      %497 = vst.msk [vmem:[#allocation4 + $0x90] sm:$0xff] %vm367, %v465
      %498 = vst.msk [vmem:[#allocation4 + $0xa0] sm:$0xff] %vm367, %v466
      %499 = vst.msk [vmem:[#allocation4 + $0xb0] sm:$0xff] %vm367, %v467
      %500 = vst.msk [vmem:[#allocation4 + $0xc0] sm:$0xff] %vm367, %v468
      %501 = vst.msk [vmem:[#allocation4 + $0xd0] sm:$0xff] %vm367, %v469
      %502 = vst.msk [vmem:[#allocation4 + $0xe0] sm:$0xff] %vm367, %v470
      %503 = vst.msk [vmem:[#allocation4 + $0xf0] sm:$0xff] %vm367, %v471
      %504 = vst.msk [vmem:[#allocation4 + $0x100] sm:$0xff] %vm367, %v472
      %505 = vst.msk [vmem:[#allocation4 + $0x110] sm:$0xff] %vm367, %v473
      %506 = vst.msk [vmem:[#allocation4 + $0x120] sm:$0xff] %vm367, %v474
      %507 = vst.msk [vmem:[#allocation4 + $0x130] sm:$0xff] %vm367, %v475
      %508 = vst.msk [vmem:[#allocation4 + $0x140] sm:$0xff] %vm367, %v476
      %509 = vst.msk [vmem:[#allocation4 + $0x150] sm:$0xff] %vm367, %v477
      %510 = vst.msk [vmem:[#allocation4 + $0x160] sm:$0xff] %vm367, %v478
      %511 = vst.msk [vmem:[#allocation4 + $0x170] sm:$0xff] %vm367, %v479
      %512 = vst.msk [vmem:[#allocation4 + $0x180] sm:$0xff] %vm367, %v480
      %513 = vst.msk [vmem:[#allocation4 + $0x190] sm:$0xff] %vm367, %v481
      %514 = vst.msk [vmem:[#allocation4 + $0x1a0] sm:$0xff] %vm367, %v482
      %515 = vst.msk [vmem:[#allocation4 + $0x1b0] sm:$0xff] %vm367, %v483
      %516 = vst.msk [vmem:[#allocation4 + $0x1c0] sm:$0xff] %vm367, %v484
      %517 = vst.msk [vmem:[#allocation4 + $0x1d0] sm:$0xff] %vm367, %v485
      %518 = vst.msk [vmem:[#allocation4 + $0x1e0] sm:$0xff] %vm367, %v486
      %519 = vst.msk [vmem:[#allocation4 + $0x1f0] sm:$0xff] %vm367, %v487
      %v520 = vld [vmem:[#allocation2 + $0x1] sm:$0xff]
      %v521 = vld [vmem:[#allocation2 + $0x9] sm:$0xff]
      %v522 = vld [vmem:[#allocation2 + $0x19] sm:$0xff]
      %v523 = vld [vmem:[#allocation2 + $0x21] sm:$0xff]
      %v524 = vld [vmem:[#allocation2 + $0x31] sm:$0xff]
      %v525 = vld [vmem:[#allocation2 + $0x39] sm:$0xff]
      %v526 = vld [vmem:[#allocation2 + $0x49] sm:$0xff]
      %v527 = vld [vmem:[#allocation2 + $0x51] sm:$0xff]
      %v528 = vld [vmem:[#allocation2 + $0x61] sm:$0xff]
      %v529 = vld [vmem:[#allocation2 + $0x69] sm:$0xff]
      %v530 = vld [vmem:[#allocation2 + $0x79] sm:$0xff]
      %v531 = vld [vmem:[#allocation2 + $0x81] sm:$0xff]
      %v532 = vld [vmem:[#allocation2 + $0x91] sm:$0xff]
      %v533 = vld [vmem:[#allocation2 + $0x99] sm:$0xff]
      %v534 = vld [vmem:[#allocation2 + $0xa9] sm:$0xff]
      %v535 = vld [vmem:[#allocation2 + $0xb1] sm:$0xff]
      %v536 = vld [vmem:[#allocation2 + $0xc1] sm:$0xff]
      %v537 = vld [vmem:[#allocation2 + $0xc9] sm:$0xff]
      %v538 = vld [vmem:[#allocation2 + $0xd9] sm:$0xff]
      %v539 = vld [vmem:[#allocation2 + $0xe1] sm:$0xff]
      %v540 = vld [vmem:[#allocation2 + $0xf1] sm:$0xff]
      %v541 = vld [vmem:[#allocation2 + $0xf9] sm:$0xff]
      %v542 = vld [vmem:[#allocation2 + $0x109] sm:$0xff]
      %v543 = vld [vmem:[#allocation2 + $0x111] sm:$0xff]
      %v544 = vld [vmem:[#allocation2 + $0x121] sm:$0xff]
      %v545 = vld [vmem:[#allocation2 + $0x129] sm:$0xff]
      %v546 = vld [vmem:[#allocation2 + $0x139] sm:$0xff]
      %v547 = vld [vmem:[#allocation2 + $0x141] sm:$0xff]
      %v548 = vld [vmem:[#allocation2 + $0x151] sm:$0xff]
      %v549 = vld [vmem:[#allocation2 + $0x159] sm:$0xff]
      %v550 = vld [vmem:[#allocation2 + $0x169] sm:$0xff]
      %v551 = vld [vmem:[#allocation2 + $0x171] sm:$0xff]
      %584 = vrot.lane.b32.xlu0 %v520, 3
      %v585 = vpop.permute.xlu0 %584
      %586 = vrot.lane.b32.xlu0 %v521, 3
      %v587 = vpop.permute.xlu0 %586
      %588 = vrot.lane.b32.xlu0 %v522, 3
      %v589 = vpop.permute.xlu0 %588
      %590 = vrot.lane.b32.xlu0 %v523, 3
      %v591 = vpop.permute.xlu0 %590
      %592 = vrot.lane.b32.xlu0 %v524, 3
      %v593 = vpop.permute.xlu0 %592
      %594 = vrot.lane.b32.xlu0 %v525, 3
      %v595 = vpop.permute.xlu0 %594
      %596 = vrot.lane.b32.xlu0 %v526, 3
      %v597 = vpop.permute.xlu0 %596
      %598 = vrot.lane.b32.xlu0 %v527, 3
      %v599 = vpop.permute.xlu0 %598
      %600 = vrot.lane.b32.xlu0 %v528, 3
      %v601 = vpop.permute.xlu0 %600
      %602 = vrot.lane.b32.xlu0 %v529, 3
      %v603 = vpop.permute.xlu0 %602
      %604 = vrot.lane.b32.xlu0 %v530, 3
      %v605 = vpop.permute.xlu0 %604
      %606 = vrot.lane.b32.xlu0 %v531, 3
      %v607 = vpop.permute.xlu0 %606
      %608 = vrot.lane.b32.xlu0 %v532, 3
      %v609 = vpop.permute.xlu0 %608
      %610 = vrot.lane.b32.xlu0 %v533, 3
      %v611 = vpop.permute.xlu0 %610
      %612 = vrot.lane.b32.xlu0 %v534, 3
      %v613 = vpop.permute.xlu0 %612
      %614 = vrot.lane.b32.xlu0 %v535, 3
      %v615 = vpop.permute.xlu0 %614
      %616 = vrot.lane.b32.xlu0 %v536, 3
      %v617 = vpop.permute.xlu0 %616
      %618 = vrot.lane.b32.xlu0 %v537, 3
      %v619 = vpop.permute.xlu0 %618
      %620 = vrot.lane.b32.xlu0 %v538, 3
      %v621 = vpop.permute.xlu0 %620
      %622 = vrot.lane.b32.xlu0 %v539, 3
      %v623 = vpop.permute.xlu0 %622
      %624 = vrot.lane.b32.xlu0 %v540, 3
      %v625 = vpop.permute.xlu0 %624
      %626 = vrot.lane.b32.xlu0 %v541, 3
      %v627 = vpop.permute.xlu0 %626
      %628 = vrot.lane.b32.xlu0 %v542, 3
      %v629 = vpop.permute.xlu0 %628
      %630 = vrot.lane.b32.xlu0 %v543, 3
      %v631 = vpop.permute.xlu0 %630
      %632 = vrot.lane.b32.xlu0 %v544, 3
      %v633 = vpop.permute.xlu0 %632
      %634 = vrot.lane.b32.xlu0 %v545, 3
      %v635 = vpop.permute.xlu0 %634
      %636 = vrot.lane.b32.xlu0 %v546, 3
      %v637 = vpop.permute.xlu0 %636
      %638 = vrot.lane.b32.xlu0 %v547, 3
      %v639 = vpop.permute.xlu0 %638
      %640 = vrot.lane.b32.xlu0 %v548, 3
      %v641 = vpop.permute.xlu0 %640
      %642 = vrot.lane.b32.xlu0 %v549, 3
      %v643 = vpop.permute.xlu0 %642
      %644 = vrot.lane.b32.xlu0 %v550, 3
      %v645 = vpop.permute.xlu0 %644
      %646 = vrot.lane.b32.xlu0 %v551, 3
      %v647 = vpop.permute.xlu0 %646
      %vm680 = vcmask 48152
      %681 = vst.msk [vmem:[#allocation4] sm:$0xff] %vm680, %v585
      %682 = vst.msk [vmem:[#allocation4 + $0x10] sm:$0xff] %vm680, %v587
      %683 = vst.msk [vmem:[#allocation4 + $0x20] sm:$0xff] %vm680, %v589
      %684 = vst.msk [vmem:[#allocation4 + $0x30] sm:$0xff] %vm680, %v591
      %685 = vst.msk [vmem:[#allocation4 + $0x40] sm:$0xff] %vm680, %v593
      %686 = vst.msk [vmem:[#allocation4 + $0x50] sm:$0xff] %vm680, %v595
      %687 = vst.msk [vmem:[#allocation4 + $0x60] sm:$0xff] %vm680, %v597
      %688 = vst.msk [vmem:[#allocation4 + $0x70] sm:$0xff] %vm680, %v599
      %689 = vst.msk [vmem:[#allocation4 + $0x80] sm:$0xff] %vm680, %v601
      %690 = vst.msk [vmem:[#allocation4 + $0x90] sm:$0xff] %vm680, %v603
      %691 = vst.msk [vmem:[#allocation4 + $0xa0] sm:$0xff] %vm680, %v605
      %692 = vst.msk [vmem:[#allocation4 + $0xb0] sm:$0xff] %vm680, %v607
      %693 = vst.msk [vmem:[#allocation4 + $0xc0] sm:$0xff] %vm680, %v609
      %694 = vst.msk [vmem:[#allocation4 + $0xd0] sm:$0xff] %vm680, %v611
      %695 = vst.msk [vmem:[#allocation4 + $0xe0] sm:$0xff] %vm680, %v613
      %696 = vst.msk [vmem:[#allocation4 + $0xf0] sm:$0xff] %vm680, %v615
      %697 = vst.msk [vmem:[#allocation4 + $0x100] sm:$0xff] %vm680, %v617
      %698 = vst.msk [vmem:[#allocation4 + $0x110] sm:$0xff] %vm680, %v619
      %699 = vst.msk [vmem:[#allocation4 + $0x120] sm:$0xff] %vm680, %v621
      %700 = vst.msk [vmem:[#allocation4 + $0x130] sm:$0xff] %vm680, %v623
      %701 = vst.msk [vmem:[#allocation4 + $0x140] sm:$0xff] %vm680, %v625
      %702 = vst.msk [vmem:[#allocation4 + $0x150] sm:$0xff] %vm680, %v627
      %703 = vst.msk [vmem:[#allocation4 + $0x160] sm:$0xff] %vm680, %v629
      %704 = vst.msk [vmem:[#allocation4 + $0x170] sm:$0xff] %vm680, %v631
      %705 = vst.msk [vmem:[#allocation4 + $0x180] sm:$0xff] %vm680, %v633
      %706 = vst.msk [vmem:[#allocation4 + $0x190] sm:$0xff] %vm680, %v635
      %707 = vst.msk [vmem:[#allocation4 + $0x1a0] sm:$0xff] %vm680, %v637
      %708 = vst.msk [vmem:[#allocation4 + $0x1b0] sm:$0xff] %vm680, %v639
      %709 = vst.msk [vmem:[#allocation4 + $0x1c0] sm:$0xff] %vm680, %v641
      %710 = vst.msk [vmem:[#allocation4 + $0x1d0] sm:$0xff] %vm680, %v643
      %711 = vst.msk [vmem:[#allocation4 + $0x1e0] sm:$0xff] %vm680, %v645
      %712 = vst.msk [vmem:[#allocation4 + $0x1f0] sm:$0xff] %vm680, %v647
      %v713 = vld [vmem:[#allocation2 + $0x2] sm:$0xff]
      %v714 = vld [vmem:[#allocation2 + $0xa] sm:$0xff]
      %v715 = vld [vmem:[#allocation2 + $0x1a] sm:$0xff]
      %v716 = vld [vmem:[#allocation2 + $0x22] sm:$0xff]
      %v717 = vld [vmem:[#allocation2 + $0x32] sm:$0xff]
      %v718 = vld [vmem:[#allocation2 + $0x3a] sm:$0xff]
      %v719 = vld [vmem:[#allocation2 + $0x4a] sm:$0xff]
      %v720 = vld [vmem:[#allocation2 + $0x52] sm:$0xff]
      %v721 = vld [vmem:[#allocation2 + $0x62] sm:$0xff]
      %v722 = vld [vmem:[#allocation2 + $0x6a] sm:$0xff]
      %v723 = vld [vmem:[#allocation2 + $0x7a] sm:$0xff]
      %v724 = vld [vmem:[#allocation2 + $0x82] sm:$0xff]
      %v725 = vld [vmem:[#allocation2 + $0x92] sm:$0xff]
      %v726 = vld [vmem:[#allocation2 + $0x9a] sm:$0xff]
      %v727 = vld [vmem:[#allocation2 + $0xaa] sm:$0xff]
      %v728 = vld [vmem:[#allocation2 + $0xb2] sm:$0xff]
      %v729 = vld [vmem:[#allocation2 + $0xc2] sm:$0xff]
      %v730 = vld [vmem:[#allocation2 + $0xca] sm:$0xff]
      %v731 = vld [vmem:[#allocation2 + $0xda] sm:$0xff]
      %v732 = vld [vmem:[#allocation2 + $0xe2] sm:$0xff]
      %v733 = vld [vmem:[#allocation2 + $0xf2] sm:$0xff]
      %v734 = vld [vmem:[#allocation2 + $0xfa] sm:$0xff]
      %v735 = vld [vmem:[#allocation2 + $0x10a] sm:$0xff]
      %v736 = vld [vmem:[#allocation2 + $0x112] sm:$0xff]
      %v737 = vld [vmem:[#allocation2 + $0x122] sm:$0xff]
      %v738 = vld [vmem:[#allocation2 + $0x12a] sm:$0xff]
      %v739 = vld [vmem:[#allocation2 + $0x13a] sm:$0xff]
      %v740 = vld [vmem:[#allocation2 + $0x142] sm:$0xff]
      %v741 = vld [vmem:[#allocation2 + $0x152] sm:$0xff]
      %v742 = vld [vmem:[#allocation2 + $0x15a] sm:$0xff]
      %v743 = vld [vmem:[#allocation2 + $0x16a] sm:$0xff]
      %v744 = vld [vmem:[#allocation2 + $0x172] sm:$0xff]
      %777 = vrot.lane.b32.xlu0 %v713, 6
      %v778 = vpop.permute.xlu0 %777
      %779 = vrot.lane.b32.xlu0 %v714, 6
      %v780 = vpop.permute.xlu0 %779
      %781 = vrot.lane.b32.xlu0 %v715, 6
      %v782 = vpop.permute.xlu0 %781
      %783 = vrot.lane.b32.xlu0 %v716, 6
      %v784 = vpop.permute.xlu0 %783
      %785 = vrot.lane.b32.xlu0 %v717, 6
      %v786 = vpop.permute.xlu0 %785
      %787 = vrot.lane.b32.xlu0 %v718, 6
      %v788 = vpop.permute.xlu0 %787
      %789 = vrot.lane.b32.xlu0 %v719, 6
      %v790 = vpop.permute.xlu0 %789
      %791 = vrot.lane.b32.xlu0 %v720, 6
      %v792 = vpop.permute.xlu0 %791
      %793 = vrot.lane.b32.xlu0 %v721, 6
      %v794 = vpop.permute.xlu0 %793
      %795 = vrot.lane.b32.xlu0 %v722, 6
      %v796 = vpop.permute.xlu0 %795
      %797 = vrot.lane.b32.xlu0 %v723, 6
      %v798 = vpop.permute.xlu0 %797
      %799 = vrot.lane.b32.xlu0 %v724, 6
      %v800 = vpop.permute.xlu0 %799
      %801 = vrot.lane.b32.xlu0 %v725, 6
      %v802 = vpop.permute.xlu0 %801
      %803 = vrot.lane.b32.xlu0 %v726, 6
      %v804 = vpop.permute.xlu0 %803
      %805 = vrot.lane.b32.xlu0 %v727, 6
      %v806 = vpop.permute.xlu0 %805
      %807 = vrot.lane.b32.xlu0 %v728, 6
      %v808 = vpop.permute.xlu0 %807
      %809 = vrot.lane.b32.xlu0 %v729, 6
      %v810 = vpop.permute.xlu0 %809
      %811 = vrot.lane.b32.xlu0 %v730, 6
      %v812 = vpop.permute.xlu0 %811
      %813 = vrot.lane.b32.xlu0 %v731, 6
      %v814 = vpop.permute.xlu0 %813
      %815 = vrot.lane.b32.xlu0 %v732, 6
      %v816 = vpop.permute.xlu0 %815
      %817 = vrot.lane.b32.xlu0 %v733, 6
      %v818 = vpop.permute.xlu0 %817
      %819 = vrot.lane.b32.xlu0 %v734, 6
      %v820 = vpop.permute.xlu0 %819
      %821 = vrot.lane.b32.xlu0 %v735, 6
      %v822 = vpop.permute.xlu0 %821
      %823 = vrot.lane.b32.xlu0 %v736, 6
      %v824 = vpop.permute.xlu0 %823
      %825 = vrot.lane.b32.xlu0 %v737, 6
      %v826 = vpop.permute.xlu0 %825
      %827 = vrot.lane.b32.xlu0 %v738, 6
      %v828 = vpop.permute.xlu0 %827
      %829 = vrot.lane.b32.xlu0 %v739, 6
      %v830 = vpop.permute.xlu0 %829
      %831 = vrot.lane.b32.xlu0 %v740, 6
      %v832 = vpop.permute.xlu0 %831
      %833 = vrot.lane.b32.xlu0 %v741, 6
      %v834 = vpop.permute.xlu0 %833
      %835 = vrot.lane.b32.xlu0 %v742, 6
      %v836 = vpop.permute.xlu0 %835
      %837 = vrot.lane.b32.xlu0 %v743, 6
      %v838 = vpop.permute.xlu0 %837
      %839 = vrot.lane.b32.xlu0 %v744, 6
      %v840 = vpop.permute.xlu0 %839
      %vm873 = vcmask 72752
      %874 = vst.msk [vmem:[#allocation4] sm:$0xff] %vm873, %v778
      %875 = vst.msk [vmem:[#allocation4 + $0x10] sm:$0xff] %vm873, %v780
      %876 = vst.msk [vmem:[#allocation4 + $0x20] sm:$0xff] %vm873, %v782
      %877 = vst.msk [vmem:[#allocation4 + $0x30] sm:$0xff] %vm873, %v784
      %878 = vst.msk [vmem:[#allocation4 + $0x40] sm:$0xff] %vm873, %v786
      %879 = vst.msk [vmem:[#allocation4 + $0x50] sm:$0xff] %vm873, %v788
      %880 = vst.msk [vmem:[#allocation4 + $0x60] sm:$0xff] %vm873, %v790
      %881 = vst.msk [vmem:[#allocation4 + $0x70] sm:$0xff] %vm873, %v792
      %882 = vst.msk [vmem:[#allocation4 + $0x80] sm:$0xff] %vm873, %v794
      %883 = vst.msk [vmem:[#allocation4 + $0x90] sm:$0xff] %vm873, %v796
      %884 = vst.msk [vmem:[#allocation4 + $0xa0] sm:$0xff] %vm873, %v798
      %885 = vst.msk [vmem:[#allocation4 + $0xb0] sm:$0xff] %vm873, %v800
      %886 = vst.msk [vmem:[#allocation4 + $0xc0] sm:$0xff] %vm873, %v802
      %887 = vst.msk [vmem:[#allocation4 + $0xd0] sm:$0xff] %vm873, %v804
      %888 = vst.msk [vmem:[#allocation4 + $0xe0] sm:$0xff] %vm873, %v806
      %889 = vst.msk [vmem:[#allocation4 + $0xf0] sm:$0xff] %vm873, %v808
      %890 = vst.msk [vmem:[#allocation4 + $0x100] sm:$0xff] %vm873, %v810
      %891 = vst.msk [vmem:[#allocation4 + $0x110] sm:$0xff] %vm873, %v812
      %892 = vst.msk [vmem:[#allocation4 + $0x120] sm:$0xff] %vm873, %v814
      %893 = vst.msk [vmem:[#allocation4 + $0x130] sm:$0xff] %vm873, %v816
      %894 = vst.msk [vmem:[#allocation4 + $0x140] sm:$0xff] %vm873, %v818
      %895 = vst.msk [vmem:[#allocation4 + $0x150] sm:$0xff] %vm873, %v820
      %896 = vst.msk [vmem:[#allocation4 + $0x160] sm:$0xff] %vm873, %v822
      %897 = vst.msk [vmem:[#allocation4 + $0x170] sm:$0xff] %vm873, %v824
      %898 = vst.msk [vmem:[#allocation4 + $0x180] sm:$0xff] %vm873, %v826
      %899 = vst.msk [vmem:[#allocation4 + $0x190] sm:$0xff] %vm873, %v828
      %900 = vst.msk [vmem:[#allocation4 + $0x1a0] sm:$0xff] %vm873, %v830
      %901 = vst.msk [vmem:[#allocation4 + $0x1b0] sm:$0xff] %vm873, %v832
      %902 = vst.msk [vmem:[#allocation4 + $0x1c0] sm:$0xff] %vm873, %v834
      %903 = vst.msk [vmem:[#allocation4 + $0x1d0] sm:$0xff] %vm873, %v836
      %904 = vst.msk [vmem:[#allocation4 + $0x1e0] sm:$0xff] %vm873, %v838
      %905 = vst.msk [vmem:[#allocation4 + $0x1f0] sm:$0xff] %vm873, %v840
      %v906 = vld [vmem:[%s423] sm:$0xff]
      %v907 = vld [vmem:[%s423 + $0x8] sm:$0xff]
      %v908 = vld [vmem:[%s423 + $0x18] sm:$0xff]
      %v909 = vld [vmem:[%s423 + $0x20] sm:$0xff]
      %v910 = vld [vmem:[%s423 + $0x30] sm:$0xff]
      %v911 = vld [vmem:[%s423 + $0x38] sm:$0xff]
      %v912 = vld [vmem:[%s423 + $0x48] sm:$0xff]
      %v913 = vld [vmem:[%s423 + $0x50] sm:$0xff]
      %v914 = vld [vmem:[%s423 + $0x60] sm:$0xff]
      %v915 = vld [vmem:[%s423 + $0x68] sm:$0xff]
      %v916 = vld [vmem:[%s423 + $0x78] sm:$0xff]
      %v917 = vld [vmem:[%s423 + $0x80] sm:$0xff]
      %v918 = vld [vmem:[%s423 + $0x90] sm:$0xff]
      %v919 = vld [vmem:[%s423 + $0x98] sm:$0xff]
      %v920 = vld [vmem:[%s423 + $0xa8] sm:$0xff]
      %v921 = vld [vmem:[%s423 + $0xb0] sm:$0xff]
      %v922 = vld [vmem:[%s423 + $0xc0] sm:$0xff]
      %v923 = vld [vmem:[%s423 + $0xc8] sm:$0xff]
      %v924 = vld [vmem:[%s423 + $0xd8] sm:$0xff]
      %v925 = vld [vmem:[%s423 + $0xe0] sm:$0xff]
      %v926 = vld [vmem:[%s423 + $0xf0] sm:$0xff]
      %v927 = vld [vmem:[%s423 + $0xf8] sm:$0xff]
      %v928 = vld [vmem:[%s423 + $0x108] sm:$0xff]
      %v929 = vld [vmem:[%s423 + $0x110] sm:$0xff]
      %v930 = vld [vmem:[%s423 + $0x120] sm:$0xff]
      %v931 = vld [vmem:[%s423 + $0x128] sm:$0xff]
      %v932 = vld [vmem:[%s423 + $0x138] sm:$0xff]
      %v933 = vld [vmem:[%s423 + $0x140] sm:$0xff]
      %v934 = vld [vmem:[%s423 + $0x150] sm:$0xff]
      %v935 = vld [vmem:[%s423 + $0x158] sm:$0xff]
      %v936 = vld [vmem:[%s423 + $0x168] sm:$0xff]
      %v937 = vld [vmem:[%s423 + $0x170] sm:$0xff]
      %970 = vrot.lane.b32.xlu0 %v906, 9
      %v971 = vpop.permute.xlu0 %970
      %972 = vrot.lane.b32.xlu0 %v907, 9
      %v973 = vpop.permute.xlu0 %972
      %974 = vrot.lane.b32.xlu0 %v908, 9
      %v975 = vpop.permute.xlu0 %974
      %976 = vrot.lane.b32.xlu0 %v909, 9
      %v977 = vpop.permute.xlu0 %976
      %978 = vrot.lane.b32.xlu0 %v910, 9
      %v979 = vpop.permute.xlu0 %978
      %980 = vrot.lane.b32.xlu0 %v911, 9
      %v981 = vpop.permute.xlu0 %980
      %982 = vrot.lane.b32.xlu0 %v912, 9
      %v983 = vpop.permute.xlu0 %982
      %984 = vrot.lane.b32.xlu0 %v913, 9
      %v985 = vpop.permute.xlu0 %984
      %986 = vrot.lane.b32.xlu0 %v914, 9
      %v987 = vpop.permute.xlu0 %986
      %988 = vrot.lane.b32.xlu0 %v915, 9
      %v989 = vpop.permute.xlu0 %988
      %990 = vrot.lane.b32.xlu0 %v916, 9
      %v991 = vpop.permute.xlu0 %990
      %992 = vrot.lane.b32.xlu0 %v917, 9
      %v993 = vpop.permute.xlu0 %992
      %994 = vrot.lane.b32.xlu0 %v918, 9
      %v995 = vpop.permute.xlu0 %994
      %996 = vrot.lane.b32.xlu0 %v919, 9
      %v997 = vpop.permute.xlu0 %996
      %998 = vrot.lane.b32.xlu0 %v920, 9
      %v999 = vpop.permute.xlu0 %998
      %1000 = vrot.lane.b32.xlu0 %v921, 9
      %v1001 = vpop.permute.xlu0 %1000
      %1002 = vrot.lane.b32.xlu0 %v922, 9
      %v1003 = vpop.permute.xlu0 %1002
      %1004 = vrot.lane.b32.xlu0 %v923, 9
      %v1005 = vpop.permute.xlu0 %1004
      %1006 = vrot.lane.b32.xlu0 %v924, 9
      %v1007 = vpop.permute.xlu0 %1006
      %1008 = vrot.lane.b32.xlu0 %v925, 9
      %v1009 = vpop.permute.xlu0 %1008
      %1010 = vrot.lane.b32.xlu0 %v926, 9
      %v1011 = vpop.permute.xlu0 %1010
      %1012 = vrot.lane.b32.xlu0 %v927, 9
      %v1013 = vpop.permute.xlu0 %1012
      %1014 = vrot.lane.b32.xlu0 %v928, 9
      %v1015 = vpop.permute.xlu0 %1014
      %1016 = vrot.lane.b32.xlu0 %v929, 9
      %v1017 = vpop.permute.xlu0 %1016
      %1018 = vrot.lane.b32.xlu0 %v930, 9
      %v1019 = vpop.permute.xlu0 %1018
      %1020 = vrot.lane.b32.xlu0 %v931, 9
      %v1021 = vpop.permute.xlu0 %1020
      %1022 = vrot.lane.b32.xlu0 %v932, 9
      %v1023 = vpop.permute.xlu0 %1022
      %1024 = vrot.lane.b32.xlu0 %v933, 9
      %v1025 = vpop.permute.xlu0 %1024
      %1026 = vrot.lane.b32.xlu0 %v934, 9
      %v1027 = vpop.permute.xlu0 %1026
      %1028 = vrot.lane.b32.xlu0 %v935, 9
      %v1029 = vpop.permute.xlu0 %1028
      %1030 = vrot.lane.b32.xlu0 %v936, 9
      %v1031 = vpop.permute.xlu0 %1030
      %1032 = vrot.lane.b32.xlu0 %v937, 9
      %v1033 = vpop.permute.xlu0 %1032
      %vm1066 = vcmask 97352
      %1067 = vst.msk [vmem:[#allocation4] sm:$0xff] %vm1066, %v971
      %1068 = vst.msk [vmem:[#allocation4 + $0x10] sm:$0xff] %vm1066, %v973
      %1069 = vst.msk [vmem:[#allocation4 + $0x20] sm:$0xff] %vm1066, %v975
      %1070 = vst.msk [vmem:[#allocation4 + $0x30] sm:$0xff] %vm1066, %v977
      %1071 = vst.msk [vmem:[#allocation4 + $0x40] sm:$0xff] %vm1066, %v979
      %1072 = vst.msk [vmem:[#allocation4 + $0x50] sm:$0xff] %vm1066, %v981
      %1073 = vst.msk [vmem:[#allocation4 + $0x60] sm:$0xff] %vm1066, %v983
      %1074 = vst.msk [vmem:[#allocation4 + $0x70] sm:$0xff] %vm1066, %v985
      %1075 = vst.msk [vmem:[#allocation4 + $0x80] sm:$0xff] %vm1066, %v987
      %1076 = vst.msk [vmem:[#allocation4 + $0x90] sm:$0xff] %vm1066, %v989
      %1077 = vst.msk [vmem:[#allocation4 + $0xa0] sm:$0xff] %vm1066, %v991
      %1078 = vst.msk [vmem:[#allocation4 + $0xb0] sm:$0xff] %vm1066, %v993
      %1079 = vst.msk [vmem:[#allocation4 + $0xc0] sm:$0xff] %vm1066, %v995
      %1080 = vst.msk [vmem:[#allocation4 + $0xd0] sm:$0xff] %vm1066, %v997
      %1081 = vst.msk [vmem:[#allocation4 + $0xe0] sm:$0xff] %vm1066, %v999
      %1082 = vst.msk [vmem:[#allocation4 + $0xf0] sm:$0xff] %vm1066, %v1001
      %1083 = vst.msk [vmem:[#allocation4 + $0x100] sm:$0xff] %vm1066, %v1003
      %1084 = vst.msk [vmem:[#allocation4 + $0x110] sm:$0xff] %vm1066, %v1005
      %1085 = vst.msk [vmem:[#allocation4 + $0x120] sm:$0xff] %vm1066, %v1007
      %1086 = vst.msk [vmem:[#allocation4 + $0x130] sm:$0xff] %vm1066, %v1009
      %1087 = vst.msk [vmem:[#allocation4 + $0x140] sm:$0xff] %vm1066, %v1011
      %1088 = vst.msk [vmem:[#allocation4 + $0x150] sm:$0xff] %vm1066, %v1013
      %1089 = vst.msk [vmem:[#allocation4 + $0x160] sm:$0xff] %vm1066, %v1015
      %1090 = vst.msk [vmem:[#allocation4 + $0x170] sm:$0xff] %vm1066, %v1017
      %1091 = vst.msk [vmem:[#allocation4 + $0x180] sm:$0xff] %vm1066, %v1019
      %1092 = vst.msk [vmem:[#allocation4 + $0x190] sm:$0xff] %vm1066, %v1021
      %1093 = vst.msk [vmem:[#allocation4 + $0x1a0] sm:$0xff] %vm1066, %v1023
      %1094 = vst.msk [vmem:[#allocation4 + $0x1b0] sm:$0xff] %vm1066, %v1025
      %1095 = vst.msk [vmem:[#allocation4 + $0x1c0] sm:$0xff] %vm1066, %v1027
      %1096 = vst.msk [vmem:[#allocation4 + $0x1d0] sm:$0xff] %vm1066, %v1029
      %1097 = vst.msk [vmem:[#allocation4 + $0x1e0] sm:$0xff] %vm1066, %v1031
      %1098 = vst.msk [vmem:[#allocation4 + $0x1f0] sm:$0xff] %vm1066, %v1033
      %v1099 = vld [vmem:[%s423 + $0x1] sm:$0xff]
      %v1100 = vld [vmem:[%s423 + $0x9] sm:$0xff]
      %v1101 = vld [vmem:[%s423 + $0x19] sm:$0xff]
      %v1102 = vld [vmem:[%s423 + $0x21] sm:$0xff]
      %v1103 = vld [vmem:[%s423 + $0x31] sm:$0xff]
      %v1104 = vld [vmem:[%s423 + $0x39] sm:$0xff]
      %v1105 = vld [vmem:[%s423 + $0x49] sm:$0xff]
      %v1106 = vld [vmem:[%s423 + $0x51] sm:$0xff]
      %v1107 = vld [vmem:[%s423 + $0x61] sm:$0xff]
      %v1108 = vld [vmem:[%s423 + $0x69] sm:$0xff]
      %v1109 = vld [vmem:[%s423 + $0x79] sm:$0xff]
      %v1110 = vld [vmem:[%s423 + $0x81] sm:$0xff]
      %v1111 = vld [vmem:[%s423 + $0x91] sm:$0xff]
      %v1112 = vld [vmem:[%s423 + $0x99] sm:$0xff]
      %v1113 = vld [vmem:[%s423 + $0xa9] sm:$0xff]
      %v1114 = vld [vmem:[%s423 + $0xb1] sm:$0xff]
      %v1115 = vld [vmem:[%s423 + $0xc1] sm:$0xff]
      %v1116 = vld [vmem:[%s423 + $0xc9] sm:$0xff]
      %v1117 = vld [vmem:[%s423 + $0xd9] sm:$0xff]
      %v1118 = vld [vmem:[%s423 + $0xe1] sm:$0xff]
      %v1119 = vld [vmem:[%s423 + $0xf1] sm:$0xff]
      %v1120 = vld [vmem:[%s423 + $0xf9] sm:$0xff]
      %v1121 = vld [vmem:[%s423 + $0x109] sm:$0xff]
      %v1122 = vld [vmem:[%s423 + $0x111] sm:$0xff]
      %v1123 = vld [vmem:[%s423 + $0x121] sm:$0xff]
      %v1124 = vld [vmem:[%s423 + $0x129] sm:$0xff]
      %v1125 = vld [vmem:[%s423 + $0x139] sm:$0xff]
      %v1126 = vld [vmem:[%s423 + $0x141] sm:$0xff]
      %v1127 = vld [vmem:[%s423 + $0x151] sm:$0xff]
      %v1128 = vld [vmem:[%s423 + $0x159] sm:$0xff]
      %v1129 = vld [vmem:[%s423 + $0x169] sm:$0xff]
      %v1130 = vld [vmem:[%s423 + $0x171] sm:$0xff]
      %1163 = vrot.lane.b32.xlu0 %v1099, 12
      %v1164 = vpop.permute.xlu0 %1163
      %1165 = vrot.lane.b32.xlu0 %v1100, 12
      %v1166 = vpop.permute.xlu0 %1165
      %1167 = vrot.lane.b32.xlu0 %v1101, 12
      %v1168 = vpop.permute.xlu0 %1167
      %1169 = vrot.lane.b32.xlu0 %v1102, 12
      %v1170 = vpop.permute.xlu0 %1169
      %1171 = vrot.lane.b32.xlu0 %v1103, 12
      %v1172 = vpop.permute.xlu0 %1171
      %1173 = vrot.lane.b32.xlu0 %v1104, 12
      %v1174 = vpop.permute.xlu0 %1173
      %1175 = vrot.lane.b32.xlu0 %v1105, 12
      %v1176 = vpop.permute.xlu0 %1175
      %1177 = vrot.lane.b32.xlu0 %v1106, 12
      %v1178 = vpop.permute.xlu0 %1177
      %1179 = vrot.lane.b32.xlu0 %v1107, 12
      %v1180 = vpop.permute.xlu0 %1179
      %1181 = vrot.lane.b32.xlu0 %v1108, 12
      %v1182 = vpop.permute.xlu0 %1181
      %1183 = vrot.lane.b32.xlu0 %v1109, 12
      %v1184 = vpop.permute.xlu0 %1183
      %1185 = vrot.lane.b32.xlu0 %v1110, 12
      %v1186 = vpop.permute.xlu0 %1185
      %1187 = vrot.lane.b32.xlu0 %v1111, 12
      %v1188 = vpop.permute.xlu0 %1187
      %1189 = vrot.lane.b32.xlu0 %v1112, 12
      %v1190 = vpop.permute.xlu0 %1189
      %1191 = vrot.lane.b32.xlu0 %v1113, 12
      %v1192 = vpop.permute.xlu0 %1191
      %1193 = vrot.lane.b32.xlu0 %v1114, 12
      %v1194 = vpop.permute.xlu0 %1193
      %1195 = vrot.lane.b32.xlu0 %v1115, 12
      %v1196 = vpop.permute.xlu0 %1195
      %1197 = vrot.lane.b32.xlu0 %v1116, 12
      %v1198 = vpop.permute.xlu0 %1197
      %1199 = vrot.lane.b32.xlu0 %v1117, 12
      %v1200 = vpop.permute.xlu0 %1199
      %1201 = vrot.lane.b32.xlu0 %v1118, 12
      %v1202 = vpop.permute.xlu0 %1201
      %1203 = vrot.lane.b32.xlu0 %v1119, 12
      %v1204 = vpop.permute.xlu0 %1203
      %1205 = vrot.lane.b32.xlu0 %v1120, 12
      %v1206 = vpop.permute.xlu0 %1205
      %1207 = vrot.lane.b32.xlu0 %v1121, 12
      %v1208 = vpop.permute.xlu0 %1207
      %1209 = vrot.lane.b32.xlu0 %v1122, 12
      %v1210 = vpop.permute.xlu0 %1209
      %1211 = vrot.lane.b32.xlu0 %v1123, 12
      %v1212 = vpop.permute.xlu0 %1211
      %1213 = vrot.lane.b32.xlu0 %v1124, 12
      %v1214 = vpop.permute.xlu0 %1213
      %1215 = vrot.lane.b32.xlu0 %v1125, 12
      %v1216 = vpop.permute.xlu0 %1215
      %1217 = vrot.lane.b32.xlu0 %v1126, 12
      %v1218 = vpop.permute.xlu0 %1217
      %1219 = vrot.lane.b32.xlu0 %v1127, 12
      %v1220 = vpop.permute.xlu0 %1219
      %1221 = vrot.lane.b32.xlu0 %v1128, 12
      %v1222 = vpop.permute.xlu0 %1221
      %1223 = vrot.lane.b32.xlu0 %v1129, 12
      %v1224 = vpop.permute.xlu0 %1223
      %1225 = vrot.lane.b32.xlu0 %v1130, 12
      %v1226 = vpop.permute.xlu0 %1225
      %vm1259 = vcmask 121952
      %1260 = vst.msk [vmem:[#allocation4] sm:$0xff] %vm1259, %v1164
      %1261 = vst.msk [vmem:[#allocation4 + $0x10] sm:$0xff] %vm1259, %v1166
      %1262 = vst.msk [vmem:[#allocation4 + $0x20] sm:$0xff] %vm1259, %v1168
      %1263 = vst.msk [vmem:[#allocation4 + $0x30] sm:$0xff] %vm1259, %v1170
      %1264 = vst.msk [vmem:[#allocation4 + $0x40] sm:$0xff] %vm1259, %v1172
      %1265 = vst.msk [vmem:[#allocation4 + $0x50] sm:$0xff] %vm1259, %v1174
      %1266 = vst.msk [vmem:[#allocation4 + $0x60] sm:$0xff] %vm1259, %v1176
      %1267 = vst.msk [vmem:[#allocation4 + $0x70] sm:$0xff] %vm1259, %v1178
      %1268 = vst.msk [vmem:[#allocation4 + $0x80] sm:$0xff] %vm1259, %v1180
      %1269 = vst.msk [vmem:[#allocation4 + $0x90] sm:$0xff] %vm1259, %v1182
      %1270 = vst.msk [vmem:[#allocation4 + $0xa0] sm:$0xff] %vm1259, %v1184
      %1271 = vst.msk [vmem:[#allocation4 + $0xb0] sm:$0xff] %vm1259, %v1186
      %1272 = vst.msk [vmem:[#allocation4 + $0xc0] sm:$0xff] %vm1259, %v1188
      %1273 = vst.msk [vmem:[#allocation4 + $0xd0] sm:$0xff] %vm1259, %v1190
      %1274 = vst.msk [vmem:[#allocation4 + $0xe0] sm:$0xff] %vm1259, %v1192
      %1275 = vst.msk [vmem:[#allocation4 + $0xf0] sm:$0xff] %vm1259, %v1194
      %1276 = vst.msk [vmem:[#allocation4 + $0x100] sm:$0xff] %vm1259, %v1196
      %1277 = vst.msk [vmem:[#allocation4 + $0x110] sm:$0xff] %vm1259, %v1198
      %1278 = vst.msk [vmem:[#allocation4 + $0x120] sm:$0xff] %vm1259, %v1200
      %1279 = vst.msk [vmem:[#allocation4 + $0x130] sm:$0xff] %vm1259, %v1202
      %1280 = vst.msk [vmem:[#allocation4 + $0x140] sm:$0xff] %vm1259, %v1204
      %1281 = vst.msk [vmem:[#allocation4 + $0x150] sm:$0xff] %vm1259, %v1206
      %1282 = vst.msk [vmem:[#allocation4 + $0x160] sm:$0xff] %vm1259, %v1208
      %1283 = vst.msk [vmem:[#allocation4 + $0x170] sm:$0xff] %vm1259, %v1210
      %1284 = vst.msk [vmem:[#allocation4 + $0x180] sm:$0xff] %vm1259, %v1212
      %1285 = vst.msk [vmem:[#allocation4 + $0x190] sm:$0xff] %vm1259, %v1214
      %1286 = vst.msk [vmem:[#allocation4 + $0x1a0] sm:$0xff] %vm1259, %v1216
      %1287 = vst.msk [vmem:[#allocation4 + $0x1b0] sm:$0xff] %vm1259, %v1218
      %1288 = vst.msk [vmem:[#allocation4 + $0x1c0] sm:$0xff] %vm1259, %v1220
      %1289 = vst.msk [vmem:[#allocation4 + $0x1d0] sm:$0xff] %vm1259, %v1222
      %1290 = vst.msk [vmem:[#allocation4 + $0x1e0] sm:$0xff] %vm1259, %v1224
      %1291 = vst.msk [vmem:[#allocation4 + $0x1f0] sm:$0xff] %vm1259, %v1226
      %v1292 = vld [vmem:[%s423 + $0x2] sm:$0xff]
      %v1293 = vld [vmem:[%s423 + $0xa] sm:$0xff]
      %v1294 = vld [vmem:[%s423 + $0x1a] sm:$0xff]
      %v1295 = vld [vmem:[%s423 + $0x22] sm:$0xff]
      %v1296 = vld [vmem:[%s423 + $0x32] sm:$0xff]
      %v1297 = vld [vmem:[%s423 + $0x3a] sm:$0xff]
      %v1298 = vld [vmem:[%s423 + $0x4a] sm:$0xff]
      %v1299 = vld [vmem:[%s423 + $0x52] sm:$0xff]
      %v1300 = vld [vmem:[%s423 + $0x62] sm:$0xff]
      %v1301 = vld [vmem:[%s423 + $0x6a] sm:$0xff]
      %v1302 = vld [vmem:[%s423 + $0x7a] sm:$0xff]
      %v1303 = vld [vmem:[%s423 + $0x82] sm:$0xff]
      %v1304 = vld [vmem:[%s423 + $0x92] sm:$0xff]
      %v1305 = vld [vmem:[%s423 + $0x9a] sm:$0xff]
      %v1306 = vld [vmem:[%s423 + $0xaa] sm:$0xff]
      %v1307 = vld [vmem:[%s423 + $0xb2] sm:$0xff]
      %v1308 = vld [vmem:[%s423 + $0xc2] sm:$0xff]
      %v1309 = vld [vmem:[%s423 + $0xca] sm:$0xff]
      %v1310 = vld [vmem:[%s423 + $0xda] sm:$0xff]
      %v1311 = vld [vmem:[%s423 + $0xe2] sm:$0xff]
      %v1312 = vld [vmem:[%s423 + $0xf2] sm:$0xff]
      %v1313 = vld [vmem:[%s423 + $0xfa] sm:$0xff]
      %v1314 = vld [vmem:[%s423 + $0x10a] sm:$0xff]
      %v1315 = vld [vmem:[%s423 + $0x112] sm:$0xff]
      %v1316 = vld [vmem:[%s423 + $0x122] sm:$0xff]
      %v1317 = vld [vmem:[%s423 + $0x12a] sm:$0xff]
      %v1318 = vld [vmem:[%s423 + $0x13a] sm:$0xff]
      %v1319 = vld [vmem:[%s423 + $0x142] sm:$0xff]
      %v1320 = vld [vmem:[%s423 + $0x152] sm:$0xff]
      %v1321 = vld [vmem:[%s423 + $0x15a] sm:$0xff]
      %v1322 = vld [vmem:[%s423 + $0x16a] sm:$0xff]
      %v1323 = vld [vmem:[%s423 + $0x172] sm:$0xff]
      %1356 = vrot.lane.b32.xlu0 %v1292, 15
      %v1357 = vpop.permute.xlu0 %1356
      %1358 = vrot.lane.b32.xlu0 %v1293, 15
      %v1359 = vpop.permute.xlu0 %1358
      %1360 = vrot.lane.b32.xlu0 %v1294, 15
      %v1361 = vpop.permute.xlu0 %1360
      %1362 = vrot.lane.b32.xlu0 %v1295, 15
      %v1363 = vpop.permute.xlu0 %1362
      %1364 = vrot.lane.b32.xlu0 %v1296, 15
      %v1365 = vpop.permute.xlu0 %1364
      %1366 = vrot.lane.b32.xlu0 %v1297, 15
      %v1367 = vpop.permute.xlu0 %1366
      %1368 = vrot.lane.b32.xlu0 %v1298, 15
      %v1369 = vpop.permute.xlu0 %1368
      %1370 = vrot.lane.b32.xlu0 %v1299, 15
      %v1371 = vpop.permute.xlu0 %1370
      %1372 = vrot.lane.b32.xlu0 %v1300, 15
      %v1373 = vpop.permute.xlu0 %1372
      %1374 = vrot.lane.b32.xlu0 %v1301, 15
      %v1375 = vpop.permute.xlu0 %1374
      %1376 = vrot.lane.b32.xlu0 %v1302, 15
      %v1377 = vpop.permute.xlu0 %1376
      %1378 = vrot.lane.b32.xlu0 %v1303, 15
      %v1379 = vpop.permute.xlu0 %1378
      %1380 = vrot.lane.b32.xlu0 %v1304, 15
      %v1381 = vpop.permute.xlu0 %1380
      %1382 = vrot.lane.b32.xlu0 %v1305, 15
      %v1383 = vpop.permute.xlu0 %1382
      %1384 = vrot.lane.b32.xlu0 %v1306, 15
      %v1385 = vpop.permute.xlu0 %1384
      %1386 = vrot.lane.b32.xlu0 %v1307, 15
      %v1387 = vpop.permute.xlu0 %1386
      %1388 = vrot.lane.b32.xlu0 %v1308, 15
      %v1389 = vpop.permute.xlu0 %1388
      %1390 = vrot.lane.b32.xlu0 %v1309, 15
      %v1391 = vpop.permute.xlu0 %1390
      %1392 = vrot.lane.b32.xlu0 %v1310, 15
      %v1393 = vpop.permute.xlu0 %1392
      %1394 = vrot.lane.b32.xlu0 %v1311, 15
      %v1395 = vpop.permute.xlu0 %1394
      %1396 = vrot.lane.b32.xlu0 %v1312, 15
      %v1397 = vpop.permute.xlu0 %1396
      %1398 = vrot.lane.b32.xlu0 %v1313, 15
      %v1399 = vpop.permute.xlu0 %1398
      %1400 = vrot.lane.b32.xlu0 %v1314, 15
      %v1401 = vpop.permute.xlu0 %1400
      %1402 = vrot.lane.b32.xlu0 %v1315, 15
      %v1403 = vpop.permute.xlu0 %1402
      %1404 = vrot.lane.b32.xlu0 %v1316, 15
      %v1405 = vpop.permute.xlu0 %1404
      %1406 = vrot.lane.b32.xlu0 %v1317, 15
      %v1407 = vpop.permute.xlu0 %1406
      %1408 = vrot.lane.b32.xlu0 %v1318, 15
      %v1409 = vpop.permute.xlu0 %1408
      %1410 = vrot.lane.b32.xlu0 %v1319, 15
      %v1411 = vpop.permute.xlu0 %1410
      %1412 = vrot.lane.b32.xlu0 %v1320, 15
      %v1413 = vpop.permute.xlu0 %1412
      %1414 = vrot.lane.b32.xlu0 %v1321, 15
      %v1415 = vpop.permute.xlu0 %1414
      %1416 = vrot.lane.b32.xlu0 %v1322, 15
      %v1417 = vpop.permute.xlu0 %1416
      %1418 = vrot.lane.b32.xlu0 %v1323, 15
      %v1419 = vpop.permute.xlu0 %1418
      %vm1452 = vcmask 146552
      %1453 = vst.msk [vmem:[#allocation4] sm:$0xff] %vm1452, %v1357
      %1454 = vst.msk [vmem:[#allocation4 + $0x10] sm:$0xff] %vm1452, %v1359
      %1455 = vst.msk [vmem:[#allocation4 + $0x20] sm:$0xff] %vm1452, %v1361
      %1456 = vst.msk [vmem:[#allocation4 + $0x30] sm:$0xff] %vm1452, %v1363
      %1457 = vst.msk [vmem:[#allocation4 + $0x40] sm:$0xff] %vm1452, %v1365
      %1458 = vst.msk [vmem:[#allocation4 + $0x50] sm:$0xff] %vm1452, %v1367
      %1459 = vst.msk [vmem:[#allocation4 + $0x60] sm:$0xff] %vm1452, %v1369
      %1460 = vst.msk [vmem:[#allocation4 + $0x70] sm:$0xff] %vm1452, %v1371
      %1461 = vst.msk [vmem:[#allocation4 + $0x80] sm:$0xff] %vm1452, %v1373
      %1462 = vst.msk [vmem:[#allocation4 + $0x90] sm:$0xff] %vm1452, %v1375
      %1463 = vst.msk [vmem:[#allocation4 + $0xa0] sm:$0xff] %vm1452, %v1377
      %1464 = vst.msk [vmem:[#allocation4 + $0xb0] sm:$0xff] %vm1452, %v1379
      %1465 = vst.msk [vmem:[#allocation4 + $0xc0] sm:$0xff] %vm1452, %v1381
      %1466 = vst.msk [vmem:[#allocation4 + $0xd0] sm:$0xff] %vm1452, %v1383
      %1467 = vst.msk [vmem:[#allocation4 + $0xe0] sm:$0xff] %vm1452, %v1385
      %1468 = vst.msk [vmem:[#allocation4 + $0xf0] sm:$0xff] %vm1452, %v1387
      %1469 = vst.msk [vmem:[#allocation4 + $0x100] sm:$0xff] %vm1452, %v1389
      %1470 = vst.msk [vmem:[#allocation4 + $0x110] sm:$0xff] %vm1452, %v1391
      %1471 = vst.msk [vmem:[#allocation4 + $0x120] sm:$0xff] %vm1452, %v1393
      %1472 = vst.msk [vmem:[#allocation4 + $0x130] sm:$0xff] %vm1452, %v1395
      %1473 = vst.msk [vmem:[#allocation4 + $0x140] sm:$0xff] %vm1452, %v1397
      %1474 = vst.msk [vmem:[#allocation4 + $0x150] sm:$0xff] %vm1452, %v1399
      %1475 = vst.msk [vmem:[#allocation4 + $0x160] sm:$0xff] %vm1452, %v1401
      %1476 = vst.msk [vmem:[#allocation4 + $0x170] sm:$0xff] %vm1452, %v1403
      %1477 = vst.msk [vmem:[#allocation4 + $0x180] sm:$0xff] %vm1452, %v1405
      %1478 = vst.msk [vmem:[#allocation4 + $0x190] sm:$0xff] %vm1452, %v1407
      %1479 = vst.msk [vmem:[#allocation4 + $0x1a0] sm:$0xff] %vm1452, %v1409
      %1480 = vst.msk [vmem:[#allocation4 + $0x1b0] sm:$0xff] %vm1452, %v1411
      %1481 = vst.msk [vmem:[#allocation4 + $0x1c0] sm:$0xff] %vm1452, %v1413
      %1482 = vst.msk [vmem:[#allocation4 + $0x1d0] sm:$0xff] %vm1452, %v1415
      %1483 = vst.msk [vmem:[#allocation4 + $0x1e0] sm:$0xff] %vm1452, %v1417
      %1484 = vst.msk [vmem:[#allocation4 + $0x1f0] sm:$0xff] %vm1452, %v1419
      %s1485 = scalar_lea.vmem [#allocation2], 48
      %v1486 = vld [vmem:[%s1485] sm:$0xff]
      %v1487 = vld [vmem:[%s1485 + $0x8] sm:$0xff]
      %v1488 = vld [vmem:[%s1485 + $0x18] sm:$0xff]
      %v1489 = vld [vmem:[%s1485 + $0x20] sm:$0xff]
      %v1490 = vld [vmem:[%s1485 + $0x30] sm:$0xff]
      %v1491 = vld [vmem:[%s1485 + $0x38] sm:$0xff]
      %v1492 = vld [vmem:[%s1485 + $0x48] sm:$0xff]
      %v1493 = vld [vmem:[%s1485 + $0x50] sm:$0xff]
      %v1494 = vld [vmem:[%s1485 + $0x60] sm:$0xff]
      %v1495 = vld [vmem:[%s1485 + $0x68] sm:$0xff]
      %v1496 = vld [vmem:[%s1485 + $0x78] sm:$0xff]
      %v1497 = vld [vmem:[%s1485 + $0x80] sm:$0xff]
      %v1498 = vld [vmem:[%s1485 + $0x90] sm:$0xff]
      %v1499 = vld [vmem:[%s1485 + $0x98] sm:$0xff]
      %v1500 = vld [vmem:[%s1485 + $0xa8] sm:$0xff]
      %v1501 = vld [vmem:[%s1485 + $0xb0] sm:$0xff]
      %v1502 = vld [vmem:[%s1485 + $0xc0] sm:$0xff]
      %v1503 = vld [vmem:[%s1485 + $0xc8] sm:$0xff]
      %v1504 = vld [vmem:[%s1485 + $0xd8] sm:$0xff]
      %v1505 = vld [vmem:[%s1485 + $0xe0] sm:$0xff]
      %v1506 = vld [vmem:[%s1485 + $0xf0] sm:$0xff]
      %v1507 = vld [vmem:[%s1485 + $0xf8] sm:$0xff]
      %v1508 = vld [vmem:[%s1485 + $0x108] sm:$0xff]
      %v1509 = vld [vmem:[%s1485 + $0x110] sm:$0xff]
      %v1510 = vld [vmem:[%s1485 + $0x120] sm:$0xff]
      %v1511 = vld [vmem:[%s1485 + $0x128] sm:$0xff]
      %v1512 = vld [vmem:[%s1485 + $0x138] sm:$0xff]
      %v1513 = vld [vmem:[%s1485 + $0x140] sm:$0xff]
      %v1514 = vld [vmem:[%s1485 + $0x150] sm:$0xff]
      %v1515 = vld [vmem:[%s1485 + $0x158] sm:$0xff]
      %v1516 = vld [vmem:[%s1485 + $0x168] sm:$0xff]
      %v1517 = vld [vmem:[%s1485 + $0x170] sm:$0xff]
      %1550 = vrot.lane.b32.xlu0 %v1486, 18
      %v1551 = vpop.permute.xlu0 %1550
      %1552 = vrot.lane.b32.xlu0 %v1487, 18
      %v1553 = vpop.permute.xlu0 %1552
      %1554 = vrot.lane.b32.xlu0 %v1488, 18
      %v1555 = vpop.permute.xlu0 %1554
      %1556 = vrot.lane.b32.xlu0 %v1489, 18
      %v1557 = vpop.permute.xlu0 %1556
      %1558 = vrot.lane.b32.xlu0 %v1490, 18
      %v1559 = vpop.permute.xlu0 %1558
      %1560 = vrot.lane.b32.xlu0 %v1491, 18
      %v1561 = vpop.permute.xlu0 %1560
      %1562 = vrot.lane.b32.xlu0 %v1492, 18
      %v1563 = vpop.permute.xlu0 %1562
      %1564 = vrot.lane.b32.xlu0 %v1493, 18
      %v1565 = vpop.permute.xlu0 %1564
      %1566 = vrot.lane.b32.xlu0 %v1494, 18
      %v1567 = vpop.permute.xlu0 %1566
      %1568 = vrot.lane.b32.xlu0 %v1495, 18
      %v1569 = vpop.permute.xlu0 %1568
      %1570 = vrot.lane.b32.xlu0 %v1496, 18
      %v1571 = vpop.permute.xlu0 %1570
      %1572 = vrot.lane.b32.xlu0 %v1497, 18
      %v1573 = vpop.permute.xlu0 %1572
      %1574 = vrot.lane.b32.xlu0 %v1498, 18
      %v1575 = vpop.permute.xlu0 %1574
      %1576 = vrot.lane.b32.xlu0 %v1499, 18
      %v1577 = vpop.permute.xlu0 %1576
      %1578 = vrot.lane.b32.xlu0 %v1500, 18
      %v1579 = vpop.permute.xlu0 %1578
      %1580 = vrot.lane.b32.xlu0 %v1501, 18
      %v1581 = vpop.permute.xlu0 %1580
      %1582 = vrot.lane.b32.xlu0 %v1502, 18
      %v1583 = vpop.permute.xlu0 %1582
      %1584 = vrot.lane.b32.xlu0 %v1503, 18
      %v1585 = vpop.permute.xlu0 %1584
      %1586 = vrot.lane.b32.xlu0 %v1504, 18
      %v1587 = vpop.permute.xlu0 %1586
      %1588 = vrot.lane.b32.xlu0 %v1505, 18
      %v1589 = vpop.permute.xlu0 %1588
      %1590 = vrot.lane.b32.xlu0 %v1506, 18
      %v1591 = vpop.permute.xlu0 %1590
      %1592 = vrot.lane.b32.xlu0 %v1507, 18
      %v1593 = vpop.permute.xlu0 %1592
      %1594 = vrot.lane.b32.xlu0 %v1508, 18
      %v1595 = vpop.permute.xlu0 %1594
      %1596 = vrot.lane.b32.xlu0 %v1509, 18
      %v1597 = vpop.permute.xlu0 %1596
      %1598 = vrot.lane.b32.xlu0 %v1510, 18
      %v1599 = vpop.permute.xlu0 %1598
      %1600 = vrot.lane.b32.xlu0 %v1511, 18
      %v1601 = vpop.permute.xlu0 %1600
      %1602 = vrot.lane.b32.xlu0 %v1512, 18
      %v1603 = vpop.permute.xlu0 %1602
      %1604 = vrot.lane.b32.xlu0 %v1513, 18
      %v1605 = vpop.permute.xlu0 %1604
      %1606 = vrot.lane.b32.xlu0 %v1514, 18
      %v1607 = vpop.permute.xlu0 %1606
      %1608 = vrot.lane.b32.xlu0 %v1515, 18
      %v1609 = vpop.permute.xlu0 %1608
      %1610 = vrot.lane.b32.xlu0 %v1516, 18
      %v1611 = vpop.permute.xlu0 %1610
      %1612 = vrot.lane.b32.xlu0 %v1517, 18
      %v1613 = vpop.permute.xlu0 %1612
      %vm1646 = vcmask 171152
      %1647 = vst.msk [vmem:[#allocation4] sm:$0xff] %vm1646, %v1551
      %1648 = vst.msk [vmem:[#allocation4 + $0x10] sm:$0xff] %vm1646, %v1553
      %1649 = vst.msk [vmem:[#allocation4 + $0x20] sm:$0xff] %vm1646, %v1555
      %1650 = vst.msk [vmem:[#allocation4 + $0x30] sm:$0xff] %vm1646, %v1557
      %1651 = vst.msk [vmem:[#allocation4 + $0x40] sm:$0xff] %vm1646, %v1559
      %1652 = vst.msk [vmem:[#allocation4 + $0x50] sm:$0xff] %vm1646, %v1561
      %1653 = vst.msk [vmem:[#allocation4 + $0x60] sm:$0xff] %vm1646, %v1563
      %1654 = vst.msk [vmem:[#allocation4 + $0x70] sm:$0xff] %vm1646, %v1565
      %1655 = vst.msk [vmem:[#allocation4 + $0x80] sm:$0xff] %vm1646, %v1567
      %1656 = vst.msk [vmem:[#allocation4 + $0x90] sm:$0xff] %vm1646, %v1569
      %1657 = vst.msk [vmem:[#allocation4 + $0xa0] sm:$0xff] %vm1646, %v1571
      %1658 = vst.msk [vmem:[#allocation4 + $0xb0] sm:$0xff] %vm1646, %v1573
      %1659 = vst.msk [vmem:[#allocation4 + $0xc0] sm:$0xff] %vm1646, %v1575
      %1660 = vst.msk [vmem:[#allocation4 + $0xd0] sm:$0xff] %vm1646, %v1577
      %1661 = vst.msk [vmem:[#allocation4 + $0xe0] sm:$0xff] %vm1646, %v1579
      %1662 = vst.msk [vmem:[#allocation4 + $0xf0] sm:$0xff] %vm1646, %v1581
      %1663 = vst.msk [vmem:[#allocation4 + $0x100] sm:$0xff] %vm1646, %v1583
      %1664 = vst.msk [vmem:[#allocation4 + $0x110] sm:$0xff] %vm1646, %v1585
      %1665 = vst.msk [vmem:[#allocation4 + $0x120] sm:$0xff] %vm1646, %v1587
      %1666 = vst.msk [vmem:[#allocation4 + $0x130] sm:$0xff] %vm1646, %v1589
      %1667 = vst.msk [vmem:[#allocation4 + $0x140] sm:$0xff] %vm1646, %v1591
      %1668 = vst.msk [vmem:[#allocation4 + $0x150] sm:$0xff] %vm1646, %v1593
      %1669 = vst.msk [vmem:[#allocation4 + $0x160] sm:$0xff] %vm1646, %v1595
      %1670 = vst.msk [vmem:[#allocation4 + $0x170] sm:$0xff] %vm1646, %v1597
      %1671 = vst.msk [vmem:[#allocation4 + $0x180] sm:$0xff] %vm1646, %v1599
      %1672 = vst.msk [vmem:[#allocation4 + $0x190] sm:$0xff] %vm1646, %v1601
      %1673 = vst.msk [vmem:[#allocation4 + $0x1a0] sm:$0xff] %vm1646, %v1603
      %1674 = vst.msk [vmem:[#allocation4 + $0x1b0] sm:$0xff] %vm1646, %v1605
      %1675 = vst.msk [vmem:[#allocation4 + $0x1c0] sm:$0xff] %vm1646, %v1607
      %1676 = vst.msk [vmem:[#allocation4 + $0x1d0] sm:$0xff] %vm1646, %v1609
      %1677 = vst.msk [vmem:[#allocation4 + $0x1e0] sm:$0xff] %vm1646, %v1611
      %1678 = vst.msk [vmem:[#allocation4 + $0x1f0] sm:$0xff] %vm1646, %v1613
      %v1679 = vld [vmem:[%s1485 + $0x1] sm:$0xff]
      %v1680 = vld [vmem:[%s1485 + $0x9] sm:$0xff]
      %v1681 = vld [vmem:[%s1485 + $0x19] sm:$0xff]
      %v1682 = vld [vmem:[%s1485 + $0x21] sm:$0xff]
      %v1683 = vld [vmem:[%s1485 + $0x31] sm:$0xff]
      %v1684 = vld [vmem:[%s1485 + $0x39] sm:$0xff]
      %v1685 = vld [vmem:[%s1485 + $0x49] sm:$0xff]
      %v1686 = vld [vmem:[%s1485 + $0x51] sm:$0xff]
      %v1687 = vld [vmem:[%s1485 + $0x61] sm:$0xff]
      %v1688 = vld [vmem:[%s1485 + $0x69] sm:$0xff]
      %v1689 = vld [vmem:[%s1485 + $0x79] sm:$0xff]
      %v1690 = vld [vmem:[%s1485 + $0x81] sm:$0xff]
      %v1691 = vld [vmem:[%s1485 + $0x91] sm:$0xff]
      %v1692 = vld [vmem:[%s1485 + $0x99] sm:$0xff]
      %v1693 = vld [vmem:[%s1485 + $0xa9] sm:$0xff]
      %v1694 = vld [vmem:[%s1485 + $0xb1] sm:$0xff]
      %v1695 = vld [vmem:[%s1485 + $0xc1] sm:$0xff]
      %v1696 = vld [vmem:[%s1485 + $0xc9] sm:$0xff]
      %v1697 = vld [vmem:[%s1485 + $0xd9] sm:$0xff]
      %v1698 = vld [vmem:[%s1485 + $0xe1] sm:$0xff]
      %v1699 = vld [vmem:[%s1485 + $0xf1] sm:$0xff]
      %v1700 = vld [vmem:[%s1485 + $0xf9] sm:$0xff]
      %v1701 = vld [vmem:[%s1485 + $0x109] sm:$0xff]
      %v1702 = vld [vmem:[%s1485 + $0x111] sm:$0xff]
      %v1703 = vld [vmem:[%s1485 + $0x121] sm:$0xff]
      %v1704 = vld [vmem:[%s1485 + $0x129] sm:$0xff]
      %v1705 = vld [vmem:[%s1485 + $0x139] sm:$0xff]
      %v1706 = vld [vmem:[%s1485 + $0x141] sm:$0xff]
      %v1707 = vld [vmem:[%s1485 + $0x151] sm:$0xff]
      %v1708 = vld [vmem:[%s1485 + $0x159] sm:$0xff]
      %v1709 = vld [vmem:[%s1485 + $0x169] sm:$0xff]
      %v1710 = vld [vmem:[%s1485 + $0x171] sm:$0xff]
      %1743 = vrot.lane.b32.xlu0 %v1679, 21
      %v1744 = vpop.permute.xlu0 %1743
      %1745 = vrot.lane.b32.xlu0 %v1680, 21
      %v1746 = vpop.permute.xlu0 %1745
      %1747 = vrot.lane.b32.xlu0 %v1681, 21
      %v1748 = vpop.permute.xlu0 %1747
      %1749 = vrot.lane.b32.xlu0 %v1682, 21
      %v1750 = vpop.permute.xlu0 %1749
      %1751 = vrot.lane.b32.xlu0 %v1683, 21
      %v1752 = vpop.permute.xlu0 %1751
      %1753 = vrot.lane.b32.xlu0 %v1684, 21
      %v1754 = vpop.permute.xlu0 %1753
      %1755 = vrot.lane.b32.xlu0 %v1685, 21
      %v1756 = vpop.permute.xlu0 %1755
      %1757 = vrot.lane.b32.xlu0 %v1686, 21
      %v1758 = vpop.permute.xlu0 %1757
      %1759 = vrot.lane.b32.xlu0 %v1687, 21
      %v1760 = vpop.permute.xlu0 %1759
      %1761 = vrot.lane.b32.xlu0 %v1688, 21
      %v1762 = vpop.permute.xlu0 %1761
      %1763 = vrot.lane.b32.xlu0 %v1689, 21
      %v1764 = vpop.permute.xlu0 %1763
      %1765 = vrot.lane.b32.xlu0 %v1690, 21
      %v1766 = vpop.permute.xlu0 %1765
      %1767 = vrot.lane.b32.xlu0 %v1691, 21
      %v1768 = vpop.permute.xlu0 %1767
      %1769 = vrot.lane.b32.xlu0 %v1692, 21
      %v1770 = vpop.permute.xlu0 %1769
      %1771 = vrot.lane.b32.xlu0 %v1693, 21
      %v1772 = vpop.permute.xlu0 %1771
      %1773 = vrot.lane.b32.xlu0 %v1694, 21
      %v1774 = vpop.permute.xlu0 %1773
      %1775 = vrot.lane.b32.xlu0 %v1695, 21
      %v1776 = vpop.permute.xlu0 %1775
      %1777 = vrot.lane.b32.xlu0 %v1696, 21
      %v1778 = vpop.permute.xlu0 %1777
      %1779 = vrot.lane.b32.xlu0 %v1697, 21
      %v1780 = vpop.permute.xlu0 %1779
      %1781 = vrot.lane.b32.xlu0 %v1698, 21
      %v1782 = vpop.permute.xlu0 %1781
      %1783 = vrot.lane.b32.xlu0 %v1699, 21
      %v1784 = vpop.permute.xlu0 %1783
      %1785 = vrot.lane.b32.xlu0 %v1700, 21
      %v1786 = vpop.permute.xlu0 %1785
      %1787 = vrot.lane.b32.xlu0 %v1701, 21
      %v1788 = vpop.permute.xlu0 %1787
      %1789 = vrot.lane.b32.xlu0 %v1702, 21
      %v1790 = vpop.permute.xlu0 %1789
      %1791 = vrot.lane.b32.xlu0 %v1703, 21
      %v1792 = vpop.permute.xlu0 %1791
      %1793 = vrot.lane.b32.xlu0 %v1704, 21
      %v1794 = vpop.permute.xlu0 %1793
      %1795 = vrot.lane.b32.xlu0 %v1705, 21
      %v1796 = vpop.permute.xlu0 %1795
      %1797 = vrot.lane.b32.xlu0 %v1706, 21
      %v1798 = vpop.permute.xlu0 %1797
      %1799 = vrot.lane.b32.xlu0 %v1707, 21
      %v1800 = vpop.permute.xlu0 %1799
      %1801 = vrot.lane.b32.xlu0 %v1708, 21
      %v1802 = vpop.permute.xlu0 %1801
      %1803 = vrot.lane.b32.xlu0 %v1709, 21
      %v1804 = vpop.permute.xlu0 %1803
      %1805 = vrot.lane.b32.xlu0 %v1710, 21
      %v1806 = vpop.permute.xlu0 %1805
      %vm1839 = vcmask 195752
      %1840 = vst.msk [vmem:[#allocation4] sm:$0xff] %vm1839, %v1744
      %1841 = vst.msk [vmem:[#allocation4 + $0x10] sm:$0xff] %vm1839, %v1746
      %1842 = vst.msk [vmem:[#allocation4 + $0x20] sm:$0xff] %vm1839, %v1748
      %1843 = vst.msk [vmem:[#allocation4 + $0x30] sm:$0xff] %vm1839, %v1750
      %1844 = vst.msk [vmem:[#allocation4 + $0x40] sm:$0xff] %vm1839, %v1752
      %1845 = vst.msk [vmem:[#allocation4 + $0x50] sm:$0xff] %vm1839, %v1754
      %1846 = vst.msk [vmem:[#allocation4 + $0x60] sm:$0xff] %vm1839, %v1756
      %1847 = vst.msk [vmem:[#allocation4 + $0x70] sm:$0xff] %vm1839, %v1758
      %1848 = vst.msk [vmem:[#allocation4 + $0x80] sm:$0xff] %vm1839, %v1760
      %1849 = vst.msk [vmem:[#allocation4 + $0x90] sm:$0xff] %vm1839, %v1762
      %1850 = vst.msk [vmem:[#allocation4 + $0xa0] sm:$0xff] %vm1839, %v1764
      %1851 = vst.msk [vmem:[#allocation4 + $0xb0] sm:$0xff] %vm1839, %v1766
      %1852 = vst.msk [vmem:[#allocation4 + $0xc0] sm:$0xff] %vm1839, %v1768
      %1853 = vst.msk [vmem:[#allocation4 + $0xd0] sm:$0xff] %vm1839, %v1770
      %1854 = vst.msk [vmem:[#allocation4 + $0xe0] sm:$0xff] %vm1839, %v1772
      %1855 = vst.msk [vmem:[#allocation4 + $0xf0] sm:$0xff] %vm1839, %v1774
      %1856 = vst.msk [vmem:[#allocation4 + $0x100] sm:$0xff] %vm1839, %v1776
      %1857 = vst.msk [vmem:[#allocation4 + $0x110] sm:$0xff] %vm1839, %v1778
      %1858 = vst.msk [vmem:[#allocation4 + $0x120] sm:$0xff] %vm1839, %v1780
      %1859 = vst.msk [vmem:[#allocation4 + $0x130] sm:$0xff] %vm1839, %v1782
      %1860 = vst.msk [vmem:[#allocation4 + $0x140] sm:$0xff] %vm1839, %v1784
      %1861 = vst.msk [vmem:[#allocation4 + $0x150] sm:$0xff] %vm1839, %v1786
      %1862 = vst.msk [vmem:[#allocation4 + $0x160] sm:$0xff] %vm1839, %v1788
      %1863 = vst.msk [vmem:[#allocation4 + $0x170] sm:$0xff] %vm1839, %v1790
      %1864 = vst.msk [vmem:[#allocation4 + $0x180] sm:$0xff] %vm1839, %v1792
      %1865 = vst.msk [vmem:[#allocation4 + $0x190] sm:$0xff] %vm1839, %v1794
      %1866 = vst.msk [vmem:[#allocation4 + $0x1a0] sm:$0xff] %vm1839, %v1796
      %1867 = vst.msk [vmem:[#allocation4 + $0x1b0] sm:$0xff] %vm1839, %v1798
      %1868 = vst.msk [vmem:[#allocation4 + $0x1c0] sm:$0xff] %vm1839, %v1800
      %1869 = vst.msk [vmem:[#allocation4 + $0x1d0] sm:$0xff] %vm1839, %v1802
      %1870 = vst.msk [vmem:[#allocation4 + $0x1e0] sm:$0xff] %vm1839, %v1804
      %1871 = vst.msk [vmem:[#allocation4 + $0x1f0] sm:$0xff] %vm1839, %v1806
      %v1872 = vld [vmem:[%s1485 + $0x2] sm:$0xff]
      %v1873 = vld [vmem:[%s1485 + $0xa] sm:$0xff]
      %v1874 = vld [vmem:[%s1485 + $0x1a] sm:$0xff]
      %v1875 = vld [vmem:[%s1485 + $0x22] sm:$0xff]
      %v1876 = vld [vmem:[%s1485 + $0x32] sm:$0xff]
      %v1877 = vld [vmem:[%s1485 + $0x3a] sm:$0xff]
      %v1878 = vld [vmem:[%s1485 + $0x4a] sm:$0xff]
      %v1879 = vld [vmem:[%s1485 + $0x52] sm:$0xff]
      %v1880 = vld [vmem:[%s1485 + $0x62] sm:$0xff]
      %v1881 = vld [vmem:[%s1485 + $0x6a] sm:$0xff]
      %v1882 = vld [vmem:[%s1485 + $0x7a] sm:$0xff]
      %v1883 = vld [vmem:[%s1485 + $0x82] sm:$0xff]
      %v1884 = vld [vmem:[%s1485 + $0x92] sm:$0xff]
      %v1885 = vld [vmem:[%s1485 + $0x9a] sm:$0xff]
      %v1886 = vld [vmem:[%s1485 + $0xaa] sm:$0xff]
      %v1887 = vld [vmem:[%s1485 + $0xb2] sm:$0xff]
      %v1888 = vld [vmem:[%s1485 + $0xc2] sm:$0xff]
      %v1889 = vld [vmem:[%s1485 + $0xca] sm:$0xff]
      %v1890 = vld [vmem:[%s1485 + $0xda] sm:$0xff]
      %v1891 = vld [vmem:[%s1485 + $0xe2] sm:$0xff]
      %v1892 = vld [vmem:[%s1485 + $0xf2] sm:$0xff]
      %v1893 = vld [vmem:[%s1485 + $0xfa] sm:$0xff]
      %v1894 = vld [vmem:[%s1485 + $0x10a] sm:$0xff]
      %v1895 = vld [vmem:[%s1485 + $0x112] sm:$0xff]
      %v1896 = vld [vmem:[%s1485 + $0x122] sm:$0xff]
      %v1897 = vld [vmem:[%s1485 + $0x12a] sm:$0xff]
      %v1898 = vld [vmem:[%s1485 + $0x13a] sm:$0xff]
      %v1899 = vld [vmem:[%s1485 + $0x142] sm:$0xff]
      %v1900 = vld [vmem:[%s1485 + $0x152] sm:$0xff]
      %v1901 = vld [vmem:[%s1485 + $0x15a] sm:$0xff]
      %v1902 = vld [vmem:[%s1485 + $0x16a] sm:$0xff]
      %v1903 = vld [vmem:[%s1485 + $0x172] sm:$0xff]
      %1936 = vrot.lane.b32.xlu0 %v1872, 24
      %v1937 = vpop.permute.xlu0 %1936
      %1938 = vrot.lane.b32.xlu0 %v1873, 24
      %v1939 = vpop.permute.xlu0 %1938
      %1940 = vrot.lane.b32.xlu0 %v1874, 24
      %v1941 = vpop.permute.xlu0 %1940
      %1942 = vrot.lane.b32.xlu0 %v1875, 24
      %v1943 = vpop.permute.xlu0 %1942
      %1944 = vrot.lane.b32.xlu0 %v1876, 24
      %v1945 = vpop.permute.xlu0 %1944
      %1946 = vrot.lane.b32.xlu0 %v1877, 24
      %v1947 = vpop.permute.xlu0 %1946
      %1948 = vrot.lane.b32.xlu0 %v1878, 24
      %v1949 = vpop.permute.xlu0 %1948
      %1950 = vrot.lane.b32.xlu0 %v1879, 24
      %v1951 = vpop.permute.xlu0 %1950
      %1952 = vrot.lane.b32.xlu0 %v1880, 24
      %v1953 = vpop.permute.xlu0 %1952
      %1954 = vrot.lane.b32.xlu0 %v1881, 24
      %v1955 = vpop.permute.xlu0 %1954
      %1956 = vrot.lane.b32.xlu0 %v1882, 24
      %v1957 = vpop.permute.xlu0 %1956
      %1958 = vrot.lane.b32.xlu0 %v1883, 24
      %v1959 = vpop.permute.xlu0 %1958
      %1960 = vrot.lane.b32.xlu0 %v1884, 24
      %v1961 = vpop.permute.xlu0 %1960
      %1962 = vrot.lane.b32.xlu0 %v1885, 24
      %v1963 = vpop.permute.xlu0 %1962
      %1964 = vrot.lane.b32.xlu0 %v1886, 24
      %v1965 = vpop.permute.xlu0 %1964
      %1966 = vrot.lane.b32.xlu0 %v1887, 24
      %v1967 = vpop.permute.xlu0 %1966
      %1968 = vrot.lane.b32.xlu0 %v1888, 24
      %v1969 = vpop.permute.xlu0 %1968
      %1970 = vrot.lane.b32.xlu0 %v1889, 24
      %v1971 = vpop.permute.xlu0 %1970
      %1972 = vrot.lane.b32.xlu0 %v1890, 24
      %v1973 = vpop.permute.xlu0 %1972
      %1974 = vrot.lane.b32.xlu0 %v1891, 24
      %v1975 = vpop.permute.xlu0 %1974
      %1976 = vrot.lane.b32.xlu0 %v1892, 24
      %v1977 = vpop.permute.xlu0 %1976
      %1978 = vrot.lane.b32.xlu0 %v1893, 24
      %v1979 = vpop.permute.xlu0 %1978
      %1980 = vrot.lane.b32.xlu0 %v1894, 24
      %v1981 = vpop.permute.xlu0 %1980
      %1982 = vrot.lane.b32.xlu0 %v1895, 24
      %v1983 = vpop.permute.xlu0 %1982
      %1984 = vrot.lane.b32.xlu0 %v1896, 24
      %v1985 = vpop.permute.xlu0 %1984
      %1986 = vrot.lane.b32.xlu0 %v1897, 24
      %v1987 = vpop.permute.xlu0 %1986
      %1988 = vrot.lane.b32.xlu0 %v1898, 24
      %v1989 = vpop.permute.xlu0 %1988
      %1990 = vrot.lane.b32.xlu0 %v1899, 24
      %v1991 = vpop.permute.xlu0 %1990
      %1992 = vrot.lane.b32.xlu0 %v1900, 24
      %v1993 = vpop.permute.xlu0 %1992
      %1994 = vrot.lane.b32.xlu0 %v1901, 24
      %v1995 = vpop.permute.xlu0 %1994
      %1996 = vrot.lane.b32.xlu0 %v1902, 24
      %v1997 = vpop.permute.xlu0 %1996
      %1998 = vrot.lane.b32.xlu0 %v1903, 24
      %v1999 = vpop.permute.xlu0 %1998
      %vm2032 = vcmask 220352
      %2033 = vst.msk [vmem:[#allocation4] sm:$0xff] %vm2032, %v1937
      %2034 = vst.msk [vmem:[#allocation4 + $0x10] sm:$0xff] %vm2032, %v1939
      %2035 = vst.msk [vmem:[#allocation4 + $0x20] sm:$0xff] %vm2032, %v1941
      %2036 = vst.msk [vmem:[#allocation4 + $0x30] sm:$0xff] %vm2032, %v1943
      %2037 = vst.msk [vmem:[#allocation4 + $0x40] sm:$0xff] %vm2032, %v1945
      %2038 = vst.msk [vmem:[#allocation4 + $0x50] sm:$0xff] %vm2032, %v1947
      %2039 = vst.msk [vmem:[#allocation4 + $0x60] sm:$0xff] %vm2032, %v1949
      %2040 = vst.msk [vmem:[#allocation4 + $0x70] sm:$0xff] %vm2032, %v1951
      %2041 = vst.msk [vmem:[#allocation4 + $0x80] sm:$0xff] %vm2032, %v1953
      %2042 = vst.msk [vmem:[#allocation4 + $0x90] sm:$0xff] %vm2032, %v1955
      %2043 = vst.msk [vmem:[#allocation4 + $0xa0] sm:$0xff] %vm2032, %v1957
      %2044 = vst.msk [vmem:[#allocation4 + $0xb0] sm:$0xff] %vm2032, %v1959
      %2045 = vst.msk [vmem:[#allocation4 + $0xc0] sm:$0xff] %vm2032, %v1961
      %2046 = vst.msk [vmem:[#allocation4 + $0xd0] sm:$0xff] %vm2032, %v1963
      %2047 = vst.msk [vmem:[#allocation4 + $0xe0] sm:$0xff] %vm2032, %v1965
      %2048 = vst.msk [vmem:[#allocation4 + $0xf0] sm:$0xff] %vm2032, %v1967
      %2049 = vst.msk [vmem:[#allocation4 + $0x100] sm:$0xff] %vm2032, %v1969
      %2050 = vst.msk [vmem:[#allocation4 + $0x110] sm:$0xff] %vm2032, %v1971
      %2051 = vst.msk [vmem:[#allocation4 + $0x120] sm:$0xff] %vm2032, %v1973
      %2052 = vst.msk [vmem:[#allocation4 + $0x130] sm:$0xff] %vm2032, %v1975
      %2053 = vst.msk [vmem:[#allocation4 + $0x140] sm:$0xff] %vm2032, %v1977
      %2054 = vst.msk [vmem:[#allocation4 + $0x150] sm:$0xff] %vm2032, %v1979
      %2055 = vst.msk [vmem:[#allocation4 + $0x160] sm:$0xff] %vm2032, %v1981
      %2056 = vst.msk [vmem:[#allocation4 + $0x170] sm:$0xff] %vm2032, %v1983
      %2057 = vst.msk [vmem:[#allocation4 + $0x180] sm:$0xff] %vm2032, %v1985
      %2058 = vst.msk [vmem:[#allocation4 + $0x190] sm:$0xff] %vm2032, %v1987
      %2059 = vst.msk [vmem:[#allocation4 + $0x1a0] sm:$0xff] %vm2032, %v1989
      %2060 = vst.msk [vmem:[#allocation4 + $0x1b0] sm:$0xff] %vm2032, %v1991
      %2061 = vst.msk [vmem:[#allocation4 + $0x1c0] sm:$0xff] %vm2032, %v1993
      %2062 = vst.msk [vmem:[#allocation4 + $0x1d0] sm:$0xff] %vm2032, %v1995
      %2063 = vst.msk [vmem:[#allocation4 + $0x1e0] sm:$0xff] %vm2032, %v1997
      %2064 = vst.msk [vmem:[#allocation4 + $0x1f0] sm:$0xff] %vm2032, %v1999
      %v2065 = vld [vmem:[#allocation4] sm:$0xff]
      %v2066 = vld [vmem:[#allocation4 + $0x10] sm:$0xff]
      %v2067 = vld [vmem:[#allocation4 + $0x20] sm:$0xff]
      %v2068 = vld [vmem:[#allocation4 + $0x30] sm:$0xff]
      %v2069 = vld [vmem:[#allocation4 + $0x40] sm:$0xff]
      %v2070 = vld [vmem:[#allocation4 + $0x50] sm:$0xff]
      %v2071 = vld [vmem:[#allocation4 + $0x60] sm:$0xff]
      %v2072 = vld [vmem:[#allocation4 + $0x70] sm:$0xff]
      %v2073 = vld [vmem:[#allocation4 + $0x80] sm:$0xff]
      %v2074 = vld [vmem:[#allocation4 + $0x90] sm:$0xff]
      %v2075 = vld [vmem:[#allocation4 + $0xa0] sm:$0xff]
      %v2076 = vld [vmem:[#allocation4 + $0xb0] sm:$0xff]
      %v2077 = vld [vmem:[#allocation4 + $0xc0] sm:$0xff]
      %v2078 = vld [vmem:[#allocation4 + $0xd0] sm:$0xff]
      %v2079 = vld [vmem:[#allocation4 + $0xe0] sm:$0xff]
      %v2080 = vld [vmem:[#allocation4 + $0xf0] sm:$0xff]
      %v2081 = vld [vmem:[#allocation4 + $0x100] sm:$0xff]
      %v2082 = vld [vmem:[#allocation4 + $0x110] sm:$0xff]
      %v2083 = vld [vmem:[#allocation4 + $0x120] sm:$0xff]
      %v2084 = vld [vmem:[#allocation4 + $0x130] sm:$0xff]
      %v2085 = vld [vmem:[#allocation4 + $0x140] sm:$0xff]
      %v2086 = vld [vmem:[#allocation4 + $0x150] sm:$0xff]
      %v2087 = vld [vmem:[#allocation4 + $0x160] sm:$0xff]
      %v2088 = vld [vmem:[#allocation4 + $0x170] sm:$0xff]
      %v2089 = vld [vmem:[#allocation4 + $0x180] sm:$0xff]
      %v2090 = vld [vmem:[#allocation4 + $0x190] sm:$0xff]
      %v2091 = vld [vmem:[#allocation4 + $0x1a0] sm:$0xff]
      %v2092 = vld [vmem:[#allocation4 + $0x1b0] sm:$0xff]
      %v2093 = vld [vmem:[#allocation4 + $0x1c0] sm:$0xff]
      %v2094 = vld [vmem:[#allocation4 + $0x1d0] sm:$0xff]
      %v2095 = vld [vmem:[#allocation4 + $0x1e0] sm:$0xff]
      %v2096 = vld [vmem:[#allocation4 + $0x1f0] sm:$0xff]
      %v2097 = vpack.c.bf16 %v2066, %v2065
      %v2098 = vpack.c.bf16 %v2068, %v2067
      %v2099 = vpack.c.bf16 %v2070, %v2069
      %v2100 = vpack.c.bf16 %v2072, %v2071
      %v2101 = vpack.c.bf16 %v2074, %v2073
      %v2102 = vpack.c.bf16 %v2076, %v2075
      %v2103 = vpack.c.bf16 %v2078, %v2077
      %v2104 = vpack.c.bf16 %v2080, %v2079
      %v2105 = vpack.c.bf16 %v2082, %v2081
      %v2106 = vpack.c.bf16 %v2084, %v2083
      %v2107 = vpack.c.bf16 %v2086, %v2085
      %v2108 = vpack.c.bf16 %v2088, %v2087
      %v2109 = vpack.c.bf16 %v2090, %v2089
      %v2110 = vpack.c.bf16 %v2092, %v2091
      %v2111 = vpack.c.bf16 %v2094, %v2093
      %v2112 = vpack.c.bf16 %v2096, %v2095
      %v2113 = vld [vmem:[%s3] sm:$0xf]
      %v2114 = vld [vmem:[%s3 + $0x4] sm:$0xf]
      %v2115 = vld [vmem:[%s3 + $0x8] sm:$0xf]
      %v2116 = vld [vmem:[%s3 + $0xc] sm:$0x3]
      %v2117 = vld [vmem:[%s4] sm:$0x1]
      %v2119 = vlaneseq
      %v2120 = vshrl.u32 %v2119, 7
      %v2121 = vsub.s32 0, %v2120
      %v2122 = vrot.slane %v2117, %v2121
      %v2128 = vunpack.c.l.b16 %v2113
      %v2129 = vunpack.c.l.b16 %v2114
      %v2130 = vunpack.c.l.b16 %v2115
      %v2131 = vunpack.c.l.b16 %v2116
      %v2132 = vpack.c.b16 %v2129, %v2128
      %v2133 = vpack.c.b16 %v2131, %v2130
      %vm2135 = vcmask 220160
      %v2137 = vsel %vm2135, %v2097, 0
      %v2140 = vsel %vm2135, %v2098, 0
      %v2143 = vsel %vm2135, %v2099, 0
      %v2146 = vsel %vm2135, %v2100, 0
      %v2149 = vsel %vm2135, %v2101, 0
      %v2152 = vsel %vm2135, %v2102, 0
      %v2155 = vsel %vm2135, %v2103, 0
      %v2158 = vsel %vm2135, %v2104, 0
      %v2161 = vsel %vm2135, %v2105, 0
      %v2164 = vsel %vm2135, %v2106, 0
      %v2167 = vsel %vm2135, %v2107, 0
      %v2170 = vsel %vm2135, %v2108, 0
      %v2173 = vsel %vm2135, %v2109, 0
      %v2176 = vsel %vm2135, %v2110, 0
      %v2179 = vsel %vm2135, %v2111, 0
      %v2182 = vsel %vm2135, %v2112, 0
      %vm2184 = vcmask 1044480
      %vm2185 = vcmask 1045504
      %v2186 = vsel %vm2184, 4294967295, 65535
      %v2187 = vsel %vm2185, %v2186, 0
      %v2189 = vand.u32 %v2133, %v2187
      %2191 = vmatprep.subr.bf16.mxu0 0
      %2192 = vmatpush1.bf16.msra.mxu0 %v2132
      %2193 = vmatprep.subr.bf16.mxu0 0
      %2194 = vmatpush1.bf16.msra.mxu0 %v2189
      %2195 = vmatprep.subr.bf16.mxu0 0
      %2196 = vmatpush1.bf16.msra.mxu0 0
      %2197 = vmatprep.subr.bf16.mxu0 0
      %2198 = vmatpush1.bf16.msra.mxu0 0
      %2199 = vmatprep.subr.bf16.mxu0 0
      %2200 = vmatpush1.bf16.msra.mxu0 0
      %2201 = vmatprep.subr.bf16.mxu0 0
      %2202 = vmatpush1.bf16.msra.mxu0 0
      %2203 = vmatprep.subr.bf16.mxu0 0
      %2204 = vmatpush1.bf16.msra.mxu0 0
      %2205 = vmatprep.subr.bf16.mxu0 0
      %2206 = vmatpush1.bf16.msra.mxu0 0
      %2207 = vmatprep.subr.bf16.mxu0 0
      %2208 = vmatpush1.bf16.msra.mxu0 0
      %2209 = vmatprep.subr.bf16.mxu0 0
      %2210 = vmatpush1.bf16.msra.mxu0 0
      %2211 = vmatprep.subr.bf16.mxu0 0
      %2212 = vmatpush1.bf16.msra.mxu0 0
      %2213 = vmatprep.subr.bf16.mxu0 0
      %2214 = vmatpush1.bf16.msra.mxu0 0
      %2215 = vmatprep.subr.bf16.mxu0 0
      %2216 = vmatpush1.bf16.msra.mxu0 0
      %2217 = vmatprep.subr.bf16.mxu0 0
      %2218 = vmatpush1.bf16.msra.mxu0 0
      %2219 = vmatprep.subr.bf16.mxu0 0
      %2220 = vmatpush1.bf16.msra.mxu0 0
      %2221 = vmatprep.subr.bf16.mxu0 0
      %2222 = vmatpush1.bf16.msra.mxu0 0
      %2223 = vmatprep.mubr.bf16.mxu0 0
      %2224 = vmatmul.mubr.bf16.gmra.mrb[0].mxu0 %v2137
      %v2225 = vpop.f32.mrb[0].mxu0
      %v2226 = vadd.f32 %v2122, %v2225
      %v2227 = vpop.f32.mrb[0].mxu0
      %v2228 = vpop.f32.mrb[0].mxu0
      %v2229 = vadd.f32 %v2122, %v2228
      %v2230 = vpop.f32.mrb[0].mxu0
      %2231 = vmatprep.mubr.bf16.mxu0 0
      %2232 = vmatmul.mubr.bf16.gmra.mrb[0].mxu0 %v2140
      %v2233 = vpop.f32.mrb[0].mxu0
      %v2234 = vadd.f32 %v2122, %v2233
      %v2235 = vpop.f32.mrb[0].mxu0
      %v2236 = vpop.f32.mrb[0].mxu0
      %v2237 = vadd.f32 %v2122, %v2236
      %v2238 = vpop.f32.mrb[0].mxu0
      %2239 = vmatprep.mubr.bf16.mxu0 0
      %2240 = vmatmul.mubr.bf16.gmra.mrb[0].mxu0 %v2143
      %v2241 = vpop.f32.mrb[0].mxu0
      %v2242 = vadd.f32 %v2122, %v2241
      %v2243 = vpop.f32.mrb[0].mxu0
      %v2244 = vpop.f32.mrb[0].mxu0
      %v2245 = vadd.f32 %v2122, %v2244
      %v2246 = vpop.f32.mrb[0].mxu0
      %2247 = vmatprep.mubr.bf16.mxu0 0
      %2248 = vmatmul.mubr.bf16.gmra.mrb[0].mxu0 %v2146
      %v2249 = vpop.f32.mrb[0].mxu0
      %v2250 = vadd.f32 %v2122, %v2249
      %v2251 = vpop.f32.mrb[0].mxu0
      %v2252 = vpop.f32.mrb[0].mxu0
      %v2253 = vadd.f32 %v2122, %v2252
      %v2254 = vpop.f32.mrb[0].mxu0
      %2255 = vmatprep.mubr.bf16.mxu0 0
      %2256 = vmatmul.mubr.bf16.gmra.mrb[0].mxu0 %v2149
      %v2257 = vpop.f32.mrb[0].mxu0
      %v2258 = vadd.f32 %v2122, %v2257
      %v2259 = vpop.f32.mrb[0].mxu0
      %v2260 = vpop.f32.mrb[0].mxu0
      %v2261 = vadd.f32 %v2122, %v2260
      %v2262 = vpop.f32.mrb[0].mxu0
      %2263 = vmatprep.mubr.bf16.mxu0 0
      %2264 = vmatmul.mubr.bf16.gmra.mrb[0].mxu0 %v2152
      %v2265 = vpop.f32.mrb[0].mxu0
      %v2266 = vadd.f32 %v2122, %v2265
      %v2267 = vpop.f32.mrb[0].mxu0
      %v2268 = vpop.f32.mrb[0].mxu0
      %v2269 = vadd.f32 %v2122, %v2268
      %v2270 = vpop.f32.mrb[0].mxu0
      %2271 = vmatprep.mubr.bf16.mxu0 0
      %2272 = vmatmul.mubr.bf16.gmra.mrb[0].mxu0 %v2155
      %v2273 = vpop.f32.mrb[0].mxu0
      %v2274 = vadd.f32 %v2122, %v2273
      %v2275 = vpop.f32.mrb[0].mxu0
      %v2276 = vpop.f32.mrb[0].mxu0
      %v2277 = vadd.f32 %v2122, %v2276
      %v2278 = vpop.f32.mrb[0].mxu0
      %2279 = vmatprep.mubr.bf16.mxu0 0
      %2280 = vmatmul.mubr.bf16.gmra.mrb[0].mxu0 %v2158
      %v2281 = vpop.f32.mrb[0].mxu0
      %v2282 = vadd.f32 %v2122, %v2281
      %v2283 = vpop.f32.mrb[0].mxu0
      %v2284 = vpop.f32.mrb[0].mxu0
      %v2285 = vadd.f32 %v2122, %v2284
      %v2286 = vpop.f32.mrb[0].mxu0
      %2287 = vmatprep.mubr.bf16.mxu0 0
      %2288 = vmatmul.mubr.bf16.gmra.mrb[0].mxu0 %v2161
      %v2289 = vpop.f32.mrb[0].mxu0
      %v2290 = vadd.f32 %v2122, %v2289
      %v2291 = vpop.f32.mrb[0].mxu0
      %v2292 = vpop.f32.mrb[0].mxu0
      %v2293 = vadd.f32 %v2122, %v2292
      %v2294 = vpop.f32.mrb[0].mxu0
      %2295 = vmatprep.mubr.bf16.mxu0 0
      %2296 = vmatmul.mubr.bf16.gmra.mrb[0].mxu0 %v2164
      %v2297 = vpop.f32.mrb[0].mxu0
      %v2298 = vadd.f32 %v2122, %v2297
      %v2299 = vpop.f32.mrb[0].mxu0
      %v2300 = vpop.f32.mrb[0].mxu0
      %v2301 = vadd.f32 %v2122, %v2300
      %v2302 = vpop.f32.mrb[0].mxu0
      %2303 = vmatprep.mubr.bf16.mxu0 0
      %2304 = vmatmul.mubr.bf16.gmra.mrb[0].mxu0 %v2167
      %v2305 = vpop.f32.mrb[0].mxu0
      %v2306 = vadd.f32 %v2122, %v2305
      %v2307 = vpop.f32.mrb[0].mxu0
      %v2308 = vpop.f32.mrb[0].mxu0
      %v2309 = vadd.f32 %v2122, %v2308
      %v2310 = vpop.f32.mrb[0].mxu0
      %2311 = vmatprep.mubr.bf16.mxu0 0
      %2312 = vmatmul.mubr.bf16.gmra.mrb[0].mxu0 %v2170
      %v2313 = vpop.f32.mrb[0].mxu0
      %v2314 = vadd.f32 %v2122, %v2313
      %v2315 = vpop.f32.mrb[0].mxu0
      %v2316 = vpop.f32.mrb[0].mxu0
      %v2317 = vadd.f32 %v2122, %v2316
      %v2318 = vpop.f32.mrb[0].mxu0
      %2319 = vmatprep.mubr.bf16.mxu0 0
      %2320 = vmatmul.mubr.bf16.gmra.mrb[0].mxu0 %v2173
      %v2321 = vpop.f32.mrb[0].mxu0
      %v2322 = vadd.f32 %v2122, %v2321
      %v2323 = vpop.f32.mrb[0].mxu0
      %v2324 = vpop.f32.mrb[0].mxu0
      %v2325 = vadd.f32 %v2122, %v2324
      %v2326 = vpop.f32.mrb[0].mxu0
      %2327 = vmatprep.mubr.bf16.mxu0 0
      %2328 = vmatmul.mubr.bf16.gmra.mrb[0].mxu0 %v2176
      %v2329 = vpop.f32.mrb[0].mxu0
      %v2330 = vadd.f32 %v2122, %v2329
      %v2331 = vpop.f32.mrb[0].mxu0
      %v2332 = vpop.f32.mrb[0].mxu0
      %v2333 = vadd.f32 %v2122, %v2332
      %v2334 = vpop.f32.mrb[0].mxu0
      %2335 = vmatprep.mubr.bf16.mxu0 0
      %2336 = vmatmul.mubr.bf16.gmra.mrb[0].mxu0 %v2179
      %v2337 = vpop.f32.mrb[0].mxu0
      %v2338 = vadd.f32 %v2122, %v2337
      %v2339 = vpop.f32.mrb[0].mxu0
      %v2340 = vpop.f32.mrb[0].mxu0
      %v2341 = vadd.f32 %v2122, %v2340
      %v2342 = vpop.f32.mrb[0].mxu0
      %2343 = vmatprep.mubr.bf16.mxu0 0
      %2344 = vmatmul.mubr.bf16.gmra.mrb[0].mxu0 %v2182
      %v2345 = vpop.f32.mrb[0].mxu0
      %v2346 = vadd.f32 %v2122, %v2345
      %v2347 = vpop.f32.mrb[0].mxu0
      %v2348 = vpop.f32.mrb[0].mxu0
      %v2349 = vadd.f32 %v2122, %v2348
      %v2350 = vpop.f32.mrb[0].mxu0
      %2351 = vdwg.mxu0
      %v2352 = vmax.f32 %v2226, 0.0
      %v2353 = vmax.f32 %v2229, 0.0
      %v2354 = vmax.f32 %v2234, 0.0
      %v2355 = vmax.f32 %v2237, 0.0
      %v2356 = vmax.f32 %v2242, 0.0
      %v2357 = vmax.f32 %v2245, 0.0
      %v2358 = vmax.f32 %v2250, 0.0
      %v2359 = vmax.f32 %v2253, 0.0
      %v2360 = vmax.f32 %v2258, 0.0
      %v2361 = vmax.f32 %v2261, 0.0
      %v2362 = vmax.f32 %v2266, 0.0
      %v2363 = vmax.f32 %v2269, 0.0
      %v2364 = vmax.f32 %v2274, 0.0
      %v2365 = vmax.f32 %v2277, 0.0
      %v2366 = vmax.f32 %v2282, 0.0
      %v2367 = vmax.f32 %v2285, 0.0
      %v2368 = vmax.f32 %v2290, 0.0
      %v2369 = vmax.f32 %v2293, 0.0
      %v2370 = vmax.f32 %v2298, 0.0
      %v2371 = vmax.f32 %v2301, 0.0
      %v2372 = vmax.f32 %v2306, 0.0
      %v2373 = vmax.f32 %v2309, 0.0
      %v2374 = vmax.f32 %v2314, 0.0
      %v2375 = vmax.f32 %v2317, 0.0
      %v2376 = vmax.f32 %v2322, 0.0
      %v2377 = vmax.f32 %v2325, 0.0
      %v2378 = vmax.f32 %v2330, 0.0
      %v2379 = vmax.f32 %v2333, 0.0
      %v2380 = vmax.f32 %v2338, 0.0
      %v2381 = vmax.f32 %v2341, 0.0
      %v2382 = vmax.f32 %v2346, 0.0
      %v2383 = vmax.f32 %v2349, 0.0
      %vm2384 = vcmask 130048
      %2385 = vst.msk [vmem:[#allocation3] sm:$0xff] %vm2384, 0.0
      %2386 = vst.msk [vmem:[#allocation3 + $0x8] sm:$0xff] %vm2384, 0.0
      %vm2387 = vcmask 123904
      %2388 = vst.msk [vmem:[#allocation3 + $0x10] sm:$0x3] %vm2387, 0.0
      %2389 = vst.msk [vmem:[#allocation3 + $0x18] sm:$0xff] %vm2384, 0.0
      %2390 = vst.msk [vmem:[#allocation3 + $0x20] sm:$0xff] %vm2384, 0.0
      %2391 = vst.msk [vmem:[#allocation3 + $0x28] sm:$0x3] %vm2387, 0.0
      %2392 = vst.msk [vmem:[#allocation3 + $0x30] sm:$0xff] %vm2384, 0.0
      %2393 = vst.msk [vmem:[#allocation3 + $0x38] sm:$0xff] %vm2384, 0.0
      %2394 = vst.msk [vmem:[#allocation3 + $0x40] sm:$0x3] %vm2387, 0.0
      %2395 = vst.msk [vmem:[#allocation3 + $0x48] sm:$0xff] %vm2384, 0.0
      %2396 = vst.msk [vmem:[#allocation3 + $0x50] sm:$0xff] %vm2384, 0.0
      %2397 = vst.msk [vmem:[#allocation3 + $0x58] sm:$0x3] %vm2387, 0.0
      %2398 = vst.msk [vmem:[#allocation3 + $0x60] sm:$0xff] %vm2384, 0.0
      %2399 = vst.msk [vmem:[#allocation3 + $0x68] sm:$0xff] %vm2384, 0.0
      %2400 = vst.msk [vmem:[#allocation3 + $0x70] sm:$0x3] %vm2387, 0.0
      %2401 = vst.msk [vmem:[#allocation3 + $0x78] sm:$0xff] %vm2384, 0.0
      %2402 = vst.msk [vmem:[#allocation3 + $0x80] sm:$0xff] %vm2384, 0.0
      %2403 = vst.msk [vmem:[#allocation3 + $0x88] sm:$0x3] %vm2387, 0.0
      %2404 = vst.msk [vmem:[#allocation3 + $0x90] sm:$0xff] %vm2384, 0.0
      %2405 = vst.msk [vmem:[#allocation3 + $0x98] sm:$0xff] %vm2384, 0.0
      %2406 = vst.msk [vmem:[#allocation3 + $0xa0] sm:$0x3] %vm2387, 0.0
      %2407 = vst.msk [vmem:[#allocation3 + $0xa8] sm:$0xff] %vm2384, 0.0
      %2408 = vst.msk [vmem:[#allocation3 + $0xb0] sm:$0xff] %vm2384, 0.0
      %2409 = vst.msk [vmem:[#allocation3 + $0xb8] sm:$0x3] %vm2387, 0.0
      %2410 = vst.msk [vmem:[#allocation3 + $0xc0] sm:$0xff] %vm2384, 0.0
      %2411 = vst.msk [vmem:[#allocation3 + $0xc8] sm:$0xff] %vm2384, 0.0
      %2412 = vst.msk [vmem:[#allocation3 + $0xd0] sm:$0x3] %vm2387, 0.0
      %2413 = vst.msk [vmem:[#allocation3 + $0xd8] sm:$0xff] %vm2384, 0.0
      %2414 = vst.msk [vmem:[#allocation3 + $0xe0] sm:$0xff] %vm2384, 0.0
      %2415 = vst.msk [vmem:[#allocation3 + $0xe8] sm:$0x3] %vm2387, 0.0
      %2416 = vst.msk [vmem:[#allocation3 + $0xf0] sm:$0xff] %vm2384, 0.0
      %2417 = vst.msk [vmem:[#allocation3 + $0xf8] sm:$0xff] %vm2384, 0.0
      %2418 = vst.msk [vmem:[#allocation3 + $0x100] sm:$0x3] %vm2387, 0.0
      %2419 = vst.msk [vmem:[#allocation3 + $0x108] sm:$0xff] %vm2384, 0.0
      %2420 = vst.msk [vmem:[#allocation3 + $0x110] sm:$0xff] %vm2384, 0.0
      %2421 = vst.msk [vmem:[#allocation3 + $0x118] sm:$0x3] %vm2387, 0.0
      %2422 = vst.msk [vmem:[#allocation3 + $0x120] sm:$0xff] %vm2384, 0.0
      %2423 = vst.msk [vmem:[#allocation3 + $0x128] sm:$0xff] %vm2384, 0.0
      %2424 = vst.msk [vmem:[#allocation3 + $0x130] sm:$0x3] %vm2387, 0.0
      %2425 = vst.msk [vmem:[#allocation3 + $0x138] sm:$0xff] %vm2384, 0.0
      %2426 = vst.msk [vmem:[#allocation3 + $0x140] sm:$0xff] %vm2384, 0.0
      %2427 = vst.msk [vmem:[#allocation3 + $0x148] sm:$0x3] %vm2387, 0.0
      %2428 = vst.msk [vmem:[#allocation3 + $0x150] sm:$0xff] %vm2384, 0.0
      %2429 = vst.msk [vmem:[#allocation3 + $0x158] sm:$0xff] %vm2384, 0.0
      %2430 = vst.msk [vmem:[#allocation3 + $0x160] sm:$0x3] %vm2387, 0.0
      %2431 = vst.msk [vmem:[#allocation3 + $0x168] sm:$0xff] %vm2384, 0.0
      %2432 = vst.msk [vmem:[#allocation3 + $0x170] sm:$0xff] %vm2384, 0.0
      %2433 = vst.msk [vmem:[#allocation3 + $0x178] sm:$0x3] %vm2387, 0.0
      %2434 = vst.msk [vmem:[#allocation3 + $0x180] sm:$0xff] %vm2384, 0.0
      %2435 = vst.msk [vmem:[#allocation3 + $0x188] sm:$0xff] %vm2384, 0.0
      %2436 = vst.msk [vmem:[#allocation3 + $0x190] sm:$0x3] %vm2387, 0.0
      %2437 = vst.msk [vmem:[#allocation3 + $0x198] sm:$0xff] %vm2384, 0.0
      %2438 = vst.msk [vmem:[#allocation3 + $0x1a0] sm:$0xff] %vm2384, 0.0
      %2439 = vst.msk [vmem:[#allocation3 + $0x1a8] sm:$0x3] %vm2387, 0.0
      %s2440 = scalar_lea.vmem [#allocation3], 24
      %2441 = vst.msk [vmem:[%s2440 + $0x1] sm:$0xff] %vm2384, %v2352
      %2442 = vst.msk [vmem:[%s2440 + $0x9] sm:$0xff] %vm2384, %v2353
      %2443 = vst.msk [vmem:[%s2440 + $0x19] sm:$0xff] %vm2384, %v2354
      %2444 = vst.msk [vmem:[%s2440 + $0x21] sm:$0xff] %vm2384, %v2355
      %2445 = vst.msk [vmem:[%s2440 + $0x31] sm:$0xff] %vm2384, %v2356
      %2446 = vst.msk [vmem:[%s2440 + $0x39] sm:$0xff] %vm2384, %v2357
      %2447 = vst.msk [vmem:[%s2440 + $0x49] sm:$0xff] %vm2384, %v2358
      %2448 = vst.msk [vmem:[%s2440 + $0x51] sm:$0xff] %vm2384, %v2359
      %2449 = vst.msk [vmem:[%s2440 + $0x61] sm:$0xff] %vm2384, %v2360
      %2450 = vst.msk [vmem:[%s2440 + $0x69] sm:$0xff] %vm2384, %v2361
      %2451 = vst.msk [vmem:[%s2440 + $0x79] sm:$0xff] %vm2384, %v2362
      %2452 = vst.msk [vmem:[%s2440 + $0x81] sm:$0xff] %vm2384, %v2363
      %2453 = vst.msk [vmem:[%s2440 + $0x91] sm:$0xff] %vm2384, %v2364
      %2454 = vst.msk [vmem:[%s2440 + $0x99] sm:$0xff] %vm2384, %v2365
      %2455 = vst.msk [vmem:[%s2440 + $0xa9] sm:$0xff] %vm2384, %v2366
      %2456 = vst.msk [vmem:[%s2440 + $0xb1] sm:$0xff] %vm2384, %v2367
      %2457 = vst.msk [vmem:[%s2440 + $0xc1] sm:$0xff] %vm2384, %v2368
      %2458 = vst.msk [vmem:[%s2440 + $0xc9] sm:$0xff] %vm2384, %v2369
      %2459 = vst.msk [vmem:[%s2440 + $0xd9] sm:$0xff] %vm2384, %v2370
      %2460 = vst.msk [vmem:[%s2440 + $0xe1] sm:$0xff] %vm2384, %v2371
      %2461 = vst.msk [vmem:[%s2440 + $0xf1] sm:$0xff] %vm2384, %v2372
      %2462 = vst.msk [vmem:[%s2440 + $0xf9] sm:$0xff] %vm2384, %v2373
      %2463 = vst.msk [vmem:[%s2440 + $0x109] sm:$0xff] %vm2384, %v2374
      %2464 = vst.msk [vmem:[%s2440 + $0x111] sm:$0xff] %vm2384, %v2375
      %2465 = vst.msk [vmem:[%s2440 + $0x121] sm:$0xff] %vm2384, %v2376
      %2466 = vst.msk [vmem:[%s2440 + $0x129] sm:$0xff] %vm2384, %v2377
      %2467 = vst.msk [vmem:[%s2440 + $0x139] sm:$0xff] %vm2384, %v2378
      %2468 = vst.msk [vmem:[%s2440 + $0x141] sm:$0xff] %vm2384, %v2379
      %2469 = vst.msk [vmem:[%s2440 + $0x151] sm:$0xff] %vm2384, %v2380
      %2470 = vst.msk [vmem:[%s2440 + $0x159] sm:$0xff] %vm2384, %v2381
      %2471 = vst.msk [vmem:[%s2440 + $0x169] sm:$0xff] %vm2384, %v2382
      %2472 = vst.msk [vmem:[%s2440 + $0x171] sm:$0xff] %vm2384, %v2383
      %v2473 = vld [vmem:[#allocation3] sm:$0xff]
      %v2474 = vld [vmem:[#allocation3 + $0x8] sm:$0xff]
      %v2475 = vld [vmem:[#allocation3 + $0x18] sm:$0xff]
      %v2476 = vld [vmem:[#allocation3 + $0x20] sm:$0xff]
      %v2477 = vld [vmem:[#allocation3 + $0x30] sm:$0xff]
      %v2478 = vld [vmem:[#allocation3 + $0x38] sm:$0xff]
      %v2479 = vld [vmem:[#allocation3 + $0x48] sm:$0xff]
      %v2480 = vld [vmem:[#allocation3 + $0x50] sm:$0xff]
      %v2481 = vld [vmem:[#allocation3 + $0x60] sm:$0xff]
      %v2482 = vld [vmem:[#allocation3 + $0x68] sm:$0xff]
      %v2483 = vld [vmem:[#allocation3 + $0x78] sm:$0xff]
      %v2484 = vld [vmem:[#allocation3 + $0x80] sm:$0xff]
      %v2485 = vld [vmem:[#allocation3 + $0x90] sm:$0xff]
      %v2486 = vld [vmem:[#allocation3 + $0x98] sm:$0xff]
      %v2487 = vld [vmem:[#allocation3 + $0xa8] sm:$0xff]
      %v2488 = vld [vmem:[#allocation3 + $0xb0] sm:$0xff]
      %v2489 = vld [vmem:[#allocation3 + $0xc0] sm:$0xff]
      %v2490 = vld [vmem:[#allocation3 + $0xc8] sm:$0xff]
      %v2491 = vld [vmem:[#allocation3 + $0xd8] sm:$0xff]
      %v2492 = vld [vmem:[#allocation3 + $0xe0] sm:$0xff]
      %v2493 = vld [vmem:[#allocation3 + $0xf0] sm:$0xff]
      %v2494 = vld [vmem:[#allocation3 + $0xf8] sm:$0xff]
      %v2495 = vld [vmem:[#allocation3 + $0x108] sm:$0xff]
      %v2496 = vld [vmem:[#allocation3 + $0x110] sm:$0xff]
      %v2497 = vld [vmem:[#allocation3 + $0x120] sm:$0xff]
      %v2498 = vld [vmem:[#allocation3 + $0x128] sm:$0xff]
      %v2499 = vld [vmem:[#allocation3 + $0x138] sm:$0xff]
      %v2500 = vld [vmem:[#allocation3 + $0x140] sm:$0xff]
      %v2501 = vld [vmem:[#allocation3 + $0x150] sm:$0xff]
      %v2502 = vld [vmem:[#allocation3 + $0x158] sm:$0xff]
      %v2503 = vld [vmem:[#allocation3 + $0x168] sm:$0xff]
      %v2504 = vld [vmem:[#allocation3 + $0x170] sm:$0xff]
      %2505 = vst.msk [vmem:[#allocation4] sm:$0xff] %vm2384, %v2473
      %2506 = vst.msk [vmem:[#allocation4 + $0x10] sm:$0xff] %vm2384, %v2474
      %2507 = vst.msk [vmem:[#allocation4 + $0x20] sm:$0xff] %vm2384, %v2475
      %2508 = vst.msk [vmem:[#allocation4 + $0x30] sm:$0xff] %vm2384, %v2476
      %2509 = vst.msk [vmem:[#allocation4 + $0x40] sm:$0xff] %vm2384, %v2477
      %2510 = vst.msk [vmem:[#allocation4 + $0x50] sm:$0xff] %vm2384, %v2478
      %2511 = vst.msk [vmem:[#allocation4 + $0x60] sm:$0xff] %vm2384, %v2479
      %2512 = vst.msk [vmem:[#allocation4 + $0x70] sm:$0xff] %vm2384, %v2480
      %2513 = vst.msk [vmem:[#allocation4 + $0x80] sm:$0xff] %vm2384, %v2481
      %2514 = vst.msk [vmem:[#allocation4 + $0x90] sm:$0xff] %vm2384, %v2482
      %2515 = vst.msk [vmem:[#allocation4 + $0xa0] sm:$0xff] %vm2384, %v2483
      %2516 = vst.msk [vmem:[#allocation4 + $0xb0] sm:$0xff] %vm2384, %v2484
      %2517 = vst.msk [vmem:[#allocation4 + $0xc0] sm:$0xff] %vm2384, %v2485
      %2518 = vst.msk [vmem:[#allocation4 + $0xd0] sm:$0xff] %vm2384, %v2486
      %2519 = vst.msk [vmem:[#allocation4 + $0xe0] sm:$0xff] %vm2384, %v2487
      %2520 = vst.msk [vmem:[#allocation4 + $0xf0] sm:$0xff] %vm2384, %v2488
      %2521 = vst.msk [vmem:[#allocation4 + $0x100] sm:$0xff] %vm2384, %v2489
      %2522 = vst.msk [vmem:[#allocation4 + $0x110] sm:$0xff] %vm2384, %v2490
      %2523 = vst.msk [vmem:[#allocation4 + $0x120] sm:$0xff] %vm2384, %v2491
      %2524 = vst.msk [vmem:[#allocation4 + $0x130] sm:$0xff] %vm2384, %v2492
      %2525 = vst.msk [vmem:[#allocation4 + $0x140] sm:$0xff] %vm2384, %v2493
      %2526 = vst.msk [vmem:[#allocation4 + $0x150] sm:$0xff] %vm2384, %v2494
      %2527 = vst.msk [vmem:[#allocation4 + $0x160] sm:$0xff] %vm2384, %v2495
      %2528 = vst.msk [vmem:[#allocation4 + $0x170] sm:$0xff] %vm2384, %v2496
      %2529 = vst.msk [vmem:[#allocation4 + $0x180] sm:$0xff] %vm2384, %v2497
      %2530 = vst.msk [vmem:[#allocation4 + $0x190] sm:$0xff] %vm2384, %v2498
      %2531 = vst.msk [vmem:[#allocation4 + $0x1a0] sm:$0xff] %vm2384, %v2499
      %2532 = vst.msk [vmem:[#allocation4 + $0x1b0] sm:$0xff] %vm2384, %v2500
      %2533 = vst.msk [vmem:[#allocation4 + $0x1c0] sm:$0xff] %vm2384, %v2501
      %2534 = vst.msk [vmem:[#allocation4 + $0x1d0] sm:$0xff] %vm2384, %v2502
      %2535 = vst.msk [vmem:[#allocation4 + $0x1e0] sm:$0xff] %vm2384, %v2503
      %2536 = vst.msk [vmem:[#allocation4 + $0x1f0] sm:$0xff] %vm2384, %v2504
      %v2537 = vld [vmem:[#allocation3 + $0x1] sm:$0xff]
      %v2538 = vld [vmem:[#allocation3 + $0x9] sm:$0xff]
      %v2539 = vld [vmem:[#allocation3 + $0x19] sm:$0xff]
      %v2540 = vld [vmem:[#allocation3 + $0x21] sm:$0xff]
      %v2541 = vld [vmem:[#allocation3 + $0x31] sm:$0xff]
      %v2542 = vld [vmem:[#allocation3 + $0x39] sm:$0xff]
      %v2543 = vld [vmem:[#allocation3 + $0x49] sm:$0xff]
      %v2544 = vld [vmem:[#allocation3 + $0x51] sm:$0xff]
      %v2545 = vld [vmem:[#allocation3 + $0x61] sm:$0xff]
      %v2546 = vld [vmem:[#allocation3 + $0x69] sm:$0xff]
      %v2547 = vld [vmem:[#allocation3 + $0x79] sm:$0xff]
      %v2548 = vld [vmem:[#allocation3 + $0x81] sm:$0xff]
      %v2549 = vld [vmem:[#allocation3 + $0x91] sm:$0xff]
      %v2550 = vld [vmem:[#allocation3 + $0x99] sm:$0xff]
      %v2551 = vld [vmem:[#allocation3 + $0xa9] sm:$0xff]
      %v2552 = vld [vmem:[#allocation3 + $0xb1] sm:$0xff]
      %v2553 = vld [vmem:[#allocation3 + $0xc1] sm:$0xff]
      %v2554 = vld [vmem:[#allocation3 + $0xc9] sm:$0xff]
      %v2555 = vld [vmem:[#allocation3 + $0xd9] sm:$0xff]
      %v2556 = vld [vmem:[#allocation3 + $0xe1] sm:$0xff]
      %v2557 = vld [vmem:[#allocation3 + $0xf1] sm:$0xff]
      %v2558 = vld [vmem:[#allocation3 + $0xf9] sm:$0xff]
      %v2559 = vld [vmem:[#allocation3 + $0x109] sm:$0xff]
      %v2560 = vld [vmem:[#allocation3 + $0x111] sm:$0xff]
      %v2561 = vld [vmem:[#allocation3 + $0x121] sm:$0xff]
      %v2562 = vld [vmem:[#allocation3 + $0x129] sm:$0xff]
      %v2563 = vld [vmem:[#allocation3 + $0x139] sm:$0xff]
      %v2564 = vld [vmem:[#allocation3 + $0x141] sm:$0xff]
      %v2565 = vld [vmem:[#allocation3 + $0x151] sm:$0xff]
      %v2566 = vld [vmem:[#allocation3 + $0x159] sm:$0xff]
      %v2567 = vld [vmem:[#allocation3 + $0x169] sm:$0xff]
      %v2568 = vld [vmem:[#allocation3 + $0x171] sm:$0xff]
      %2601 = vrot.lane.b32.xlu0 %v2537, 16
      %v2602 = vpop.permute.xlu0 %2601
      %2603 = vrot.lane.b32.xlu0 %v2538, 16
      %v2604 = vpop.permute.xlu0 %2603
      %2605 = vrot.lane.b32.xlu0 %v2539, 16
      %v2606 = vpop.permute.xlu0 %2605
      %2607 = vrot.lane.b32.xlu0 %v2540, 16
      %v2608 = vpop.permute.xlu0 %2607
      %2609 = vrot.lane.b32.xlu0 %v2541, 16
      %v2610 = vpop.permute.xlu0 %2609
      %2611 = vrot.lane.b32.xlu0 %v2542, 16
      %v2612 = vpop.permute.xlu0 %2611
      %2613 = vrot.lane.b32.xlu0 %v2543, 16
      %v2614 = vpop.permute.xlu0 %2613
      %2615 = vrot.lane.b32.xlu0 %v2544, 16
      %v2616 = vpop.permute.xlu0 %2615
      %2617 = vrot.lane.b32.xlu0 %v2545, 16
      %v2618 = vpop.permute.xlu0 %2617
      %2619 = vrot.lane.b32.xlu0 %v2546, 16
      %v2620 = vpop.permute.xlu0 %2619
      %2621 = vrot.lane.b32.xlu0 %v2547, 16
      %v2622 = vpop.permute.xlu0 %2621
      %2623 = vrot.lane.b32.xlu0 %v2548, 16
      %v2624 = vpop.permute.xlu0 %2623
      %2625 = vrot.lane.b32.xlu0 %v2549, 16
      %v2626 = vpop.permute.xlu0 %2625
      %2627 = vrot.lane.b32.xlu0 %v2550, 16
      %v2628 = vpop.permute.xlu0 %2627
      %2629 = vrot.lane.b32.xlu0 %v2551, 16
      %v2630 = vpop.permute.xlu0 %2629
      %2631 = vrot.lane.b32.xlu0 %v2552, 16
      %v2632 = vpop.permute.xlu0 %2631
      %2633 = vrot.lane.b32.xlu0 %v2553, 16
      %v2634 = vpop.permute.xlu0 %2633
      %2635 = vrot.lane.b32.xlu0 %v2554, 16
      %v2636 = vpop.permute.xlu0 %2635
      %2637 = vrot.lane.b32.xlu0 %v2555, 16
      %v2638 = vpop.permute.xlu0 %2637
      %2639 = vrot.lane.b32.xlu0 %v2556, 16
      %v2640 = vpop.permute.xlu0 %2639
      %2641 = vrot.lane.b32.xlu0 %v2557, 16
      %v2642 = vpop.permute.xlu0 %2641
      %2643 = vrot.lane.b32.xlu0 %v2558, 16
      %v2644 = vpop.permute.xlu0 %2643
      %2645 = vrot.lane.b32.xlu0 %v2559, 16
      %v2646 = vpop.permute.xlu0 %2645
      %2647 = vrot.lane.b32.xlu0 %v2560, 16
      %v2648 = vpop.permute.xlu0 %2647
      %2649 = vrot.lane.b32.xlu0 %v2561, 16
      %v2650 = vpop.permute.xlu0 %2649
      %2651 = vrot.lane.b32.xlu0 %v2562, 16
      %v2652 = vpop.permute.xlu0 %2651
      %2653 = vrot.lane.b32.xlu0 %v2563, 16
      %v2654 = vpop.permute.xlu0 %2653
      %2655 = vrot.lane.b32.xlu0 %v2564, 16
      %v2656 = vpop.permute.xlu0 %2655
      %2657 = vrot.lane.b32.xlu0 %v2565, 16
      %v2658 = vpop.permute.xlu0 %2657
      %2659 = vrot.lane.b32.xlu0 %v2566, 16
      %v2660 = vpop.permute.xlu0 %2659
      %2661 = vrot.lane.b32.xlu0 %v2567, 16
      %v2662 = vpop.permute.xlu0 %2661
      %2663 = vrot.lane.b32.xlu0 %v2568, 16
      %v2664 = vpop.permute.xlu0 %2663
      %vm2697 = vcmask 261248
      %2698 = vst.msk [vmem:[#allocation4] sm:$0xff] %vm2697, %v2602
      %2699 = vst.msk [vmem:[#allocation4 + $0x10] sm:$0xff] %vm2697, %v2604
      %2700 = vst.msk [vmem:[#allocation4 + $0x20] sm:$0xff] %vm2697, %v2606
      %2701 = vst.msk [vmem:[#allocation4 + $0x30] sm:$0xff] %vm2697, %v2608
      %2702 = vst.msk [vmem:[#allocation4 + $0x40] sm:$0xff] %vm2697, %v2610
      %2703 = vst.msk [vmem:[#allocation4 + $0x50] sm:$0xff] %vm2697, %v2612
      %2704 = vst.msk [vmem:[#allocation4 + $0x60] sm:$0xff] %vm2697, %v2614
      %2705 = vst.msk [vmem:[#allocation4 + $0x70] sm:$0xff] %vm2697, %v2616
      %2706 = vst.msk [vmem:[#allocation4 + $0x80] sm:$0xff] %vm2697, %v2618
      %2707 = vst.msk [vmem:[#allocation4 + $0x90] sm:$0xff] %vm2697, %v2620
      %2708 = vst.msk [vmem:[#allocation4 + $0xa0] sm:$0xff] %vm2697, %v2622
      %2709 = vst.msk [vmem:[#allocation4 + $0xb0] sm:$0xff] %vm2697, %v2624
      %2710 = vst.msk [vmem:[#allocation4 + $0xc0] sm:$0xff] %vm2697, %v2626
      %2711 = vst.msk [vmem:[#allocation4 + $0xd0] sm:$0xff] %vm2697, %v2628
      %2712 = vst.msk [vmem:[#allocation4 + $0xe0] sm:$0xff] %vm2697, %v2630
      %2713 = vst.msk [vmem:[#allocation4 + $0xf0] sm:$0xff] %vm2697, %v2632
      %2714 = vst.msk [vmem:[#allocation4 + $0x100] sm:$0xff] %vm2697, %v2634
      %2715 = vst.msk [vmem:[#allocation4 + $0x110] sm:$0xff] %vm2697, %v2636
      %2716 = vst.msk [vmem:[#allocation4 + $0x120] sm:$0xff] %vm2697, %v2638
      %2717 = vst.msk [vmem:[#allocation4 + $0x130] sm:$0xff] %vm2697, %v2640
      %2718 = vst.msk [vmem:[#allocation4 + $0x140] sm:$0xff] %vm2697, %v2642
      %2719 = vst.msk [vmem:[#allocation4 + $0x150] sm:$0xff] %vm2697, %v2644
      %2720 = vst.msk [vmem:[#allocation4 + $0x160] sm:$0xff] %vm2697, %v2646
      %2721 = vst.msk [vmem:[#allocation4 + $0x170] sm:$0xff] %vm2697, %v2648
      %2722 = vst.msk [vmem:[#allocation4 + $0x180] sm:$0xff] %vm2697, %v2650
      %2723 = vst.msk [vmem:[#allocation4 + $0x190] sm:$0xff] %vm2697, %v2652
      %2724 = vst.msk [vmem:[#allocation4 + $0x1a0] sm:$0xff] %vm2697, %v2654
      %2725 = vst.msk [vmem:[#allocation4 + $0x1b0] sm:$0xff] %vm2697, %v2656
      %2726 = vst.msk [vmem:[#allocation4 + $0x1c0] sm:$0xff] %vm2697, %v2658
      %2727 = vst.msk [vmem:[#allocation4 + $0x1d0] sm:$0xff] %vm2697, %v2660
      %2728 = vst.msk [vmem:[#allocation4 + $0x1e0] sm:$0xff] %vm2697, %v2662
      %2729 = vst.msk [vmem:[#allocation4 + $0x1f0] sm:$0xff] %vm2697, %v2664
      %v2730 = vld [vmem:[#allocation3 + $0x2] sm:$0xff]
      %v2731 = vld [vmem:[#allocation3 + $0xa] sm:$0xff]
      %v2732 = vld [vmem:[#allocation3 + $0x1a] sm:$0xff]
      %v2733 = vld [vmem:[#allocation3 + $0x22] sm:$0xff]
      %v2734 = vld [vmem:[#allocation3 + $0x32] sm:$0xff]
      %v2735 = vld [vmem:[#allocation3 + $0x3a] sm:$0xff]
      %v2736 = vld [vmem:[#allocation3 + $0x4a] sm:$0xff]
      %v2737 = vld [vmem:[#allocation3 + $0x52] sm:$0xff]
      %v2738 = vld [vmem:[#allocation3 + $0x62] sm:$0xff]
      %v2739 = vld [vmem:[#allocation3 + $0x6a] sm:$0xff]
      %v2740 = vld [vmem:[#allocation3 + $0x7a] sm:$0xff]
      %v2741 = vld [vmem:[#allocation3 + $0x82] sm:$0xff]
      %v2742 = vld [vmem:[#allocation3 + $0x92] sm:$0xff]
      %v2743 = vld [vmem:[#allocation3 + $0x9a] sm:$0xff]
      %v2744 = vld [vmem:[#allocation3 + $0xaa] sm:$0xff]
      %v2745 = vld [vmem:[#allocation3 + $0xb2] sm:$0xff]
      %v2746 = vld [vmem:[#allocation3 + $0xc2] sm:$0xff]
      %v2747 = vld [vmem:[#allocation3 + $0xca] sm:$0xff]
      %v2748 = vld [vmem:[#allocation3 + $0xda] sm:$0xff]
      %v2749 = vld [vmem:[#allocation3 + $0xe2] sm:$0xff]
      %v2750 = vld [vmem:[#allocation3 + $0xf2] sm:$0xff]
      %v2751 = vld [vmem:[#allocation3 + $0xfa] sm:$0xff]
      %v2752 = vld [vmem:[#allocation3 + $0x10a] sm:$0xff]
      %v2753 = vld [vmem:[#allocation3 + $0x112] sm:$0xff]
      %v2754 = vld [vmem:[#allocation3 + $0x122] sm:$0xff]
      %v2755 = vld [vmem:[#allocation3 + $0x12a] sm:$0xff]
      %v2756 = vld [vmem:[#allocation3 + $0x13a] sm:$0xff]
      %v2757 = vld [vmem:[#allocation3 + $0x142] sm:$0xff]
      %v2758 = vld [vmem:[#allocation3 + $0x152] sm:$0xff]
      %v2759 = vld [vmem:[#allocation3 + $0x15a] sm:$0xff]
      %v2760 = vld [vmem:[#allocation3 + $0x16a] sm:$0xff]
      %v2761 = vld [vmem:[#allocation3 + $0x172] sm:$0xff]
      %2794 = vrot.lane.b32.xlu0 %v2730, 32
      %v2795 = vpop.permute.xlu0 %2794
      %2796 = vrot.lane.b32.xlu0 %v2731, 32
      %v2797 = vpop.permute.xlu0 %2796
      %2798 = vrot.lane.b32.xlu0 %v2732, 32
      %v2799 = vpop.permute.xlu0 %2798
      %2800 = vrot.lane.b32.xlu0 %v2733, 32
      %v2801 = vpop.permute.xlu0 %2800
      %2802 = vrot.lane.b32.xlu0 %v2734, 32
      %v2803 = vpop.permute.xlu0 %2802
      %2804 = vrot.lane.b32.xlu0 %v2735, 32
      %v2805 = vpop.permute.xlu0 %2804
      %2806 = vrot.lane.b32.xlu0 %v2736, 32
      %v2807 = vpop.permute.xlu0 %2806
      %2808 = vrot.lane.b32.xlu0 %v2737, 32
      %v2809 = vpop.permute.xlu0 %2808
      %2810 = vrot.lane.b32.xlu0 %v2738, 32
      %v2811 = vpop.permute.xlu0 %2810
      %2812 = vrot.lane.b32.xlu0 %v2739, 32
      %v2813 = vpop.permute.xlu0 %2812
      %2814 = vrot.lane.b32.xlu0 %v2740, 32
      %v2815 = vpop.permute.xlu0 %2814
      %2816 = vrot.lane.b32.xlu0 %v2741, 32
      %v2817 = vpop.permute.xlu0 %2816
      %2818 = vrot.lane.b32.xlu0 %v2742, 32
      %v2819 = vpop.permute.xlu0 %2818
      %2820 = vrot.lane.b32.xlu0 %v2743, 32
      %v2821 = vpop.permute.xlu0 %2820
      %2822 = vrot.lane.b32.xlu0 %v2744, 32
      %v2823 = vpop.permute.xlu0 %2822
      %2824 = vrot.lane.b32.xlu0 %v2745, 32
      %v2825 = vpop.permute.xlu0 %2824
      %2826 = vrot.lane.b32.xlu0 %v2746, 32
      %v2827 = vpop.permute.xlu0 %2826
      %2828 = vrot.lane.b32.xlu0 %v2747, 32
      %v2829 = vpop.permute.xlu0 %2828
      %2830 = vrot.lane.b32.xlu0 %v2748, 32
      %v2831 = vpop.permute.xlu0 %2830
      %2832 = vrot.lane.b32.xlu0 %v2749, 32
      %v2833 = vpop.permute.xlu0 %2832
      %2834 = vrot.lane.b32.xlu0 %v2750, 32
      %v2835 = vpop.permute.xlu0 %2834
      %2836 = vrot.lane.b32.xlu0 %v2751, 32
      %v2837 = vpop.permute.xlu0 %2836
      %2838 = vrot.lane.b32.xlu0 %v2752, 32
      %v2839 = vpop.permute.xlu0 %2838
      %2840 = vrot.lane.b32.xlu0 %v2753, 32
      %v2841 = vpop.permute.xlu0 %2840
      %2842 = vrot.lane.b32.xlu0 %v2754, 32
      %v2843 = vpop.permute.xlu0 %2842
      %2844 = vrot.lane.b32.xlu0 %v2755, 32
      %v2845 = vpop.permute.xlu0 %2844
      %2846 = vrot.lane.b32.xlu0 %v2756, 32
      %v2847 = vpop.permute.xlu0 %2846
      %2848 = vrot.lane.b32.xlu0 %v2757, 32
      %v2849 = vpop.permute.xlu0 %2848
      %2850 = vrot.lane.b32.xlu0 %v2758, 32
      %v2851 = vpop.permute.xlu0 %2850
      %2852 = vrot.lane.b32.xlu0 %v2759, 32
      %v2853 = vpop.permute.xlu0 %2852
      %2854 = vrot.lane.b32.xlu0 %v2760, 32
      %v2855 = vpop.permute.xlu0 %2854
      %2856 = vrot.lane.b32.xlu0 %v2761, 32
      %v2857 = vpop.permute.xlu0 %2856
      %vm2890 = vcmask 392448
      %2891 = vst.msk [vmem:[#allocation4] sm:$0xff] %vm2890, %v2795
      %2892 = vst.msk [vmem:[#allocation4 + $0x10] sm:$0xff] %vm2890, %v2797
      %2893 = vst.msk [vmem:[#allocation4 + $0x20] sm:$0xff] %vm2890, %v2799
      %2894 = vst.msk [vmem:[#allocation4 + $0x30] sm:$0xff] %vm2890, %v2801
      %2895 = vst.msk [vmem:[#allocation4 + $0x40] sm:$0xff] %vm2890, %v2803
      %2896 = vst.msk [vmem:[#allocation4 + $0x50] sm:$0xff] %vm2890, %v2805
      %2897 = vst.msk [vmem:[#allocation4 + $0x60] sm:$0xff] %vm2890, %v2807
      %2898 = vst.msk [vmem:[#allocation4 + $0x70] sm:$0xff] %vm2890, %v2809
      %2899 = vst.msk [vmem:[#allocation4 + $0x80] sm:$0xff] %vm2890, %v2811
      %2900 = vst.msk [vmem:[#allocation4 + $0x90] sm:$0xff] %vm2890, %v2813
      %2901 = vst.msk [vmem:[#allocation4 + $0xa0] sm:$0xff] %vm2890, %v2815
      %2902 = vst.msk [vmem:[#allocation4 + $0xb0] sm:$0xff] %vm2890, %v2817
      %2903 = vst.msk [vmem:[#allocation4 + $0xc0] sm:$0xff] %vm2890, %v2819
      %2904 = vst.msk [vmem:[#allocation4 + $0xd0] sm:$0xff] %vm2890, %v2821
      %2905 = vst.msk [vmem:[#allocation4 + $0xe0] sm:$0xff] %vm2890, %v2823
      %2906 = vst.msk [vmem:[#allocation4 + $0xf0] sm:$0xff] %vm2890, %v2825
      %2907 = vst.msk [vmem:[#allocation4 + $0x100] sm:$0xff] %vm2890, %v2827
      %2908 = vst.msk [vmem:[#allocation4 + $0x110] sm:$0xff] %vm2890, %v2829
      %2909 = vst.msk [vmem:[#allocation4 + $0x120] sm:$0xff] %vm2890, %v2831
      %2910 = vst.msk [vmem:[#allocation4 + $0x130] sm:$0xff] %vm2890, %v2833
      %2911 = vst.msk [vmem:[#allocation4 + $0x140] sm:$0xff] %vm2890, %v2835
      %2912 = vst.msk [vmem:[#allocation4 + $0x150] sm:$0xff] %vm2890, %v2837
      %2913 = vst.msk [vmem:[#allocation4 + $0x160] sm:$0xff] %vm2890, %v2839
      %2914 = vst.msk [vmem:[#allocation4 + $0x170] sm:$0xff] %vm2890, %v2841
      %2915 = vst.msk [vmem:[#allocation4 + $0x180] sm:$0xff] %vm2890, %v2843
      %2916 = vst.msk [vmem:[#allocation4 + $0x190] sm:$0xff] %vm2890, %v2845
      %2917 = vst.msk [vmem:[#allocation4 + $0x1a0] sm:$0xff] %vm2890, %v2847
      %2918 = vst.msk [vmem:[#allocation4 + $0x1b0] sm:$0xff] %vm2890, %v2849
      %2919 = vst.msk [vmem:[#allocation4 + $0x1c0] sm:$0xff] %vm2890, %v2851
      %2920 = vst.msk [vmem:[#allocation4 + $0x1d0] sm:$0xff] %vm2890, %v2853
      %2921 = vst.msk [vmem:[#allocation4 + $0x1e0] sm:$0xff] %vm2890, %v2855
      %2922 = vst.msk [vmem:[#allocation4 + $0x1f0] sm:$0xff] %vm2890, %v2857
      %v2923 = vld [vmem:[%s2440] sm:$0xff]
      %v2924 = vld [vmem:[%s2440 + $0x8] sm:$0xff]
      %v2925 = vld [vmem:[%s2440 + $0x18] sm:$0xff]
      %v2926 = vld [vmem:[%s2440 + $0x20] sm:$0xff]
      %v2927 = vld [vmem:[%s2440 + $0x30] sm:$0xff]
      %v2928 = vld [vmem:[%s2440 + $0x38] sm:$0xff]
      %v2929 = vld [vmem:[%s2440 + $0x48] sm:$0xff]
      %v2930 = vld [vmem:[%s2440 + $0x50] sm:$0xff]
      %v2931 = vld [vmem:[%s2440 + $0x60] sm:$0xff]
      %v2932 = vld [vmem:[%s2440 + $0x68] sm:$0xff]
      %v2933 = vld [vmem:[%s2440 + $0x78] sm:$0xff]
      %v2934 = vld [vmem:[%s2440 + $0x80] sm:$0xff]
      %v2935 = vld [vmem:[%s2440 + $0x90] sm:$0xff]
      %v2936 = vld [vmem:[%s2440 + $0x98] sm:$0xff]
      %v2937 = vld [vmem:[%s2440 + $0xa8] sm:$0xff]
      %v2938 = vld [vmem:[%s2440 + $0xb0] sm:$0xff]
      %v2939 = vld [vmem:[%s2440 + $0xc0] sm:$0xff]
      %v2940 = vld [vmem:[%s2440 + $0xc8] sm:$0xff]
      %v2941 = vld [vmem:[%s2440 + $0xd8] sm:$0xff]
      %v2942 = vld [vmem:[%s2440 + $0xe0] sm:$0xff]
      %v2943 = vld [vmem:[%s2440 + $0xf0] sm:$0xff]
      %v2944 = vld [vmem:[%s2440 + $0xf8] sm:$0xff]
      %v2945 = vld [vmem:[%s2440 + $0x108] sm:$0xff]
      %v2946 = vld [vmem:[%s2440 + $0x110] sm:$0xff]
      %v2947 = vld [vmem:[%s2440 + $0x120] sm:$0xff]
      %v2948 = vld [vmem:[%s2440 + $0x128] sm:$0xff]
      %v2949 = vld [vmem:[%s2440 + $0x138] sm:$0xff]
      %v2950 = vld [vmem:[%s2440 + $0x140] sm:$0xff]
      %v2951 = vld [vmem:[%s2440 + $0x150] sm:$0xff]
      %v2952 = vld [vmem:[%s2440 + $0x158] sm:$0xff]
      %v2953 = vld [vmem:[%s2440 + $0x168] sm:$0xff]
      %v2954 = vld [vmem:[%s2440 + $0x170] sm:$0xff]
      %2987 = vrot.lane.b32.xlu0 %v2923, 48
      %v2988 = vpop.permute.xlu0 %2987
      %2989 = vrot.lane.b32.xlu0 %v2924, 48
      %v2990 = vpop.permute.xlu0 %2989
      %2991 = vrot.lane.b32.xlu0 %v2925, 48
      %v2992 = vpop.permute.xlu0 %2991
      %2993 = vrot.lane.b32.xlu0 %v2926, 48
      %v2994 = vpop.permute.xlu0 %2993
      %2995 = vrot.lane.b32.xlu0 %v2927, 48
      %v2996 = vpop.permute.xlu0 %2995
      %2997 = vrot.lane.b32.xlu0 %v2928, 48
      %v2998 = vpop.permute.xlu0 %2997
      %2999 = vrot.lane.b32.xlu0 %v2929, 48
      %v3000 = vpop.permute.xlu0 %2999
      %3001 = vrot.lane.b32.xlu0 %v2930, 48
      %v3002 = vpop.permute.xlu0 %3001
      %3003 = vrot.lane.b32.xlu0 %v2931, 48
      %v3004 = vpop.permute.xlu0 %3003
      %3005 = vrot.lane.b32.xlu0 %v2932, 48
      %v3006 = vpop.permute.xlu0 %3005
      %3007 = vrot.lane.b32.xlu0 %v2933, 48
      %v3008 = vpop.permute.xlu0 %3007
      %3009 = vrot.lane.b32.xlu0 %v2934, 48
      %v3010 = vpop.permute.xlu0 %3009
      %3011 = vrot.lane.b32.xlu0 %v2935, 48
      %v3012 = vpop.permute.xlu0 %3011
      %3013 = vrot.lane.b32.xlu0 %v2936, 48
      %v3014 = vpop.permute.xlu0 %3013
      %3015 = vrot.lane.b32.xlu0 %v2937, 48
      %v3016 = vpop.permute.xlu0 %3015
      %3017 = vrot.lane.b32.xlu0 %v2938, 48
      %v3018 = vpop.permute.xlu0 %3017
      %3019 = vrot.lane.b32.xlu0 %v2939, 48
      %v3020 = vpop.permute.xlu0 %3019
      %3021 = vrot.lane.b32.xlu0 %v2940, 48
      %v3022 = vpop.permute.xlu0 %3021
      %3023 = vrot.lane.b32.xlu0 %v2941, 48
      %v3024 = vpop.permute.xlu0 %3023
      %3025 = vrot.lane.b32.xlu0 %v2942, 48
      %v3026 = vpop.permute.xlu0 %3025
      %3027 = vrot.lane.b32.xlu0 %v2943, 48
      %v3028 = vpop.permute.xlu0 %3027
      %3029 = vrot.lane.b32.xlu0 %v2944, 48
      %v3030 = vpop.permute.xlu0 %3029
      %3031 = vrot.lane.b32.xlu0 %v2945, 48
      %v3032 = vpop.permute.xlu0 %3031
      %3033 = vrot.lane.b32.xlu0 %v2946, 48
      %v3034 = vpop.permute.xlu0 %3033
      %3035 = vrot.lane.b32.xlu0 %v2947, 48
      %v3036 = vpop.permute.xlu0 %3035
      %3037 = vrot.lane.b32.xlu0 %v2948, 48
      %v3038 = vpop.permute.xlu0 %3037
      %3039 = vrot.lane.b32.xlu0 %v2949, 48
      %v3040 = vpop.permute.xlu0 %3039
      %3041 = vrot.lane.b32.xlu0 %v2950, 48
      %v3042 = vpop.permute.xlu0 %3041
      %3043 = vrot.lane.b32.xlu0 %v2951, 48
      %v3044 = vpop.permute.xlu0 %3043
      %3045 = vrot.lane.b32.xlu0 %v2952, 48
      %v3046 = vpop.permute.xlu0 %3045
      %3047 = vrot.lane.b32.xlu0 %v2953, 48
      %v3048 = vpop.permute.xlu0 %3047
      %3049 = vrot.lane.b32.xlu0 %v2954, 48
      %v3050 = vpop.permute.xlu0 %3049
      %vm3083 = vcmask 523648
      %3084 = vst.msk [vmem:[#allocation4] sm:$0xff] %vm3083, %v2988
      %3085 = vst.msk [vmem:[#allocation4 + $0x10] sm:$0xff] %vm3083, %v2990
      %3086 = vst.msk [vmem:[#allocation4 + $0x20] sm:$0xff] %vm3083, %v2992
      %3087 = vst.msk [vmem:[#allocation4 + $0x30] sm:$0xff] %vm3083, %v2994
      %3088 = vst.msk [vmem:[#allocation4 + $0x40] sm:$0xff] %vm3083, %v2996
      %3089 = vst.msk [vmem:[#allocation4 + $0x50] sm:$0xff] %vm3083, %v2998
      %3090 = vst.msk [vmem:[#allocation4 + $0x60] sm:$0xff] %vm3083, %v3000
      %3091 = vst.msk [vmem:[#allocation4 + $0x70] sm:$0xff] %vm3083, %v3002
      %3092 = vst.msk [vmem:[#allocation4 + $0x80] sm:$0xff] %vm3083, %v3004
      %3093 = vst.msk [vmem:[#allocation4 + $0x90] sm:$0xff] %vm3083, %v3006
      %3094 = vst.msk [vmem:[#allocation4 + $0xa0] sm:$0xff] %vm3083, %v3008
      %3095 = vst.msk [vmem:[#allocation4 + $0xb0] sm:$0xff] %vm3083, %v3010
      %3096 = vst.msk [vmem:[#allocation4 + $0xc0] sm:$0xff] %vm3083, %v3012
      %3097 = vst.msk [vmem:[#allocation4 + $0xd0] sm:$0xff] %vm3083, %v3014
      %3098 = vst.msk [vmem:[#allocation4 + $0xe0] sm:$0xff] %vm3083, %v3016
      %3099 = vst.msk [vmem:[#allocation4 + $0xf0] sm:$0xff] %vm3083, %v3018
      %3100 = vst.msk [vmem:[#allocation4 + $0x100] sm:$0xff] %vm3083, %v3020
      %3101 = vst.msk [vmem:[#allocation4 + $0x110] sm:$0xff] %vm3083, %v3022
      %3102 = vst.msk [vmem:[#allocation4 + $0x120] sm:$0xff] %vm3083, %v3024
      %3103 = vst.msk [vmem:[#allocation4 + $0x130] sm:$0xff] %vm3083, %v3026
      %3104 = vst.msk [vmem:[#allocation4 + $0x140] sm:$0xff] %vm3083, %v3028
      %3105 = vst.msk [vmem:[#allocation4 + $0x150] sm:$0xff] %vm3083, %v3030
      %3106 = vst.msk [vmem:[#allocation4 + $0x160] sm:$0xff] %vm3083, %v3032
      %3107 = vst.msk [vmem:[#allocation4 + $0x170] sm:$0xff] %vm3083, %v3034
      %3108 = vst.msk [vmem:[#allocation4 + $0x180] sm:$0xff] %vm3083, %v3036
      %3109 = vst.msk [vmem:[#allocation4 + $0x190] sm:$0xff] %vm3083, %v3038
      %3110 = vst.msk [vmem:[#allocation4 + $0x1a0] sm:$0xff] %vm3083, %v3040
      %3111 = vst.msk [vmem:[#allocation4 + $0x1b0] sm:$0xff] %vm3083, %v3042
      %3112 = vst.msk [vmem:[#allocation4 + $0x1c0] sm:$0xff] %vm3083, %v3044
      %3113 = vst.msk [vmem:[#allocation4 + $0x1d0] sm:$0xff] %vm3083, %v3046
      %3114 = vst.msk [vmem:[#allocation4 + $0x1e0] sm:$0xff] %vm3083, %v3048
      %3115 = vst.msk [vmem:[#allocation4 + $0x1f0] sm:$0xff] %vm3083, %v3050
      %v3116 = vld [vmem:[%s2440 + $0x1] sm:$0xff]
      %v3117 = vld [vmem:[%s2440 + $0x9] sm:$0xff]
      %v3118 = vld [vmem:[%s2440 + $0x19] sm:$0xff]
      %v3119 = vld [vmem:[%s2440 + $0x21] sm:$0xff]
      %v3120 = vld [vmem:[%s2440 + $0x31] sm:$0xff]
      %v3121 = vld [vmem:[%s2440 + $0x39] sm:$0xff]
      %v3122 = vld [vmem:[%s2440 + $0x49] sm:$0xff]
      %v3123 = vld [vmem:[%s2440 + $0x51] sm:$0xff]
      %v3124 = vld [vmem:[%s2440 + $0x61] sm:$0xff]
      %v3125 = vld [vmem:[%s2440 + $0x69] sm:$0xff]
      %v3126 = vld [vmem:[%s2440 + $0x79] sm:$0xff]
      %v3127 = vld [vmem:[%s2440 + $0x81] sm:$0xff]
      %v3128 = vld [vmem:[%s2440 + $0x91] sm:$0xff]
      %v3129 = vld [vmem:[%s2440 + $0x99] sm:$0xff]
      %v3130 = vld [vmem:[%s2440 + $0xa9] sm:$0xff]
      %v3131 = vld [vmem:[%s2440 + $0xb1] sm:$0xff]
      %v3132 = vld [vmem:[%s2440 + $0xc1] sm:$0xff]
      %v3133 = vld [vmem:[%s2440 + $0xc9] sm:$0xff]
      %v3134 = vld [vmem:[%s2440 + $0xd9] sm:$0xff]
      %v3135 = vld [vmem:[%s2440 + $0xe1] sm:$0xff]
      %v3136 = vld [vmem:[%s2440 + $0xf1] sm:$0xff]
      %v3137 = vld [vmem:[%s2440 + $0xf9] sm:$0xff]
      %v3138 = vld [vmem:[%s2440 + $0x109] sm:$0xff]
      %v3139 = vld [vmem:[%s2440 + $0x111] sm:$0xff]
      %v3140 = vld [vmem:[%s2440 + $0x121] sm:$0xff]
      %v3141 = vld [vmem:[%s2440 + $0x129] sm:$0xff]
      %v3142 = vld [vmem:[%s2440 + $0x139] sm:$0xff]
      %v3143 = vld [vmem:[%s2440 + $0x141] sm:$0xff]
      %v3144 = vld [vmem:[%s2440 + $0x151] sm:$0xff]
      %v3145 = vld [vmem:[%s2440 + $0x159] sm:$0xff]
      %v3146 = vld [vmem:[%s2440 + $0x169] sm:$0xff]
      %v3147 = vld [vmem:[%s2440 + $0x171] sm:$0xff]
      %3180 = vrot.lane.b32.xlu0 %v3116, 64
      %v3181 = vpop.permute.xlu0 %3180
      %3182 = vrot.lane.b32.xlu0 %v3117, 64
      %v3183 = vpop.permute.xlu0 %3182
      %3184 = vrot.lane.b32.xlu0 %v3118, 64
      %v3185 = vpop.permute.xlu0 %3184
      %3186 = vrot.lane.b32.xlu0 %v3119, 64
      %v3187 = vpop.permute.xlu0 %3186
      %3188 = vrot.lane.b32.xlu0 %v3120, 64
      %v3189 = vpop.permute.xlu0 %3188
      %3190 = vrot.lane.b32.xlu0 %v3121, 64
      %v3191 = vpop.permute.xlu0 %3190
      %3192 = vrot.lane.b32.xlu0 %v3122, 64
      %v3193 = vpop.permute.xlu0 %3192
      %3194 = vrot.lane.b32.xlu0 %v3123, 64
      %v3195 = vpop.permute.xlu0 %3194
      %3196 = vrot.lane.b32.xlu0 %v3124, 64
      %v3197 = vpop.permute.xlu0 %3196
      %3198 = vrot.lane.b32.xlu0 %v3125, 64
      %v3199 = vpop.permute.xlu0 %3198
      %3200 = vrot.lane.b32.xlu0 %v3126, 64
      %v3201 = vpop.permute.xlu0 %3200
      %3202 = vrot.lane.b32.xlu0 %v3127, 64
      %v3203 = vpop.permute.xlu0 %3202
      %3204 = vrot.lane.b32.xlu0 %v3128, 64
      %v3205 = vpop.permute.xlu0 %3204
      %3206 = vrot.lane.b32.xlu0 %v3129, 64
      %v3207 = vpop.permute.xlu0 %3206
      %3208 = vrot.lane.b32.xlu0 %v3130, 64
      %v3209 = vpop.permute.xlu0 %3208
      %3210 = vrot.lane.b32.xlu0 %v3131, 64
      %v3211 = vpop.permute.xlu0 %3210
      %3212 = vrot.lane.b32.xlu0 %v3132, 64
      %v3213 = vpop.permute.xlu0 %3212
      %3214 = vrot.lane.b32.xlu0 %v3133, 64
      %v3215 = vpop.permute.xlu0 %3214
      %3216 = vrot.lane.b32.xlu0 %v3134, 64
      %v3217 = vpop.permute.xlu0 %3216
      %3218 = vrot.lane.b32.xlu0 %v3135, 64
      %v3219 = vpop.permute.xlu0 %3218
      %3220 = vrot.lane.b32.xlu0 %v3136, 64
      %v3221 = vpop.permute.xlu0 %3220
      %3222 = vrot.lane.b32.xlu0 %v3137, 64
      %v3223 = vpop.permute.xlu0 %3222
      %3224 = vrot.lane.b32.xlu0 %v3138, 64
      %v3225 = vpop.permute.xlu0 %3224
      %3226 = vrot.lane.b32.xlu0 %v3139, 64
      %v3227 = vpop.permute.xlu0 %3226
      %3228 = vrot.lane.b32.xlu0 %v3140, 64
      %v3229 = vpop.permute.xlu0 %3228
      %3230 = vrot.lane.b32.xlu0 %v3141, 64
      %v3231 = vpop.permute.xlu0 %3230
      %3232 = vrot.lane.b32.xlu0 %v3142, 64
      %v3233 = vpop.permute.xlu0 %3232
      %3234 = vrot.lane.b32.xlu0 %v3143, 64
      %v3235 = vpop.permute.xlu0 %3234
      %3236 = vrot.lane.b32.xlu0 %v3144, 64
      %v3237 = vpop.permute.xlu0 %3236
      %3238 = vrot.lane.b32.xlu0 %v3145, 64
      %v3239 = vpop.permute.xlu0 %3238
      %3240 = vrot.lane.b32.xlu0 %v3146, 64
      %v3241 = vpop.permute.xlu0 %3240
      %3242 = vrot.lane.b32.xlu0 %v3147, 64
      %v3243 = vpop.permute.xlu0 %3242
      %vm3276 = vcmask 654848
      %3277 = vst.msk [vmem:[#allocation4] sm:$0xff] %vm3276, %v3181
      %3278 = vst.msk [vmem:[#allocation4 + $0x10] sm:$0xff] %vm3276, %v3183
      %3279 = vst.msk [vmem:[#allocation4 + $0x20] sm:$0xff] %vm3276, %v3185
      %3280 = vst.msk [vmem:[#allocation4 + $0x30] sm:$0xff] %vm3276, %v3187
      %3281 = vst.msk [vmem:[#allocation4 + $0x40] sm:$0xff] %vm3276, %v3189
      %3282 = vst.msk [vmem:[#allocation4 + $0x50] sm:$0xff] %vm3276, %v3191
      %3283 = vst.msk [vmem:[#allocation4 + $0x60] sm:$0xff] %vm3276, %v3193
      %3284 = vst.msk [vmem:[#allocation4 + $0x70] sm:$0xff] %vm3276, %v3195
      %3285 = vst.msk [vmem:[#allocation4 + $0x80] sm:$0xff] %vm3276, %v3197
      %3286 = vst.msk [vmem:[#allocation4 + $0x90] sm:$0xff] %vm3276, %v3199
      %3287 = vst.msk [vmem:[#allocation4 + $0xa0] sm:$0xff] %vm3276, %v3201
      %3288 = vst.msk [vmem:[#allocation4 + $0xb0] sm:$0xff] %vm3276, %v3203
      %3289 = vst.msk [vmem:[#allocation4 + $0xc0] sm:$0xff] %vm3276, %v3205
      %3290 = vst.msk [vmem:[#allocation4 + $0xd0] sm:$0xff] %vm3276, %v3207
      %3291 = vst.msk [vmem:[#allocation4 + $0xe0] sm:$0xff] %vm3276, %v3209
      %3292 = vst.msk [vmem:[#allocation4 + $0xf0] sm:$0xff] %vm3276, %v3211
      %3293 = vst.msk [vmem:[#allocation4 + $0x100] sm:$0xff] %vm3276, %v3213
      %3294 = vst.msk [vmem:[#allocation4 + $0x110] sm:$0xff] %vm3276, %v3215
      %3295 = vst.msk [vmem:[#allocation4 + $0x120] sm:$0xff] %vm3276, %v3217
      %3296 = vst.msk [vmem:[#allocation4 + $0x130] sm:$0xff] %vm3276, %v3219
      %3297 = vst.msk [vmem:[#allocation4 + $0x140] sm:$0xff] %vm3276, %v3221
      %3298 = vst.msk [vmem:[#allocation4 + $0x150] sm:$0xff] %vm3276, %v3223
      %3299 = vst.msk [vmem:[#allocation4 + $0x160] sm:$0xff] %vm3276, %v3225
      %3300 = vst.msk [vmem:[#allocation4 + $0x170] sm:$0xff] %vm3276, %v3227
      %3301 = vst.msk [vmem:[#allocation4 + $0x180] sm:$0xff] %vm3276, %v3229
      %3302 = vst.msk [vmem:[#allocation4 + $0x190] sm:$0xff] %vm3276, %v3231
      %3303 = vst.msk [vmem:[#allocation4 + $0x1a0] sm:$0xff] %vm3276, %v3233
      %3304 = vst.msk [vmem:[#allocation4 + $0x1b0] sm:$0xff] %vm3276, %v3235
      %3305 = vst.msk [vmem:[#allocation4 + $0x1c0] sm:$0xff] %vm3276, %v3237
      %3306 = vst.msk [vmem:[#allocation4 + $0x1d0] sm:$0xff] %vm3276, %v3239
      %3307 = vst.msk [vmem:[#allocation4 + $0x1e0] sm:$0xff] %vm3276, %v3241
      %3308 = vst.msk [vmem:[#allocation4 + $0x1f0] sm:$0xff] %vm3276, %v3243
      %v3309 = vld [vmem:[%s2440 + $0x2] sm:$0xff]
      %v3310 = vld [vmem:[%s2440 + $0xa] sm:$0xff]
      %v3311 = vld [vmem:[%s2440 + $0x1a] sm:$0xff]
      %v3312 = vld [vmem:[%s2440 + $0x22] sm:$0xff]
      %v3313 = vld [vmem:[%s2440 + $0x32] sm:$0xff]
      %v3314 = vld [vmem:[%s2440 + $0x3a] sm:$0xff]
      %v3315 = vld [vmem:[%s2440 + $0x4a] sm:$0xff]
      %v3316 = vld [vmem:[%s2440 + $0x52] sm:$0xff]
      %v3317 = vld [vmem:[%s2440 + $0x62] sm:$0xff]
      %v3318 = vld [vmem:[%s2440 + $0x6a] sm:$0xff]
      %v3319 = vld [vmem:[%s2440 + $0x7a] sm:$0xff]
      %v3320 = vld [vmem:[%s2440 + $0x82] sm:$0xff]
      %v3321 = vld [vmem:[%s2440 + $0x92] sm:$0xff]
      %v3322 = vld [vmem:[%s2440 + $0x9a] sm:$0xff]
      %v3323 = vld [vmem:[%s2440 + $0xaa] sm:$0xff]
      %v3324 = vld [vmem:[%s2440 + $0xb2] sm:$0xff]
      %v3325 = vld [vmem:[%s2440 + $0xc2] sm:$0xff]
      %v3326 = vld [vmem:[%s2440 + $0xca] sm:$0xff]
      %v3327 = vld [vmem:[%s2440 + $0xda] sm:$0xff]
      %v3328 = vld [vmem:[%s2440 + $0xe2] sm:$0xff]
      %v3329 = vld [vmem:[%s2440 + $0xf2] sm:$0xff]
      %v3330 = vld [vmem:[%s2440 + $0xfa] sm:$0xff]
      %v3331 = vld [vmem:[%s2440 + $0x10a] sm:$0xff]
      %v3332 = vld [vmem:[%s2440 + $0x112] sm:$0xff]
      %v3333 = vld [vmem:[%s2440 + $0x122] sm:$0xff]
      %v3334 = vld [vmem:[%s2440 + $0x12a] sm:$0xff]
      %v3335 = vld [vmem:[%s2440 + $0x13a] sm:$0xff]
      %v3336 = vld [vmem:[%s2440 + $0x142] sm:$0xff]
      %v3337 = vld [vmem:[%s2440 + $0x152] sm:$0xff]
      %v3338 = vld [vmem:[%s2440 + $0x15a] sm:$0xff]
      %v3339 = vld [vmem:[%s2440 + $0x16a] sm:$0xff]
      %v3340 = vld [vmem:[%s2440 + $0x172] sm:$0xff]
      %3373 = vrot.lane.b32.xlu0 %v3309, 80
      %v3374 = vpop.permute.xlu0 %3373
      %3375 = vrot.lane.b32.xlu0 %v3310, 80
      %v3376 = vpop.permute.xlu0 %3375
      %3377 = vrot.lane.b32.xlu0 %v3311, 80
      %v3378 = vpop.permute.xlu0 %3377
      %3379 = vrot.lane.b32.xlu0 %v3312, 80
      %v3380 = vpop.permute.xlu0 %3379
      %3381 = vrot.lane.b32.xlu0 %v3313, 80
      %v3382 = vpop.permute.xlu0 %3381
      %3383 = vrot.lane.b32.xlu0 %v3314, 80
      %v3384 = vpop.permute.xlu0 %3383
      %3385 = vrot.lane.b32.xlu0 %v3315, 80
      %v3386 = vpop.permute.xlu0 %3385
      %3387 = vrot.lane.b32.xlu0 %v3316, 80
      %v3388 = vpop.permute.xlu0 %3387
      %3389 = vrot.lane.b32.xlu0 %v3317, 80
      %v3390 = vpop.permute.xlu0 %3389
      %3391 = vrot.lane.b32.xlu0 %v3318, 80
      %v3392 = vpop.permute.xlu0 %3391
      %3393 = vrot.lane.b32.xlu0 %v3319, 80
      %v3394 = vpop.permute.xlu0 %3393
      %3395 = vrot.lane.b32.xlu0 %v3320, 80
      %v3396 = vpop.permute.xlu0 %3395
      %3397 = vrot.lane.b32.xlu0 %v3321, 80
      %v3398 = vpop.permute.xlu0 %3397
      %3399 = vrot.lane.b32.xlu0 %v3322, 80
      %v3400 = vpop.permute.xlu0 %3399
      %3401 = vrot.lane.b32.xlu0 %v3323, 80
      %v3402 = vpop.permute.xlu0 %3401
      %3403 = vrot.lane.b32.xlu0 %v3324, 80
      %v3404 = vpop.permute.xlu0 %3403
      %3405 = vrot.lane.b32.xlu0 %v3325, 80
      %v3406 = vpop.permute.xlu0 %3405
      %3407 = vrot.lane.b32.xlu0 %v3326, 80
      %v3408 = vpop.permute.xlu0 %3407
      %3409 = vrot.lane.b32.xlu0 %v3327, 80
      %v3410 = vpop.permute.xlu0 %3409
      %3411 = vrot.lane.b32.xlu0 %v3328, 80
      %v3412 = vpop.permute.xlu0 %3411
      %3413 = vrot.lane.b32.xlu0 %v3329, 80
      %v3414 = vpop.permute.xlu0 %3413
      %3415 = vrot.lane.b32.xlu0 %v3330, 80
      %v3416 = vpop.permute.xlu0 %3415
      %3417 = vrot.lane.b32.xlu0 %v3331, 80
      %v3418 = vpop.permute.xlu0 %3417
      %3419 = vrot.lane.b32.xlu0 %v3332, 80
      %v3420 = vpop.permute.xlu0 %3419
      %3421 = vrot.lane.b32.xlu0 %v3333, 80
      %v3422 = vpop.permute.xlu0 %3421
      %3423 = vrot.lane.b32.xlu0 %v3334, 80
      %v3424 = vpop.permute.xlu0 %3423
      %3425 = vrot.lane.b32.xlu0 %v3335, 80
      %v3426 = vpop.permute.xlu0 %3425
      %3427 = vrot.lane.b32.xlu0 %v3336, 80
      %v3428 = vpop.permute.xlu0 %3427
      %3429 = vrot.lane.b32.xlu0 %v3337, 80
      %v3430 = vpop.permute.xlu0 %3429
      %3431 = vrot.lane.b32.xlu0 %v3338, 80
      %v3432 = vpop.permute.xlu0 %3431
      %3433 = vrot.lane.b32.xlu0 %v3339, 80
      %v3434 = vpop.permute.xlu0 %3433
      %3435 = vrot.lane.b32.xlu0 %v3340, 80
      %v3436 = vpop.permute.xlu0 %3435
      %vm3469 = vcmask 786048
      %3470 = vst.msk [vmem:[#allocation4] sm:$0xff] %vm3469, %v3374
      %3471 = vst.msk [vmem:[#allocation4 + $0x10] sm:$0xff] %vm3469, %v3376
      %3472 = vst.msk [vmem:[#allocation4 + $0x20] sm:$0xff] %vm3469, %v3378
      %3473 = vst.msk [vmem:[#allocation4 + $0x30] sm:$0xff] %vm3469, %v3380
      %3474 = vst.msk [vmem:[#allocation4 + $0x40] sm:$0xff] %vm3469, %v3382
      %3475 = vst.msk [vmem:[#allocation4 + $0x50] sm:$0xff] %vm3469, %v3384
      %3476 = vst.msk [vmem:[#allocation4 + $0x60] sm:$0xff] %vm3469, %v3386
      %3477 = vst.msk [vmem:[#allocation4 + $0x70] sm:$0xff] %vm3469, %v3388
      %3478 = vst.msk [vmem:[#allocation4 + $0x80] sm:$0xff] %vm3469, %v3390
      %3479 = vst.msk [vmem:[#allocation4 + $0x90] sm:$0xff] %vm3469, %v3392
      %3480 = vst.msk [vmem:[#allocation4 + $0xa0] sm:$0xff] %vm3469, %v3394
      %3481 = vst.msk [vmem:[#allocation4 + $0xb0] sm:$0xff] %vm3469, %v3396
      %3482 = vst.msk [vmem:[#allocation4 + $0xc0] sm:$0xff] %vm3469, %v3398
      %3483 = vst.msk [vmem:[#allocation4 + $0xd0] sm:$0xff] %vm3469, %v3400
      %3484 = vst.msk [vmem:[#allocation4 + $0xe0] sm:$0xff] %vm3469, %v3402
      %3485 = vst.msk [vmem:[#allocation4 + $0xf0] sm:$0xff] %vm3469, %v3404
      %3486 = vst.msk [vmem:[#allocation4 + $0x100] sm:$0xff] %vm3469, %v3406
      %3487 = vst.msk [vmem:[#allocation4 + $0x110] sm:$0xff] %vm3469, %v3408
      %3488 = vst.msk [vmem:[#allocation4 + $0x120] sm:$0xff] %vm3469, %v3410
      %3489 = vst.msk [vmem:[#allocation4 + $0x130] sm:$0xff] %vm3469, %v3412
      %3490 = vst.msk [vmem:[#allocation4 + $0x140] sm:$0xff] %vm3469, %v3414
      %3491 = vst.msk [vmem:[#allocation4 + $0x150] sm:$0xff] %vm3469, %v3416
      %3492 = vst.msk [vmem:[#allocation4 + $0x160] sm:$0xff] %vm3469, %v3418
      %3493 = vst.msk [vmem:[#allocation4 + $0x170] sm:$0xff] %vm3469, %v3420
      %3494 = vst.msk [vmem:[#allocation4 + $0x180] sm:$0xff] %vm3469, %v3422
      %3495 = vst.msk [vmem:[#allocation4 + $0x190] sm:$0xff] %vm3469, %v3424
      %3496 = vst.msk [vmem:[#allocation4 + $0x1a0] sm:$0xff] %vm3469, %v3426
      %3497 = vst.msk [vmem:[#allocation4 + $0x1b0] sm:$0xff] %vm3469, %v3428
      %3498 = vst.msk [vmem:[#allocation4 + $0x1c0] sm:$0xff] %vm3469, %v3430
      %3499 = vst.msk [vmem:[#allocation4 + $0x1d0] sm:$0xff] %vm3469, %v3432
      %3500 = vst.msk [vmem:[#allocation4 + $0x1e0] sm:$0xff] %vm3469, %v3434
      %3501 = vst.msk [vmem:[#allocation4 + $0x1f0] sm:$0xff] %vm3469, %v3436
      %s3502 = scalar_lea.vmem [#allocation3], 48
      %v3503 = vld [vmem:[%s3502] sm:$0xff]
      %v3504 = vld [vmem:[%s3502 + $0x8] sm:$0xff]
      %v3505 = vld [vmem:[%s3502 + $0x18] sm:$0xff]
      %v3506 = vld [vmem:[%s3502 + $0x20] sm:$0xff]
      %v3507 = vld [vmem:[%s3502 + $0x30] sm:$0xff]
      %v3508 = vld [vmem:[%s3502 + $0x38] sm:$0xff]
      %v3509 = vld [vmem:[%s3502 + $0x48] sm:$0xff]
      %v3510 = vld [vmem:[%s3502 + $0x50] sm:$0xff]
      %v3511 = vld [vmem:[%s3502 + $0x60] sm:$0xff]
      %v3512 = vld [vmem:[%s3502 + $0x68] sm:$0xff]
      %v3513 = vld [vmem:[%s3502 + $0x78] sm:$0xff]
      %v3514 = vld [vmem:[%s3502 + $0x80] sm:$0xff]
      %v3515 = vld [vmem:[%s3502 + $0x90] sm:$0xff]
      %v3516 = vld [vmem:[%s3502 + $0x98] sm:$0xff]
      %v3517 = vld [vmem:[%s3502 + $0xa8] sm:$0xff]
      %v3518 = vld [vmem:[%s3502 + $0xb0] sm:$0xff]
      %v3519 = vld [vmem:[%s3502 + $0xc0] sm:$0xff]
      %v3520 = vld [vmem:[%s3502 + $0xc8] sm:$0xff]
      %v3521 = vld [vmem:[%s3502 + $0xd8] sm:$0xff]
      %v3522 = vld [vmem:[%s3502 + $0xe0] sm:$0xff]
      %v3523 = vld [vmem:[%s3502 + $0xf0] sm:$0xff]
      %v3524 = vld [vmem:[%s3502 + $0xf8] sm:$0xff]
      %v3525 = vld [vmem:[%s3502 + $0x108] sm:$0xff]
      %v3526 = vld [vmem:[%s3502 + $0x110] sm:$0xff]
      %v3527 = vld [vmem:[%s3502 + $0x120] sm:$0xff]
      %v3528 = vld [vmem:[%s3502 + $0x128] sm:$0xff]
      %v3529 = vld [vmem:[%s3502 + $0x138] sm:$0xff]
      %v3530 = vld [vmem:[%s3502 + $0x140] sm:$0xff]
      %v3531 = vld [vmem:[%s3502 + $0x150] sm:$0xff]
      %v3532 = vld [vmem:[%s3502 + $0x158] sm:$0xff]
      %v3533 = vld [vmem:[%s3502 + $0x168] sm:$0xff]
      %v3534 = vld [vmem:[%s3502 + $0x170] sm:$0xff]
      %3567 = vrot.lane.b32.xlu0 %v3503, 96
      %v3568 = vpop.permute.xlu0 %3567
      %3569 = vrot.lane.b32.xlu0 %v3504, 96
      %v3570 = vpop.permute.xlu0 %3569
      %3571 = vrot.lane.b32.xlu0 %v3505, 96
      %v3572 = vpop.permute.xlu0 %3571
      %3573 = vrot.lane.b32.xlu0 %v3506, 96
      %v3574 = vpop.permute.xlu0 %3573
      %3575 = vrot.lane.b32.xlu0 %v3507, 96
      %v3576 = vpop.permute.xlu0 %3575
      %3577 = vrot.lane.b32.xlu0 %v3508, 96
      %v3578 = vpop.permute.xlu0 %3577
      %3579 = vrot.lane.b32.xlu0 %v3509, 96
      %v3580 = vpop.permute.xlu0 %3579
      %3581 = vrot.lane.b32.xlu0 %v3510, 96
      %v3582 = vpop.permute.xlu0 %3581
      %3583 = vrot.lane.b32.xlu0 %v3511, 96
      %v3584 = vpop.permute.xlu0 %3583
      %3585 = vrot.lane.b32.xlu0 %v3512, 96
      %v3586 = vpop.permute.xlu0 %3585
      %3587 = vrot.lane.b32.xlu0 %v3513, 96
      %v3588 = vpop.permute.xlu0 %3587
      %3589 = vrot.lane.b32.xlu0 %v3514, 96
      %v3590 = vpop.permute.xlu0 %3589
      %3591 = vrot.lane.b32.xlu0 %v3515, 96
      %v3592 = vpop.permute.xlu0 %3591
      %3593 = vrot.lane.b32.xlu0 %v3516, 96
      %v3594 = vpop.permute.xlu0 %3593
      %3595 = vrot.lane.b32.xlu0 %v3517, 96
      %v3596 = vpop.permute.xlu0 %3595
      %3597 = vrot.lane.b32.xlu0 %v3518, 96
      %v3598 = vpop.permute.xlu0 %3597
      %3599 = vrot.lane.b32.xlu0 %v3519, 96
      %v3600 = vpop.permute.xlu0 %3599
      %3601 = vrot.lane.b32.xlu0 %v3520, 96
      %v3602 = vpop.permute.xlu0 %3601
      %3603 = vrot.lane.b32.xlu0 %v3521, 96
      %v3604 = vpop.permute.xlu0 %3603
      %3605 = vrot.lane.b32.xlu0 %v3522, 96
      %v3606 = vpop.permute.xlu0 %3605
      %3607 = vrot.lane.b32.xlu0 %v3523, 96
      %v3608 = vpop.permute.xlu0 %3607
      %3609 = vrot.lane.b32.xlu0 %v3524, 96
      %v3610 = vpop.permute.xlu0 %3609
      %3611 = vrot.lane.b32.xlu0 %v3525, 96
      %v3612 = vpop.permute.xlu0 %3611
      %3613 = vrot.lane.b32.xlu0 %v3526, 96
      %v3614 = vpop.permute.xlu0 %3613
      %3615 = vrot.lane.b32.xlu0 %v3527, 96
      %v3616 = vpop.permute.xlu0 %3615
      %3617 = vrot.lane.b32.xlu0 %v3528, 96
      %v3618 = vpop.permute.xlu0 %3617
      %3619 = vrot.lane.b32.xlu0 %v3529, 96
      %v3620 = vpop.permute.xlu0 %3619
      %3621 = vrot.lane.b32.xlu0 %v3530, 96
      %v3622 = vpop.permute.xlu0 %3621
      %3623 = vrot.lane.b32.xlu0 %v3531, 96
      %v3624 = vpop.permute.xlu0 %3623
      %3625 = vrot.lane.b32.xlu0 %v3532, 96
      %v3626 = vpop.permute.xlu0 %3625
      %3627 = vrot.lane.b32.xlu0 %v3533, 96
      %v3628 = vpop.permute.xlu0 %3627
      %3629 = vrot.lane.b32.xlu0 %v3534, 96
      %v3630 = vpop.permute.xlu0 %3629
      %vm3663 = vcmask 917248
      %3664 = vst.msk [vmem:[#allocation4] sm:$0xff] %vm3663, %v3568
      %3665 = vst.msk [vmem:[#allocation4 + $0x10] sm:$0xff] %vm3663, %v3570
      %3666 = vst.msk [vmem:[#allocation4 + $0x20] sm:$0xff] %vm3663, %v3572
      %3667 = vst.msk [vmem:[#allocation4 + $0x30] sm:$0xff] %vm3663, %v3574
      %3668 = vst.msk [vmem:[#allocation4 + $0x40] sm:$0xff] %vm3663, %v3576
      %3669 = vst.msk [vmem:[#allocation4 + $0x50] sm:$0xff] %vm3663, %v3578
      %3670 = vst.msk [vmem:[#allocation4 + $0x60] sm:$0xff] %vm3663, %v3580
      %3671 = vst.msk [vmem:[#allocation4 + $0x70] sm:$0xff] %vm3663, %v3582
      %3672 = vst.msk [vmem:[#allocation4 + $0x80] sm:$0xff] %vm3663, %v3584
      %3673 = vst.msk [vmem:[#allocation4 + $0x90] sm:$0xff] %vm3663, %v3586
      %3674 = vst.msk [vmem:[#allocation4 + $0xa0] sm:$0xff] %vm3663, %v3588
      %3675 = vst.msk [vmem:[#allocation4 + $0xb0] sm:$0xff] %vm3663, %v3590
      %3676 = vst.msk [vmem:[#allocation4 + $0xc0] sm:$0xff] %vm3663, %v3592
      %3677 = vst.msk [vmem:[#allocation4 + $0xd0] sm:$0xff] %vm3663, %v3594
      %3678 = vst.msk [vmem:[#allocation4 + $0xe0] sm:$0xff] %vm3663, %v3596
      %3679 = vst.msk [vmem:[#allocation4 + $0xf0] sm:$0xff] %vm3663, %v3598
      %3680 = vst.msk [vmem:[#allocation4 + $0x100] sm:$0xff] %vm3663, %v3600
      %3681 = vst.msk [vmem:[#allocation4 + $0x110] sm:$0xff] %vm3663, %v3602
      %3682 = vst.msk [vmem:[#allocation4 + $0x120] sm:$0xff] %vm3663, %v3604
      %3683 = vst.msk [vmem:[#allocation4 + $0x130] sm:$0xff] %vm3663, %v3606
      %3684 = vst.msk [vmem:[#allocation4 + $0x140] sm:$0xff] %vm3663, %v3608
      %3685 = vst.msk [vmem:[#allocation4 + $0x150] sm:$0xff] %vm3663, %v3610
      %3686 = vst.msk [vmem:[#allocation4 + $0x160] sm:$0xff] %vm3663, %v3612
      %3687 = vst.msk [vmem:[#allocation4 + $0x170] sm:$0xff] %vm3663, %v3614
      %3688 = vst.msk [vmem:[#allocation4 + $0x180] sm:$0xff] %vm3663, %v3616
      %3689 = vst.msk [vmem:[#allocation4 + $0x190] sm:$0xff] %vm3663, %v3618
      %3690 = vst.msk [vmem:[#allocation4 + $0x1a0] sm:$0xff] %vm3663, %v3620
      %3691 = vst.msk [vmem:[#allocation4 + $0x1b0] sm:$0xff] %vm3663, %v3622
      %3692 = vst.msk [vmem:[#allocation4 + $0x1c0] sm:$0xff] %vm3663, %v3624
      %3693 = vst.msk [vmem:[#allocation4 + $0x1d0] sm:$0xff] %vm3663, %v3626
      %3694 = vst.msk [vmem:[#allocation4 + $0x1e0] sm:$0xff] %vm3663, %v3628
      %3695 = vst.msk [vmem:[#allocation4 + $0x1f0] sm:$0xff] %vm3663, %v3630
      %v3696 = vld [vmem:[%s3502 + $0x1] sm:$0xff]
      %v3697 = vld [vmem:[%s3502 + $0x9] sm:$0xff]
      %v3698 = vld [vmem:[%s3502 + $0x19] sm:$0xff]
      %v3699 = vld [vmem:[%s3502 + $0x21] sm:$0xff]
      %v3700 = vld [vmem:[%s3502 + $0x31] sm:$0xff]
      %v3701 = vld [vmem:[%s3502 + $0x39] sm:$0xff]
      %v3702 = vld [vmem:[%s3502 + $0x49] sm:$0xff]
      %v3703 = vld [vmem:[%s3502 + $0x51] sm:$0xff]
      %v3704 = vld [vmem:[%s3502 + $0x61] sm:$0xff]
      %v3705 = vld [vmem:[%s3502 + $0x69] sm:$0xff]
      %v3706 = vld [vmem:[%s3502 + $0x79] sm:$0xff]
      %v3707 = vld [vmem:[%s3502 + $0x81] sm:$0xff]
      %v3708 = vld [vmem:[%s3502 + $0x91] sm:$0xff]
      %v3709 = vld [vmem:[%s3502 + $0x99] sm:$0xff]
      %v3710 = vld [vmem:[%s3502 + $0xa9] sm:$0xff]
      %v3711 = vld [vmem:[%s3502 + $0xb1] sm:$0xff]
      %v3712 = vld [vmem:[%s3502 + $0xc1] sm:$0xff]
      %v3713 = vld [vmem:[%s3502 + $0xc9] sm:$0xff]
      %v3714 = vld [vmem:[%s3502 + $0xd9] sm:$0xff]
      %v3715 = vld [vmem:[%s3502 + $0xe1] sm:$0xff]
      %v3716 = vld [vmem:[%s3502 + $0xf1] sm:$0xff]
      %v3717 = vld [vmem:[%s3502 + $0xf9] sm:$0xff]
      %v3718 = vld [vmem:[%s3502 + $0x109] sm:$0xff]
      %v3719 = vld [vmem:[%s3502 + $0x111] sm:$0xff]
      %v3720 = vld [vmem:[%s3502 + $0x121] sm:$0xff]
      %v3721 = vld [vmem:[%s3502 + $0x129] sm:$0xff]
      %v3722 = vld [vmem:[%s3502 + $0x139] sm:$0xff]
      %v3723 = vld [vmem:[%s3502 + $0x141] sm:$0xff]
      %v3724 = vld [vmem:[%s3502 + $0x151] sm:$0xff]
      %v3725 = vld [vmem:[%s3502 + $0x159] sm:$0xff]
      %v3726 = vld [vmem:[%s3502 + $0x169] sm:$0xff]
      %v3727 = vld [vmem:[%s3502 + $0x171] sm:$0xff]
      %3760 = vrot.lane.b32.xlu0 %v3696, 112
      %v3761 = vpop.permute.xlu0 %3760
      %3762 = vrot.lane.b32.xlu0 %v3697, 112
      %v3763 = vpop.permute.xlu0 %3762
      %3764 = vrot.lane.b32.xlu0 %v3698, 112
      %v3765 = vpop.permute.xlu0 %3764
      %3766 = vrot.lane.b32.xlu0 %v3699, 112
      %v3767 = vpop.permute.xlu0 %3766
      %3768 = vrot.lane.b32.xlu0 %v3700, 112
      %v3769 = vpop.permute.xlu0 %3768
      %3770 = vrot.lane.b32.xlu0 %v3701, 112
      %v3771 = vpop.permute.xlu0 %3770
      %3772 = vrot.lane.b32.xlu0 %v3702, 112
      %v3773 = vpop.permute.xlu0 %3772
      %3774 = vrot.lane.b32.xlu0 %v3703, 112
      %v3775 = vpop.permute.xlu0 %3774
      %3776 = vrot.lane.b32.xlu0 %v3704, 112
      %v3777 = vpop.permute.xlu0 %3776
      %3778 = vrot.lane.b32.xlu0 %v3705, 112
      %v3779 = vpop.permute.xlu0 %3778
      %3780 = vrot.lane.b32.xlu0 %v3706, 112
      %v3781 = vpop.permute.xlu0 %3780
      %3782 = vrot.lane.b32.xlu0 %v3707, 112
      %v3783 = vpop.permute.xlu0 %3782
      %3784 = vrot.lane.b32.xlu0 %v3708, 112
      %v3785 = vpop.permute.xlu0 %3784
      %3786 = vrot.lane.b32.xlu0 %v3709, 112
      %v3787 = vpop.permute.xlu0 %3786
      %3788 = vrot.lane.b32.xlu0 %v3710, 112
      %v3789 = vpop.permute.xlu0 %3788
      %3790 = vrot.lane.b32.xlu0 %v3711, 112
      %v3791 = vpop.permute.xlu0 %3790
      %3792 = vrot.lane.b32.xlu0 %v3712, 112
      %v3793 = vpop.permute.xlu0 %3792
      %3794 = vrot.lane.b32.xlu0 %v3713, 112
      %v3795 = vpop.permute.xlu0 %3794
      %3796 = vrot.lane.b32.xlu0 %v3714, 112
      %v3797 = vpop.permute.xlu0 %3796
      %3798 = vrot.lane.b32.xlu0 %v3715, 112
      %v3799 = vpop.permute.xlu0 %3798
      %3800 = vrot.lane.b32.xlu0 %v3716, 112
      %v3801 = vpop.permute.xlu0 %3800
      %3802 = vrot.lane.b32.xlu0 %v3717, 112
      %v3803 = vpop.permute.xlu0 %3802
      %3804 = vrot.lane.b32.xlu0 %v3718, 112
      %v3805 = vpop.permute.xlu0 %3804
      %3806 = vrot.lane.b32.xlu0 %v3719, 112
      %v3807 = vpop.permute.xlu0 %3806
      %3808 = vrot.lane.b32.xlu0 %v3720, 112
      %v3809 = vpop.permute.xlu0 %3808
      %3810 = vrot.lane.b32.xlu0 %v3721, 112
      %v3811 = vpop.permute.xlu0 %3810
      %3812 = vrot.lane.b32.xlu0 %v3722, 112
      %v3813 = vpop.permute.xlu0 %3812
      %3814 = vrot.lane.b32.xlu0 %v3723, 112
      %v3815 = vpop.permute.xlu0 %3814
      %3816 = vrot.lane.b32.xlu0 %v3724, 112
      %v3817 = vpop.permute.xlu0 %3816
      %3818 = vrot.lane.b32.xlu0 %v3725, 112
      %v3819 = vpop.permute.xlu0 %3818
      %3820 = vrot.lane.b32.xlu0 %v3726, 112
      %v3821 = vpop.permute.xlu0 %3820
      %3822 = vrot.lane.b32.xlu0 %v3727, 112
      %v3823 = vpop.permute.xlu0 %3822
      %vm3856 = vcmask 1048448
      %3857 = vst.msk [vmem:[#allocation4] sm:$0xff] %vm3856, %v3761
      %3858 = vst.msk [vmem:[#allocation4 + $0x10] sm:$0xff] %vm3856, %v3763
      %3859 = vst.msk [vmem:[#allocation4 + $0x20] sm:$0xff] %vm3856, %v3765
      %3860 = vst.msk [vmem:[#allocation4 + $0x30] sm:$0xff] %vm3856, %v3767
      %3861 = vst.msk [vmem:[#allocation4 + $0x40] sm:$0xff] %vm3856, %v3769
      %3862 = vst.msk [vmem:[#allocation4 + $0x50] sm:$0xff] %vm3856, %v3771
      %3863 = vst.msk [vmem:[#allocation4 + $0x60] sm:$0xff] %vm3856, %v3773
      %3864 = vst.msk [vmem:[#allocation4 + $0x70] sm:$0xff] %vm3856, %v3775
      %3865 = vst.msk [vmem:[#allocation4 + $0x80] sm:$0xff] %vm3856, %v3777
      %3866 = vst.msk [vmem:[#allocation4 + $0x90] sm:$0xff] %vm3856, %v3779
      %3867 = vst.msk [vmem:[#allocation4 + $0xa0] sm:$0xff] %vm3856, %v3781
      %3868 = vst.msk [vmem:[#allocation4 + $0xb0] sm:$0xff] %vm3856, %v3783
      %3869 = vst.msk [vmem:[#allocation4 + $0xc0] sm:$0xff] %vm3856, %v3785
      %3870 = vst.msk [vmem:[#allocation4 + $0xd0] sm:$0xff] %vm3856, %v3787
      %3871 = vst.msk [vmem:[#allocation4 + $0xe0] sm:$0xff] %vm3856, %v3789
      %3872 = vst.msk [vmem:[#allocation4 + $0xf0] sm:$0xff] %vm3856, %v3791
      %3873 = vst.msk [vmem:[#allocation4 + $0x100] sm:$0xff] %vm3856, %v3793
      %3874 = vst.msk [vmem:[#allocation4 + $0x110] sm:$0xff] %vm3856, %v3795
      %3875 = vst.msk [vmem:[#allocation4 + $0x120] sm:$0xff] %vm3856, %v3797
      %3876 = vst.msk [vmem:[#allocation4 + $0x130] sm:$0xff] %vm3856, %v3799
      %3877 = vst.msk [vmem:[#allocation4 + $0x140] sm:$0xff] %vm3856, %v3801
      %3878 = vst.msk [vmem:[#allocation4 + $0x150] sm:$0xff] %vm3856, %v3803
      %3879 = vst.msk [vmem:[#allocation4 + $0x160] sm:$0xff] %vm3856, %v3805
      %3880 = vst.msk [vmem:[#allocation4 + $0x170] sm:$0xff] %vm3856, %v3807
      %3881 = vst.msk [vmem:[#allocation4 + $0x180] sm:$0xff] %vm3856, %v3809
      %3882 = vst.msk [vmem:[#allocation4 + $0x190] sm:$0xff] %vm3856, %v3811
      %3883 = vst.msk [vmem:[#allocation4 + $0x1a0] sm:$0xff] %vm3856, %v3813
      %3884 = vst.msk [vmem:[#allocation4 + $0x1b0] sm:$0xff] %vm3856, %v3815
      %3885 = vst.msk [vmem:[#allocation4 + $0x1c0] sm:$0xff] %vm3856, %v3817
      %3886 = vst.msk [vmem:[#allocation4 + $0x1d0] sm:$0xff] %vm3856, %v3819
      %3887 = vst.msk [vmem:[#allocation4 + $0x1e0] sm:$0xff] %vm3856, %v3821
      %3888 = vst.msk [vmem:[#allocation4 + $0x1f0] sm:$0xff] %vm3856, %v3823
      %v3889 = vld [vmem:[%s3502 + $0x2] sm:$0xff]
      %v3890 = vld [vmem:[%s3502 + $0xa] sm:$0xff]
      %v3891 = vld [vmem:[%s3502 + $0x1a] sm:$0xff]
      %v3892 = vld [vmem:[%s3502 + $0x22] sm:$0xff]
      %v3893 = vld [vmem:[%s3502 + $0x32] sm:$0xff]
      %v3894 = vld [vmem:[%s3502 + $0x3a] sm:$0xff]
      %v3895 = vld [vmem:[%s3502 + $0x4a] sm:$0xff]
      %v3896 = vld [vmem:[%s3502 + $0x52] sm:$0xff]
      %v3897 = vld [vmem:[%s3502 + $0x62] sm:$0xff]
      %v3898 = vld [vmem:[%s3502 + $0x6a] sm:$0xff]
      %v3899 = vld [vmem:[%s3502 + $0x7a] sm:$0xff]
      %v3900 = vld [vmem:[%s3502 + $0x82] sm:$0xff]
      %v3901 = vld [vmem:[%s3502 + $0x92] sm:$0xff]
      %v3902 = vld [vmem:[%s3502 + $0x9a] sm:$0xff]
      %v3903 = vld [vmem:[%s3502 + $0xaa] sm:$0xff]
      %v3904 = vld [vmem:[%s3502 + $0xb2] sm:$0xff]
      %v3905 = vld [vmem:[%s3502 + $0xc2] sm:$0xff]
      %v3906 = vld [vmem:[%s3502 + $0xca] sm:$0xff]
      %v3907 = vld [vmem:[%s3502 + $0xda] sm:$0xff]
      %v3908 = vld [vmem:[%s3502 + $0xe2] sm:$0xff]
      %v3909 = vld [vmem:[%s3502 + $0xf2] sm:$0xff]
      %v3910 = vld [vmem:[%s3502 + $0xfa] sm:$0xff]
      %v3911 = vld [vmem:[%s3502 + $0x10a] sm:$0xff]
      %v3912 = vld [vmem:[%s3502 + $0x112] sm:$0xff]
      %v3913 = vld [vmem:[%s3502 + $0x122] sm:$0xff]
      %v3914 = vld [vmem:[%s3502 + $0x12a] sm:$0xff]
      %v3915 = vld [vmem:[%s3502 + $0x13a] sm:$0xff]
      %v3916 = vld [vmem:[%s3502 + $0x142] sm:$0xff]
      %v3917 = vld [vmem:[%s3502 + $0x152] sm:$0xff]
      %v3918 = vld [vmem:[%s3502 + $0x15a] sm:$0xff]
      %v3919 = vld [vmem:[%s3502 + $0x16a] sm:$0xff]
      %v3920 = vld [vmem:[%s3502 + $0x172] sm:$0xff]
      %3921 = vst.msk [vmem:[#allocation4 + $0x8] sm:$0xff] %vm2384, %v3889
      %3922 = vst.msk [vmem:[#allocation4 + $0x18] sm:$0xff] %vm2384, %v3890
      %3923 = vst.msk [vmem:[#allocation4 + $0x28] sm:$0xff] %vm2384, %v3891
      %3924 = vst.msk [vmem:[#allocation4 + $0x38] sm:$0xff] %vm2384, %v3892
      %3925 = vst.msk [vmem:[#allocation4 + $0x48] sm:$0xff] %vm2384, %v3893
      %3926 = vst.msk [vmem:[#allocation4 + $0x58] sm:$0xff] %vm2384, %v3894
      %3927 = vst.msk [vmem:[#allocation4 + $0x68] sm:$0xff] %vm2384, %v3895
      %3928 = vst.msk [vmem:[#allocation4 + $0x78] sm:$0xff] %vm2384, %v3896
      %3929 = vst.msk [vmem:[#allocation4 + $0x88] sm:$0xff] %vm2384, %v3897
      %3930 = vst.msk [vmem:[#allocation4 + $0x98] sm:$0xff] %vm2384, %v3898
      %3931 = vst.msk [vmem:[#allocation4 + $0xa8] sm:$0xff] %vm2384, %v3899
      %3932 = vst.msk [vmem:[#allocation4 + $0xb8] sm:$0xff] %vm2384, %v3900
      %3933 = vst.msk [vmem:[#allocation4 + $0xc8] sm:$0xff] %vm2384, %v3901
      %3934 = vst.msk [vmem:[#allocation4 + $0xd8] sm:$0xff] %vm2384, %v3902
      %3935 = vst.msk [vmem:[#allocation4 + $0xe8] sm:$0xff] %vm2384, %v3903
      %3936 = vst.msk [vmem:[#allocation4 + $0xf8] sm:$0xff] %vm2384, %v3904
      %3937 = vst.msk [vmem:[#allocation4 + $0x108] sm:$0xff] %vm2384, %v3905
      %3938 = vst.msk [vmem:[#allocation4 + $0x118] sm:$0xff] %vm2384, %v3906
      %3939 = vst.msk [vmem:[#allocation4 + $0x128] sm:$0xff] %vm2384, %v3907
      %3940 = vst.msk [vmem:[#allocation4 + $0x138] sm:$0xff] %vm2384, %v3908
      %3941 = vst.msk [vmem:[#allocation4 + $0x148] sm:$0xff] %vm2384, %v3909
      %3942 = vst.msk [vmem:[#allocation4 + $0x158] sm:$0xff] %vm2384, %v3910
      %3943 = vst.msk [vmem:[#allocation4 + $0x168] sm:$0xff] %vm2384, %v3911
      %3944 = vst.msk [vmem:[#allocation4 + $0x178] sm:$0xff] %vm2384, %v3912
      %3945 = vst.msk [vmem:[#allocation4 + $0x188] sm:$0xff] %vm2384, %v3913
      %3946 = vst.msk [vmem:[#allocation4 + $0x198] sm:$0xff] %vm2384, %v3914
      %3947 = vst.msk [vmem:[#allocation4 + $0x1a8] sm:$0xff] %vm2384, %v3915
      %3948 = vst.msk [vmem:[#allocation4 + $0x1b8] sm:$0xff] %vm2384, %v3916
      %3949 = vst.msk [vmem:[#allocation4 + $0x1c8] sm:$0xff] %vm2384, %v3917
      %3950 = vst.msk [vmem:[#allocation4 + $0x1d8] sm:$0xff] %vm2384, %v3918
      %3951 = vst.msk [vmem:[#allocation4 + $0x1e8] sm:$0xff] %vm2384, %v3919
      %3952 = vst.msk [vmem:[#allocation4 + $0x1f8] sm:$0xff] %vm2384, %v3920
      %v3953 = vld [vmem:[#allocation4] sm:$0xff]
      %v3954 = vld [vmem:[#allocation4 + $0x8] sm:$0xff]
      %v3955 = vld [vmem:[#allocation4 + $0x10] sm:$0xff]
      %v3956 = vld [vmem:[#allocation4 + $0x18] sm:$0xff]
      %v3957 = vld [vmem:[#allocation4 + $0x20] sm:$0xff]
      %v3958 = vld [vmem:[#allocation4 + $0x28] sm:$0xff]
      %v3959 = vld [vmem:[#allocation4 + $0x30] sm:$0xff]
      %v3960 = vld [vmem:[#allocation4 + $0x38] sm:$0xff]
      %v3961 = vld [vmem:[#allocation4 + $0x40] sm:$0xff]
      %v3962 = vld [vmem:[#allocation4 + $0x48] sm:$0xff]
      %v3963 = vld [vmem:[#allocation4 + $0x50] sm:$0xff]
      %v3964 = vld [vmem:[#allocation4 + $0x58] sm:$0xff]
      %v3965 = vld [vmem:[#allocation4 + $0x60] sm:$0xff]
      %v3966 = vld [vmem:[#allocation4 + $0x68] sm:$0xff]
      %v3967 = vld [vmem:[#allocation4 + $0x70] sm:$0xff]
      %v3968 = vld [vmem:[#allocation4 + $0x78] sm:$0xff]
      %v3969 = vld [vmem:[#allocation4 + $0x80] sm:$0xff]
      %v3970 = vld [vmem:[#allocation4 + $0x88] sm:$0xff]
      %v3971 = vld [vmem:[#allocation4 + $0x90] sm:$0xff]
      %v3972 = vld [vmem:[#allocation4 + $0x98] sm:$0xff]
      %v3973 = vld [vmem:[#allocation4 + $0xa0] sm:$0xff]
      %v3974 = vld [vmem:[#allocation4 + $0xa8] sm:$0xff]
      %v3975 = vld [vmem:[#allocation4 + $0xb0] sm:$0xff]
      %v3976 = vld [vmem:[#allocation4 + $0xb8] sm:$0xff]
      %v3977 = vld [vmem:[#allocation4 + $0xc0] sm:$0xff]
      %v3978 = vld [vmem:[#allocation4 + $0xc8] sm:$0xff]
      %v3979 = vld [vmem:[#allocation4 + $0xd0] sm:$0xff]
      %v3980 = vld [vmem:[#allocation4 + $0xd8] sm:$0xff]
      %v3981 = vld [vmem:[#allocation4 + $0xe0] sm:$0xff]
      %v3982 = vld [vmem:[#allocation4 + $0xe8] sm:$0xff]
      %v3983 = vld [vmem:[#allocation4 + $0xf0] sm:$0xff]
      %v3984 = vld [vmem:[#allocation4 + $0xf8] sm:$0xff]
      %v3985 = vld [vmem:[#allocation4 + $0x100] sm:$0xff]
      %v3986 = vld [vmem:[#allocation4 + $0x108] sm:$0xff]
      %v3987 = vld [vmem:[#allocation4 + $0x110] sm:$0xff]
      %v3988 = vld [vmem:[#allocation4 + $0x118] sm:$0xff]
      %v3989 = vld [vmem:[#allocation4 + $0x120] sm:$0xff]
      %v3990 = vld [vmem:[#allocation4 + $0x128] sm:$0xff]
      %v3991 = vld [vmem:[#allocation4 + $0x130] sm:$0xff]
      %v3992 = vld [vmem:[#allocation4 + $0x138] sm:$0xff]
      %v3993 = vld [vmem:[#allocation4 + $0x140] sm:$0xff]
      %v3994 = vld [vmem:[#allocation4 + $0x148] sm:$0xff]
      %v3995 = vld [vmem:[#allocation4 + $0x150] sm:$0xff]
      %v3996 = vld [vmem:[#allocation4 + $0x158] sm:$0xff]
      %v3997 = vld [vmem:[#allocation4 + $0x160] sm:$0xff]
      %v3998 = vld [vmem:[#allocation4 + $0x168] sm:$0xff]
      %v3999 = vld [vmem:[#allocation4 + $0x170] sm:$0xff]
      %v4000 = vld [vmem:[#allocation4 + $0x178] sm:$0xff]
      %v4001 = vld [vmem:[#allocation4 + $0x180] sm:$0xff]
      %v4002 = vld [vmem:[#allocation4 + $0x188] sm:$0xff]
      %v4003 = vld [vmem:[#allocation4 + $0x190] sm:$0xff]
      %v4004 = vld [vmem:[#allocation4 + $0x198] sm:$0xff]
      %v4005 = vld [vmem:[#allocation4 + $0x1a0] sm:$0xff]
      %v4006 = vld [vmem:[#allocation4 + $0x1a8] sm:$0xff]
      %v4007 = vld [vmem:[#allocation4 + $0x1b0] sm:$0xff]
      %v4008 = vld [vmem:[#allocation4 + $0x1b8] sm:$0xff]
      %v4009 = vld [vmem:[#allocation4 + $0x1c0] sm:$0xff]
      %v4010 = vld [vmem:[#allocation4 + $0x1c8] sm:$0xff]
      %v4011 = vld [vmem:[#allocation4 + $0x1d0] sm:$0xff]
      %v4012 = vld [vmem:[#allocation4 + $0x1d8] sm:$0xff]
      %v4013 = vld [vmem:[#allocation4 + $0x1e0] sm:$0xff]
      %v4014 = vld [vmem:[#allocation4 + $0x1e8] sm:$0xff]
      %v4015 = vld [vmem:[#allocation4 + $0x1f0] sm:$0xff]
      %v4016 = vld [vmem:[#allocation4 + $0x1f8] sm:$0xff]
      %v4017 = vpack.c.bf16 %v3955, %v3953
      %v4018 = vpack.c.bf16 %v3956, %v3954
      %v4019 = vpack.c.bf16 %v3959, %v3957
      %v4020 = vpack.c.bf16 %v3960, %v3958
      %v4021 = vpack.c.bf16 %v3963, %v3961
      %v4022 = vpack.c.bf16 %v3964, %v3962
      %v4023 = vpack.c.bf16 %v3967, %v3965
      %v4024 = vpack.c.bf16 %v3968, %v3966
      %v4025 = vpack.c.bf16 %v3971, %v3969
      %v4026 = vpack.c.bf16 %v3972, %v3970
      %v4027 = vpack.c.bf16 %v3975, %v3973
      %v4028 = vpack.c.bf16 %v3976, %v3974
      %v4029 = vpack.c.bf16 %v3979, %v3977
      %v4030 = vpack.c.bf16 %v3980, %v3978
      %v4031 = vpack.c.bf16 %v3983, %v3981
      %v4032 = vpack.c.bf16 %v3984, %v3982
      %v4033 = vpack.c.bf16 %v3987, %v3985
      %v4034 = vpack.c.bf16 %v3988, %v3986
      %v4035 = vpack.c.bf16 %v3991, %v3989
      %v4036 = vpack.c.bf16 %v3992, %v3990
      %v4037 = vpack.c.bf16 %v3995, %v3993
      %v4038 = vpack.c.bf16 %v3996, %v3994
      %v4039 = vpack.c.bf16 %v3999, %v3997
      %v4040 = vpack.c.bf16 %v4000, %v3998
      %v4041 = vpack.c.bf16 %v4003, %v4001
      %v4042 = vpack.c.bf16 %v4004, %v4002
      %v4043 = vpack.c.bf16 %v4007, %v4005
      %v4044 = vpack.c.bf16 %v4008, %v4006
      %v4045 = vpack.c.bf16 %v4011, %v4009
      %v4046 = vpack.c.bf16 %v4012, %v4010
      %v4047 = vpack.c.bf16 %v4015, %v4013
      %v4048 = vpack.c.bf16 %v4016, %v4014
      %v4049 = vld [vmem:[%s5] sm:$0xf]
      %v4050 = vld [vmem:[%s5 + $0x4] sm:$0xf]
      %v4051 = vld [vmem:[%s5 + $0x8] sm:$0xf]
      %v4052 = vld [vmem:[%s5 + $0xc] sm:$0xf]
      %v4053 = vld [vmem:[%s5 + $0x10] sm:$0xf]
      %v4054 = vld [vmem:[%s5 + $0x14] sm:$0xf]
      %v4055 = vld [vmem:[%s5 + $0x18] sm:$0xf]
      %v4056 = vld [vmem:[%s5 + $0x1c] sm:$0xf]
      %v4057 = vld [vmem:[%s5 + $0x20] sm:$0xf]
      %v4058 = vld [vmem:[%s5 + $0x24] sm:$0xf]
      %v4059 = vld [vmem:[%s5 + $0x28] sm:$0xf]
      %v4060 = vld [vmem:[%s5 + $0x2c] sm:$0xf]
      %v4061 = vld [vmem:[%s5 + $0x30] sm:$0xf]
      %v4062 = vld [vmem:[%s5 + $0x34] sm:$0xf]
      %v4063 = vld [vmem:[%s5 + $0x38] sm:$0xf]
      %v4064 = vld [vmem:[%s5 + $0x3c] sm:$0xf]
      %v4065 = vld [vmem:[%s5 + $0x40] sm:$0xf]
      %v4066 = vld [vmem:[%s5 + $0x44] sm:$0xf]
      %v4067 = vld [vmem:[%s6] sm:$0x1]
      %v4069 = vlaneseq
      %v4070 = vshrl.u32 %v4069, 7
      %v4071 = vsub.s32 0, %v4070
      %v4072 = vrot.slane %v4067, %v4071
      %v4092 = vunpack.c.l.b16 %v4049
      %v4093 = vunpack.c.l.b16 %v4050
      %v4094 = vunpack.c.l.b16 %v4051
      %v4095 = vunpack.c.l.b16 %v4052
      %v4096 = vunpack.c.l.b16 %v4053
      %v4097 = vunpack.c.l.b16 %v4054
      %v4098 = vunpack.c.l.b16 %v4055
      %v4099 = vunpack.c.l.b16 %v4056
      %v4100 = vunpack.c.l.b16 %v4057
      %v4101 = vunpack.c.l.b16 %v4058
      %v4102 = vunpack.c.l.b16 %v4059
      %v4103 = vunpack.c.l.b16 %v4060
      %v4104 = vunpack.c.l.b16 %v4061
      %v4105 = vunpack.c.l.b16 %v4062
      %v4106 = vunpack.c.l.b16 %v4063
      %v4107 = vunpack.c.l.b16 %v4064
      %v4108 = vunpack.c.l.b16 %v4065
      %v4109 = vunpack.c.l.b16 %v4066
      %v4110 = vpack.c.b16 %v4093, %v4092
      %v4111 = vpack.c.b16 %v4095, %v4094
      %v4112 = vpack.c.b16 %v4097, %v4096
      %v4113 = vpack.c.b16 %v4099, %v4098
      %v4114 = vpack.c.b16 %v4101, %v4100
      %v4115 = vpack.c.b16 %v4103, %v4102
      %v4116 = vpack.c.b16 %v4105, %v4104
      %v4117 = vpack.c.b16 %v4107, %v4106
      %v4118 = vpack.c.b16 %v4109, %v4108
      %v4129 = vsel %vm2384, %v4018, 0
      %v4132 = vsel %vm2384, %v4020, 0
      %v4135 = vsel %vm2384, %v4022, 0
      %v4138 = vsel %vm2384, %v4024, 0
      %v4141 = vsel %vm2384, %v4026, 0
      %v4144 = vsel %vm2384, %v4028, 0
      %v4147 = vsel %vm2384, %v4030, 0
      %v4150 = vsel %vm2384, %v4032, 0
      %v4153 = vsel %vm2384, %v4034, 0
      %v4156 = vsel %vm2384, %v4036, 0
      %v4159 = vsel %vm2384, %v4038, 0
      %v4162 = vsel %vm2384, %v4040, 0
      %v4165 = vsel %vm2384, %v4042, 0
      %v4168 = vsel %vm2384, %v4044, 0
      %v4171 = vsel %vm2384, %v4046, 0
      %v4174 = vsel %vm2384, %v4048, 0
      %4176 = vmatprep.subr.bf16.mxu0 0
      %4177 = vmatpush1.bf16.msra.mxu0 %v4110
      %4178 = vmatprep.subr.bf16.mxu0 0
      %4179 = vmatpush1.bf16.msra.mxu0 %v4111
      %4180 = vmatprep.subr.bf16.mxu0 0
      %4181 = vmatpush1.bf16.msra.mxu0 %v4112
      %4182 = vmatprep.subr.bf16.mxu0 0
      %4183 = vmatpush1.bf16.msra.mxu0 %v4113
      %4184 = vmatprep.subr.bf16.mxu0 0
      %4185 = vmatpush1.bf16.msra.mxu0 %v4114
      %4186 = vmatprep.subr.bf16.mxu0 0
      %4187 = vmatpush1.bf16.msra.mxu0 %v4115
      %4188 = vmatprep.subr.bf16.mxu0 0
      %4189 = vmatpush1.bf16.msra.mxu0 %v4116
      %4190 = vmatprep.subr.bf16.mxu0 0
      %4191 = vmatpush1.bf16.msra.mxu0 %v4117
      %4192 = vmatprep.subr.bf16.mxu0 0
      %4193 = vmatpush1.bf16.msra.mxu0 %v4118
      %4194 = vmatprep.subr.bf16.mxu0 0
      %4195 = vmatpush1.bf16.msra.mxu0 0
      %4196 = vmatprep.subr.bf16.mxu0 0
      %4197 = vmatpush1.bf16.msra.mxu0 0
      %4198 = vmatprep.subr.bf16.mxu0 0
      %4199 = vmatpush1.bf16.msra.mxu0 0
      %4200 = vmatprep.subr.bf16.mxu0 0
      %4201 = vmatpush1.bf16.msra.mxu0 0
      %4202 = vmatprep.subr.bf16.mxu0 0
      %4203 = vmatpush1.bf16.msra.mxu0 0
      %4204 = vmatprep.subr.bf16.mxu0 0
      %4205 = vmatpush1.bf16.msra.mxu0 0
      %4206 = vmatprep.subr.bf16.mxu0 0
      %4207 = vmatpush1.bf16.msra.mxu0 0
      %4208 = vmatprep.mubr.bf16.mxu0 %v4129
      %4209 = vmatmul.mubr.bf16.gmra.mrb[0].mxu0 %v4017
      %v4210 = vpop.f32.mrb[0].mxu0
      %v4211 = vadd.f32 %v4072, %v4210
      %v4212 = vpop.f32.mrb[0].mxu0
      %v4213 = vpop.f32.mrb[0].mxu0
      %v4214 = vadd.f32 %v4072, %v4213
      %v4215 = vpop.f32.mrb[0].mxu0
      %4216 = vmatprep.mubr.bf16.mxu0 %v4132
      %4217 = vmatmul.mubr.bf16.gmra.mrb[0].mxu0 %v4019
      %v4218 = vpop.f32.mrb[0].mxu0
      %v4219 = vadd.f32 %v4072, %v4218
      %v4220 = vpop.f32.mrb[0].mxu0
      %v4221 = vpop.f32.mrb[0].mxu0
      %v4222 = vadd.f32 %v4072, %v4221
      %v4223 = vpop.f32.mrb[0].mxu0
      %4224 = vmatprep.mubr.bf16.mxu0 %v4135
      %4225 = vmatmul.mubr.bf16.gmra.mrb[0].mxu0 %v4021
      %v4226 = vpop.f32.mrb[0].mxu0
      %v4227 = vadd.f32 %v4072, %v4226
      %v4228 = vpop.f32.mrb[0].mxu0
      %v4229 = vpop.f32.mrb[0].mxu0
      %v4230 = vadd.f32 %v4072, %v4229
      %v4231 = vpop.f32.mrb[0].mxu0
      %4232 = vmatprep.mubr.bf16.mxu0 %v4138
      %4233 = vmatmul.mubr.bf16.gmra.mrb[0].mxu0 %v4023
      %v4234 = vpop.f32.mrb[0].mxu0
      %v4235 = vadd.f32 %v4072, %v4234
      %v4236 = vpop.f32.mrb[0].mxu0
      %v4237 = vpop.f32.mrb[0].mxu0
      %v4238 = vadd.f32 %v4072, %v4237
      %v4239 = vpop.f32.mrb[0].mxu0
      %4240 = vmatprep.mubr.bf16.mxu0 %v4141
      %4241 = vmatmul.mubr.bf16.gmra.mrb[0].mxu0 %v4025
      %v4242 = vpop.f32.mrb[0].mxu0
      %v4243 = vadd.f32 %v4072, %v4242
      %v4244 = vpop.f32.mrb[0].mxu0
      %v4245 = vpop.f32.mrb[0].mxu0
      %v4246 = vadd.f32 %v4072, %v4245
      %v4247 = vpop.f32.mrb[0].mxu0
      %4248 = vmatprep.mubr.bf16.mxu0 %v4144
      %4249 = vmatmul.mubr.bf16.gmra.mrb[0].mxu0 %v4027
      %v4250 = vpop.f32.mrb[0].mxu0
      %v4251 = vadd.f32 %v4072, %v4250
      %v4252 = vpop.f32.mrb[0].mxu0
      %v4253 = vpop.f32.mrb[0].mxu0
      %v4254 = vadd.f32 %v4072, %v4253
      %v4255 = vpop.f32.mrb[0].mxu0
      %4256 = vmatprep.mubr.bf16.mxu0 %v4147
      %4257 = vmatmul.mubr.bf16.gmra.mrb[0].mxu0 %v4029
      %v4258 = vpop.f32.mrb[0].mxu0
      %v4259 = vadd.f32 %v4072, %v4258
      %v4260 = vpop.f32.mrb[0].mxu0
      %v4261 = vpop.f32.mrb[0].mxu0
      %v4262 = vadd.f32 %v4072, %v4261
      %v4263 = vpop.f32.mrb[0].mxu0
      %4264 = vmatprep.mubr.bf16.mxu0 %v4150
      %4265 = vmatmul.mubr.bf16.gmra.mrb[0].mxu0 %v4031
      %v4266 = vpop.f32.mrb[0].mxu0
      %v4267 = vadd.f32 %v4072, %v4266
      %v4268 = vpop.f32.mrb[0].mxu0
      %v4269 = vpop.f32.mrb[0].mxu0
      %v4270 = vadd.f32 %v4072, %v4269
      %v4271 = vpop.f32.mrb[0].mxu0
      %4272 = vmatprep.mubr.bf16.mxu0 %v4153
      %4273 = vmatmul.mubr.bf16.gmra.mrb[0].mxu0 %v4033
      %v4274 = vpop.f32.mrb[0].mxu0
      %v4275 = vadd.f32 %v4072, %v4274
      %v4276 = vpop.f32.mrb[0].mxu0
      %v4277 = vpop.f32.mrb[0].mxu0
      %v4278 = vadd.f32 %v4072, %v4277
      %v4279 = vpop.f32.mrb[0].mxu0
      %4280 = vmatprep.mubr.bf16.mxu0 %v4156
      %4281 = vmatmul.mubr.bf16.gmra.mrb[0].mxu0 %v4035
      %v4282 = vpop.f32.mrb[0].mxu0
      %v4283 = vadd.f32 %v4072, %v4282
      %v4284 = vpop.f32.mrb[0].mxu0
      %v4285 = vpop.f32.mrb[0].mxu0
      %v4286 = vadd.f32 %v4072, %v4285
      %v4287 = vpop.f32.mrb[0].mxu0
      %4288 = vmatprep.mubr.bf16.mxu0 %v4159
      %4289 = vmatmul.mubr.bf16.gmra.mrb[0].mxu0 %v4037
      %v4290 = vpop.f32.mrb[0].mxu0
      %v4291 = vadd.f32 %v4072, %v4290
      %v4292 = vpop.f32.mrb[0].mxu0
      %v4293 = vpop.f32.mrb[0].mxu0
      %v4294 = vadd.f32 %v4072, %v4293
      %v4295 = vpop.f32.mrb[0].mxu0
      %4296 = vmatprep.mubr.bf16.mxu0 %v4162
      %4297 = vmatmul.mubr.bf16.gmra.mrb[0].mxu0 %v4039
      %v4298 = vpop.f32.mrb[0].mxu0
      %v4299 = vadd.f32 %v4072, %v4298
      %v4300 = vpop.f32.mrb[0].mxu0
      %v4301 = vpop.f32.mrb[0].mxu0
      %v4302 = vadd.f32 %v4072, %v4301
      %v4303 = vpop.f32.mrb[0].mxu0
      %4304 = vmatprep.mubr.bf16.mxu0 %v4165
      %4305 = vmatmul.mubr.bf16.gmra.mrb[0].mxu0 %v4041
      %v4306 = vpop.f32.mrb[0].mxu0
      %v4307 = vadd.f32 %v4072, %v4306
      %v4308 = vpop.f32.mrb[0].mxu0
      %v4309 = vpop.f32.mrb[0].mxu0
      %v4310 = vadd.f32 %v4072, %v4309
      %v4311 = vpop.f32.mrb[0].mxu0
      %4312 = vmatprep.mubr.bf16.mxu0 %v4168
      %4313 = vmatmul.mubr.bf16.gmra.mrb[0].mxu0 %v4043
      %v4314 = vpop.f32.mrb[0].mxu0
      %v4315 = vadd.f32 %v4072, %v4314
      %v4316 = vpop.f32.mrb[0].mxu0
      %v4317 = vpop.f32.mrb[0].mxu0
      %v4318 = vadd.f32 %v4072, %v4317
      %v4319 = vpop.f32.mrb[0].mxu0
      %4320 = vmatprep.mubr.bf16.mxu0 %v4171
      %4321 = vmatmul.mubr.bf16.gmra.mrb[0].mxu0 %v4045
      %v4322 = vpop.f32.mrb[0].mxu0
      %v4323 = vadd.f32 %v4072, %v4322
      %v4324 = vpop.f32.mrb[0].mxu0
      %v4325 = vpop.f32.mrb[0].mxu0
      %v4326 = vadd.f32 %v4072, %v4325
      %v4327 = vpop.f32.mrb[0].mxu0
      %4328 = vmatprep.mubr.bf16.mxu0 %v4174
      %4329 = vmatmul.mubr.bf16.gmra.mrb[0].mxu0 %v4047
      %v4330 = vpop.f32.mrb[0].mxu0
      %v4331 = vadd.f32 %v4072, %v4330
      %v4332 = vpop.f32.mrb[0].mxu0
      %v4333 = vpop.f32.mrb[0].mxu0
      %v4334 = vadd.f32 %v4072, %v4333
      %v4335 = vpop.f32.mrb[0].mxu0
      %4336 = vdwg.mxu0
      %v4337 = vmax.f32 %v4211, 0.0
      %v4338 = vmax.f32 %v4214, 0.0
      %v4339 = vmax.f32 %v4219, 0.0
      %v4340 = vmax.f32 %v4222, 0.0
      %v4341 = vmax.f32 %v4227, 0.0
      %v4342 = vmax.f32 %v4230, 0.0
      %v4343 = vmax.f32 %v4235, 0.0
      %v4344 = vmax.f32 %v4238, 0.0
      %v4345 = vmax.f32 %v4243, 0.0
      %v4346 = vmax.f32 %v4246, 0.0
      %v4347 = vmax.f32 %v4251, 0.0
      %v4348 = vmax.f32 %v4254, 0.0
      %v4349 = vmax.f32 %v4259, 0.0
      %v4350 = vmax.f32 %v4262, 0.0
      %v4351 = vmax.f32 %v4267, 0.0
      %v4352 = vmax.f32 %v4270, 0.0
      %v4353 = vmax.f32 %v4275, 0.0
      %v4354 = vmax.f32 %v4278, 0.0
      %v4355 = vmax.f32 %v4283, 0.0
      %v4356 = vmax.f32 %v4286, 0.0
      %v4357 = vmax.f32 %v4291, 0.0
      %v4358 = vmax.f32 %v4294, 0.0
      %v4359 = vmax.f32 %v4299, 0.0
      %v4360 = vmax.f32 %v4302, 0.0
      %v4361 = vmax.f32 %v4307, 0.0
      %v4362 = vmax.f32 %v4310, 0.0
      %v4363 = vmax.f32 %v4315, 0.0
      %v4364 = vmax.f32 %v4318, 0.0
      %v4365 = vmax.f32 %v4323, 0.0
      %v4366 = vmax.f32 %v4326, 0.0
      %v4367 = vmax.f32 %v4331, 0.0
      %v4368 = vmax.f32 %v4334, 0.0
      %v4369 = vld [vmem:[%s291] sm:$0xff]
      %v4370 = vld [vmem:[%s291 + $0x8] sm:$0xff]
      %v4371 = vld [vmem:[%s291 + $0x10] sm:$0xff]
      %v4372 = vld [vmem:[%s291 + $0x18] sm:$0xff]
      %v4373 = vld [vmem:[%s291 + $0x20] sm:$0xff]
      %v4374 = vld [vmem:[%s291 + $0x28] sm:$0xff]
      %v4375 = vld [vmem:[%s291 + $0x30] sm:$0xff]
      %v4376 = vld [vmem:[%s291 + $0x38] sm:$0xff]
      %v4377 = vld [vmem:[%s291 + $0x40] sm:$0xff]
      %v4378 = vld [vmem:[%s291 + $0x48] sm:$0xff]
      %v4379 = vld [vmem:[%s291 + $0x50] sm:$0xff]
      %v4380 = vld [vmem:[%s291 + $0x58] sm:$0xff]
      %v4381 = vld [vmem:[%s291 + $0x60] sm:$0xff]
      %v4382 = vld [vmem:[%s291 + $0x68] sm:$0xff]
      %v4383 = vld [vmem:[%s291 + $0x70] sm:$0xff]
      %v4384 = vld [vmem:[%s291 + $0x78] sm:$0xff]
      %v4385 = vld [vmem:[%s291 + $0x80] sm:$0xff]
      %v4386 = vld [vmem:[%s291 + $0x88] sm:$0xff]
      %v4387 = vld [vmem:[%s291 + $0x90] sm:$0xff]
      %v4388 = vld [vmem:[%s291 + $0x98] sm:$0xff]
      %v4389 = vld [vmem:[%s291 + $0xa0] sm:$0xff]
      %v4390 = vld [vmem:[%s291 + $0xa8] sm:$0xff]
      %v4391 = vld [vmem:[%s291 + $0xb0] sm:$0xff]
      %v4392 = vld [vmem:[%s291 + $0xb8] sm:$0xff]
      %v4393 = vld [vmem:[%s291 + $0xc0] sm:$0xff]
      %v4394 = vld [vmem:[%s291 + $0xc8] sm:$0xff]
      %v4395 = vld [vmem:[%s291 + $0xd0] sm:$0xff]
      %v4396 = vld [vmem:[%s291 + $0xd8] sm:$0xff]
      %v4397 = vld [vmem:[%s291 + $0xe0] sm:$0xff]
      %v4398 = vld [vmem:[%s291 + $0xe8] sm:$0xff]
      %v4399 = vld [vmem:[%s291 + $0xf0] sm:$0xff]
      %v4400 = vld [vmem:[%s291 + $0xf8] sm:$0xff]
      %v4401 = vsub.f32 %v4369, %v333
      %v4402 = vsub.f32 %v4370, %v333
      %v4403 = vsub.f32 %v4371, %v333
      %v4404 = vsub.f32 %v4372, %v333
      %v4405 = vsub.f32 %v4373, %v333
      %v4406 = vsub.f32 %v4374, %v333
      %v4407 = vsub.f32 %v4375, %v333
      %v4408 = vsub.f32 %v4376, %v333
      %v4409 = vsub.f32 %v4377, %v333
      %v4410 = vsub.f32 %v4378, %v333
      %v4411 = vsub.f32 %v4379, %v333
      %v4412 = vsub.f32 %v4380, %v333
      %v4413 = vsub.f32 %v4381, %v333
      %v4414 = vsub.f32 %v4382, %v333
      %v4415 = vsub.f32 %v4383, %v333
      %v4416 = vsub.f32 %v4384, %v333
      %v4417 = vsub.f32 %v4385, %v333
      %v4418 = vsub.f32 %v4386, %v333
      %v4419 = vsub.f32 %v4387, %v333
      %v4420 = vsub.f32 %v4388, %v333
      %v4421 = vsub.f32 %v4389, %v333
      %v4422 = vsub.f32 %v4390, %v333
      %v4423 = vsub.f32 %v4391, %v333
      %v4424 = vsub.f32 %v4392, %v333
      %v4425 = vsub.f32 %v4393, %v333
      %v4426 = vsub.f32 %v4394, %v333
      %v4427 = vsub.f32 %v4395, %v333
      %v4428 = vsub.f32 %v4396, %v333
      %v4429 = vsub.f32 %v4397, %v333
      %v4430 = vsub.f32 %v4398, %v333
      %v4431 = vsub.f32 %v4399, %v333
      %v4432 = vsub.f32 %v4400, %v333
      %4433 = vst.msk [vmem:[#allocation2] sm:$0xff] %vm367, 0.0
      %4434 = vst.msk [vmem:[#allocation2 + $0x8] sm:$0xff] %vm367, 0.0
      %4435 = vst.msk [vmem:[#allocation2 + $0x10] sm:$0x3] %vm370, 0.0
      %4436 = vst.msk [vmem:[#allocation2 + $0x18] sm:$0xff] %vm367, 0.0
      %4437 = vst.msk [vmem:[#allocation2 + $0x20] sm:$0xff] %vm367, 0.0
      %4438 = vst.msk [vmem:[#allocation2 + $0x28] sm:$0x3] %vm370, 0.0
      %4439 = vst.msk [vmem:[#allocation2 + $0x30] sm:$0xff] %vm367, 0.0
      %4440 = vst.msk [vmem:[#allocation2 + $0x38] sm:$0xff] %vm367, 0.0
      %4441 = vst.msk [vmem:[#allocation2 + $0x40] sm:$0x3] %vm370, 0.0
      %4442 = vst.msk [vmem:[#allocation2 + $0x48] sm:$0xff] %vm367, 0.0
      %4443 = vst.msk [vmem:[#allocation2 + $0x50] sm:$0xff] %vm367, 0.0
      %4444 = vst.msk [vmem:[#allocation2 + $0x58] sm:$0x3] %vm370, 0.0
      %4445 = vst.msk [vmem:[#allocation2 + $0x60] sm:$0xff] %vm367, 0.0
      %4446 = vst.msk [vmem:[#allocation2 + $0x68] sm:$0xff] %vm367, 0.0
      %4447 = vst.msk [vmem:[#allocation2 + $0x70] sm:$0x3] %vm370, 0.0
      %4448 = vst.msk [vmem:[#allocation2 + $0x78] sm:$0xff] %vm367, 0.0
      %4449 = vst.msk [vmem:[#allocation2 + $0x80] sm:$0xff] %vm367, 0.0
      %4450 = vst.msk [vmem:[#allocation2 + $0x88] sm:$0x3] %vm370, 0.0
      %4451 = vst.msk [vmem:[#allocation2 + $0x90] sm:$0xff] %vm367, 0.0
      %4452 = vst.msk [vmem:[#allocation2 + $0x98] sm:$0xff] %vm367, 0.0
      %4453 = vst.msk [vmem:[#allocation2 + $0xa0] sm:$0x3] %vm370, 0.0
      %4454 = vst.msk [vmem:[#allocation2 + $0xa8] sm:$0xff] %vm367, 0.0
      %4455 = vst.msk [vmem:[#allocation2 + $0xb0] sm:$0xff] %vm367, 0.0
      %4456 = vst.msk [vmem:[#allocation2 + $0xb8] sm:$0x3] %vm370, 0.0
      %4457 = vst.msk [vmem:[#allocation2 + $0xc0] sm:$0xff] %vm367, 0.0
      %4458 = vst.msk [vmem:[#allocation2 + $0xc8] sm:$0xff] %vm367, 0.0
      %4459 = vst.msk [vmem:[#allocation2 + $0xd0] sm:$0x3] %vm370, 0.0
      %4460 = vst.msk [vmem:[#allocation2 + $0xd8] sm:$0xff] %vm367, 0.0
      %4461 = vst.msk [vmem:[#allocation2 + $0xe0] sm:$0xff] %vm367, 0.0
      %4462 = vst.msk [vmem:[#allocation2 + $0xe8] sm:$0x3] %vm370, 0.0
      %4463 = vst.msk [vmem:[#allocation2 + $0xf0] sm:$0xff] %vm367, 0.0
      %4464 = vst.msk [vmem:[#allocation2 + $0xf8] sm:$0xff] %vm367, 0.0
      %4465 = vst.msk [vmem:[#allocation2 + $0x100] sm:$0x3] %vm370, 0.0
      %4466 = vst.msk [vmem:[#allocation2 + $0x108] sm:$0xff] %vm367, 0.0
      %4467 = vst.msk [vmem:[#allocation2 + $0x110] sm:$0xff] %vm367, 0.0
      %4468 = vst.msk [vmem:[#allocation2 + $0x118] sm:$0x3] %vm370, 0.0
      %4469 = vst.msk [vmem:[#allocation2 + $0x120] sm:$0xff] %vm367, 0.0
      %4470 = vst.msk [vmem:[#allocation2 + $0x128] sm:$0xff] %vm367, 0.0
      %4471 = vst.msk [vmem:[#allocation2 + $0x130] sm:$0x3] %vm370, 0.0
      %4472 = vst.msk [vmem:[#allocation2 + $0x138] sm:$0xff] %vm367, 0.0
      %4473 = vst.msk [vmem:[#allocation2 + $0x140] sm:$0xff] %vm367, 0.0
      %4474 = vst.msk [vmem:[#allocation2 + $0x148] sm:$0x3] %vm370, 0.0
      %4475 = vst.msk [vmem:[#allocation2 + $0x150] sm:$0xff] %vm367, 0.0
      %4476 = vst.msk [vmem:[#allocation2 + $0x158] sm:$0xff] %vm367, 0.0
      %4477 = vst.msk [vmem:[#allocation2 + $0x160] sm:$0x3] %vm370, 0.0
      %4478 = vst.msk [vmem:[#allocation2 + $0x168] sm:$0xff] %vm367, 0.0
      %4479 = vst.msk [vmem:[#allocation2 + $0x170] sm:$0xff] %vm367, 0.0
      %4480 = vst.msk [vmem:[#allocation2 + $0x178] sm:$0x3] %vm370, 0.0
      %4481 = vst.msk [vmem:[#allocation2 + $0x180] sm:$0xff] %vm367, 0.0
      %4482 = vst.msk [vmem:[#allocation2 + $0x188] sm:$0xff] %vm367, 0.0
      %4483 = vst.msk [vmem:[#allocation2 + $0x190] sm:$0x3] %vm370, 0.0
      %4484 = vst.msk [vmem:[#allocation2 + $0x198] sm:$0xff] %vm367, 0.0
      %4485 = vst.msk [vmem:[#allocation2 + $0x1a0] sm:$0xff] %vm367, 0.0
      %4486 = vst.msk [vmem:[#allocation2 + $0x1a8] sm:$0x3] %vm370, 0.0
      %4487 = vst.msk [vmem:[%s423 + $0x1] sm:$0xff] %vm367, %v4401
      %4488 = vst.msk [vmem:[%s423 + $0x9] sm:$0xff] %vm367, %v4402
      %4489 = vst.msk [vmem:[%s423 + $0x19] sm:$0xff] %vm367, %v4403
      %4490 = vst.msk [vmem:[%s423 + $0x21] sm:$0xff] %vm367, %v4404
      %4491 = vst.msk [vmem:[%s423 + $0x31] sm:$0xff] %vm367, %v4405
      %4492 = vst.msk [vmem:[%s423 + $0x39] sm:$0xff] %vm367, %v4406
      %4493 = vst.msk [vmem:[%s423 + $0x49] sm:$0xff] %vm367, %v4407
      %4494 = vst.msk [vmem:[%s423 + $0x51] sm:$0xff] %vm367, %v4408
      %4495 = vst.msk [vmem:[%s423 + $0x61] sm:$0xff] %vm367, %v4409
      %4496 = vst.msk [vmem:[%s423 + $0x69] sm:$0xff] %vm367, %v4410
      %4497 = vst.msk [vmem:[%s423 + $0x79] sm:$0xff] %vm367, %v4411
      %4498 = vst.msk [vmem:[%s423 + $0x81] sm:$0xff] %vm367, %v4412
      %4499 = vst.msk [vmem:[%s423 + $0x91] sm:$0xff] %vm367, %v4413
      %4500 = vst.msk [vmem:[%s423 + $0x99] sm:$0xff] %vm367, %v4414
      %4501 = vst.msk [vmem:[%s423 + $0xa9] sm:$0xff] %vm367, %v4415
      %4502 = vst.msk [vmem:[%s423 + $0xb1] sm:$0xff] %vm367, %v4416
      %4503 = vst.msk [vmem:[%s423 + $0xc1] sm:$0xff] %vm367, %v4417
      %4504 = vst.msk [vmem:[%s423 + $0xc9] sm:$0xff] %vm367, %v4418
      %4505 = vst.msk [vmem:[%s423 + $0xd9] sm:$0xff] %vm367, %v4419
      %4506 = vst.msk [vmem:[%s423 + $0xe1] sm:$0xff] %vm367, %v4420
      %4507 = vst.msk [vmem:[%s423 + $0xf1] sm:$0xff] %vm367, %v4421
      %4508 = vst.msk [vmem:[%s423 + $0xf9] sm:$0xff] %vm367, %v4422
      %4509 = vst.msk [vmem:[%s423 + $0x109] sm:$0xff] %vm367, %v4423
      %4510 = vst.msk [vmem:[%s423 + $0x111] sm:$0xff] %vm367, %v4424
      %4511 = vst.msk [vmem:[%s423 + $0x121] sm:$0xff] %vm367, %v4425
      %4512 = vst.msk [vmem:[%s423 + $0x129] sm:$0xff] %vm367, %v4426
      %4513 = vst.msk [vmem:[%s423 + $0x139] sm:$0xff] %vm367, %v4427
      %4514 = vst.msk [vmem:[%s423 + $0x141] sm:$0xff] %vm367, %v4428
      %4515 = vst.msk [vmem:[%s423 + $0x151] sm:$0xff] %vm367, %v4429
      %4516 = vst.msk [vmem:[%s423 + $0x159] sm:$0xff] %vm367, %v4430
      %4517 = vst.msk [vmem:[%s423 + $0x169] sm:$0xff] %vm367, %v4431
      %4518 = vst.msk [vmem:[%s423 + $0x171] sm:$0xff] %vm367, %v4432
      %v4519 = vld [vmem:[#allocation2] sm:$0xff]
      %v4520 = vld [vmem:[#allocation2 + $0x8] sm:$0xff]
      %v4521 = vld [vmem:[#allocation2 + $0x18] sm:$0xff]
      %v4522 = vld [vmem:[#allocation2 + $0x20] sm:$0xff]
      %v4523 = vld [vmem:[#allocation2 + $0x30] sm:$0xff]
      %v4524 = vld [vmem:[#allocation2 + $0x38] sm:$0xff]
      %v4525 = vld [vmem:[#allocation2 + $0x48] sm:$0xff]
      %v4526 = vld [vmem:[#allocation2 + $0x50] sm:$0xff]
      %v4527 = vld [vmem:[#allocation2 + $0x60] sm:$0xff]
      %v4528 = vld [vmem:[#allocation2 + $0x68] sm:$0xff]
      %v4529 = vld [vmem:[#allocation2 + $0x78] sm:$0xff]
      %v4530 = vld [vmem:[#allocation2 + $0x80] sm:$0xff]
      %v4531 = vld [vmem:[#allocation2 + $0x90] sm:$0xff]
      %v4532 = vld [vmem:[#allocation2 + $0x98] sm:$0xff]
      %v4533 = vld [vmem:[#allocation2 + $0xa8] sm:$0xff]
      %v4534 = vld [vmem:[#allocation2 + $0xb0] sm:$0xff]
      %v4535 = vld [vmem:[#allocation2 + $0xc0] sm:$0xff]
      %v4536 = vld [vmem:[#allocation2 + $0xc8] sm:$0xff]
      %v4537 = vld [vmem:[#allocation2 + $0xd8] sm:$0xff]
      %v4538 = vld [vmem:[#allocation2 + $0xe0] sm:$0xff]
      %v4539 = vld [vmem:[#allocation2 + $0xf0] sm:$0xff]
      %v4540 = vld [vmem:[#allocation2 + $0xf8] sm:$0xff]
      %v4541 = vld [vmem:[#allocation2 + $0x108] sm:$0xff]
      %v4542 = vld [vmem:[#allocation2 + $0x110] sm:$0xff]
      %v4543 = vld [vmem:[#allocation2 + $0x120] sm:$0xff]
      %v4544 = vld [vmem:[#allocation2 + $0x128] sm:$0xff]
      %v4545 = vld [vmem:[#allocation2 + $0x138] sm:$0xff]
      %v4546 = vld [vmem:[#allocation2 + $0x140] sm:$0xff]
      %v4547 = vld [vmem:[#allocation2 + $0x150] sm:$0xff]
      %v4548 = vld [vmem:[#allocation2 + $0x158] sm:$0xff]
      %v4549 = vld [vmem:[#allocation2 + $0x168] sm:$0xff]
      %v4550 = vld [vmem:[#allocation2 + $0x170] sm:$0xff]
      %4551 = vst.msk [vmem:[#allocation4] sm:$0xff] %vm367, %v4519
      %4552 = vst.msk [vmem:[#allocation4 + $0x10] sm:$0xff] %vm367, %v4520
      %4553 = vst.msk [vmem:[#allocation4 + $0x20] sm:$0xff] %vm367, %v4521
      %4554 = vst.msk [vmem:[#allocation4 + $0x30] sm:$0xff] %vm367, %v4522
      %4555 = vst.msk [vmem:[#allocation4 + $0x40] sm:$0xff] %vm367, %v4523
      %4556 = vst.msk [vmem:[#allocation4 + $0x50] sm:$0xff] %vm367, %v4524
      %4557 = vst.msk [vmem:[#allocation4 + $0x60] sm:$0xff] %vm367, %v4525
      %4558 = vst.msk [vmem:[#allocation4 + $0x70] sm:$0xff] %vm367, %v4526
      %4559 = vst.msk [vmem:[#allocation4 + $0x80] sm:$0xff] %vm367, %v4527
      %4560 = vst.msk [vmem:[#allocation4 + $0x90] sm:$0xff] %vm367, %v4528
      %4561 = vst.msk [vmem:[#allocation4 + $0xa0] sm:$0xff] %vm367, %v4529
      %4562 = vst.msk [vmem:[#allocation4 + $0xb0] sm:$0xff] %vm367, %v4530
      %4563 = vst.msk [vmem:[#allocation4 + $0xc0] sm:$0xff] %vm367, %v4531
      %4564 = vst.msk [vmem:[#allocation4 + $0xd0] sm:$0xff] %vm367, %v4532
      %4565 = vst.msk [vmem:[#allocation4 + $0xe0] sm:$0xff] %vm367, %v4533
      %4566 = vst.msk [vmem:[#allocation4 + $0xf0] sm:$0xff] %vm367, %v4534
      %4567 = vst.msk [vmem:[#allocation4 + $0x100] sm:$0xff] %vm367, %v4535
      %4568 = vst.msk [vmem:[#allocation4 + $0x110] sm:$0xff] %vm367, %v4536
      %4569 = vst.msk [vmem:[#allocation4 + $0x120] sm:$0xff] %vm367, %v4537
      %4570 = vst.msk [vmem:[#allocation4 + $0x130] sm:$0xff] %vm367, %v4538
      %4571 = vst.msk [vmem:[#allocation4 + $0x140] sm:$0xff] %vm367, %v4539
      %4572 = vst.msk [vmem:[#allocation4 + $0x150] sm:$0xff] %vm367, %v4540
      %4573 = vst.msk [vmem:[#allocation4 + $0x160] sm:$0xff] %vm367, %v4541
      %4574 = vst.msk [vmem:[#allocation4 + $0x170] sm:$0xff] %vm367, %v4542
      %4575 = vst.msk [vmem:[#allocation4 + $0x180] sm:$0xff] %vm367, %v4543
      %4576 = vst.msk [vmem:[#allocation4 + $0x190] sm:$0xff] %vm367, %v4544
      %4577 = vst.msk [vmem:[#allocation4 + $0x1a0] sm:$0xff] %vm367, %v4545
      %4578 = vst.msk [vmem:[#allocation4 + $0x1b0] sm:$0xff] %vm367, %v4546
      %4579 = vst.msk [vmem:[#allocation4 + $0x1c0] sm:$0xff] %vm367, %v4547
      %4580 = vst.msk [vmem:[#allocation4 + $0x1d0] sm:$0xff] %vm367, %v4548
      %4581 = vst.msk [vmem:[#allocation4 + $0x1e0] sm:$0xff] %vm367, %v4549
      %4582 = vst.msk [vmem:[#allocation4 + $0x1f0] sm:$0xff] %vm367, %v4550
      %v4583 = vld [vmem:[#allocation2 + $0x1] sm:$0xff]
      %v4584 = vld [vmem:[#allocation2 + $0x9] sm:$0xff]
      %v4585 = vld [vmem:[#allocation2 + $0x19] sm:$0xff]
      %v4586 = vld [vmem:[#allocation2 + $0x21] sm:$0xff]
      %v4587 = vld [vmem:[#allocation2 + $0x31] sm:$0xff]
      %v4588 = vld [vmem:[#allocation2 + $0x39] sm:$0xff]
      %v4589 = vld [vmem:[#allocation2 + $0x49] sm:$0xff]
      %v4590 = vld [vmem:[#allocation2 + $0x51] sm:$0xff]
      %v4591 = vld [vmem:[#allocation2 + $0x61] sm:$0xff]
      %v4592 = vld [vmem:[#allocation2 + $0x69] sm:$0xff]
      %v4593 = vld [vmem:[#allocation2 + $0x79] sm:$0xff]
      %v4594 = vld [vmem:[#allocation2 + $0x81] sm:$0xff]
      %v4595 = vld [vmem:[#allocation2 + $0x91] sm:$0xff]
      %v4596 = vld [vmem:[#allocation2 + $0x99] sm:$0xff]
      %v4597 = vld [vmem:[#allocation2 + $0xa9] sm:$0xff]
      %v4598 = vld [vmem:[#allocation2 + $0xb1] sm:$0xff]
      %v4599 = vld [vmem:[#allocation2 + $0xc1] sm:$0xff]
      %v4600 = vld [vmem:[#allocation2 + $0xc9] sm:$0xff]
      %v4601 = vld [vmem:[#allocation2 + $0xd9] sm:$0xff]
      %v4602 = vld [vmem:[#allocation2 + $0xe1] sm:$0xff]
      %v4603 = vld [vmem:[#allocation2 + $0xf1] sm:$0xff]
      %v4604 = vld [vmem:[#allocation2 + $0xf9] sm:$0xff]
      %v4605 = vld [vmem:[#allocation2 + $0x109] sm:$0xff]
      %v4606 = vld [vmem:[#allocation2 + $0x111] sm:$0xff]
      %v4607 = vld [vmem:[#allocation2 + $0x121] sm:$0xff]
      %v4608 = vld [vmem:[#allocation2 + $0x129] sm:$0xff]
      %v4609 = vld [vmem:[#allocation2 + $0x139] sm:$0xff]
      %v4610 = vld [vmem:[#allocation2 + $0x141] sm:$0xff]
      %v4611 = vld [vmem:[#allocation2 + $0x151] sm:$0xff]
      %v4612 = vld [vmem:[#allocation2 + $0x159] sm:$0xff]
      %v4613 = vld [vmem:[#allocation2 + $0x169] sm:$0xff]
      %v4614 = vld [vmem:[#allocation2 + $0x171] sm:$0xff]
      %4647 = vrot.lane.b32.xlu0 %v4583, 3
      %v4648 = vpop.permute.xlu0 %4647
      %4649 = vrot.lane.b32.xlu0 %v4584, 3
      %v4650 = vpop.permute.xlu0 %4649
      %4651 = vrot.lane.b32.xlu0 %v4585, 3
      %v4652 = vpop.permute.xlu0 %4651
      %4653 = vrot.lane.b32.xlu0 %v4586, 3
      %v4654 = vpop.permute.xlu0 %4653
      %4655 = vrot.lane.b32.xlu0 %v4587, 3
      %v4656 = vpop.permute.xlu0 %4655
      %4657 = vrot.lane.b32.xlu0 %v4588, 3
      %v4658 = vpop.permute.xlu0 %4657
      %4659 = vrot.lane.b32.xlu0 %v4589, 3
      %v4660 = vpop.permute.xlu0 %4659
      %4661 = vrot.lane.b32.xlu0 %v4590, 3
      %v4662 = vpop.permute.xlu0 %4661
      %4663 = vrot.lane.b32.xlu0 %v4591, 3
      %v4664 = vpop.permute.xlu0 %4663
      %4665 = vrot.lane.b32.xlu0 %v4592, 3
      %v4666 = vpop.permute.xlu0 %4665
      %4667 = vrot.lane.b32.xlu0 %v4593, 3
      %v4668 = vpop.permute.xlu0 %4667
      %4669 = vrot.lane.b32.xlu0 %v4594, 3
      %v4670 = vpop.permute.xlu0 %4669
      %4671 = vrot.lane.b32.xlu0 %v4595, 3
      %v4672 = vpop.permute.xlu0 %4671
      %4673 = vrot.lane.b32.xlu0 %v4596, 3
      %v4674 = vpop.permute.xlu0 %4673
      %4675 = vrot.lane.b32.xlu0 %v4597, 3
      %v4676 = vpop.permute.xlu0 %4675
      %4677 = vrot.lane.b32.xlu0 %v4598, 3
      %v4678 = vpop.permute.xlu0 %4677
      %4679 = vrot.lane.b32.xlu0 %v4599, 3
      %v4680 = vpop.permute.xlu0 %4679
      %4681 = vrot.lane.b32.xlu0 %v4600, 3
      %v4682 = vpop.permute.xlu0 %4681
      %4683 = vrot.lane.b32.xlu0 %v4601, 3
      %v4684 = vpop.permute.xlu0 %4683
      %4685 = vrot.lane.b32.xlu0 %v4602, 3
      %v4686 = vpop.permute.xlu0 %4685
      %4687 = vrot.lane.b32.xlu0 %v4603, 3
      %v4688 = vpop.permute.xlu0 %4687
      %4689 = vrot.lane.b32.xlu0 %v4604, 3
      %v4690 = vpop.permute.xlu0 %4689
      %4691 = vrot.lane.b32.xlu0 %v4605, 3
      %v4692 = vpop.permute.xlu0 %4691
      %4693 = vrot.lane.b32.xlu0 %v4606, 3
      %v4694 = vpop.permute.xlu0 %4693
      %4695 = vrot.lane.b32.xlu0 %v4607, 3
      %v4696 = vpop.permute.xlu0 %4695
      %4697 = vrot.lane.b32.xlu0 %v4608, 3
      %v4698 = vpop.permute.xlu0 %4697
      %4699 = vrot.lane.b32.xlu0 %v4609, 3
      %v4700 = vpop.permute.xlu0 %4699
      %4701 = vrot.lane.b32.xlu0 %v4610, 3
      %v4702 = vpop.permute.xlu0 %4701
      %4703 = vrot.lane.b32.xlu0 %v4611, 3
      %v4704 = vpop.permute.xlu0 %4703
      %4705 = vrot.lane.b32.xlu0 %v4612, 3
      %v4706 = vpop.permute.xlu0 %4705
      %4707 = vrot.lane.b32.xlu0 %v4613, 3
      %v4708 = vpop.permute.xlu0 %4707
      %4709 = vrot.lane.b32.xlu0 %v4614, 3
      %v4710 = vpop.permute.xlu0 %4709
      %4743 = vst.msk [vmem:[#allocation4] sm:$0xff] %vm680, %v4648
      %4744 = vst.msk [vmem:[#allocation4 + $0x10] sm:$0xff] %vm680, %v4650
      %4745 = vst.msk [vmem:[#allocation4 + $0x20] sm:$0xff] %vm680, %v4652
      %4746 = vst.msk [vmem:[#allocation4 + $0x30] sm:$0xff] %vm680, %v4654
      %4747 = vst.msk [vmem:[#allocation4 + $0x40] sm:$0xff] %vm680, %v4656
      %4748 = vst.msk [vmem:[#allocation4 + $0x50] sm:$0xff] %vm680, %v4658
      %4749 = vst.msk [vmem:[#allocation4 + $0x60] sm:$0xff] %vm680, %v4660
      %4750 = vst.msk [vmem:[#allocation4 + $0x70] sm:$0xff] %vm680, %v4662
      %4751 = vst.msk [vmem:[#allocation4 + $0x80] sm:$0xff] %vm680, %v4664
      %4752 = vst.msk [vmem:[#allocation4 + $0x90] sm:$0xff] %vm680, %v4666
      %4753 = vst.msk [vmem:[#allocation4 + $0xa0] sm:$0xff] %vm680, %v4668
      %4754 = vst.msk [vmem:[#allocation4 + $0xb0] sm:$0xff] %vm680, %v4670
      %4755 = vst.msk [vmem:[#allocation4 + $0xc0] sm:$0xff] %vm680, %v4672
      %4756 = vst.msk [vmem:[#allocation4 + $0xd0] sm:$0xff] %vm680, %v4674
      %4757 = vst.msk [vmem:[#allocation4 + $0xe0] sm:$0xff] %vm680, %v4676
      %4758 = vst.msk [vmem:[#allocation4 + $0xf0] sm:$0xff] %vm680, %v4678
      %4759 = vst.msk [vmem:[#allocation4 + $0x100] sm:$0xff] %vm680, %v4680
      %4760 = vst.msk [vmem:[#allocation4 + $0x110] sm:$0xff] %vm680, %v4682
      %4761 = vst.msk [vmem:[#allocation4 + $0x120] sm:$0xff] %vm680, %v4684
      %4762 = vst.msk [vmem:[#allocation4 + $0x130] sm:$0xff] %vm680, %v4686
      %4763 = vst.msk [vmem:[#allocation4 + $0x140] sm:$0xff] %vm680, %v4688
      %4764 = vst.msk [vmem:[#allocation4 + $0x150] sm:$0xff] %vm680, %v4690
      %4765 = vst.msk [vmem:[#allocation4 + $0x160] sm:$0xff] %vm680, %v4692
      %4766 = vst.msk [vmem:[#allocation4 + $0x170] sm:$0xff] %vm680, %v4694
      %4767 = vst.msk [vmem:[#allocation4 + $0x180] sm:$0xff] %vm680, %v4696
      %4768 = vst.msk [vmem:[#allocation4 + $0x190] sm:$0xff] %vm680, %v4698
      %4769 = vst.msk [vmem:[#allocation4 + $0x1a0] sm:$0xff] %vm680, %v4700
      %4770 = vst.msk [vmem:[#allocation4 + $0x1b0] sm:$0xff] %vm680, %v4702
      %4771 = vst.msk [vmem:[#allocation4 + $0x1c0] sm:$0xff] %vm680, %v4704
      %4772 = vst.msk [vmem:[#allocation4 + $0x1d0] sm:$0xff] %vm680, %v4706
      %4773 = vst.msk [vmem:[#allocation4 + $0x1e0] sm:$0xff] %vm680, %v4708
      %4774 = vst.msk [vmem:[#allocation4 + $0x1f0] sm:$0xff] %vm680, %v4710
      %v4775 = vld [vmem:[#allocation2 + $0x2] sm:$0xff]
      %v4776 = vld [vmem:[#allocation2 + $0xa] sm:$0xff]
      %v4777 = vld [vmem:[#allocation2 + $0x1a] sm:$0xff]
      %v4778 = vld [vmem:[#allocation2 + $0x22] sm:$0xff]
      %v4779 = vld [vmem:[#allocation2 + $0x32] sm:$0xff]
      %v4780 = vld [vmem:[#allocation2 + $0x3a] sm:$0xff]
      %v4781 = vld [vmem:[#allocation2 + $0x4a] sm:$0xff]
      %v4782 = vld [vmem:[#allocation2 + $0x52] sm:$0xff]
      %v4783 = vld [vmem:[#allocation2 + $0x62] sm:$0xff]
      %v4784 = vld [vmem:[#allocation2 + $0x6a] sm:$0xff]
      %v4785 = vld [vmem:[#allocation2 + $0x7a] sm:$0xff]
      %v4786 = vld [vmem:[#allocation2 + $0x82] sm:$0xff]
      %v4787 = vld [vmem:[#allocation2 + $0x92] sm:$0xff]
      %v4788 = vld [vmem:[#allocation2 + $0x9a] sm:$0xff]
      %v4789 = vld [vmem:[#allocation2 + $0xaa] sm:$0xff]
      %v4790 = vld [vmem:[#allocation2 + $0xb2] sm:$0xff]
      %v4791 = vld [vmem:[#allocation2 + $0xc2] sm:$0xff]
      %v4792 = vld [vmem:[#allocation2 + $0xca] sm:$0xff]
      %v4793 = vld [vmem:[#allocation2 + $0xda] sm:$0xff]
      %v4794 = vld [vmem:[#allocation2 + $0xe2] sm:$0xff]
      %v4795 = vld [vmem:[#allocation2 + $0xf2] sm:$0xff]
      %v4796 = vld [vmem:[#allocation2 + $0xfa] sm:$0xff]
      %v4797 = vld [vmem:[#allocation2 + $0x10a] sm:$0xff]
      %v4798 = vld [vmem:[#allocation2 + $0x112] sm:$0xff]
      %v4799 = vld [vmem:[#allocation2 + $0x122] sm:$0xff]
      %v4800 = vld [vmem:[#allocation2 + $0x12a] sm:$0xff]
      %v4801 = vld [vmem:[#allocation2 + $0x13a] sm:$0xff]
      %v4802 = vld [vmem:[#allocation2 + $0x142] sm:$0xff]
      %v4803 = vld [vmem:[#allocation2 + $0x152] sm:$0xff]
      %v4804 = vld [vmem:[#allocation2 + $0x15a] sm:$0xff]
      %v4805 = vld [vmem:[#allocation2 + $0x16a] sm:$0xff]
      %v4806 = vld [vmem:[#allocation2 + $0x172] sm:$0xff]
      %4839 = vrot.lane.b32.xlu0 %v4775, 6
      %v4840 = vpop.permute.xlu0 %4839
      %4841 = vrot.lane.b32.xlu0 %v4776, 6
      %v4842 = vpop.permute.xlu0 %4841
      %4843 = vrot.lane.b32.xlu0 %v4777, 6
      %v4844 = vpop.permute.xlu0 %4843
      %4845 = vrot.lane.b32.xlu0 %v4778, 6
      %v4846 = vpop.permute.xlu0 %4845
      %4847 = vrot.lane.b32.xlu0 %v4779, 6
      %v4848 = vpop.permute.xlu0 %4847
      %4849 = vrot.lane.b32.xlu0 %v4780, 6
      %v4850 = vpop.permute.xlu0 %4849
      %4851 = vrot.lane.b32.xlu0 %v4781, 6
      %v4852 = vpop.permute.xlu0 %4851
      %4853 = vrot.lane.b32.xlu0 %v4782, 6
      %v4854 = vpop.permute.xlu0 %4853
      %4855 = vrot.lane.b32.xlu0 %v4783, 6
      %v4856 = vpop.permute.xlu0 %4855
      %4857 = vrot.lane.b32.xlu0 %v4784, 6
      %v4858 = vpop.permute.xlu0 %4857
      %4859 = vrot.lane.b32.xlu0 %v4785, 6
      %v4860 = vpop.permute.xlu0 %4859
      %4861 = vrot.lane.b32.xlu0 %v4786, 6
      %v4862 = vpop.permute.xlu0 %4861
      %4863 = vrot.lane.b32.xlu0 %v4787, 6
      %v4864 = vpop.permute.xlu0 %4863
      %4865 = vrot.lane.b32.xlu0 %v4788, 6
      %v4866 = vpop.permute.xlu0 %4865
      %4867 = vrot.lane.b32.xlu0 %v4789, 6
      %v4868 = vpop.permute.xlu0 %4867
      %4869 = vrot.lane.b32.xlu0 %v4790, 6
      %v4870 = vpop.permute.xlu0 %4869
      %4871 = vrot.lane.b32.xlu0 %v4791, 6
      %v4872 = vpop.permute.xlu0 %4871
      %4873 = vrot.lane.b32.xlu0 %v4792, 6
      %v4874 = vpop.permute.xlu0 %4873
      %4875 = vrot.lane.b32.xlu0 %v4793, 6
      %v4876 = vpop.permute.xlu0 %4875
      %4877 = vrot.lane.b32.xlu0 %v4794, 6
      %v4878 = vpop.permute.xlu0 %4877
      %4879 = vrot.lane.b32.xlu0 %v4795, 6
      %v4880 = vpop.permute.xlu0 %4879
      %4881 = vrot.lane.b32.xlu0 %v4796, 6
      %v4882 = vpop.permute.xlu0 %4881
      %4883 = vrot.lane.b32.xlu0 %v4797, 6
      %v4884 = vpop.permute.xlu0 %4883
      %4885 = vrot.lane.b32.xlu0 %v4798, 6
      %v4886 = vpop.permute.xlu0 %4885
      %4887 = vrot.lane.b32.xlu0 %v4799, 6
      %v4888 = vpop.permute.xlu0 %4887
      %4889 = vrot.lane.b32.xlu0 %v4800, 6
      %v4890 = vpop.permute.xlu0 %4889
      %4891 = vrot.lane.b32.xlu0 %v4801, 6
      %v4892 = vpop.permute.xlu0 %4891
      %4893 = vrot.lane.b32.xlu0 %v4802, 6
      %v4894 = vpop.permute.xlu0 %4893
      %4895 = vrot.lane.b32.xlu0 %v4803, 6
      %v4896 = vpop.permute.xlu0 %4895
      %4897 = vrot.lane.b32.xlu0 %v4804, 6
      %v4898 = vpop.permute.xlu0 %4897
      %4899 = vrot.lane.b32.xlu0 %v4805, 6
      %v4900 = vpop.permute.xlu0 %4899
      %4901 = vrot.lane.b32.xlu0 %v4806, 6
      %v4902 = vpop.permute.xlu0 %4901
      %4935 = vst.msk [vmem:[#allocation4] sm:$0xff] %vm873, %v4840
      %4936 = vst.msk [vmem:[#allocation4 + $0x10] sm:$0xff] %vm873, %v4842
      %4937 = vst.msk [vmem:[#allocation4 + $0x20] sm:$0xff] %vm873, %v4844
      %4938 = vst.msk [vmem:[#allocation4 + $0x30] sm:$0xff] %vm873, %v4846
      %4939 = vst.msk [vmem:[#allocation4 + $0x40] sm:$0xff] %vm873, %v4848
      %4940 = vst.msk [vmem:[#allocation4 + $0x50] sm:$0xff] %vm873, %v4850
      %4941 = vst.msk [vmem:[#allocation4 + $0x60] sm:$0xff] %vm873, %v4852
      %4942 = vst.msk [vmem:[#allocation4 + $0x70] sm:$0xff] %vm873, %v4854
      %4943 = vst.msk [vmem:[#allocation4 + $0x80] sm:$0xff] %vm873, %v4856
      %4944 = vst.msk [vmem:[#allocation4 + $0x90] sm:$0xff] %vm873, %v4858
      %4945 = vst.msk [vmem:[#allocation4 + $0xa0] sm:$0xff] %vm873, %v4860
      %4946 = vst.msk [vmem:[#allocation4 + $0xb0] sm:$0xff] %vm873, %v4862
      %4947 = vst.msk [vmem:[#allocation4 + $0xc0] sm:$0xff] %vm873, %v4864
      %4948 = vst.msk [vmem:[#allocation4 + $0xd0] sm:$0xff] %vm873, %v4866
      %4949 = vst.msk [vmem:[#allocation4 + $0xe0] sm:$0xff] %vm873, %v4868
      %4950 = vst.msk [vmem:[#allocation4 + $0xf0] sm:$0xff] %vm873, %v4870
      %4951 = vst.msk [vmem:[#allocation4 + $0x100] sm:$0xff] %vm873, %v4872
      %4952 = vst.msk [vmem:[#allocation4 + $0x110] sm:$0xff] %vm873, %v4874
      %4953 = vst.msk [vmem:[#allocation4 + $0x120] sm:$0xff] %vm873, %v4876
      %4954 = vst.msk [vmem:[#allocation4 + $0x130] sm:$0xff] %vm873, %v4878
      %4955 = vst.msk [vmem:[#allocation4 + $0x140] sm:$0xff] %vm873, %v4880
      %4956 = vst.msk [vmem:[#allocation4 + $0x150] sm:$0xff] %vm873, %v4882
      %4957 = vst.msk [vmem:[#allocation4 + $0x160] sm:$0xff] %vm873, %v4884
      %4958 = vst.msk [vmem:[#allocation4 + $0x170] sm:$0xff] %vm873, %v4886
      %4959 = vst.msk [vmem:[#allocation4 + $0x180] sm:$0xff] %vm873, %v4888
      %4960 = vst.msk [vmem:[#allocation4 + $0x190] sm:$0xff] %vm873, %v4890
      %4961 = vst.msk [vmem:[#allocation4 + $0x1a0] sm:$0xff] %vm873, %v4892
      %4962 = vst.msk [vmem:[#allocation4 + $0x1b0] sm:$0xff] %vm873, %v4894
      %4963 = vst.msk [vmem:[#allocation4 + $0x1c0] sm:$0xff] %vm873, %v4896
      %4964 = vst.msk [vmem:[#allocation4 + $0x1d0] sm:$0xff] %vm873, %v4898
      %4965 = vst.msk [vmem:[#allocation4 + $0x1e0] sm:$0xff] %vm873, %v4900
      %4966 = vst.msk [vmem:[#allocation4 + $0x1f0] sm:$0xff] %vm873, %v4902
      %v4967 = vld [vmem:[%s423] sm:$0xff]
      %v4968 = vld [vmem:[%s423 + $0x8] sm:$0xff]
      %v4969 = vld [vmem:[%s423 + $0x18] sm:$0xff]
      %v4970 = vld [vmem:[%s423 + $0x20] sm:$0xff]
      %v4971 = vld [vmem:[%s423 + $0x30] sm:$0xff]
      %v4972 = vld [vmem:[%s423 + $0x38] sm:$0xff]
      %v4973 = vld [vmem:[%s423 + $0x48] sm:$0xff]
      %v4974 = vld [vmem:[%s423 + $0x50] sm:$0xff]
      %v4975 = vld [vmem:[%s423 + $0x60] sm:$0xff]
      %v4976 = vld [vmem:[%s423 + $0x68] sm:$0xff]
      %v4977 = vld [vmem:[%s423 + $0x78] sm:$0xff]
      %v4978 = vld [vmem:[%s423 + $0x80] sm:$0xff]
      %v4979 = vld [vmem:[%s423 + $0x90] sm:$0xff]
      %v4980 = vld [vmem:[%s423 + $0x98] sm:$0xff]
      %v4981 = vld [vmem:[%s423 + $0xa8] sm:$0xff]
      %v4982 = vld [vmem:[%s423 + $0xb0] sm:$0xff]
      %v4983 = vld [vmem:[%s423 + $0xc0] sm:$0xff]
      %v4984 = vld [vmem:[%s423 + $0xc8] sm:$0xff]
      %v4985 = vld [vmem:[%s423 + $0xd8] sm:$0xff]
      %v4986 = vld [vmem:[%s423 + $0xe0] sm:$0xff]
      %v4987 = vld [vmem:[%s423 + $0xf0] sm:$0xff]
      %v4988 = vld [vmem:[%s423 + $0xf8] sm:$0xff]
      %v4989 = vld [vmem:[%s423 + $0x108] sm:$0xff]
      %v4990 = vld [vmem:[%s423 + $0x110] sm:$0xff]
      %v4991 = vld [vmem:[%s423 + $0x120] sm:$0xff]
      %v4992 = vld [vmem:[%s423 + $0x128] sm:$0xff]
      %v4993 = vld [vmem:[%s423 + $0x138] sm:$0xff]
      %v4994 = vld [vmem:[%s423 + $0x140] sm:$0xff]
      %v4995 = vld [vmem:[%s423 + $0x150] sm:$0xff]
      %v4996 = vld [vmem:[%s423 + $0x158] sm:$0xff]
      %v4997 = vld [vmem:[%s423 + $0x168] sm:$0xff]
      %v4998 = vld [vmem:[%s423 + $0x170] sm:$0xff]
      %5031 = vrot.lane.b32.xlu0 %v4967, 9
      %v5032 = vpop.permute.xlu0 %5031
      %5033 = vrot.lane.b32.xlu0 %v4968, 9
      %v5034 = vpop.permute.xlu0 %5033
      %5035 = vrot.lane.b32.xlu0 %v4969, 9
      %v5036 = vpop.permute.xlu0 %5035
      %5037 = vrot.lane.b32.xlu0 %v4970, 9
      %v5038 = vpop.permute.xlu0 %5037
      %5039 = vrot.lane.b32.xlu0 %v4971, 9
      %v5040 = vpop.permute.xlu0 %5039
      %5041 = vrot.lane.b32.xlu0 %v4972, 9
      %v5042 = vpop.permute.xlu0 %5041
      %5043 = vrot.lane.b32.xlu0 %v4973, 9
      %v5044 = vpop.permute.xlu0 %5043
      %5045 = vrot.lane.b32.xlu0 %v4974, 9
      %v5046 = vpop.permute.xlu0 %5045
      %5047 = vrot.lane.b32.xlu0 %v4975, 9
      %v5048 = vpop.permute.xlu0 %5047
      %5049 = vrot.lane.b32.xlu0 %v4976, 9
      %v5050 = vpop.permute.xlu0 %5049
      %5051 = vrot.lane.b32.xlu0 %v4977, 9
      %v5052 = vpop.permute.xlu0 %5051
      %5053 = vrot.lane.b32.xlu0 %v4978, 9
      %v5054 = vpop.permute.xlu0 %5053
      %5055 = vrot.lane.b32.xlu0 %v4979, 9
      %v5056 = vpop.permute.xlu0 %5055
      %5057 = vrot.lane.b32.xlu0 %v4980, 9
      %v5058 = vpop.permute.xlu0 %5057
      %5059 = vrot.lane.b32.xlu0 %v4981, 9
      %v5060 = vpop.permute.xlu0 %5059
      %5061 = vrot.lane.b32.xlu0 %v4982, 9
      %v5062 = vpop.permute.xlu0 %5061
      %5063 = vrot.lane.b32.xlu0 %v4983, 9
      %v5064 = vpop.permute.xlu0 %5063
      %5065 = vrot.lane.b32.xlu0 %v4984, 9
      %v5066 = vpop.permute.xlu0 %5065
      %5067 = vrot.lane.b32.xlu0 %v4985, 9
      %v5068 = vpop.permute.xlu0 %5067
      %5069 = vrot.lane.b32.xlu0 %v4986, 9
      %v5070 = vpop.permute.xlu0 %5069
      %5071 = vrot.lane.b32.xlu0 %v4987, 9
      %v5072 = vpop.permute.xlu0 %5071
      %5073 = vrot.lane.b32.xlu0 %v4988, 9
      %v5074 = vpop.permute.xlu0 %5073
      %5075 = vrot.lane.b32.xlu0 %v4989, 9
      %v5076 = vpop.permute.xlu0 %5075
      %5077 = vrot.lane.b32.xlu0 %v4990, 9
      %v5078 = vpop.permute.xlu0 %5077
      %5079 = vrot.lane.b32.xlu0 %v4991, 9
      %v5080 = vpop.permute.xlu0 %5079
      %5081 = vrot.lane.b32.xlu0 %v4992, 9
      %v5082 = vpop.permute.xlu0 %5081
      %5083 = vrot.lane.b32.xlu0 %v4993, 9
      %v5084 = vpop.permute.xlu0 %5083
      %5085 = vrot.lane.b32.xlu0 %v4994, 9
      %v5086 = vpop.permute.xlu0 %5085
      %5087 = vrot.lane.b32.xlu0 %v4995, 9
      %v5088 = vpop.permute.xlu0 %5087
      %5089 = vrot.lane.b32.xlu0 %v4996, 9
      %v5090 = vpop.permute.xlu0 %5089
      %5091 = vrot.lane.b32.xlu0 %v4997, 9
      %v5092 = vpop.permute.xlu0 %5091
      %5093 = vrot.lane.b32.xlu0 %v4998, 9
      %v5094 = vpop.permute.xlu0 %5093
      %5127 = vst.msk [vmem:[#allocation4] sm:$0xff] %vm1066, %v5032
      %5128 = vst.msk [vmem:[#allocation4 + $0x10] sm:$0xff] %vm1066, %v5034
      %5129 = vst.msk [vmem:[#allocation4 + $0x20] sm:$0xff] %vm1066, %v5036
      %5130 = vst.msk [vmem:[#allocation4 + $0x30] sm:$0xff] %vm1066, %v5038
      %5131 = vst.msk [vmem:[#allocation4 + $0x40] sm:$0xff] %vm1066, %v5040
      %5132 = vst.msk [vmem:[#allocation4 + $0x50] sm:$0xff] %vm1066, %v5042
      %5133 = vst.msk [vmem:[#allocation4 + $0x60] sm:$0xff] %vm1066, %v5044
      %5134 = vst.msk [vmem:[#allocation4 + $0x70] sm:$0xff] %vm1066, %v5046
      %5135 = vst.msk [vmem:[#allocation4 + $0x80] sm:$0xff] %vm1066, %v5048
      %5136 = vst.msk [vmem:[#allocation4 + $0x90] sm:$0xff] %vm1066, %v5050
      %5137 = vst.msk [vmem:[#allocation4 + $0xa0] sm:$0xff] %vm1066, %v5052
      %5138 = vst.msk [vmem:[#allocation4 + $0xb0] sm:$0xff] %vm1066, %v5054
      %5139 = vst.msk [vmem:[#allocation4 + $0xc0] sm:$0xff] %vm1066, %v5056
      %5140 = vst.msk [vmem:[#allocation4 + $0xd0] sm:$0xff] %vm1066, %v5058
      %5141 = vst.msk [vmem:[#allocation4 + $0xe0] sm:$0xff] %vm1066, %v5060
      %5142 = vst.msk [vmem:[#allocation4 + $0xf0] sm:$0xff] %vm1066, %v5062
      %5143 = vst.msk [vmem:[#allocation4 + $0x100] sm:$0xff] %vm1066, %v5064
      %5144 = vst.msk [vmem:[#allocation4 + $0x110] sm:$0xff] %vm1066, %v5066
      %5145 = vst.msk [vmem:[#allocation4 + $0x120] sm:$0xff] %vm1066, %v5068
      %5146 = vst.msk [vmem:[#allocation4 + $0x130] sm:$0xff] %vm1066, %v5070
      %5147 = vst.msk [vmem:[#allocation4 + $0x140] sm:$0xff] %vm1066, %v5072
      %5148 = vst.msk [vmem:[#allocation4 + $0x150] sm:$0xff] %vm1066, %v5074
      %5149 = vst.msk [vmem:[#allocation4 + $0x160] sm:$0xff] %vm1066, %v5076
      %5150 = vst.msk [vmem:[#allocation4 + $0x170] sm:$0xff] %vm1066, %v5078
      %5151 = vst.msk [vmem:[#allocation4 + $0x180] sm:$0xff] %vm1066, %v5080
      %5152 = vst.msk [vmem:[#allocation4 + $0x190] sm:$0xff] %vm1066, %v5082
      %5153 = vst.msk [vmem:[#allocation4 + $0x1a0] sm:$0xff] %vm1066, %v5084
      %5154 = vst.msk [vmem:[#allocation4 + $0x1b0] sm:$0xff] %vm1066, %v5086
      %5155 = vst.msk [vmem:[#allocation4 + $0x1c0] sm:$0xff] %vm1066, %v5088
      %5156 = vst.msk [vmem:[#allocation4 + $0x1d0] sm:$0xff] %vm1066, %v5090
      %5157 = vst.msk [vmem:[#allocation4 + $0x1e0] sm:$0xff] %vm1066, %v5092
      %5158 = vst.msk [vmem:[#allocation4 + $0x1f0] sm:$0xff] %vm1066, %v5094
      %v5159 = vld [vmem:[%s423 + $0x1] sm:$0xff]
      %v5160 = vld [vmem:[%s423 + $0x9] sm:$0xff]
      %v5161 = vld [vmem:[%s423 + $0x19] sm:$0xff]
      %v5162 = vld [vmem:[%s423 + $0x21] sm:$0xff]
      %v5163 = vld [vmem:[%s423 + $0x31] sm:$0xff]
      %v5164 = vld [vmem:[%s423 + $0x39] sm:$0xff]
      %v5165 = vld [vmem:[%s423 + $0x49] sm:$0xff]
      %v5166 = vld [vmem:[%s423 + $0x51] sm:$0xff]
      %v5167 = vld [vmem:[%s423 + $0x61] sm:$0xff]
      %v5168 = vld [vmem:[%s423 + $0x69] sm:$0xff]
      %v5169 = vld [vmem:[%s423 + $0x79] sm:$0xff]
      %v5170 = vld [vmem:[%s423 + $0x81] sm:$0xff]
      %v5171 = vld [vmem:[%s423 + $0x91] sm:$0xff]
      %v5172 = vld [vmem:[%s423 + $0x99] sm:$0xff]
      %v5173 = vld [vmem:[%s423 + $0xa9] sm:$0xff]
      %v5174 = vld [vmem:[%s423 + $0xb1] sm:$0xff]
      %v5175 = vld [vmem:[%s423 + $0xc1] sm:$0xff]
      %v5176 = vld [vmem:[%s423 + $0xc9] sm:$0xff]
      %v5177 = vld [vmem:[%s423 + $0xd9] sm:$0xff]
      %v5178 = vld [vmem:[%s423 + $0xe1] sm:$0xff]
      %v5179 = vld [vmem:[%s423 + $0xf1] sm:$0xff]
      %v5180 = vld [vmem:[%s423 + $0xf9] sm:$0xff]
      %v5181 = vld [vmem:[%s423 + $0x109] sm:$0xff]
      %v5182 = vld [vmem:[%s423 + $0x111] sm:$0xff]
      %v5183 = vld [vmem:[%s423 + $0x121] sm:$0xff]
      %v5184 = vld [vmem:[%s423 + $0x129] sm:$0xff]
      %v5185 = vld [vmem:[%s423 + $0x139] sm:$0xff]
      %v5186 = vld [vmem:[%s423 + $0x141] sm:$0xff]
      %v5187 = vld [vmem:[%s423 + $0x151] sm:$0xff]
      %v5188 = vld [vmem:[%s423 + $0x159] sm:$0xff]
      %v5189 = vld [vmem:[%s423 + $0x169] sm:$0xff]
      %v5190 = vld [vmem:[%s423 + $0x171] sm:$0xff]
      %5223 = vrot.lane.b32.xlu0 %v5159, 12
      %v5224 = vpop.permute.xlu0 %5223
      %5225 = vrot.lane.b32.xlu0 %v5160, 12
      %v5226 = vpop.permute.xlu0 %5225
      %5227 = vrot.lane.b32.xlu0 %v5161, 12
      %v5228 = vpop.permute.xlu0 %5227
      %5229 = vrot.lane.b32.xlu0 %v5162, 12
      %v5230 = vpop.permute.xlu0 %5229
      %5231 = vrot.lane.b32.xlu0 %v5163, 12
      %v5232 = vpop.permute.xlu0 %5231
      %5233 = vrot.lane.b32.xlu0 %v5164, 12
      %v5234 = vpop.permute.xlu0 %5233
      %5235 = vrot.lane.b32.xlu0 %v5165, 12
      %v5236 = vpop.permute.xlu0 %5235
      %5237 = vrot.lane.b32.xlu0 %v5166, 12
      %v5238 = vpop.permute.xlu0 %5237
      %5239 = vrot.lane.b32.xlu0 %v5167, 12
      %v5240 = vpop.permute.xlu0 %5239
      %5241 = vrot.lane.b32.xlu0 %v5168, 12
      %v5242 = vpop.permute.xlu0 %5241
      %5243 = vrot.lane.b32.xlu0 %v5169, 12
      %v5244 = vpop.permute.xlu0 %5243
      %5245 = vrot.lane.b32.xlu0 %v5170, 12
      %v5246 = vpop.permute.xlu0 %5245
      %5247 = vrot.lane.b32.xlu0 %v5171, 12
      %v5248 = vpop.permute.xlu0 %5247
      %5249 = vrot.lane.b32.xlu0 %v5172, 12
      %v5250 = vpop.permute.xlu0 %5249
      %5251 = vrot.lane.b32.xlu0 %v5173, 12
      %v5252 = vpop.permute.xlu0 %5251
      %5253 = vrot.lane.b32.xlu0 %v5174, 12
      %v5254 = vpop.permute.xlu0 %5253
      %5255 = vrot.lane.b32.xlu0 %v5175, 12
      %v5256 = vpop.permute.xlu0 %5255
      %5257 = vrot.lane.b32.xlu0 %v5176, 12
      %v5258 = vpop.permute.xlu0 %5257
      %5259 = vrot.lane.b32.xlu0 %v5177, 12
      %v5260 = vpop.permute.xlu0 %5259
      %5261 = vrot.lane.b32.xlu0 %v5178, 12
      %v5262 = vpop.permute.xlu0 %5261
      %5263 = vrot.lane.b32.xlu0 %v5179, 12
      %v5264 = vpop.permute.xlu0 %5263
      %5265 = vrot.lane.b32.xlu0 %v5180, 12
      %v5266 = vpop.permute.xlu0 %5265
      %5267 = vrot.lane.b32.xlu0 %v5181, 12
      %v5268 = vpop.permute.xlu0 %5267
      %5269 = vrot.lane.b32.xlu0 %v5182, 12
      %v5270 = vpop.permute.xlu0 %5269
      %5271 = vrot.lane.b32.xlu0 %v5183, 12
      %v5272 = vpop.permute.xlu0 %5271
      %5273 = vrot.lane.b32.xlu0 %v5184, 12
      %v5274 = vpop.permute.xlu0 %5273
      %5275 = vrot.lane.b32.xlu0 %v5185, 12
      %v5276 = vpop.permute.xlu0 %5275
      %5277 = vrot.lane.b32.xlu0 %v5186, 12
      %v5278 = vpop.permute.xlu0 %5277
      %5279 = vrot.lane.b32.xlu0 %v5187, 12
      %v5280 = vpop.permute.xlu0 %5279
      %5281 = vrot.lane.b32.xlu0 %v5188, 12
      %v5282 = vpop.permute.xlu0 %5281
      %5283 = vrot.lane.b32.xlu0 %v5189, 12
      %v5284 = vpop.permute.xlu0 %5283
      %5285 = vrot.lane.b32.xlu0 %v5190, 12
      %v5286 = vpop.permute.xlu0 %5285
      %5319 = vst.msk [vmem:[#allocation4] sm:$0xff] %vm1259, %v5224
      %5320 = vst.msk [vmem:[#allocation4 + $0x10] sm:$0xff] %vm1259, %v5226
      %5321 = vst.msk [vmem:[#allocation4 + $0x20] sm:$0xff] %vm1259, %v5228
      %5322 = vst.msk [vmem:[#allocation4 + $0x30] sm:$0xff] %vm1259, %v5230
      %5323 = vst.msk [vmem:[#allocation4 + $0x40] sm:$0xff] %vm1259, %v5232
      %5324 = vst.msk [vmem:[#allocation4 + $0x50] sm:$0xff] %vm1259, %v5234
      %5325 = vst.msk [vmem:[#allocation4 + $0x60] sm:$0xff] %vm1259, %v5236
      %5326 = vst.msk [vmem:[#allocation4 + $0x70] sm:$0xff] %vm1259, %v5238
      %5327 = vst.msk [vmem:[#allocation4 + $0x80] sm:$0xff] %vm1259, %v5240
      %5328 = vst.msk [vmem:[#allocation4 + $0x90] sm:$0xff] %vm1259, %v5242
      %5329 = vst.msk [vmem:[#allocation4 + $0xa0] sm:$0xff] %vm1259, %v5244
      %5330 = vst.msk [vmem:[#allocation4 + $0xb0] sm:$0xff] %vm1259, %v5246
      %5331 = vst.msk [vmem:[#allocation4 + $0xc0] sm:$0xff] %vm1259, %v5248
      %5332 = vst.msk [vmem:[#allocation4 + $0xd0] sm:$0xff] %vm1259, %v5250
      %5333 = vst.msk [vmem:[#allocation4 + $0xe0] sm:$0xff] %vm1259, %v5252
      %5334 = vst.msk [vmem:[#allocation4 + $0xf0] sm:$0xff] %vm1259, %v5254
      %5335 = vst.msk [vmem:[#allocation4 + $0x100] sm:$0xff] %vm1259, %v5256
      %5336 = vst.msk [vmem:[#allocation4 + $0x110] sm:$0xff] %vm1259, %v5258
      %5337 = vst.msk [vmem:[#allocation4 + $0x120] sm:$0xff] %vm1259, %v5260
      %5338 = vst.msk [vmem:[#allocation4 + $0x130] sm:$0xff] %vm1259, %v5262
      %5339 = vst.msk [vmem:[#allocation4 + $0x140] sm:$0xff] %vm1259, %v5264
      %5340 = vst.msk [vmem:[#allocation4 + $0x150] sm:$0xff] %vm1259, %v5266
      %5341 = vst.msk [vmem:[#allocation4 + $0x160] sm:$0xff] %vm1259, %v5268
      %5342 = vst.msk [vmem:[#allocation4 + $0x170] sm:$0xff] %vm1259, %v5270
      %5343 = vst.msk [vmem:[#allocation4 + $0x180] sm:$0xff] %vm1259, %v5272
      %5344 = vst.msk [vmem:[#allocation4 + $0x190] sm:$0xff] %vm1259, %v5274
      %5345 = vst.msk [vmem:[#allocation4 + $0x1a0] sm:$0xff] %vm1259, %v5276
      %5346 = vst.msk [vmem:[#allocation4 + $0x1b0] sm:$0xff] %vm1259, %v5278
      %5347 = vst.msk [vmem:[#allocation4 + $0x1c0] sm:$0xff] %vm1259, %v5280
      %5348 = vst.msk [vmem:[#allocation4 + $0x1d0] sm:$0xff] %vm1259, %v5282
      %5349 = vst.msk [vmem:[#allocation4 + $0x1e0] sm:$0xff] %vm1259, %v5284
      %5350 = vst.msk [vmem:[#allocation4 + $0x1f0] sm:$0xff] %vm1259, %v5286
      %v5351 = vld [vmem:[%s423 + $0x2] sm:$0xff]
      %v5352 = vld [vmem:[%s423 + $0xa] sm:$0xff]
      %v5353 = vld [vmem:[%s423 + $0x1a] sm:$0xff]
      %v5354 = vld [vmem:[%s423 + $0x22] sm:$0xff]
      %v5355 = vld [vmem:[%s423 + $0x32] sm:$0xff]
      %v5356 = vld [vmem:[%s423 + $0x3a] sm:$0xff]
      %v5357 = vld [vmem:[%s423 + $0x4a] sm:$0xff]
      %v5358 = vld [vmem:[%s423 + $0x52] sm:$0xff]
      %v5359 = vld [vmem:[%s423 + $0x62] sm:$0xff]
      %v5360 = vld [vmem:[%s423 + $0x6a] sm:$0xff]
      %v5361 = vld [vmem:[%s423 + $0x7a] sm:$0xff]
      %v5362 = vld [vmem:[%s423 + $0x82] sm:$0xff]
      %v5363 = vld [vmem:[%s423 + $0x92] sm:$0xff]
      %v5364 = vld [vmem:[%s423 + $0x9a] sm:$0xff]
      %v5365 = vld [vmem:[%s423 + $0xaa] sm:$0xff]
      %v5366 = vld [vmem:[%s423 + $0xb2] sm:$0xff]
      %v5367 = vld [vmem:[%s423 + $0xc2] sm:$0xff]
      %v5368 = vld [vmem:[%s423 + $0xca] sm:$0xff]
      %v5369 = vld [vmem:[%s423 + $0xda] sm:$0xff]
      %v5370 = vld [vmem:[%s423 + $0xe2] sm:$0xff]
      %v5371 = vld [vmem:[%s423 + $0xf2] sm:$0xff]
      %v5372 = vld [vmem:[%s423 + $0xfa] sm:$0xff]
      %v5373 = vld [vmem:[%s423 + $0x10a] sm:$0xff]
      %v5374 = vld [vmem:[%s423 + $0x112] sm:$0xff]
      %v5375 = vld [vmem:[%s423 + $0x122] sm:$0xff]
      %v5376 = vld [vmem:[%s423 + $0x12a] sm:$0xff]
      %v5377 = vld [vmem:[%s423 + $0x13a] sm:$0xff]
      %v5378 = vld [vmem:[%s423 + $0x142] sm:$0xff]
      %v5379 = vld [vmem:[%s423 + $0x152] sm:$0xff]
      %v5380 = vld [vmem:[%s423 + $0x15a] sm:$0xff]
      %v5381 = vld [vmem:[%s423 + $0x16a] sm:$0xff]
      %v5382 = vld [vmem:[%s423 + $0x172] sm:$0xff]
      %5415 = vrot.lane.b32.xlu0 %v5351, 15
      %v5416 = vpop.permute.xlu0 %5415
      %5417 = vrot.lane.b32.xlu0 %v5352, 15
      %v5418 = vpop.permute.xlu0 %5417
      %5419 = vrot.lane.b32.xlu0 %v5353, 15
      %v5420 = vpop.permute.xlu0 %5419
      %5421 = vrot.lane.b32.xlu0 %v5354, 15
      %v5422 = vpop.permute.xlu0 %5421
      %5423 = vrot.lane.b32.xlu0 %v5355, 15
      %v5424 = vpop.permute.xlu0 %5423
      %5425 = vrot.lane.b32.xlu0 %v5356, 15
      %v5426 = vpop.permute.xlu0 %5425
      %5427 = vrot.lane.b32.xlu0 %v5357, 15
      %v5428 = vpop.permute.xlu0 %5427
      %5429 = vrot.lane.b32.xlu0 %v5358, 15
      %v5430 = vpop.permute.xlu0 %5429
      %5431 = vrot.lane.b32.xlu0 %v5359, 15
      %v5432 = vpop.permute.xlu0 %5431
      %5433 = vrot.lane.b32.xlu0 %v5360, 15
      %v5434 = vpop.permute.xlu0 %5433
      %5435 = vrot.lane.b32.xlu0 %v5361, 15
      %v5436 = vpop.permute.xlu0 %5435
      %5437 = vrot.lane.b32.xlu0 %v5362, 15
      %v5438 = vpop.permute.xlu0 %5437
      %5439 = vrot.lane.b32.xlu0 %v5363, 15
      %v5440 = vpop.permute.xlu0 %5439
      %5441 = vrot.lane.b32.xlu0 %v5364, 15
      %v5442 = vpop.permute.xlu0 %5441
      %5443 = vrot.lane.b32.xlu0 %v5365, 15
      %v5444 = vpop.permute.xlu0 %5443
      %5445 = vrot.lane.b32.xlu0 %v5366, 15
      %v5446 = vpop.permute.xlu0 %5445
      %5447 = vrot.lane.b32.xlu0 %v5367, 15
      %v5448 = vpop.permute.xlu0 %5447
      %5449 = vrot.lane.b32.xlu0 %v5368, 15
      %v5450 = vpop.permute.xlu0 %5449
      %5451 = vrot.lane.b32.xlu0 %v5369, 15
      %v5452 = vpop.permute.xlu0 %5451
      %5453 = vrot.lane.b32.xlu0 %v5370, 15
      %v5454 = vpop.permute.xlu0 %5453
      %5455 = vrot.lane.b32.xlu0 %v5371, 15
      %v5456 = vpop.permute.xlu0 %5455
      %5457 = vrot.lane.b32.xlu0 %v5372, 15
      %v5458 = vpop.permute.xlu0 %5457
      %5459 = vrot.lane.b32.xlu0 %v5373, 15
      %v5460 = vpop.permute.xlu0 %5459
      %5461 = vrot.lane.b32.xlu0 %v5374, 15
      %v5462 = vpop.permute.xlu0 %5461
      %5463 = vrot.lane.b32.xlu0 %v5375, 15
      %v5464 = vpop.permute.xlu0 %5463
      %5465 = vrot.lane.b32.xlu0 %v5376, 15
      %v5466 = vpop.permute.xlu0 %5465
      %5467 = vrot.lane.b32.xlu0 %v5377, 15
      %v5468 = vpop.permute.xlu0 %5467
      %5469 = vrot.lane.b32.xlu0 %v5378, 15
      %v5470 = vpop.permute.xlu0 %5469
      %5471 = vrot.lane.b32.xlu0 %v5379, 15
      %v5472 = vpop.permute.xlu0 %5471
      %5473 = vrot.lane.b32.xlu0 %v5380, 15
      %v5474 = vpop.permute.xlu0 %5473
      %5475 = vrot.lane.b32.xlu0 %v5381, 15
      %v5476 = vpop.permute.xlu0 %5475
      %5477 = vrot.lane.b32.xlu0 %v5382, 15
      %v5478 = vpop.permute.xlu0 %5477
      %5511 = vst.msk [vmem:[#allocation4] sm:$0xff] %vm1452, %v5416
      %5512 = vst.msk [vmem:[#allocation4 + $0x10] sm:$0xff] %vm1452, %v5418
      %5513 = vst.msk [vmem:[#allocation4 + $0x20] sm:$0xff] %vm1452, %v5420
      %5514 = vst.msk [vmem:[#allocation4 + $0x30] sm:$0xff] %vm1452, %v5422
      %5515 = vst.msk [vmem:[#allocation4 + $0x40] sm:$0xff] %vm1452, %v5424
      %5516 = vst.msk [vmem:[#allocation4 + $0x50] sm:$0xff] %vm1452, %v5426
      %5517 = vst.msk [vmem:[#allocation4 + $0x60] sm:$0xff] %vm1452, %v5428
      %5518 = vst.msk [vmem:[#allocation4 + $0x70] sm:$0xff] %vm1452, %v5430
      %5519 = vst.msk [vmem:[#allocation4 + $0x80] sm:$0xff] %vm1452, %v5432
      %5520 = vst.msk [vmem:[#allocation4 + $0x90] sm:$0xff] %vm1452, %v5434
      %5521 = vst.msk [vmem:[#allocation4 + $0xa0] sm:$0xff] %vm1452, %v5436
      %5522 = vst.msk [vmem:[#allocation4 + $0xb0] sm:$0xff] %vm1452, %v5438
      %5523 = vst.msk [vmem:[#allocation4 + $0xc0] sm:$0xff] %vm1452, %v5440
      %5524 = vst.msk [vmem:[#allocation4 + $0xd0] sm:$0xff] %vm1452, %v5442
      %5525 = vst.msk [vmem:[#allocation4 + $0xe0] sm:$0xff] %vm1452, %v5444
      %5526 = vst.msk [vmem:[#allocation4 + $0xf0] sm:$0xff] %vm1452, %v5446
      %5527 = vst.msk [vmem:[#allocation4 + $0x100] sm:$0xff] %vm1452, %v5448
      %5528 = vst.msk [vmem:[#allocation4 + $0x110] sm:$0xff] %vm1452, %v5450
      %5529 = vst.msk [vmem:[#allocation4 + $0x120] sm:$0xff] %vm1452, %v5452
      %5530 = vst.msk [vmem:[#allocation4 + $0x130] sm:$0xff] %vm1452, %v5454
      %5531 = vst.msk [vmem:[#allocation4 + $0x140] sm:$0xff] %vm1452, %v5456
      %5532 = vst.msk [vmem:[#allocation4 + $0x150] sm:$0xff] %vm1452, %v5458
      %5533 = vst.msk [vmem:[#allocation4 + $0x160] sm:$0xff] %vm1452, %v5460
      %5534 = vst.msk [vmem:[#allocation4 + $0x170] sm:$0xff] %vm1452, %v5462
      %5535 = vst.msk [vmem:[#allocation4 + $0x180] sm:$0xff] %vm1452, %v5464
      %5536 = vst.msk [vmem:[#allocation4 + $0x190] sm:$0xff] %vm1452, %v5466
      %5537 = vst.msk [vmem:[#allocation4 + $0x1a0] sm:$0xff] %vm1452, %v5468
      %5538 = vst.msk [vmem:[#allocation4 + $0x1b0] sm:$0xff] %vm1452, %v5470
      %5539 = vst.msk [vmem:[#allocation4 + $0x1c0] sm:$0xff] %vm1452, %v5472
      %5540 = vst.msk [vmem:[#allocation4 + $0x1d0] sm:$0xff] %vm1452, %v5474
      %5541 = vst.msk [vmem:[#allocation4 + $0x1e0] sm:$0xff] %vm1452, %v5476
      %5542 = vst.msk [vmem:[#allocation4 + $0x1f0] sm:$0xff] %vm1452, %v5478
      %v5543 = vld [vmem:[%s1485] sm:$0xff]
      %v5544 = vld [vmem:[%s1485 + $0x8] sm:$0xff]
      %v5545 = vld [vmem:[%s1485 + $0x18] sm:$0xff]
      %v5546 = vld [vmem:[%s1485 + $0x20] sm:$0xff]
      %v5547 = vld [vmem:[%s1485 + $0x30] sm:$0xff]
      %v5548 = vld [vmem:[%s1485 + $0x38] sm:$0xff]
      %v5549 = vld [vmem:[%s1485 + $0x48] sm:$0xff]
      %v5550 = vld [vmem:[%s1485 + $0x50] sm:$0xff]
      %v5551 = vld [vmem:[%s1485 + $0x60] sm:$0xff]
      %v5552 = vld [vmem:[%s1485 + $0x68] sm:$0xff]
      %v5553 = vld [vmem:[%s1485 + $0x78] sm:$0xff]
      %v5554 = vld [vmem:[%s1485 + $0x80] sm:$0xff]
      %v5555 = vld [vmem:[%s1485 + $0x90] sm:$0xff]
      %v5556 = vld [vmem:[%s1485 + $0x98] sm:$0xff]
      %v5557 = vld [vmem:[%s1485 + $0xa8] sm:$0xff]
      %v5558 = vld [vmem:[%s1485 + $0xb0] sm:$0xff]
      %v5559 = vld [vmem:[%s1485 + $0xc0] sm:$0xff]
      %v5560 = vld [vmem:[%s1485 + $0xc8] sm:$0xff]
      %v5561 = vld [vmem:[%s1485 + $0xd8] sm:$0xff]
      %v5562 = vld [vmem:[%s1485 + $0xe0] sm:$0xff]
      %v5563 = vld [vmem:[%s1485 + $0xf0] sm:$0xff]
      %v5564 = vld [vmem:[%s1485 + $0xf8] sm:$0xff]
      %v5565 = vld [vmem:[%s1485 + $0x108] sm:$0xff]
      %v5566 = vld [vmem:[%s1485 + $0x110] sm:$0xff]
      %v5567 = vld [vmem:[%s1485 + $0x120] sm:$0xff]
      %v5568 = vld [vmem:[%s1485 + $0x128] sm:$0xff]
      %v5569 = vld [vmem:[%s1485 + $0x138] sm:$0xff]
      %v5570 = vld [vmem:[%s1485 + $0x140] sm:$0xff]
      %v5571 = vld [vmem:[%s1485 + $0x150] sm:$0xff]
      %v5572 = vld [vmem:[%s1485 + $0x158] sm:$0xff]
      %v5573 = vld [vmem:[%s1485 + $0x168] sm:$0xff]
      %v5574 = vld [vmem:[%s1485 + $0x170] sm:$0xff]
      %5607 = vrot.lane.b32.xlu0 %v5543, 18
      %v5608 = vpop.permute.xlu0 %5607
      %5609 = vrot.lane.b32.xlu0 %v5544, 18
      %v5610 = vpop.permute.xlu0 %5609
      %5611 = vrot.lane.b32.xlu0 %v5545, 18
      %v5612 = vpop.permute.xlu0 %5611
      %5613 = vrot.lane.b32.xlu0 %v5546, 18
      %v5614 = vpop.permute.xlu0 %5613
      %5615 = vrot.lane.b32.xlu0 %v5547, 18
      %v5616 = vpop.permute.xlu0 %5615
      %5617 = vrot.lane.b32.xlu0 %v5548, 18
      %v5618 = vpop.permute.xlu0 %5617
      %5619 = vrot.lane.b32.xlu0 %v5549, 18
      %v5620 = vpop.permute.xlu0 %5619
      %5621 = vrot.lane.b32.xlu0 %v5550, 18
      %v5622 = vpop.permute.xlu0 %5621
      %5623 = vrot.lane.b32.xlu0 %v5551, 18
      %v5624 = vpop.permute.xlu0 %5623
      %5625 = vrot.lane.b32.xlu0 %v5552, 18
      %v5626 = vpop.permute.xlu0 %5625
      %5627 = vrot.lane.b32.xlu0 %v5553, 18
      %v5628 = vpop.permute.xlu0 %5627
      %5629 = vrot.lane.b32.xlu0 %v5554, 18
      %v5630 = vpop.permute.xlu0 %5629
      %5631 = vrot.lane.b32.xlu0 %v5555, 18
      %v5632 = vpop.permute.xlu0 %5631
      %5633 = vrot.lane.b32.xlu0 %v5556, 18
      %v5634 = vpop.permute.xlu0 %5633
      %5635 = vrot.lane.b32.xlu0 %v5557, 18
      %v5636 = vpop.permute.xlu0 %5635
      %5637 = vrot.lane.b32.xlu0 %v5558, 18
      %v5638 = vpop.permute.xlu0 %5637
      %5639 = vrot.lane.b32.xlu0 %v5559, 18
      %v5640 = vpop.permute.xlu0 %5639
      %5641 = vrot.lane.b32.xlu0 %v5560, 18
      %v5642 = vpop.permute.xlu0 %5641
      %5643 = vrot.lane.b32.xlu0 %v5561, 18
      %v5644 = vpop.permute.xlu0 %5643
      %5645 = vrot.lane.b32.xlu0 %v5562, 18
      %v5646 = vpop.permute.xlu0 %5645
      %5647 = vrot.lane.b32.xlu0 %v5563, 18
      %v5648 = vpop.permute.xlu0 %5647
      %5649 = vrot.lane.b32.xlu0 %v5564, 18
      %v5650 = vpop.permute.xlu0 %5649
      %5651 = vrot.lane.b32.xlu0 %v5565, 18
      %v5652 = vpop.permute.xlu0 %5651
      %5653 = vrot.lane.b32.xlu0 %v5566, 18
      %v5654 = vpop.permute.xlu0 %5653
      %5655 = vrot.lane.b32.xlu0 %v5567, 18
      %v5656 = vpop.permute.xlu0 %5655
      %5657 = vrot.lane.b32.xlu0 %v5568, 18
      %v5658 = vpop.permute.xlu0 %5657
      %5659 = vrot.lane.b32.xlu0 %v5569, 18
      %v5660 = vpop.permute.xlu0 %5659
      %5661 = vrot.lane.b32.xlu0 %v5570, 18
      %v5662 = vpop.permute.xlu0 %5661
      %5663 = vrot.lane.b32.xlu0 %v5571, 18
      %v5664 = vpop.permute.xlu0 %5663
      %5665 = vrot.lane.b32.xlu0 %v5572, 18
      %v5666 = vpop.permute.xlu0 %5665
      %5667 = vrot.lane.b32.xlu0 %v5573, 18
      %v5668 = vpop.permute.xlu0 %5667
      %5669 = vrot.lane.b32.xlu0 %v5574, 18
      %v5670 = vpop.permute.xlu0 %5669
      %5703 = vst.msk [vmem:[#allocation4] sm:$0xff] %vm1646, %v5608
      %5704 = vst.msk [vmem:[#allocation4 + $0x10] sm:$0xff] %vm1646, %v5610
      %5705 = vst.msk [vmem:[#allocation4 + $0x20] sm:$0xff] %vm1646, %v5612
      %5706 = vst.msk [vmem:[#allocation4 + $0x30] sm:$0xff] %vm1646, %v5614
      %5707 = vst.msk [vmem:[#allocation4 + $0x40] sm:$0xff] %vm1646, %v5616
      %5708 = vst.msk [vmem:[#allocation4 + $0x50] sm:$0xff] %vm1646, %v5618
      %5709 = vst.msk [vmem:[#allocation4 + $0x60] sm:$0xff] %vm1646, %v5620
      %5710 = vst.msk [vmem:[#allocation4 + $0x70] sm:$0xff] %vm1646, %v5622
      %5711 = vst.msk [vmem:[#allocation4 + $0x80] sm:$0xff] %vm1646, %v5624
      %5712 = vst.msk [vmem:[#allocation4 + $0x90] sm:$0xff] %vm1646, %v5626
      %5713 = vst.msk [vmem:[#allocation4 + $0xa0] sm:$0xff] %vm1646, %v5628
      %5714 = vst.msk [vmem:[#allocation4 + $0xb0] sm:$0xff] %vm1646, %v5630
      %5715 = vst.msk [vmem:[#allocation4 + $0xc0] sm:$0xff] %vm1646, %v5632
      %5716 = vst.msk [vmem:[#allocation4 + $0xd0] sm:$0xff] %vm1646, %v5634
      %5717 = vst.msk [vmem:[#allocation4 + $0xe0] sm:$0xff] %vm1646, %v5636
      %5718 = vst.msk [vmem:[#allocation4 + $0xf0] sm:$0xff] %vm1646, %v5638
      %5719 = vst.msk [vmem:[#allocation4 + $0x100] sm:$0xff] %vm1646, %v5640
      %5720 = vst.msk [vmem:[#allocation4 + $0x110] sm:$0xff] %vm1646, %v5642
      %5721 = vst.msk [vmem:[#allocation4 + $0x120] sm:$0xff] %vm1646, %v5644
      %5722 = vst.msk [vmem:[#allocation4 + $0x130] sm:$0xff] %vm1646, %v5646
      %5723 = vst.msk [vmem:[#allocation4 + $0x140] sm:$0xff] %vm1646, %v5648
      %5724 = vst.msk [vmem:[#allocation4 + $0x150] sm:$0xff] %vm1646, %v5650
      %5725 = vst.msk [vmem:[#allocation4 + $0x160] sm:$0xff] %vm1646, %v5652
      %5726 = vst.msk [vmem:[#allocation4 + $0x170] sm:$0xff] %vm1646, %v5654
      %5727 = vst.msk [vmem:[#allocation4 + $0x180] sm:$0xff] %vm1646, %v5656
      %5728 = vst.msk [vmem:[#allocation4 + $0x190] sm:$0xff] %vm1646, %v5658
      %5729 = vst.msk [vmem:[#allocation4 + $0x1a0] sm:$0xff] %vm1646, %v5660
      %5730 = vst.msk [vmem:[#allocation4 + $0x1b0] sm:$0xff] %vm1646, %v5662
      %5731 = vst.msk [vmem:[#allocation4 + $0x1c0] sm:$0xff] %vm1646, %v5664
      %5732 = vst.msk [vmem:[#allocation4 + $0x1d0] sm:$0xff] %vm1646, %v5666
      %5733 = vst.msk [vmem:[#allocation4 + $0x1e0] sm:$0xff] %vm1646, %v5668
      %5734 = vst.msk [vmem:[#allocation4 + $0x1f0] sm:$0xff] %vm1646, %v5670
      %v5735 = vld [vmem:[%s1485 + $0x1] sm:$0xff]
      %v5736 = vld [vmem:[%s1485 + $0x9] sm:$0xff]
      %v5737 = vld [vmem:[%s1485 + $0x19] sm:$0xff]
      %v5738 = vld [vmem:[%s1485 + $0x21] sm:$0xff]
      %v5739 = vld [vmem:[%s1485 + $0x31] sm:$0xff]
      %v5740 = vld [vmem:[%s1485 + $0x39] sm:$0xff]
      %v5741 = vld [vmem:[%s1485 + $0x49] sm:$0xff]
      %v5742 = vld [vmem:[%s1485 + $0x51] sm:$0xff]
      %v5743 = vld [vmem:[%s1485 + $0x61] sm:$0xff]
      %v5744 = vld [vmem:[%s1485 + $0x69] sm:$0xff]
      %v5745 = vld [vmem:[%s1485 + $0x79] sm:$0xff]
      %v5746 = vld [vmem:[%s1485 + $0x81] sm:$0xff]
      %v5747 = vld [vmem:[%s1485 + $0x91] sm:$0xff]
      %v5748 = vld [vmem:[%s1485 + $0x99] sm:$0xff]
      %v5749 = vld [vmem:[%s1485 + $0xa9] sm:$0xff]
      %v5750 = vld [vmem:[%s1485 + $0xb1] sm:$0xff]
      %v5751 = vld [vmem:[%s1485 + $0xc1] sm:$0xff]
      %v5752 = vld [vmem:[%s1485 + $0xc9] sm:$0xff]
      %v5753 = vld [vmem:[%s1485 + $0xd9] sm:$0xff]
      %v5754 = vld [vmem:[%s1485 + $0xe1] sm:$0xff]
      %v5755 = vld [vmem:[%s1485 + $0xf1] sm:$0xff]
      %v5756 = vld [vmem:[%s1485 + $0xf9] sm:$0xff]
      %v5757 = vld [vmem:[%s1485 + $0x109] sm:$0xff]
      %v5758 = vld [vmem:[%s1485 + $0x111] sm:$0xff]
      %v5759 = vld [vmem:[%s1485 + $0x121] sm:$0xff]
      %v5760 = vld [vmem:[%s1485 + $0x129] sm:$0xff]
      %v5761 = vld [vmem:[%s1485 + $0x139] sm:$0xff]
      %v5762 = vld [vmem:[%s1485 + $0x141] sm:$0xff]
      %v5763 = vld [vmem:[%s1485 + $0x151] sm:$0xff]
      %v5764 = vld [vmem:[%s1485 + $0x159] sm:$0xff]
      %v5765 = vld [vmem:[%s1485 + $0x169] sm:$0xff]
      %v5766 = vld [vmem:[%s1485 + $0x171] sm:$0xff]
      %5799 = vrot.lane.b32.xlu0 %v5735, 21
      %v5800 = vpop.permute.xlu0 %5799
      %5801 = vrot.lane.b32.xlu0 %v5736, 21
      %v5802 = vpop.permute.xlu0 %5801
      %5803 = vrot.lane.b32.xlu0 %v5737, 21
      %v5804 = vpop.permute.xlu0 %5803
      %5805 = vrot.lane.b32.xlu0 %v5738, 21
      %v5806 = vpop.permute.xlu0 %5805
      %5807 = vrot.lane.b32.xlu0 %v5739, 21
      %v5808 = vpop.permute.xlu0 %5807
      %5809 = vrot.lane.b32.xlu0 %v5740, 21
      %v5810 = vpop.permute.xlu0 %5809
      %5811 = vrot.lane.b32.xlu0 %v5741, 21
      %v5812 = vpop.permute.xlu0 %5811
      %5813 = vrot.lane.b32.xlu0 %v5742, 21
      %v5814 = vpop.permute.xlu0 %5813
      %5815 = vrot.lane.b32.xlu0 %v5743, 21
      %v5816 = vpop.permute.xlu0 %5815
      %5817 = vrot.lane.b32.xlu0 %v5744, 21
      %v5818 = vpop.permute.xlu0 %5817
      %5819 = vrot.lane.b32.xlu0 %v5745, 21
      %v5820 = vpop.permute.xlu0 %5819
      %5821 = vrot.lane.b32.xlu0 %v5746, 21
      %v5822 = vpop.permute.xlu0 %5821
      %5823 = vrot.lane.b32.xlu0 %v5747, 21
      %v5824 = vpop.permute.xlu0 %5823
      %5825 = vrot.lane.b32.xlu0 %v5748, 21
      %v5826 = vpop.permute.xlu0 %5825
      %5827 = vrot.lane.b32.xlu0 %v5749, 21
      %v5828 = vpop.permute.xlu0 %5827
      %5829 = vrot.lane.b32.xlu0 %v5750, 21
      %v5830 = vpop.permute.xlu0 %5829
      %5831 = vrot.lane.b32.xlu0 %v5751, 21
      %v5832 = vpop.permute.xlu0 %5831
      %5833 = vrot.lane.b32.xlu0 %v5752, 21
      %v5834 = vpop.permute.xlu0 %5833
      %5835 = vrot.lane.b32.xlu0 %v5753, 21
      %v5836 = vpop.permute.xlu0 %5835
      %5837 = vrot.lane.b32.xlu0 %v5754, 21
      %v5838 = vpop.permute.xlu0 %5837
      %5839 = vrot.lane.b32.xlu0 %v5755, 21
      %v5840 = vpop.permute.xlu0 %5839
      %5841 = vrot.lane.b32.xlu0 %v5756, 21
      %v5842 = vpop.permute.xlu0 %5841
      %5843 = vrot.lane.b32.xlu0 %v5757, 21
      %v5844 = vpop.permute.xlu0 %5843
      %5845 = vrot.lane.b32.xlu0 %v5758, 21
      %v5846 = vpop.permute.xlu0 %5845
      %5847 = vrot.lane.b32.xlu0 %v5759, 21
      %v5848 = vpop.permute.xlu0 %5847
      %5849 = vrot.lane.b32.xlu0 %v5760, 21
      %v5850 = vpop.permute.xlu0 %5849
      %5851 = vrot.lane.b32.xlu0 %v5761, 21
      %v5852 = vpop.permute.xlu0 %5851
      %5853 = vrot.lane.b32.xlu0 %v5762, 21
      %v5854 = vpop.permute.xlu0 %5853
      %5855 = vrot.lane.b32.xlu0 %v5763, 21
      %v5856 = vpop.permute.xlu0 %5855
      %5857 = vrot.lane.b32.xlu0 %v5764, 21
      %v5858 = vpop.permute.xlu0 %5857
      %5859 = vrot.lane.b32.xlu0 %v5765, 21
      %v5860 = vpop.permute.xlu0 %5859
      %5861 = vrot.lane.b32.xlu0 %v5766, 21
      %v5862 = vpop.permute.xlu0 %5861
      %5895 = vst.msk [vmem:[#allocation4] sm:$0xff] %vm1839, %v5800
      %5896 = vst.msk [vmem:[#allocation4 + $0x10] sm:$0xff] %vm1839, %v5802
      %5897 = vst.msk [vmem:[#allocation4 + $0x20] sm:$0xff] %vm1839, %v5804
      %5898 = vst.msk [vmem:[#allocation4 + $0x30] sm:$0xff] %vm1839, %v5806
      %5899 = vst.msk [vmem:[#allocation4 + $0x40] sm:$0xff] %vm1839, %v5808
      %5900 = vst.msk [vmem:[#allocation4 + $0x50] sm:$0xff] %vm1839, %v5810
      %5901 = vst.msk [vmem:[#allocation4 + $0x60] sm:$0xff] %vm1839, %v5812
      %5902 = vst.msk [vmem:[#allocation4 + $0x70] sm:$0xff] %vm1839, %v5814
      %5903 = vst.msk [vmem:[#allocation4 + $0x80] sm:$0xff] %vm1839, %v5816
      %5904 = vst.msk [vmem:[#allocation4 + $0x90] sm:$0xff] %vm1839, %v5818
      %5905 = vst.msk [vmem:[#allocation4 + $0xa0] sm:$0xff] %vm1839, %v5820
      %5906 = vst.msk [vmem:[#allocation4 + $0xb0] sm:$0xff] %vm1839, %v5822
      %5907 = vst.msk [vmem:[#allocation4 + $0xc0] sm:$0xff] %vm1839, %v5824
      %5908 = vst.msk [vmem:[#allocation4 + $0xd0] sm:$0xff] %vm1839, %v5826
      %5909 = vst.msk [vmem:[#allocation4 + $0xe0] sm:$0xff] %vm1839, %v5828
      %5910 = vst.msk [vmem:[#allocation4 + $0xf0] sm:$0xff] %vm1839, %v5830
      %5911 = vst.msk [vmem:[#allocation4 + $0x100] sm:$0xff] %vm1839, %v5832
      %5912 = vst.msk [vmem:[#allocation4 + $0x110] sm:$0xff] %vm1839, %v5834
      %5913 = vst.msk [vmem:[#allocation4 + $0x120] sm:$0xff] %vm1839, %v5836
      %5914 = vst.msk [vmem:[#allocation4 + $0x130] sm:$0xff] %vm1839, %v5838
      %5915 = vst.msk [vmem:[#allocation4 + $0x140] sm:$0xff] %vm1839, %v5840
      %5916 = vst.msk [vmem:[#allocation4 + $0x150] sm:$0xff] %vm1839, %v5842
      %5917 = vst.msk [vmem:[#allocation4 + $0x160] sm:$0xff] %vm1839, %v5844
      %5918 = vst.msk [vmem:[#allocation4 + $0x170] sm:$0xff] %vm1839, %v5846
      %5919 = vst.msk [vmem:[#allocation4 + $0x180] sm:$0xff] %vm1839, %v5848
      %5920 = vst.msk [vmem:[#allocation4 + $0x190] sm:$0xff] %vm1839, %v5850
      %5921 = vst.msk [vmem:[#allocation4 + $0x1a0] sm:$0xff] %vm1839, %v5852
      %5922 = vst.msk [vmem:[#allocation4 + $0x1b0] sm:$0xff] %vm1839, %v5854
      %5923 = vst.msk [vmem:[#allocation4 + $0x1c0] sm:$0xff] %vm1839, %v5856
      %5924 = vst.msk [vmem:[#allocation4 + $0x1d0] sm:$0xff] %vm1839, %v5858
      %5925 = vst.msk [vmem:[#allocation4 + $0x1e0] sm:$0xff] %vm1839, %v5860
      %5926 = vst.msk [vmem:[#allocation4 + $0x1f0] sm:$0xff] %vm1839, %v5862
      %v5927 = vld [vmem:[%s1485 + $0x2] sm:$0xff]
      %v5928 = vld [vmem:[%s1485 + $0xa] sm:$0xff]
      %v5929 = vld [vmem:[%s1485 + $0x1a] sm:$0xff]
      %v5930 = vld [vmem:[%s1485 + $0x22] sm:$0xff]
      %v5931 = vld [vmem:[%s1485 + $0x32] sm:$0xff]
      %v5932 = vld [vmem:[%s1485 + $0x3a] sm:$0xff]
      %v5933 = vld [vmem:[%s1485 + $0x4a] sm:$0xff]
      %v5934 = vld [vmem:[%s1485 + $0x52] sm:$0xff]
      %v5935 = vld [vmem:[%s1485 + $0x62] sm:$0xff]
      %v5936 = vld [vmem:[%s1485 + $0x6a] sm:$0xff]
      %v5937 = vld [vmem:[%s1485 + $0x7a] sm:$0xff]
      %v5938 = vld [vmem:[%s1485 + $0x82] sm:$0xff]
      %v5939 = vld [vmem:[%s1485 + $0x92] sm:$0xff]
      %v5940 = vld [vmem:[%s1485 + $0x9a] sm:$0xff]
      %v5941 = vld [vmem:[%s1485 + $0xaa] sm:$0xff]
      %v5942 = vld [vmem:[%s1485 + $0xb2] sm:$0xff]
      %v5943 = vld [vmem:[%s1485 + $0xc2] sm:$0xff]
      %v5944 = vld [vmem:[%s1485 + $0xca] sm:$0xff]
      %v5945 = vld [vmem:[%s1485 + $0xda] sm:$0xff]
      %v5946 = vld [vmem:[%s1485 + $0xe2] sm:$0xff]
      %v5947 = vld [vmem:[%s1485 + $0xf2] sm:$0xff]
      %v5948 = vld [vmem:[%s1485 + $0xfa] sm:$0xff]
      %v5949 = vld [vmem:[%s1485 + $0x10a] sm:$0xff]
      %v5950 = vld [vmem:[%s1485 + $0x112] sm:$0xff]
      %v5951 = vld [vmem:[%s1485 + $0x122] sm:$0xff]
      %v5952 = vld [vmem:[%s1485 + $0x12a] sm:$0xff]
      %v5953 = vld [vmem:[%s1485 + $0x13a] sm:$0xff]
      %v5954 = vld [vmem:[%s1485 + $0x142] sm:$0xff]
      %v5955 = vld [vmem:[%s1485 + $0x152] sm:$0xff]
      %v5956 = vld [vmem:[%s1485 + $0x15a] sm:$0xff]
      %v5957 = vld [vmem:[%s1485 + $0x16a] sm:$0xff]
      %v5958 = vld [vmem:[%s1485 + $0x172] sm:$0xff]
      %5991 = vrot.lane.b32.xlu0 %v5927, 24
      %v5992 = vpop.permute.xlu0 %5991
      %5993 = vrot.lane.b32.xlu0 %v5928, 24
      %v5994 = vpop.permute.xlu0 %5993
      %5995 = vrot.lane.b32.xlu0 %v5929, 24
      %v5996 = vpop.permute.xlu0 %5995
      %5997 = vrot.lane.b32.xlu0 %v5930, 24
      %v5998 = vpop.permute.xlu0 %5997
      %5999 = vrot.lane.b32.xlu0 %v5931, 24
      %v6000 = vpop.permute.xlu0 %5999
      %6001 = vrot.lane.b32.xlu0 %v5932, 24
      %v6002 = vpop.permute.xlu0 %6001
      %6003 = vrot.lane.b32.xlu0 %v5933, 24
      %v6004 = vpop.permute.xlu0 %6003
      %6005 = vrot.lane.b32.xlu0 %v5934, 24
      %v6006 = vpop.permute.xlu0 %6005
      %6007 = vrot.lane.b32.xlu0 %v5935, 24
      %v6008 = vpop.permute.xlu0 %6007
      %6009 = vrot.lane.b32.xlu0 %v5936, 24
      %v6010 = vpop.permute.xlu0 %6009
      %6011 = vrot.lane.b32.xlu0 %v5937, 24
      %v6012 = vpop.permute.xlu0 %6011
      %6013 = vrot.lane.b32.xlu0 %v5938, 24
      %v6014 = vpop.permute.xlu0 %6013
      %6015 = vrot.lane.b32.xlu0 %v5939, 24
      %v6016 = vpop.permute.xlu0 %6015
      %6017 = vrot.lane.b32.xlu0 %v5940, 24
      %v6018 = vpop.permute.xlu0 %6017
      %6019 = vrot.lane.b32.xlu0 %v5941, 24
      %v6020 = vpop.permute.xlu0 %6019
      %6021 = vrot.lane.b32.xlu0 %v5942, 24
      %v6022 = vpop.permute.xlu0 %6021
      %6023 = vrot.lane.b32.xlu0 %v5943, 24
      %v6024 = vpop.permute.xlu0 %6023
      %6025 = vrot.lane.b32.xlu0 %v5944, 24
      %v6026 = vpop.permute.xlu0 %6025
      %6027 = vrot.lane.b32.xlu0 %v5945, 24
      %v6028 = vpop.permute.xlu0 %6027
      %6029 = vrot.lane.b32.xlu0 %v5946, 24
      %v6030 = vpop.permute.xlu0 %6029
      %6031 = vrot.lane.b32.xlu0 %v5947, 24
      %v6032 = vpop.permute.xlu0 %6031
      %6033 = vrot.lane.b32.xlu0 %v5948, 24
      %v6034 = vpop.permute.xlu0 %6033
      %6035 = vrot.lane.b32.xlu0 %v5949, 24
      %v6036 = vpop.permute.xlu0 %6035
      %6037 = vrot.lane.b32.xlu0 %v5950, 24
      %v6038 = vpop.permute.xlu0 %6037
      %6039 = vrot.lane.b32.xlu0 %v5951, 24
      %v6040 = vpop.permute.xlu0 %6039
      %6041 = vrot.lane.b32.xlu0 %v5952, 24
      %v6042 = vpop.permute.xlu0 %6041
      %6043 = vrot.lane.b32.xlu0 %v5953, 24
      %v6044 = vpop.permute.xlu0 %6043
      %6045 = vrot.lane.b32.xlu0 %v5954, 24
      %v6046 = vpop.permute.xlu0 %6045
      %6047 = vrot.lane.b32.xlu0 %v5955, 24
      %v6048 = vpop.permute.xlu0 %6047
      %6049 = vrot.lane.b32.xlu0 %v5956, 24
      %v6050 = vpop.permute.xlu0 %6049
      %6051 = vrot.lane.b32.xlu0 %v5957, 24
      %v6052 = vpop.permute.xlu0 %6051
      %6053 = vrot.lane.b32.xlu0 %v5958, 24
      %v6054 = vpop.permute.xlu0 %6053
      %6087 = vst.msk [vmem:[#allocation4] sm:$0xff] %vm2032, %v5992
      %6088 = vst.msk [vmem:[#allocation4 + $0x10] sm:$0xff] %vm2032, %v5994
      %6089 = vst.msk [vmem:[#allocation4 + $0x20] sm:$0xff] %vm2032, %v5996
      %6090 = vst.msk [vmem:[#allocation4 + $0x30] sm:$0xff] %vm2032, %v5998
      %6091 = vst.msk [vmem:[#allocation4 + $0x40] sm:$0xff] %vm2032, %v6000
      %6092 = vst.msk [vmem:[#allocation4 + $0x50] sm:$0xff] %vm2032, %v6002
      %6093 = vst.msk [vmem:[#allocation4 + $0x60] sm:$0xff] %vm2032, %v6004
      %6094 = vst.msk [vmem:[#allocation4 + $0x70] sm:$0xff] %vm2032, %v6006
      %6095 = vst.msk [vmem:[#allocation4 + $0x80] sm:$0xff] %vm2032, %v6008
      %6096 = vst.msk [vmem:[#allocation4 + $0x90] sm:$0xff] %vm2032, %v6010
      %6097 = vst.msk [vmem:[#allocation4 + $0xa0] sm:$0xff] %vm2032, %v6012
      %6098 = vst.msk [vmem:[#allocation4 + $0xb0] sm:$0xff] %vm2032, %v6014
      %6099 = vst.msk [vmem:[#allocation4 + $0xc0] sm:$0xff] %vm2032, %v6016
      %6100 = vst.msk [vmem:[#allocation4 + $0xd0] sm:$0xff] %vm2032, %v6018
      %6101 = vst.msk [vmem:[#allocation4 + $0xe0] sm:$0xff] %vm2032, %v6020
      %6102 = vst.msk [vmem:[#allocation4 + $0xf0] sm:$0xff] %vm2032, %v6022
      %6103 = vst.msk [vmem:[#allocation4 + $0x100] sm:$0xff] %vm2032, %v6024
      %6104 = vst.msk [vmem:[#allocation4 + $0x110] sm:$0xff] %vm2032, %v6026
      %6105 = vst.msk [vmem:[#allocation4 + $0x120] sm:$0xff] %vm2032, %v6028
      %6106 = vst.msk [vmem:[#allocation4 + $0x130] sm:$0xff] %vm2032, %v6030
      %6107 = vst.msk [vmem:[#allocation4 + $0x140] sm:$0xff] %vm2032, %v6032
      %6108 = vst.msk [vmem:[#allocation4 + $0x150] sm:$0xff] %vm2032, %v6034
      %6109 = vst.msk [vmem:[#allocation4 + $0x160] sm:$0xff] %vm2032, %v6036
      %6110 = vst.msk [vmem:[#allocation4 + $0x170] sm:$0xff] %vm2032, %v6038
      %6111 = vst.msk [vmem:[#allocation4 + $0x180] sm:$0xff] %vm2032, %v6040
      %6112 = vst.msk [vmem:[#allocation4 + $0x190] sm:$0xff] %vm2032, %v6042
      %6113 = vst.msk [vmem:[#allocation4 + $0x1a0] sm:$0xff] %vm2032, %v6044
      %6114 = vst.msk [vmem:[#allocation4 + $0x1b0] sm:$0xff] %vm2032, %v6046
      %6115 = vst.msk [vmem:[#allocation4 + $0x1c0] sm:$0xff] %vm2032, %v6048
      %6116 = vst.msk [vmem:[#allocation4 + $0x1d0] sm:$0xff] %vm2032, %v6050
      %6117 = vst.msk [vmem:[#allocation4 + $0x1e0] sm:$0xff] %vm2032, %v6052
      %6118 = vst.msk [vmem:[#allocation4 + $0x1f0] sm:$0xff] %vm2032, %v6054
      %v6119 = vld [vmem:[#allocation4] sm:$0xff]
      %v6120 = vld [vmem:[#allocation4 + $0x10] sm:$0xff]
      %v6121 = vld [vmem:[#allocation4 + $0x20] sm:$0xff]
      %v6122 = vld [vmem:[#allocation4 + $0x30] sm:$0xff]
      %v6123 = vld [vmem:[#allocation4 + $0x40] sm:$0xff]
      %v6124 = vld [vmem:[#allocation4 + $0x50] sm:$0xff]
      %v6125 = vld [vmem:[#allocation4 + $0x60] sm:$0xff]
      %v6126 = vld [vmem:[#allocation4 + $0x70] sm:$0xff]
      %v6127 = vld [vmem:[#allocation4 + $0x80] sm:$0xff]
      %v6128 = vld [vmem:[#allocation4 + $0x90] sm:$0xff]
      %v6129 = vld [vmem:[#allocation4 + $0xa0] sm:$0xff]
      %v6130 = vld [vmem:[#allocation4 + $0xb0] sm:$0xff]
      %v6131 = vld [vmem:[#allocation4 + $0xc0] sm:$0xff]
      %v6132 = vld [vmem:[#allocation4 + $0xd0] sm:$0xff]
      %v6133 = vld [vmem:[#allocation4 + $0xe0] sm:$0xff]
      %v6134 = vld [vmem:[#allocation4 + $0xf0] sm:$0xff]
      %v6135 = vld [vmem:[#allocation4 + $0x100] sm:$0xff]
      %v6136 = vld [vmem:[#allocation4 + $0x110] sm:$0xff]
      %v6137 = vld [vmem:[#allocation4 + $0x120] sm:$0xff]
      %v6138 = vld [vmem:[#allocation4 + $0x130] sm:$0xff]
      %v6139 = vld [vmem:[#allocation4 + $0x140] sm:$0xff]
      %v6140 = vld [vmem:[#allocation4 + $0x150] sm:$0xff]
      %v6141 = vld [vmem:[#allocation4 + $0x160] sm:$0xff]
      %v6142 = vld [vmem:[#allocation4 + $0x170] sm:$0xff]
      %v6143 = vld [vmem:[#allocation4 + $0x180] sm:$0xff]
      %v6144 = vld [vmem:[#allocation4 + $0x190] sm:$0xff]
      %v6145 = vld [vmem:[#allocation4 + $0x1a0] sm:$0xff]
      %v6146 = vld [vmem:[#allocation4 + $0x1b0] sm:$0xff]
      %v6147 = vld [vmem:[#allocation4 + $0x1c0] sm:$0xff]
      %v6148 = vld [vmem:[#allocation4 + $0x1d0] sm:$0xff]
      %v6149 = vld [vmem:[#allocation4 + $0x1e0] sm:$0xff]
      %v6150 = vld [vmem:[#allocation4 + $0x1f0] sm:$0xff]
      %v6151 = vpack.c.bf16 %v6120, %v6119
      %v6152 = vpack.c.bf16 %v6122, %v6121
      %v6153 = vpack.c.bf16 %v6124, %v6123
      %v6154 = vpack.c.bf16 %v6126, %v6125
      %v6155 = vpack.c.bf16 %v6128, %v6127
      %v6156 = vpack.c.bf16 %v6130, %v6129
      %v6157 = vpack.c.bf16 %v6132, %v6131
      %v6158 = vpack.c.bf16 %v6134, %v6133
      %v6159 = vpack.c.bf16 %v6136, %v6135
      %v6160 = vpack.c.bf16 %v6138, %v6137
      %v6161 = vpack.c.bf16 %v6140, %v6139
      %v6162 = vpack.c.bf16 %v6142, %v6141
      %v6163 = vpack.c.bf16 %v6144, %v6143
      %v6164 = vpack.c.bf16 %v6146, %v6145
      %v6165 = vpack.c.bf16 %v6148, %v6147
      %v6166 = vpack.c.bf16 %v6150, %v6149
      %v6167 = vld [vmem:[%s3] sm:$0xf]
      %v6168 = vld [vmem:[%s3 + $0x4] sm:$0xf]
      %v6169 = vld [vmem:[%s3 + $0x8] sm:$0xf]
      %v6170 = vld [vmem:[%s3 + $0xc] sm:$0x3]
      %v6171 = vld [vmem:[%s4] sm:$0x1]
      %v6173 = vlaneseq
      %v6174 = vshrl.u32 %v6173, 7
      %v6175 = vsub.s32 0, %v6174
      %v6176 = vrot.slane %v6171, %v6175
      %v6182 = vunpack.c.l.b16 %v6167
      %v6183 = vunpack.c.l.b16 %v6168
      %v6184 = vunpack.c.l.b16 %v6169
      %v6185 = vunpack.c.l.b16 %v6170
      %v6186 = vpack.c.b16 %v6183, %v6182
      %v6187 = vpack.c.b16 %v6185, %v6184
      %v6190 = vsel %vm2135, %v6151, 0
      %v6193 = vsel %vm2135, %v6152, 0
      %v6196 = vsel %vm2135, %v6153, 0
      %v6199 = vsel %vm2135, %v6154, 0
      %v6202 = vsel %vm2135, %v6155, 0
      %v6205 = vsel %vm2135, %v6156, 0
      %v6208 = vsel %vm2135, %v6157, 0
      %v6211 = vsel %vm2135, %v6158, 0
      %v6214 = vsel %vm2135, %v6159, 0
      %v6217 = vsel %vm2135, %v6160, 0
      %v6220 = vsel %vm2135, %v6161, 0
      %v6223 = vsel %vm2135, %v6162, 0
      %v6226 = vsel %vm2135, %v6163, 0
      %v6229 = vsel %vm2135, %v6164, 0
      %v6232 = vsel %vm2135, %v6165, 0
      %v6235 = vsel %vm2135, %v6166, 0
      %v6238 = vand.u32 %v6187, %v2187
      %6240 = vmatprep.subr.bf16.mxu0 0
      %6241 = vmatpush1.bf16.msra.mxu0 %v6186
      %6242 = vmatprep.subr.bf16.mxu0 0
      %6243 = vmatpush1.bf16.msra.mxu0 %v6238
      %6244 = vmatprep.subr.bf16.mxu0 0
      %6245 = vmatpush1.bf16.msra.mxu0 0
      %6246 = vmatprep.subr.bf16.mxu0 0
      %6247 = vmatpush1.bf16.msra.mxu0 0
      %6248 = vmatprep.subr.bf16.mxu0 0
      %6249 = vmatpush1.bf16.msra.mxu0 0
      %6250 = vmatprep.subr.bf16.mxu0 0
      %6251 = vmatpush1.bf16.msra.mxu0 0
      %6252 = vmatprep.subr.bf16.mxu0 0
      %6253 = vmatpush1.bf16.msra.mxu0 0
      %6254 = vmatprep.subr.bf16.mxu0 0
      %6255 = vmatpush1.bf16.msra.mxu0 0
      %6256 = vmatprep.subr.bf16.mxu0 0
      %6257 = vmatpush1.bf16.msra.mxu0 0
      %6258 = vmatprep.subr.bf16.mxu0 0
      %6259 = vmatpush1.bf16.msra.mxu0 0
      %6260 = vmatprep.subr.bf16.mxu0 0
      %6261 = vmatpush1.bf16.msra.mxu0 0
      %6262 = vmatprep.subr.bf16.mxu0 0
      %6263 = vmatpush1.bf16.msra.mxu0 0
      %6264 = vmatprep.subr.bf16.mxu0 0
      %6265 = vmatpush1.bf16.msra.mxu0 0
      %6266 = vmatprep.subr.bf16.mxu0 0
      %6267 = vmatpush1.bf16.msra.mxu0 0
      %6268 = vmatprep.subr.bf16.mxu0 0
      %6269 = vmatpush1.bf16.msra.mxu0 0
      %6270 = vmatprep.subr.bf16.mxu0 0
      %6271 = vmatpush1.bf16.msra.mxu0 0
      %6272 = vmatprep.mubr.bf16.mxu0 0
      %6273 = vmatmul.mubr.bf16.gmra.mrb[0].mxu0 %v6190
      %v6274 = vpop.f32.mrb[0].mxu0
      %v6275 = vadd.f32 %v6176, %v6274
      %v6276 = vpop.f32.mrb[0].mxu0
      %v6277 = vpop.f32.mrb[0].mxu0
      %v6278 = vadd.f32 %v6176, %v6277
      %v6279 = vpop.f32.mrb[0].mxu0
      %6280 = vmatprep.mubr.bf16.mxu0 0
      %6281 = vmatmul.mubr.bf16.gmra.mrb[0].mxu0 %v6193
      %v6282 = vpop.f32.mrb[0].mxu0
      %v6283 = vadd.f32 %v6176, %v6282
      %v6284 = vpop.f32.mrb[0].mxu0
      %v6285 = vpop.f32.mrb[0].mxu0
      %v6286 = vadd.f32 %v6176, %v6285
      %v6287 = vpop.f32.mrb[0].mxu0
      %6288 = vmatprep.mubr.bf16.mxu0 0
      %6289 = vmatmul.mubr.bf16.gmra.mrb[0].mxu0 %v6196
      %v6290 = vpop.f32.mrb[0].mxu0
      %v6291 = vadd.f32 %v6176, %v6290
      %v6292 = vpop.f32.mrb[0].mxu0
      %v6293 = vpop.f32.mrb[0].mxu0
      %v6294 = vadd.f32 %v6176, %v6293
      %v6295 = vpop.f32.mrb[0].mxu0
      %6296 = vmatprep.mubr.bf16.mxu0 0
      %6297 = vmatmul.mubr.bf16.gmra.mrb[0].mxu0 %v6199
      %v6298 = vpop.f32.mrb[0].mxu0
      %v6299 = vadd.f32 %v6176, %v6298
      %v6300 = vpop.f32.mrb[0].mxu0
      %v6301 = vpop.f32.mrb[0].mxu0
      %v6302 = vadd.f32 %v6176, %v6301
      %v6303 = vpop.f32.mrb[0].mxu0
      %6304 = vmatprep.mubr.bf16.mxu0 0
      %6305 = vmatmul.mubr.bf16.gmra.mrb[0].mxu0 %v6202
      %v6306 = vpop.f32.mrb[0].mxu0
      %v6307 = vadd.f32 %v6176, %v6306
      %v6308 = vpop.f32.mrb[0].mxu0
      %v6309 = vpop.f32.mrb[0].mxu0
      %v6310 = vadd.f32 %v6176, %v6309
      %v6311 = vpop.f32.mrb[0].mxu0
      %6312 = vmatprep.mubr.bf16.mxu0 0
      %6313 = vmatmul.mubr.bf16.gmra.mrb[0].mxu0 %v6205
      %v6314 = vpop.f32.mrb[0].mxu0
      %v6315 = vadd.f32 %v6176, %v6314
      %v6316 = vpop.f32.mrb[0].mxu0
      %v6317 = vpop.f32.mrb[0].mxu0
      %v6318 = vadd.f32 %v6176, %v6317
      %v6319 = vpop.f32.mrb[0].mxu0
      %6320 = vmatprep.mubr.bf16.mxu0 0
      %6321 = vmatmul.mubr.bf16.gmra.mrb[0].mxu0 %v6208
      %v6322 = vpop.f32.mrb[0].mxu0
      %v6323 = vadd.f32 %v6176, %v6322
      %v6324 = vpop.f32.mrb[0].mxu0
      %v6325 = vpop.f32.mrb[0].mxu0
      %v6326 = vadd.f32 %v6176, %v6325
      %v6327 = vpop.f32.mrb[0].mxu0
      %6328 = vmatprep.mubr.bf16.mxu0 0
      %6329 = vmatmul.mubr.bf16.gmra.mrb[0].mxu0 %v6211
      %v6330 = vpop.f32.mrb[0].mxu0
      %v6331 = vadd.f32 %v6176, %v6330
      %v6332 = vpop.f32.mrb[0].mxu0
      %v6333 = vpop.f32.mrb[0].mxu0
      %v6334 = vadd.f32 %v6176, %v6333
      %v6335 = vpop.f32.mrb[0].mxu0
      %6336 = vmatprep.mubr.bf16.mxu0 0
      %6337 = vmatmul.mubr.bf16.gmra.mrb[0].mxu0 %v6214
      %v6338 = vpop.f32.mrb[0].mxu0
      %v6339 = vadd.f32 %v6176, %v6338
      %v6340 = vpop.f32.mrb[0].mxu0
      %v6341 = vpop.f32.mrb[0].mxu0
      %v6342 = vadd.f32 %v6176, %v6341
      %v6343 = vpop.f32.mrb[0].mxu0
      %6344 = vmatprep.mubr.bf16.mxu0 0
      %6345 = vmatmul.mubr.bf16.gmra.mrb[0].mxu0 %v6217
      %v6346 = vpop.f32.mrb[0].mxu0
      %v6347 = vadd.f32 %v6176, %v6346
      %v6348 = vpop.f32.mrb[0].mxu0
      %v6349 = vpop.f32.mrb[0].mxu0
      %v6350 = vadd.f32 %v6176, %v6349
      %v6351 = vpop.f32.mrb[0].mxu0
      %6352 = vmatprep.mubr.bf16.mxu0 0
      %6353 = vmatmul.mubr.bf16.gmra.mrb[0].mxu0 %v6220
      %v6354 = vpop.f32.mrb[0].mxu0
      %v6355 = vadd.f32 %v6176, %v6354
      %v6356 = vpop.f32.mrb[0].mxu0
      %v6357 = vpop.f32.mrb[0].mxu0
      %v6358 = vadd.f32 %v6176, %v6357
      %v6359 = vpop.f32.mrb[0].mxu0
      %6360 = vmatprep.mubr.bf16.mxu0 0
      %6361 = vmatmul.mubr.bf16.gmra.mrb[0].mxu0 %v6223
      %v6362 = vpop.f32.mrb[0].mxu0
      %v6363 = vadd.f32 %v6176, %v6362
      %v6364 = vpop.f32.mrb[0].mxu0
      %v6365 = vpop.f32.mrb[0].mxu0
      %v6366 = vadd.f32 %v6176, %v6365
      %v6367 = vpop.f32.mrb[0].mxu0
      %6368 = vmatprep.mubr.bf16.mxu0 0
      %6369 = vmatmul.mubr.bf16.gmra.mrb[0].mxu0 %v6226
      %v6370 = vpop.f32.mrb[0].mxu0
      %v6371 = vadd.f32 %v6176, %v6370
      %v6372 = vpop.f32.mrb[0].mxu0
      %v6373 = vpop.f32.mrb[0].mxu0
      %v6374 = vadd.f32 %v6176, %v6373
      %v6375 = vpop.f32.mrb[0].mxu0
      %6376 = vmatprep.mubr.bf16.mxu0 0
      %6377 = vmatmul.mubr.bf16.gmra.mrb[0].mxu0 %v6229
      %v6378 = vpop.f32.mrb[0].mxu0
      %v6379 = vadd.f32 %v6176, %v6378
      %v6380 = vpop.f32.mrb[0].mxu0
      %v6381 = vpop.f32.mrb[0].mxu0
      %v6382 = vadd.f32 %v6176, %v6381
      %v6383 = vpop.f32.mrb[0].mxu0
      %6384 = vmatprep.mubr.bf16.mxu0 0
      %6385 = vmatmul.mubr.bf16.gmra.mrb[0].mxu0 %v6232
      %v6386 = vpop.f32.mrb[0].mxu0
      %v6387 = vadd.f32 %v6176, %v6386
      %v6388 = vpop.f32.mrb[0].mxu0
      %v6389 = vpop.f32.mrb[0].mxu0
      %v6390 = vadd.f32 %v6176, %v6389
      %v6391 = vpop.f32.mrb[0].mxu0
      %6392 = vmatprep.mubr.bf16.mxu0 0
      %6393 = vmatmul.mubr.bf16.gmra.mrb[0].mxu0 %v6235
      %v6394 = vpop.f32.mrb[0].mxu0
      %v6395 = vadd.f32 %v6176, %v6394
      %v6396 = vpop.f32.mrb[0].mxu0
      %v6397 = vpop.f32.mrb[0].mxu0
      %v6398 = vadd.f32 %v6176, %v6397
      %v6399 = vpop.f32.mrb[0].mxu0
      %6400 = vdwg.mxu0
      %v6401 = vmax.f32 %v6275, 0.0
      %v6402 = vmax.f32 %v6278, 0.0
      %v6403 = vmax.f32 %v6283, 0.0
      %v6404 = vmax.f32 %v6286, 0.0
      %v6405 = vmax.f32 %v6291, 0.0
      %v6406 = vmax.f32 %v6294, 0.0
      %v6407 = vmax.f32 %v6299, 0.0
      %v6408 = vmax.f32 %v6302, 0.0
      %v6409 = vmax.f32 %v6307, 0.0
      %v6410 = vmax.f32 %v6310, 0.0
      %v6411 = vmax.f32 %v6315, 0.0
      %v6412 = vmax.f32 %v6318, 0.0
      %v6413 = vmax.f32 %v6323, 0.0
      %v6414 = vmax.f32 %v6326, 0.0
      %v6415 = vmax.f32 %v6331, 0.0
      %v6416 = vmax.f32 %v6334, 0.0
      %v6417 = vmax.f32 %v6339, 0.0
      %v6418 = vmax.f32 %v6342, 0.0
      %v6419 = vmax.f32 %v6347, 0.0
      %v6420 = vmax.f32 %v6350, 0.0
      %v6421 = vmax.f32 %v6355, 0.0
      %v6422 = vmax.f32 %v6358, 0.0
      %v6423 = vmax.f32 %v6363, 0.0
      %v6424 = vmax.f32 %v6366, 0.0
      %v6425 = vmax.f32 %v6371, 0.0
      %v6426 = vmax.f32 %v6374, 0.0
      %v6427 = vmax.f32 %v6379, 0.0
      %v6428 = vmax.f32 %v6382, 0.0
      %v6429 = vmax.f32 %v6387, 0.0
      %v6430 = vmax.f32 %v6390, 0.0
      %v6431 = vmax.f32 %v6395, 0.0
      %v6432 = vmax.f32 %v6398, 0.0
      %6433 = vst.msk [vmem:[#allocation3] sm:$0xff] %vm2384, 0.0
      %6434 = vst.msk [vmem:[#allocation3 + $0x8] sm:$0xff] %vm2384, 0.0
      %6435 = vst.msk [vmem:[#allocation3 + $0x10] sm:$0x3] %vm2387, 0.0
      %6436 = vst.msk [vmem:[#allocation3 + $0x18] sm:$0xff] %vm2384, 0.0
      %6437 = vst.msk [vmem:[#allocation3 + $0x20] sm:$0xff] %vm2384, 0.0
      %6438 = vst.msk [vmem:[#allocation3 + $0x28] sm:$0x3] %vm2387, 0.0
      %6439 = vst.msk [vmem:[#allocation3 + $0x30] sm:$0xff] %vm2384, 0.0
      %6440 = vst.msk [vmem:[#allocation3 + $0x38] sm:$0xff] %vm2384, 0.0
      %6441 = vst.msk [vmem:[#allocation3 + $0x40] sm:$0x3] %vm2387, 0.0
      %6442 = vst.msk [vmem:[#allocation3 + $0x48] sm:$0xff] %vm2384, 0.0
      %6443 = vst.msk [vmem:[#allocation3 + $0x50] sm:$0xff] %vm2384, 0.0
      %6444 = vst.msk [vmem:[#allocation3 + $0x58] sm:$0x3] %vm2387, 0.0
      %6445 = vst.msk [vmem:[#allocation3 + $0x60] sm:$0xff] %vm2384, 0.0
      %6446 = vst.msk [vmem:[#allocation3 + $0x68] sm:$0xff] %vm2384, 0.0
      %6447 = vst.msk [vmem:[#allocation3 + $0x70] sm:$0x3] %vm2387, 0.0
      %6448 = vst.msk [vmem:[#allocation3 + $0x78] sm:$0xff] %vm2384, 0.0
      %6449 = vst.msk [vmem:[#allocation3 + $0x80] sm:$0xff] %vm2384, 0.0
      %6450 = vst.msk [vmem:[#allocation3 + $0x88] sm:$0x3] %vm2387, 0.0
      %6451 = vst.msk [vmem:[#allocation3 + $0x90] sm:$0xff] %vm2384, 0.0
      %6452 = vst.msk [vmem:[#allocation3 + $0x98] sm:$0xff] %vm2384, 0.0
      %6453 = vst.msk [vmem:[#allocation3 + $0xa0] sm:$0x3] %vm2387, 0.0
      %6454 = vst.msk [vmem:[#allocation3 + $0xa8] sm:$0xff] %vm2384, 0.0
      %6455 = vst.msk [vmem:[#allocation3 + $0xb0] sm:$0xff] %vm2384, 0.0
      %6456 = vst.msk [vmem:[#allocation3 + $0xb8] sm:$0x3] %vm2387, 0.0
      %6457 = vst.msk [vmem:[#allocation3 + $0xc0] sm:$0xff] %vm2384, 0.0
      %6458 = vst.msk [vmem:[#allocation3 + $0xc8] sm:$0xff] %vm2384, 0.0
      %6459 = vst.msk [vmem:[#allocation3 + $0xd0] sm:$0x3] %vm2387, 0.0
      %6460 = vst.msk [vmem:[#allocation3 + $0xd8] sm:$0xff] %vm2384, 0.0
      %6461 = vst.msk [vmem:[#allocation3 + $0xe0] sm:$0xff] %vm2384, 0.0
      %6462 = vst.msk [vmem:[#allocation3 + $0xe8] sm:$0x3] %vm2387, 0.0
      %6463 = vst.msk [vmem:[#allocation3 + $0xf0] sm:$0xff] %vm2384, 0.0
      %6464 = vst.msk [vmem:[#allocation3 + $0xf8] sm:$0xff] %vm2384, 0.0
      %6465 = vst.msk [vmem:[#allocation3 + $0x100] sm:$0x3] %vm2387, 0.0
      %6466 = vst.msk [vmem:[#allocation3 + $0x108] sm:$0xff] %vm2384, 0.0
      %6467 = vst.msk [vmem:[#allocation3 + $0x110] sm:$0xff] %vm2384, 0.0
      %6468 = vst.msk [vmem:[#allocation3 + $0x118] sm:$0x3] %vm2387, 0.0
      %6469 = vst.msk [vmem:[#allocation3 + $0x120] sm:$0xff] %vm2384, 0.0
      %6470 = vst.msk [vmem:[#allocation3 + $0x128] sm:$0xff] %vm2384, 0.0
      %6471 = vst.msk [vmem:[#allocation3 + $0x130] sm:$0x3] %vm2387, 0.0
      %6472 = vst.msk [vmem:[#allocation3 + $0x138] sm:$0xff] %vm2384, 0.0
      %6473 = vst.msk [vmem:[#allocation3 + $0x140] sm:$0xff] %vm2384, 0.0
      %6474 = vst.msk [vmem:[#allocation3 + $0x148] sm:$0x3] %vm2387, 0.0
      %6475 = vst.msk [vmem:[#allocation3 + $0x150] sm:$0xff] %vm2384, 0.0
      %6476 = vst.msk [vmem:[#allocation3 + $0x158] sm:$0xff] %vm2384, 0.0
      %6477 = vst.msk [vmem:[#allocation3 + $0x160] sm:$0x3] %vm2387, 0.0
      %6478 = vst.msk [vmem:[#allocation3 + $0x168] sm:$0xff] %vm2384, 0.0
      %6479 = vst.msk [vmem:[#allocation3 + $0x170] sm:$0xff] %vm2384, 0.0
      %6480 = vst.msk [vmem:[#allocation3 + $0x178] sm:$0x3] %vm2387, 0.0
      %6481 = vst.msk [vmem:[#allocation3 + $0x180] sm:$0xff] %vm2384, 0.0
      %6482 = vst.msk [vmem:[#allocation3 + $0x188] sm:$0xff] %vm2384, 0.0
      %6483 = vst.msk [vmem:[#allocation3 + $0x190] sm:$0x3] %vm2387, 0.0
      %6484 = vst.msk [vmem:[#allocation3 + $0x198] sm:$0xff] %vm2384, 0.0
      %6485 = vst.msk [vmem:[#allocation3 + $0x1a0] sm:$0xff] %vm2384, 0.0
      %6486 = vst.msk [vmem:[#allocation3 + $0x1a8] sm:$0x3] %vm2387, 0.0
      %6487 = vst.msk [vmem:[%s2440 + $0x1] sm:$0xff] %vm2384, %v6401
      %6488 = vst.msk [vmem:[%s2440 + $0x9] sm:$0xff] %vm2384, %v6402
      %6489 = vst.msk [vmem:[%s2440 + $0x19] sm:$0xff] %vm2384, %v6403
      %6490 = vst.msk [vmem:[%s2440 + $0x21] sm:$0xff] %vm2384, %v6404
      %6491 = vst.msk [vmem:[%s2440 + $0x31] sm:$0xff] %vm2384, %v6405
      %6492 = vst.msk [vmem:[%s2440 + $0x39] sm:$0xff] %vm2384, %v6406
      %6493 = vst.msk [vmem:[%s2440 + $0x49] sm:$0xff] %vm2384, %v6407
      %6494 = vst.msk [vmem:[%s2440 + $0x51] sm:$0xff] %vm2384, %v6408
      %6495 = vst.msk [vmem:[%s2440 + $0x61] sm:$0xff] %vm2384, %v6409
      %6496 = vst.msk [vmem:[%s2440 + $0x69] sm:$0xff] %vm2384, %v6410
      %6497 = vst.msk [vmem:[%s2440 + $0x79] sm:$0xff] %vm2384, %v6411
      %6498 = vst.msk [vmem:[%s2440 + $0x81] sm:$0xff] %vm2384, %v6412
      %6499 = vst.msk [vmem:[%s2440 + $0x91] sm:$0xff] %vm2384, %v6413
      %6500 = vst.msk [vmem:[%s2440 + $0x99] sm:$0xff] %vm2384, %v6414
      %6501 = vst.msk [vmem:[%s2440 + $0xa9] sm:$0xff] %vm2384, %v6415
      %6502 = vst.msk [vmem:[%s2440 + $0xb1] sm:$0xff] %vm2384, %v6416
      %6503 = vst.msk [vmem:[%s2440 + $0xc1] sm:$0xff] %vm2384, %v6417
      %6504 = vst.msk [vmem:[%s2440 + $0xc9] sm:$0xff] %vm2384, %v6418
      %6505 = vst.msk [vmem:[%s2440 + $0xd9] sm:$0xff] %vm2384, %v6419
      %6506 = vst.msk [vmem:[%s2440 + $0xe1] sm:$0xff] %vm2384, %v6420
      %6507 = vst.msk [vmem:[%s2440 + $0xf1] sm:$0xff] %vm2384, %v6421
      %6508 = vst.msk [vmem:[%s2440 + $0xf9] sm:$0xff] %vm2384, %v6422
      %6509 = vst.msk [vmem:[%s2440 + $0x109] sm:$0xff] %vm2384, %v6423
      %6510 = vst.msk [vmem:[%s2440 + $0x111] sm:$0xff] %vm2384, %v6424
      %6511 = vst.msk [vmem:[%s2440 + $0x121] sm:$0xff] %vm2384, %v6425
      %6512 = vst.msk [vmem:[%s2440 + $0x129] sm:$0xff] %vm2384, %v6426
      %6513 = vst.msk [vmem:[%s2440 + $0x139] sm:$0xff] %vm2384, %v6427
      %6514 = vst.msk [vmem:[%s2440 + $0x141] sm:$0xff] %vm2384, %v6428
      %6515 = vst.msk [vmem:[%s2440 + $0x151] sm:$0xff] %vm2384, %v6429
      %6516 = vst.msk [vmem:[%s2440 + $0x159] sm:$0xff] %vm2384, %v6430
      %6517 = vst.msk [vmem:[%s2440 + $0x169] sm:$0xff] %vm2384, %v6431
      %6518 = vst.msk [vmem:[%s2440 + $0x171] sm:$0xff] %vm2384, %v6432
      %v6519 = vld [vmem:[#allocation3] sm:$0xff]
      %v6520 = vld [vmem:[#allocation3 + $0x8] sm:$0xff]
      %v6521 = vld [vmem:[#allocation3 + $0x18] sm:$0xff]
      %v6522 = vld [vmem:[#allocation3 + $0x20] sm:$0xff]
      %v6523 = vld [vmem:[#allocation3 + $0x30] sm:$0xff]
      %v6524 = vld [vmem:[#allocation3 + $0x38] sm:$0xff]
      %v6525 = vld [vmem:[#allocation3 + $0x48] sm:$0xff]
      %v6526 = vld [vmem:[#allocation3 + $0x50] sm:$0xff]
      %v6527 = vld [vmem:[#allocation3 + $0x60] sm:$0xff]
      %v6528 = vld [vmem:[#allocation3 + $0x68] sm:$0xff]
      %v6529 = vld [vmem:[#allocation3 + $0x78] sm:$0xff]
      %v6530 = vld [vmem:[#allocation3 + $0x80] sm:$0xff]
      %v6531 = vld [vmem:[#allocation3 + $0x90] sm:$0xff]
      %v6532 = vld [vmem:[#allocation3 + $0x98] sm:$0xff]
      %v6533 = vld [vmem:[#allocation3 + $0xa8] sm:$0xff]
      %v6534 = vld [vmem:[#allocation3 + $0xb0] sm:$0xff]
      %v6535 = vld [vmem:[#allocation3 + $0xc0] sm:$0xff]
      %v6536 = vld [vmem:[#allocation3 + $0xc8] sm:$0xff]
      %v6537 = vld [vmem:[#allocation3 + $0xd8] sm:$0xff]
      %v6538 = vld [vmem:[#allocation3 + $0xe0] sm:$0xff]
      %v6539 = vld [vmem:[#allocation3 + $0xf0] sm:$0xff]
      %v6540 = vld [vmem:[#allocation3 + $0xf8] sm:$0xff]
      %v6541 = vld [vmem:[#allocation3 + $0x108] sm:$0xff]
      %v6542 = vld [vmem:[#allocation3 + $0x110] sm:$0xff]
      %v6543 = vld [vmem:[#allocation3 + $0x120] sm:$0xff]
      %v6544 = vld [vmem:[#allocation3 + $0x128] sm:$0xff]
      %v6545 = vld [vmem:[#allocation3 + $0x138] sm:$0xff]
      %v6546 = vld [vmem:[#allocation3 + $0x140] sm:$0xff]
      %v6547 = vld [vmem:[#allocation3 + $0x150] sm:$0xff]
      %v6548 = vld [vmem:[#allocation3 + $0x158] sm:$0xff]
      %v6549 = vld [vmem:[#allocation3 + $0x168] sm:$0xff]
      %v6550 = vld [vmem:[#allocation3 + $0x170] sm:$0xff]
      %6551 = vst.msk [vmem:[#allocation4] sm:$0xff] %vm2384, %v6519
      %6552 = vst.msk [vmem:[#allocation4 + $0x10] sm:$0xff] %vm2384, %v6520
      %6553 = vst.msk [vmem:[#allocation4 + $0x20] sm:$0xff] %vm2384, %v6521
      %6554 = vst.msk [vmem:[#allocation4 + $0x30] sm:$0xff] %vm2384, %v6522
      %6555 = vst.msk [vmem:[#allocation4 + $0x40] sm:$0xff] %vm2384, %v6523
      %6556 = vst.msk [vmem:[#allocation4 + $0x50] sm:$0xff] %vm2384, %v6524
      %6557 = vst.msk [vmem:[#allocation4 + $0x60] sm:$0xff] %vm2384, %v6525
      %6558 = vst.msk [vmem:[#allocation4 + $0x70] sm:$0xff] %vm2384, %v6526
      %6559 = vst.msk [vmem:[#allocation4 + $0x80] sm:$0xff] %vm2384, %v6527
      %6560 = vst.msk [vmem:[#allocation4 + $0x90] sm:$0xff] %vm2384, %v6528
      %6561 = vst.msk [vmem:[#allocation4 + $0xa0] sm:$0xff] %vm2384, %v6529
      %6562 = vst.msk [vmem:[#allocation4 + $0xb0] sm:$0xff] %vm2384, %v6530
      %6563 = vst.msk [vmem:[#allocation4 + $0xc0] sm:$0xff] %vm2384, %v6531
      %6564 = vst.msk [vmem:[#allocation4 + $0xd0] sm:$0xff] %vm2384, %v6532
      %6565 = vst.msk [vmem:[#allocation4 + $0xe0] sm:$0xff] %vm2384, %v6533
      %6566 = vst.msk [vmem:[#allocation4 + $0xf0] sm:$0xff] %vm2384, %v6534
      %6567 = vst.msk [vmem:[#allocation4 + $0x100] sm:$0xff] %vm2384, %v6535
      %6568 = vst.msk [vmem:[#allocation4 + $0x110] sm:$0xff] %vm2384, %v6536
      %6569 = vst.msk [vmem:[#allocation4 + $0x120] sm:$0xff] %vm2384, %v6537
      %6570 = vst.msk [vmem:[#allocation4 + $0x130] sm:$0xff] %vm2384, %v6538
      %6571 = vst.msk [vmem:[#allocation4 + $0x140] sm:$0xff] %vm2384, %v6539
      %6572 = vst.msk [vmem:[#allocation4 + $0x150] sm:$0xff] %vm2384, %v6540
      %6573 = vst.msk [vmem:[#allocation4 + $0x160] sm:$0xff] %vm2384, %v6541
      %6574 = vst.msk [vmem:[#allocation4 + $0x170] sm:$0xff] %vm2384, %v6542
      %6575 = vst.msk [vmem:[#allocation4 + $0x180] sm:$0xff] %vm2384, %v6543
      %6576 = vst.msk [vmem:[#allocation4 + $0x190] sm:$0xff] %vm2384, %v6544
      %6577 = vst.msk [vmem:[#allocation4 + $0x1a0] sm:$0xff] %vm2384, %v6545
      %6578 = vst.msk [vmem:[#allocation4 + $0x1b0] sm:$0xff] %vm2384, %v6546
      %6579 = vst.msk [vmem:[#allocation4 + $0x1c0] sm:$0xff] %vm2384, %v6547
      %6580 = vst.msk [vmem:[#allocation4 + $0x1d0] sm:$0xff] %vm2384, %v6548
      %6581 = vst.msk [vmem:[#allocation4 + $0x1e0] sm:$0xff] %vm2384, %v6549
      %6582 = vst.msk [vmem:[#allocation4 + $0x1f0] sm:$0xff] %vm2384, %v6550
      %v6583 = vld [vmem:[#allocation3 + $0x1] sm:$0xff]
      %v6584 = vld [vmem:[#allocation3 + $0x9] sm:$0xff]
      %v6585 = vld [vmem:[#allocation3 + $0x19] sm:$0xff]
      %v6586 = vld [vmem:[#allocation3 + $0x21] sm:$0xff]
      %v6587 = vld [vmem:[#allocation3 + $0x31] sm:$0xff]
      %v6588 = vld [vmem:[#allocation3 + $0x39] sm:$0xff]
      %v6589 = vld [vmem:[#allocation3 + $0x49] sm:$0xff]
      %v6590 = vld [vmem:[#allocation3 + $0x51] sm:$0xff]
      %v6591 = vld [vmem:[#allocation3 + $0x61] sm:$0xff]
      %v6592 = vld [vmem:[#allocation3 + $0x69] sm:$0xff]
      %v6593 = vld [vmem:[#allocation3 + $0x79] sm:$0xff]
      %v6594 = vld [vmem:[#allocation3 + $0x81] sm:$0xff]
      %v6595 = vld [vmem:[#allocation3 + $0x91] sm:$0xff]
      %v6596 = vld [vmem:[#allocation3 + $0x99] sm:$0xff]
      %v6597 = vld [vmem:[#allocation3 + $0xa9] sm:$0xff]
      %v6598 = vld [vmem:[#allocation3 + $0xb1] sm:$0xff]
      %v6599 = vld [vmem:[#allocation3 + $0xc1] sm:$0xff]
      %v6600 = vld [vmem:[#allocation3 + $0xc9] sm:$0xff]
      %v6601 = vld [vmem:[#allocation3 + $0xd9] sm:$0xff]
      %v6602 = vld [vmem:[#allocation3 + $0xe1] sm:$0xff]
      %v6603 = vld [vmem:[#allocation3 + $0xf1] sm:$0xff]
      %v6604 = vld [vmem:[#allocation3 + $0xf9] sm:$0xff]
      %v6605 = vld [vmem:[#allocation3 + $0x109] sm:$0xff]
      %v6606 = vld [vmem:[#allocation3 + $0x111] sm:$0xff]
      %v6607 = vld [vmem:[#allocation3 + $0x121] sm:$0xff]
      %v6608 = vld [vmem:[#allocation3 + $0x129] sm:$0xff]
      %v6609 = vld [vmem:[#allocation3 + $0x139] sm:$0xff]
      %v6610 = vld [vmem:[#allocation3 + $0x141] sm:$0xff]
      %v6611 = vld [vmem:[#allocation3 + $0x151] sm:$0xff]
      %v6612 = vld [vmem:[#allocation3 + $0x159] sm:$0xff]
      %v6613 = vld [vmem:[#allocation3 + $0x169] sm:$0xff]
      %v6614 = vld [vmem:[#allocation3 + $0x171] sm:$0xff]
      %6647 = vrot.lane.b32.xlu0 %v6583, 16
      %v6648 = vpop.permute.xlu0 %6647
      %6649 = vrot.lane.b32.xlu0 %v6584, 16
      %v6650 = vpop.permute.xlu0 %6649
      %6651 = vrot.lane.b32.xlu0 %v6585, 16
      %v6652 = vpop.permute.xlu0 %6651
      %6653 = vrot.lane.b32.xlu0 %v6586, 16
      %v6654 = vpop.permute.xlu0 %6653
      %6655 = vrot.lane.b32.xlu0 %v6587, 16
      %v6656 = vpop.permute.xlu0 %6655
      %6657 = vrot.lane.b32.xlu0 %v6588, 16
      %v6658 = vpop.permute.xlu0 %6657
      %6659 = vrot.lane.b32.xlu0 %v6589, 16
      %v6660 = vpop.permute.xlu0 %6659
      %6661 = vrot.lane.b32.xlu0 %v6590, 16
      %v6662 = vpop.permute.xlu0 %6661
      %6663 = vrot.lane.b32.xlu0 %v6591, 16
      %v6664 = vpop.permute.xlu0 %6663
      %6665 = vrot.lane.b32.xlu0 %v6592, 16
      %v6666 = vpop.permute.xlu0 %6665
      %6667 = vrot.lane.b32.xlu0 %v6593, 16
      %v6668 = vpop.permute.xlu0 %6667
      %6669 = vrot.lane.b32.xlu0 %v6594, 16
      %v6670 = vpop.permute.xlu0 %6669
      %6671 = vrot.lane.b32.xlu0 %v6595, 16
      %v6672 = vpop.permute.xlu0 %6671
      %6673 = vrot.lane.b32.xlu0 %v6596, 16
      %v6674 = vpop.permute.xlu0 %6673
      %6675 = vrot.lane.b32.xlu0 %v6597, 16
      %v6676 = vpop.permute.xlu0 %6675
      %6677 = vrot.lane.b32.xlu0 %v6598, 16
      %v6678 = vpop.permute.xlu0 %6677
      %6679 = vrot.lane.b32.xlu0 %v6599, 16
      %v6680 = vpop.permute.xlu0 %6679
      %6681 = vrot.lane.b32.xlu0 %v6600, 16
      %v6682 = vpop.permute.xlu0 %6681
      %6683 = vrot.lane.b32.xlu0 %v6601, 16
      %v6684 = vpop.permute.xlu0 %6683
      %6685 = vrot.lane.b32.xlu0 %v6602, 16
      %v6686 = vpop.permute.xlu0 %6685
      %6687 = vrot.lane.b32.xlu0 %v6603, 16
      %v6688 = vpop.permute.xlu0 %6687
      %6689 = vrot.lane.b32.xlu0 %v6604, 16
      %v6690 = vpop.permute.xlu0 %6689
      %6691 = vrot.lane.b32.xlu0 %v6605, 16
      %v6692 = vpop.permute.xlu0 %6691
      %6693 = vrot.lane.b32.xlu0 %v6606, 16
      %v6694 = vpop.permute.xlu0 %6693
      %6695 = vrot.lane.b32.xlu0 %v6607, 16
      %v6696 = vpop.permute.xlu0 %6695
      %6697 = vrot.lane.b32.xlu0 %v6608, 16
      %v6698 = vpop.permute.xlu0 %6697
      %6699 = vrot.lane.b32.xlu0 %v6609, 16
      %v6700 = vpop.permute.xlu0 %6699
      %6701 = vrot.lane.b32.xlu0 %v6610, 16
      %v6702 = vpop.permute.xlu0 %6701
      %6703 = vrot.lane.b32.xlu0 %v6611, 16
      %v6704 = vpop.permute.xlu0 %6703
      %6705 = vrot.lane.b32.xlu0 %v6612, 16
      %v6706 = vpop.permute.xlu0 %6705
      %6707 = vrot.lane.b32.xlu0 %v6613, 16
      %v6708 = vpop.permute.xlu0 %6707
      %6709 = vrot.lane.b32.xlu0 %v6614, 16
      %v6710 = vpop.permute.xlu0 %6709
      %6743 = vst.msk [vmem:[#allocation4] sm:$0xff] %vm2697, %v6648
      %6744 = vst.msk [vmem:[#allocation4 + $0x10] sm:$0xff] %vm2697, %v6650
      %6745 = vst.msk [vmem:[#allocation4 + $0x20] sm:$0xff] %vm2697, %v6652
      %6746 = vst.msk [vmem:[#allocation4 + $0x30] sm:$0xff] %vm2697, %v6654
      %6747 = vst.msk [vmem:[#allocation4 + $0x40] sm:$0xff] %vm2697, %v6656
      %6748 = vst.msk [vmem:[#allocation4 + $0x50] sm:$0xff] %vm2697, %v6658
      %6749 = vst.msk [vmem:[#allocation4 + $0x60] sm:$0xff] %vm2697, %v6660
      %6750 = vst.msk [vmem:[#allocation4 + $0x70] sm:$0xff] %vm2697, %v6662
      %6751 = vst.msk [vmem:[#allocation4 + $0x80] sm:$0xff] %vm2697, %v6664
      %6752 = vst.msk [vmem:[#allocation4 + $0x90] sm:$0xff] %vm2697, %v6666
      %6753 = vst.msk [vmem:[#allocation4 + $0xa0] sm:$0xff] %vm2697, %v6668
      %6754 = vst.msk [vmem:[#allocation4 + $0xb0] sm:$0xff] %vm2697, %v6670
      %6755 = vst.msk [vmem:[#allocation4 + $0xc0] sm:$0xff] %vm2697, %v6672
      %6756 = vst.msk [vmem:[#allocation4 + $0xd0] sm:$0xff] %vm2697, %v6674
      %6757 = vst.msk [vmem:[#allocation4 + $0xe0] sm:$0xff] %vm2697, %v6676
      %6758 = vst.msk [vmem:[#allocation4 + $0xf0] sm:$0xff] %vm2697, %v6678
      %6759 = vst.msk [vmem:[#allocation4 + $0x100] sm:$0xff] %vm2697, %v6680
      %6760 = vst.msk [vmem:[#allocation4 + $0x110] sm:$0xff] %vm2697, %v6682
      %6761 = vst.msk [vmem:[#allocation4 + $0x120] sm:$0xff] %vm2697, %v6684
      %6762 = vst.msk [vmem:[#allocation4 + $0x130] sm:$0xff] %vm2697, %v6686
      %6763 = vst.msk [vmem:[#allocation4 + $0x140] sm:$0xff] %vm2697, %v6688
      %6764 = vst.msk [vmem:[#allocation4 + $0x150] sm:$0xff] %vm2697, %v6690
      %6765 = vst.msk [vmem:[#allocation4 + $0x160] sm:$0xff] %vm2697, %v6692
      %6766 = vst.msk [vmem:[#allocation4 + $0x170] sm:$0xff] %vm2697, %v6694
      %6767 = vst.msk [vmem:[#allocation4 + $0x180] sm:$0xff] %vm2697, %v6696
      %6768 = vst.msk [vmem:[#allocation4 + $0x190] sm:$0xff] %vm2697, %v6698
      %6769 = vst.msk [vmem:[#allocation4 + $0x1a0] sm:$0xff] %vm2697, %v6700
      %6770 = vst.msk [vmem:[#allocation4 + $0x1b0] sm:$0xff] %vm2697, %v6702
      %6771 = vst.msk [vmem:[#allocation4 + $0x1c0] sm:$0xff] %vm2697, %v6704
      %6772 = vst.msk [vmem:[#allocation4 + $0x1d0] sm:$0xff] %vm2697, %v6706
      %6773 = vst.msk [vmem:[#allocation4 + $0x1e0] sm:$0xff] %vm2697, %v6708
      %6774 = vst.msk [vmem:[#allocation4 + $0x1f0] sm:$0xff] %vm2697, %v6710
      %v6775 = vld [vmem:[#allocation3 + $0x2] sm:$0xff]
      %v6776 = vld [vmem:[#allocation3 + $0xa] sm:$0xff]
      %v6777 = vld [vmem:[#allocation3 + $0x1a] sm:$0xff]
      %v6778 = vld [vmem:[#allocation3 + $0x22] sm:$0xff]
      %v6779 = vld [vmem:[#allocation3 + $0x32] sm:$0xff]
      %v6780 = vld [vmem:[#allocation3 + $0x3a] sm:$0xff]
      %v6781 = vld [vmem:[#allocation3 + $0x4a] sm:$0xff]
      %v6782 = vld [vmem:[#allocation3 + $0x52] sm:$0xff]
      %v6783 = vld [vmem:[#allocation3 + $0x62] sm:$0xff]
      %v6784 = vld [vmem:[#allocation3 + $0x6a] sm:$0xff]
      %v6785 = vld [vmem:[#allocation3 + $0x7a] sm:$0xff]
      %v6786 = vld [vmem:[#allocation3 + $0x82] sm:$0xff]
      %v6787 = vld [vmem:[#allocation3 + $0x92] sm:$0xff]
      %v6788 = vld [vmem:[#allocation3 + $0x9a] sm:$0xff]
      %v6789 = vld [vmem:[#allocation3 + $0xaa] sm:$0xff]
      %v6790 = vld [vmem:[#allocation3 + $0xb2] sm:$0xff]
      %v6791 = vld [vmem:[#allocation3 + $0xc2] sm:$0xff]
      %v6792 = vld [vmem:[#allocation3 + $0xca] sm:$0xff]
      %v6793 = vld [vmem:[#allocation3 + $0xda] sm:$0xff]
      %v6794 = vld [vmem:[#allocation3 + $0xe2] sm:$0xff]
      %v6795 = vld [vmem:[#allocation3 + $0xf2] sm:$0xff]
      %v6796 = vld [vmem:[#allocation3 + $0xfa] sm:$0xff]
      %v6797 = vld [vmem:[#allocation3 + $0x10a] sm:$0xff]
      %v6798 = vld [vmem:[#allocation3 + $0x112] sm:$0xff]
      %v6799 = vld [vmem:[#allocation3 + $0x122] sm:$0xff]
      %v6800 = vld [vmem:[#allocation3 + $0x12a] sm:$0xff]
      %v6801 = vld [vmem:[#allocation3 + $0x13a] sm:$0xff]
      %v6802 = vld [vmem:[#allocation3 + $0x142] sm:$0xff]
      %v6803 = vld [vmem:[#allocation3 + $0x152] sm:$0xff]
      %v6804 = vld [vmem:[#allocation3 + $0x15a] sm:$0xff]
      %v6805 = vld [vmem:[#allocation3 + $0x16a] sm:$0xff]
      %v6806 = vld [vmem:[#allocation3 + $0x172] sm:$0xff]
      %6839 = vrot.lane.b32.xlu0 %v6775, 32
      %v6840 = vpop.permute.xlu0 %6839
      %6841 = vrot.lane.b32.xlu0 %v6776, 32
      %v6842 = vpop.permute.xlu0 %6841
      %6843 = vrot.lane.b32.xlu0 %v6777, 32
      %v6844 = vpop.permute.xlu0 %6843
      %6845 = vrot.lane.b32.xlu0 %v6778, 32
      %v6846 = vpop.permute.xlu0 %6845
      %6847 = vrot.lane.b32.xlu0 %v6779, 32
      %v6848 = vpop.permute.xlu0 %6847
      %6849 = vrot.lane.b32.xlu0 %v6780, 32
      %v6850 = vpop.permute.xlu0 %6849
      %6851 = vrot.lane.b32.xlu0 %v6781, 32
      %v6852 = vpop.permute.xlu0 %6851
      %6853 = vrot.lane.b32.xlu0 %v6782, 32
      %v6854 = vpop.permute.xlu0 %6853
      %6855 = vrot.lane.b32.xlu0 %v6783, 32
      %v6856 = vpop.permute.xlu0 %6855
      %6857 = vrot.lane.b32.xlu0 %v6784, 32
      %v6858 = vpop.permute.xlu0 %6857
      %6859 = vrot.lane.b32.xlu0 %v6785, 32
      %v6860 = vpop.permute.xlu0 %6859
      %6861 = vrot.lane.b32.xlu0 %v6786, 32
      %v6862 = vpop.permute.xlu0 %6861
      %6863 = vrot.lane.b32.xlu0 %v6787, 32
      %v6864 = vpop.permute.xlu0 %6863
      %6865 = vrot.lane.b32.xlu0 %v6788, 32
      %v6866 = vpop.permute.xlu0 %6865
      %6867 = vrot.lane.b32.xlu0 %v6789, 32
      %v6868 = vpop.permute.xlu0 %6867
      %6869 = vrot.lane.b32.xlu0 %v6790, 32
      %v6870 = vpop.permute.xlu0 %6869
      %6871 = vrot.lane.b32.xlu0 %v6791, 32
      %v6872 = vpop.permute.xlu0 %6871
      %6873 = vrot.lane.b32.xlu0 %v6792, 32
      %v6874 = vpop.permute.xlu0 %6873
      %6875 = vrot.lane.b32.xlu0 %v6793, 32
      %v6876 = vpop.permute.xlu0 %6875
      %6877 = vrot.lane.b32.xlu0 %v6794, 32
      %v6878 = vpop.permute.xlu0 %6877
      %6879 = vrot.lane.b32.xlu0 %v6795, 32
      %v6880 = vpop.permute.xlu0 %6879
      %6881 = vrot.lane.b32.xlu0 %v6796, 32
      %v6882 = vpop.permute.xlu0 %6881
      %6883 = vrot.lane.b32.xlu0 %v6797, 32
      %v6884 = vpop.permute.xlu0 %6883
      %6885 = vrot.lane.b32.xlu0 %v6798, 32
      %v6886 = vpop.permute.xlu0 %6885
      %6887 = vrot.lane.b32.xlu0 %v6799, 32
      %v6888 = vpop.permute.xlu0 %6887
      %6889 = vrot.lane.b32.xlu0 %v6800, 32
      %v6890 = vpop.permute.xlu0 %6889
      %6891 = vrot.lane.b32.xlu0 %v6801, 32
      %v6892 = vpop.permute.xlu0 %6891
      %6893 = vrot.lane.b32.xlu0 %v6802, 32
      %v6894 = vpop.permute.xlu0 %6893
      %6895 = vrot.lane.b32.xlu0 %v6803, 32
      %v6896 = vpop.permute.xlu0 %6895
      %6897 = vrot.lane.b32.xlu0 %v6804, 32
      %v6898 = vpop.permute.xlu0 %6897
      %6899 = vrot.lane.b32.xlu0 %v6805, 32
      %v6900 = vpop.permute.xlu0 %6899
      %6901 = vrot.lane.b32.xlu0 %v6806, 32
      %v6902 = vpop.permute.xlu0 %6901
      %6935 = vst.msk [vmem:[#allocation4] sm:$0xff] %vm2890, %v6840
      %6936 = vst.msk [vmem:[#allocation4 + $0x10] sm:$0xff] %vm2890, %v6842
      %6937 = vst.msk [vmem:[#allocation4 + $0x20] sm:$0xff] %vm2890, %v6844
      %6938 = vst.msk [vmem:[#allocation4 + $0x30] sm:$0xff] %vm2890, %v6846
      %6939 = vst.msk [vmem:[#allocation4 + $0x40] sm:$0xff] %vm2890, %v6848
      %6940 = vst.msk [vmem:[#allocation4 + $0x50] sm:$0xff] %vm2890, %v6850
      %6941 = vst.msk [vmem:[#allocation4 + $0x60] sm:$0xff] %vm2890, %v6852
      %6942 = vst.msk [vmem:[#allocation4 + $0x70] sm:$0xff] %vm2890, %v6854
      %6943 = vst.msk [vmem:[#allocation4 + $0x80] sm:$0xff] %vm2890, %v6856
      %6944 = vst.msk [vmem:[#allocation4 + $0x90] sm:$0xff] %vm2890, %v6858
      %6945 = vst.msk [vmem:[#allocation4 + $0xa0] sm:$0xff] %vm2890, %v6860
      %6946 = vst.msk [vmem:[#allocation4 + $0xb0] sm:$0xff] %vm2890, %v6862
      %6947 = vst.msk [vmem:[#allocation4 + $0xc0] sm:$0xff] %vm2890, %v6864
      %6948 = vst.msk [vmem:[#allocation4 + $0xd0] sm:$0xff] %vm2890, %v6866
      %6949 = vst.msk [vmem:[#allocation4 + $0xe0] sm:$0xff] %vm2890, %v6868
      %6950 = vst.msk [vmem:[#allocation4 + $0xf0] sm:$0xff] %vm2890, %v6870
      %6951 = vst.msk [vmem:[#allocation4 + $0x100] sm:$0xff] %vm2890, %v6872
      %6952 = vst.msk [vmem:[#allocation4 + $0x110] sm:$0xff] %vm2890, %v6874
      %6953 = vst.msk [vmem:[#allocation4 + $0x120] sm:$0xff] %vm2890, %v6876
      %6954 = vst.msk [vmem:[#allocation4 + $0x130] sm:$0xff] %vm2890, %v6878
      %6955 = vst.msk [vmem:[#allocation4 + $0x140] sm:$0xff] %vm2890, %v6880
      %6956 = vst.msk [vmem:[#allocation4 + $0x150] sm:$0xff] %vm2890, %v6882
      %6957 = vst.msk [vmem:[#allocation4 + $0x160] sm:$0xff] %vm2890, %v6884
      %6958 = vst.msk [vmem:[#allocation4 + $0x170] sm:$0xff] %vm2890, %v6886
      %6959 = vst.msk [vmem:[#allocation4 + $0x180] sm:$0xff] %vm2890, %v6888
      %6960 = vst.msk [vmem:[#allocation4 + $0x190] sm:$0xff] %vm2890, %v6890
      %6961 = vst.msk [vmem:[#allocation4 + $0x1a0] sm:$0xff] %vm2890, %v6892
      %6962 = vst.msk [vmem:[#allocation4 + $0x1b0] sm:$0xff] %vm2890, %v6894
      %6963 = vst.msk [vmem:[#allocation4 + $0x1c0] sm:$0xff] %vm2890, %v6896
      %6964 = vst.msk [vmem:[#allocation4 + $0x1d0] sm:$0xff] %vm2890, %v6898
      %6965 = vst.msk [vmem:[#allocation4 + $0x1e0] sm:$0xff] %vm2890, %v6900
      %6966 = vst.msk [vmem:[#allocation4 + $0x1f0] sm:$0xff] %vm2890, %v6902
      %v6967 = vld [vmem:[%s2440] sm:$0xff]
      %v6968 = vld [vmem:[%s2440 + $0x8] sm:$0xff]
      %v6969 = vld [vmem:[%s2440 + $0x18] sm:$0xff]
      %v6970 = vld [vmem:[%s2440 + $0x20] sm:$0xff]
      %v6971 = vld [vmem:[%s2440 + $0x30] sm:$0xff]
      %v6972 = vld [vmem:[%s2440 + $0x38] sm:$0xff]
      %v6973 = vld [vmem:[%s2440 + $0x48] sm:$0xff]
      %v6974 = vld [vmem:[%s2440 + $0x50] sm:$0xff]
      %v6975 = vld [vmem:[%s2440 + $0x60] sm:$0xff]
      %v6976 = vld [vmem:[%s2440 + $0x68] sm:$0xff]
      %v6977 = vld [vmem:[%s2440 + $0x78] sm:$0xff]
      %v6978 = vld [vmem:[%s2440 + $0x80] sm:$0xff]
      %v6979 = vld [vmem:[%s2440 + $0x90] sm:$0xff]
      %v6980 = vld [vmem:[%s2440 + $0x98] sm:$0xff]
      %v6981 = vld [vmem:[%s2440 + $0xa8] sm:$0xff]
      %v6982 = vld [vmem:[%s2440 + $0xb0] sm:$0xff]
      %v6983 = vld [vmem:[%s2440 + $0xc0] sm:$0xff]
      %v6984 = vld [vmem:[%s2440 + $0xc8] sm:$0xff]
      %v6985 = vld [vmem:[%s2440 + $0xd8] sm:$0xff]
      %v6986 = vld [vmem:[%s2440 + $0xe0] sm:$0xff]
      %v6987 = vld [vmem:[%s2440 + $0xf0] sm:$0xff]
      %v6988 = vld [vmem:[%s2440 + $0xf8] sm:$0xff]
      %v6989 = vld [vmem:[%s2440 + $0x108] sm:$0xff]
      %v6990 = vld [vmem:[%s2440 + $0x110] sm:$0xff]
      %v6991 = vld [vmem:[%s2440 + $0x120] sm:$0xff]
      %v6992 = vld [vmem:[%s2440 + $0x128] sm:$0xff]
      %v6993 = vld [vmem:[%s2440 + $0x138] sm:$0xff]
      %v6994 = vld [vmem:[%s2440 + $0x140] sm:$0xff]
      %v6995 = vld [vmem:[%s2440 + $0x150] sm:$0xff]
      %v6996 = vld [vmem:[%s2440 + $0x158] sm:$0xff]
      %v6997 = vld [vmem:[%s2440 + $0x168] sm:$0xff]
      %v6998 = vld [vmem:[%s2440 + $0x170] sm:$0xff]
      %7031 = vrot.lane.b32.xlu0 %v6967, 48
      %v7032 = vpop.permute.xlu0 %7031
      %7033 = vrot.lane.b32.xlu0 %v6968, 48
      %v7034 = vpop.permute.xlu0 %7033
      %7035 = vrot.lane.b32.xlu0 %v6969, 48
      %v7036 = vpop.permute.xlu0 %7035
      %7037 = vrot.lane.b32.xlu0 %v6970, 48
      %v7038 = vpop.permute.xlu0 %7037
      %7039 = vrot.lane.b32.xlu0 %v6971, 48
      %v7040 = vpop.permute.xlu0 %7039
      %7041 = vrot.lane.b32.xlu0 %v6972, 48
      %v7042 = vpop.permute.xlu0 %7041
      %7043 = vrot.lane.b32.xlu0 %v6973, 48
      %v7044 = vpop.permute.xlu0 %7043
      %7045 = vrot.lane.b32.xlu0 %v6974, 48
      %v7046 = vpop.permute.xlu0 %7045
      %7047 = vrot.lane.b32.xlu0 %v6975, 48
      %v7048 = vpop.permute.xlu0 %7047
      %7049 = vrot.lane.b32.xlu0 %v6976, 48
      %v7050 = vpop.permute.xlu0 %7049
      %7051 = vrot.lane.b32.xlu0 %v6977, 48
      %v7052 = vpop.permute.xlu0 %7051
      %7053 = vrot.lane.b32.xlu0 %v6978, 48
      %v7054 = vpop.permute.xlu0 %7053
      %7055 = vrot.lane.b32.xlu0 %v6979, 48
      %v7056 = vpop.permute.xlu0 %7055
      %7057 = vrot.lane.b32.xlu0 %v6980, 48
      %v7058 = vpop.permute.xlu0 %7057
      %7059 = vrot.lane.b32.xlu0 %v6981, 48
      %v7060 = vpop.permute.xlu0 %7059
      %7061 = vrot.lane.b32.xlu0 %v6982, 48
      %v7062 = vpop.permute.xlu0 %7061
      %7063 = vrot.lane.b32.xlu0 %v6983, 48
      %v7064 = vpop.permute.xlu0 %7063
      %7065 = vrot.lane.b32.xlu0 %v6984, 48
      %v7066 = vpop.permute.xlu0 %7065
      %7067 = vrot.lane.b32.xlu0 %v6985, 48
      %v7068 = vpop.permute.xlu0 %7067
      %7069 = vrot.lane.b32.xlu0 %v6986, 48
      %v7070 = vpop.permute.xlu0 %7069
      %7071 = vrot.lane.b32.xlu0 %v6987, 48
      %v7072 = vpop.permute.xlu0 %7071
      %7073 = vrot.lane.b32.xlu0 %v6988, 48
      %v7074 = vpop.permute.xlu0 %7073
      %7075 = vrot.lane.b32.xlu0 %v6989, 48
      %v7076 = vpop.permute.xlu0 %7075
      %7077 = vrot.lane.b32.xlu0 %v6990, 48
      %v7078 = vpop.permute.xlu0 %7077
      %7079 = vrot.lane.b32.xlu0 %v6991, 48
      %v7080 = vpop.permute.xlu0 %7079
      %7081 = vrot.lane.b32.xlu0 %v6992, 48
      %v7082 = vpop.permute.xlu0 %7081
      %7083 = vrot.lane.b32.xlu0 %v6993, 48
      %v7084 = vpop.permute.xlu0 %7083
      %7085 = vrot.lane.b32.xlu0 %v6994, 48
      %v7086 = vpop.permute.xlu0 %7085
      %7087 = vrot.lane.b32.xlu0 %v6995, 48
      %v7088 = vpop.permute.xlu0 %7087
      %7089 = vrot.lane.b32.xlu0 %v6996, 48
      %v7090 = vpop.permute.xlu0 %7089
      %7091 = vrot.lane.b32.xlu0 %v6997, 48
      %v7092 = vpop.permute.xlu0 %7091
      %7093 = vrot.lane.b32.xlu0 %v6998, 48
      %v7094 = vpop.permute.xlu0 %7093
      %7127 = vst.msk [vmem:[#allocation4] sm:$0xff] %vm3083, %v7032
      %7128 = vst.msk [vmem:[#allocation4 + $0x10] sm:$0xff] %vm3083, %v7034
      %7129 = vst.msk [vmem:[#allocation4 + $0x20] sm:$0xff] %vm3083, %v7036
      %7130 = vst.msk [vmem:[#allocation4 + $0x30] sm:$0xff] %vm3083, %v7038
      %7131 = vst.msk [vmem:[#allocation4 + $0x40] sm:$0xff] %vm3083, %v7040
      %7132 = vst.msk [vmem:[#allocation4 + $0x50] sm:$0xff] %vm3083, %v7042
      %7133 = vst.msk [vmem:[#allocation4 + $0x60] sm:$0xff] %vm3083, %v7044
      %7134 = vst.msk [vmem:[#allocation4 + $0x70] sm:$0xff] %vm3083, %v7046
      %7135 = vst.msk [vmem:[#allocation4 + $0x80] sm:$0xff] %vm3083, %v7048
      %7136 = vst.msk [vmem:[#allocation4 + $0x90] sm:$0xff] %vm3083, %v7050
      %7137 = vst.msk [vmem:[#allocation4 + $0xa0] sm:$0xff] %vm3083, %v7052
      %7138 = vst.msk [vmem:[#allocation4 + $0xb0] sm:$0xff] %vm3083, %v7054
      %7139 = vst.msk [vmem:[#allocation4 + $0xc0] sm:$0xff] %vm3083, %v7056
      %7140 = vst.msk [vmem:[#allocation4 + $0xd0] sm:$0xff] %vm3083, %v7058
      %7141 = vst.msk [vmem:[#allocation4 + $0xe0] sm:$0xff] %vm3083, %v7060
      %7142 = vst.msk [vmem:[#allocation4 + $0xf0] sm:$0xff] %vm3083, %v7062
      %7143 = vst.msk [vmem:[#allocation4 + $0x100] sm:$0xff] %vm3083, %v7064
      %7144 = vst.msk [vmem:[#allocation4 + $0x110] sm:$0xff] %vm3083, %v7066
      %7145 = vst.msk [vmem:[#allocation4 + $0x120] sm:$0xff] %vm3083, %v7068
      %7146 = vst.msk [vmem:[#allocation4 + $0x130] sm:$0xff] %vm3083, %v7070
      %7147 = vst.msk [vmem:[#allocation4 + $0x140] sm:$0xff] %vm3083, %v7072
      %7148 = vst.msk [vmem:[#allocation4 + $0x150] sm:$0xff] %vm3083, %v7074
      %7149 = vst.msk [vmem:[#allocation4 + $0x160] sm:$0xff] %vm3083, %v7076
      %7150 = vst.msk [vmem:[#allocation4 + $0x170] sm:$0xff] %vm3083, %v7078
      %7151 = vst.msk [vmem:[#allocation4 + $0x180] sm:$0xff] %vm3083, %v7080
      %7152 = vst.msk [vmem:[#allocation4 + $0x190] sm:$0xff] %vm3083, %v7082
      %7153 = vst.msk [vmem:[#allocation4 + $0x1a0] sm:$0xff] %vm3083, %v7084
      %7154 = vst.msk [vmem:[#allocation4 + $0x1b0] sm:$0xff] %vm3083, %v7086
      %7155 = vst.msk [vmem:[#allocation4 + $0x1c0] sm:$0xff] %vm3083, %v7088
      %7156 = vst.msk [vmem:[#allocation4 + $0x1d0] sm:$0xff] %vm3083, %v7090
      %7157 = vst.msk [vmem:[#allocation4 + $0x1e0] sm:$0xff] %vm3083, %v7092
      %7158 = vst.msk [vmem:[#allocation4 + $0x1f0] sm:$0xff] %vm3083, %v7094
      %v7159 = vld [vmem:[%s2440 + $0x1] sm:$0xff]
      %v7160 = vld [vmem:[%s2440 + $0x9] sm:$0xff]
      %v7161 = vld [vmem:[%s2440 + $0x19] sm:$0xff]
      %v7162 = vld [vmem:[%s2440 + $0x21] sm:$0xff]
      %v7163 = vld [vmem:[%s2440 + $0x31] sm:$0xff]
      %v7164 = vld [vmem:[%s2440 + $0x39] sm:$0xff]
      %v7165 = vld [vmem:[%s2440 + $0x49] sm:$0xff]
      %v7166 = vld [vmem:[%s2440 + $0x51] sm:$0xff]
      %v7167 = vld [vmem:[%s2440 + $0x61] sm:$0xff]
      %v7168 = vld [vmem:[%s2440 + $0x69] sm:$0xff]
      %v7169 = vld [vmem:[%s2440 + $0x79] sm:$0xff]
      %v7170 = vld [vmem:[%s2440 + $0x81] sm:$0xff]
      %v7171 = vld [vmem:[%s2440 + $0x91] sm:$0xff]
      %v7172 = vld [vmem:[%s2440 + $0x99] sm:$0xff]
      %v7173 = vld [vmem:[%s2440 + $0xa9] sm:$0xff]
      %v7174 = vld [vmem:[%s2440 + $0xb1] sm:$0xff]
      %v7175 = vld [vmem:[%s2440 + $0xc1] sm:$0xff]
      %v7176 = vld [vmem:[%s2440 + $0xc9] sm:$0xff]
      %v7177 = vld [vmem:[%s2440 + $0xd9] sm:$0xff]
      %v7178 = vld [vmem:[%s2440 + $0xe1] sm:$0xff]
      %v7179 = vld [vmem:[%s2440 + $0xf1] sm:$0xff]
      %v7180 = vld [vmem:[%s2440 + $0xf9] sm:$0xff]
      %v7181 = vld [vmem:[%s2440 + $0x109] sm:$0xff]
      %v7182 = vld [vmem:[%s2440 + $0x111] sm:$0xff]
      %v7183 = vld [vmem:[%s2440 + $0x121] sm:$0xff]
      %v7184 = vld [vmem:[%s2440 + $0x129] sm:$0xff]
      %v7185 = vld [vmem:[%s2440 + $0x139] sm:$0xff]
      %v7186 = vld [vmem:[%s2440 + $0x141] sm:$0xff]
      %v7187 = vld [vmem:[%s2440 + $0x151] sm:$0xff]
      %v7188 = vld [vmem:[%s2440 + $0x159] sm:$0xff]
      %v7189 = vld [vmem:[%s2440 + $0x169] sm:$0xff]
      %v7190 = vld [vmem:[%s2440 + $0x171] sm:$0xff]
      %7223 = vrot.lane.b32.xlu0 %v7159, 64
      %v7224 = vpop.permute.xlu0 %7223
      %7225 = vrot.lane.b32.xlu0 %v7160, 64
      %v7226 = vpop.permute.xlu0 %7225
      %7227 = vrot.lane.b32.xlu0 %v7161, 64
      %v7228 = vpop.permute.xlu0 %7227
      %7229 = vrot.lane.b32.xlu0 %v7162, 64
      %v7230 = vpop.permute.xlu0 %7229
      %7231 = vrot.lane.b32.xlu0 %v7163, 64
      %v7232 = vpop.permute.xlu0 %7231
      %7233 = vrot.lane.b32.xlu0 %v7164, 64
      %v7234 = vpop.permute.xlu0 %7233
      %7235 = vrot.lane.b32.xlu0 %v7165, 64
      %v7236 = vpop.permute.xlu0 %7235
      %7237 = vrot.lane.b32.xlu0 %v7166, 64
      %v7238 = vpop.permute.xlu0 %7237
      %7239 = vrot.lane.b32.xlu0 %v7167, 64
      %v7240 = vpop.permute.xlu0 %7239
      %7241 = vrot.lane.b32.xlu0 %v7168, 64
      %v7242 = vpop.permute.xlu0 %7241
      %7243 = vrot.lane.b32.xlu0 %v7169, 64
      %v7244 = vpop.permute.xlu0 %7243
      %7245 = vrot.lane.b32.xlu0 %v7170, 64
      %v7246 = vpop.permute.xlu0 %7245
      %7247 = vrot.lane.b32.xlu0 %v7171, 64
      %v7248 = vpop.permute.xlu0 %7247
      %7249 = vrot.lane.b32.xlu0 %v7172, 64
      %v7250 = vpop.permute.xlu0 %7249
      %7251 = vrot.lane.b32.xlu0 %v7173, 64
      %v7252 = vpop.permute.xlu0 %7251
      %7253 = vrot.lane.b32.xlu0 %v7174, 64
      %v7254 = vpop.permute.xlu0 %7253
      %7255 = vrot.lane.b32.xlu0 %v7175, 64
      %v7256 = vpop.permute.xlu0 %7255
      %7257 = vrot.lane.b32.xlu0 %v7176, 64
      %v7258 = vpop.permute.xlu0 %7257
      %7259 = vrot.lane.b32.xlu0 %v7177, 64
      %v7260 = vpop.permute.xlu0 %7259
      %7261 = vrot.lane.b32.xlu0 %v7178, 64
      %v7262 = vpop.permute.xlu0 %7261
      %7263 = vrot.lane.b32.xlu0 %v7179, 64
      %v7264 = vpop.permute.xlu0 %7263
      %7265 = vrot.lane.b32.xlu0 %v7180, 64
      %v7266 = vpop.permute.xlu0 %7265
      %7267 = vrot.lane.b32.xlu0 %v7181, 64
      %v7268 = vpop.permute.xlu0 %7267
      %7269 = vrot.lane.b32.xlu0 %v7182, 64
      %v7270 = vpop.permute.xlu0 %7269
      %7271 = vrot.lane.b32.xlu0 %v7183, 64
      %v7272 = vpop.permute.xlu0 %7271
      %7273 = vrot.lane.b32.xlu0 %v7184, 64
      %v7274 = vpop.permute.xlu0 %7273
      %7275 = vrot.lane.b32.xlu0 %v7185, 64
      %v7276 = vpop.permute.xlu0 %7275
      %7277 = vrot.lane.b32.xlu0 %v7186, 64
      %v7278 = vpop.permute.xlu0 %7277
      %7279 = vrot.lane.b32.xlu0 %v7187, 64
      %v7280 = vpop.permute.xlu0 %7279
      %7281 = vrot.lane.b32.xlu0 %v7188, 64
      %v7282 = vpop.permute.xlu0 %7281
      %7283 = vrot.lane.b32.xlu0 %v7189, 64
      %v7284 = vpop.permute.xlu0 %7283
      %7285 = vrot.lane.b32.xlu0 %v7190, 64
      %v7286 = vpop.permute.xlu0 %7285
      %7319 = vst.msk [vmem:[#allocation4] sm:$0xff] %vm3276, %v7224
      %7320 = vst.msk [vmem:[#allocation4 + $0x10] sm:$0xff] %vm3276, %v7226
      %7321 = vst.msk [vmem:[#allocation4 + $0x20] sm:$0xff] %vm3276, %v7228
      %7322 = vst.msk [vmem:[#allocation4 + $0x30] sm:$0xff] %vm3276, %v7230
      %7323 = vst.msk [vmem:[#allocation4 + $0x40] sm:$0xff] %vm3276, %v7232
      %7324 = vst.msk [vmem:[#allocation4 + $0x50] sm:$0xff] %vm3276, %v7234
      %7325 = vst.msk [vmem:[#allocation4 + $0x60] sm:$0xff] %vm3276, %v7236
      %7326 = vst.msk [vmem:[#allocation4 + $0x70] sm:$0xff] %vm3276, %v7238
      %7327 = vst.msk [vmem:[#allocation4 + $0x80] sm:$0xff] %vm3276, %v7240
      %7328 = vst.msk [vmem:[#allocation4 + $0x90] sm:$0xff] %vm3276, %v7242
      %7329 = vst.msk [vmem:[#allocation4 + $0xa0] sm:$0xff] %vm3276, %v7244
      %7330 = vst.msk [vmem:[#allocation4 + $0xb0] sm:$0xff] %vm3276, %v7246
      %7331 = vst.msk [vmem:[#allocation4 + $0xc0] sm:$0xff] %vm3276, %v7248
      %7332 = vst.msk [vmem:[#allocation4 + $0xd0] sm:$0xff] %vm3276, %v7250
      %7333 = vst.msk [vmem:[#allocation4 + $0xe0] sm:$0xff] %vm3276, %v7252
      %7334 = vst.msk [vmem:[#allocation4 + $0xf0] sm:$0xff] %vm3276, %v7254
      %7335 = vst.msk [vmem:[#allocation4 + $0x100] sm:$0xff] %vm3276, %v7256
      %7336 = vst.msk [vmem:[#allocation4 + $0x110] sm:$0xff] %vm3276, %v7258
      %7337 = vst.msk [vmem:[#allocation4 + $0x120] sm:$0xff] %vm3276, %v7260
      %7338 = vst.msk [vmem:[#allocation4 + $0x130] sm:$0xff] %vm3276, %v7262
      %7339 = vst.msk [vmem:[#allocation4 + $0x140] sm:$0xff] %vm3276, %v7264
      %7340 = vst.msk [vmem:[#allocation4 + $0x150] sm:$0xff] %vm3276, %v7266
      %7341 = vst.msk [vmem:[#allocation4 + $0x160] sm:$0xff] %vm3276, %v7268
      %7342 = vst.msk [vmem:[#allocation4 + $0x170] sm:$0xff] %vm3276, %v7270
      %7343 = vst.msk [vmem:[#allocation4 + $0x180] sm:$0xff] %vm3276, %v7272
      %7344 = vst.msk [vmem:[#allocation4 + $0x190] sm:$0xff] %vm3276, %v7274
      %7345 = vst.msk [vmem:[#allocation4 + $0x1a0] sm:$0xff] %vm3276, %v7276
      %7346 = vst.msk [vmem:[#allocation4 + $0x1b0] sm:$0xff] %vm3276, %v7278
      %7347 = vst.msk [vmem:[#allocation4 + $0x1c0] sm:$0xff] %vm3276, %v7280
      %7348 = vst.msk [vmem:[#allocation4 + $0x1d0] sm:$0xff] %vm3276, %v7282
      %7349 = vst.msk [vmem:[#allocation4 + $0x1e0] sm:$0xff] %vm3276, %v7284
      %7350 = vst.msk [vmem:[#allocation4 + $0x1f0] sm:$0xff] %vm3276, %v7286
      %v7351 = vld [vmem:[%s2440 + $0x2] sm:$0xff]
      %v7352 = vld [vmem:[%s2440 + $0xa] sm:$0xff]
      %v7353 = vld [vmem:[%s2440 + $0x1a] sm:$0xff]
      %v7354 = vld [vmem:[%s2440 + $0x22] sm:$0xff]
      %v7355 = vld [vmem:[%s2440 + $0x32] sm:$0xff]
      %v7356 = vld [vmem:[%s2440 + $0x3a] sm:$0xff]
      %v7357 = vld [vmem:[%s2440 + $0x4a] sm:$0xff]
      %v7358 = vld [vmem:[%s2440 + $0x52] sm:$0xff]
      %v7359 = vld [vmem:[%s2440 + $0x62] sm:$0xff]
      %v7360 = vld [vmem:[%s2440 + $0x6a] sm:$0xff]
      %v7361 = vld [vmem:[%s2440 + $0x7a] sm:$0xff]
      %v7362 = vld [vmem:[%s2440 + $0x82] sm:$0xff]
      %v7363 = vld [vmem:[%s2440 + $0x92] sm:$0xff]
      %v7364 = vld [vmem:[%s2440 + $0x9a] sm:$0xff]
      %v7365 = vld [vmem:[%s2440 + $0xaa] sm:$0xff]
      %v7366 = vld [vmem:[%s2440 + $0xb2] sm:$0xff]
      %v7367 = vld [vmem:[%s2440 + $0xc2] sm:$0xff]
      %v7368 = vld [vmem:[%s2440 + $0xca] sm:$0xff]
      %v7369 = vld [vmem:[%s2440 + $0xda] sm:$0xff]
      %v7370 = vld [vmem:[%s2440 + $0xe2] sm:$0xff]
      %v7371 = vld [vmem:[%s2440 + $0xf2] sm:$0xff]
      %v7372 = vld [vmem:[%s2440 + $0xfa] sm:$0xff]
      %v7373 = vld [vmem:[%s2440 + $0x10a] sm:$0xff]
      %v7374 = vld [vmem:[%s2440 + $0x112] sm:$0xff]
      %v7375 = vld [vmem:[%s2440 + $0x122] sm:$0xff]
      %v7376 = vld [vmem:[%s2440 + $0x12a] sm:$0xff]
      %v7377 = vld [vmem:[%s2440 + $0x13a] sm:$0xff]
      %v7378 = vld [vmem:[%s2440 + $0x142] sm:$0xff]
      %v7379 = vld [vmem:[%s2440 + $0x152] sm:$0xff]
      %v7380 = vld [vmem:[%s2440 + $0x15a] sm:$0xff]
      %v7381 = vld [vmem:[%s2440 + $0x16a] sm:$0xff]
      %v7382 = vld [vmem:[%s2440 + $0x172] sm:$0xff]
      %7415 = vrot.lane.b32.xlu0 %v7351, 80
      %v7416 = vpop.permute.xlu0 %7415
      %7417 = vrot.lane.b32.xlu0 %v7352, 80
      %v7418 = vpop.permute.xlu0 %7417
      %7419 = vrot.lane.b32.xlu0 %v7353, 80
      %v7420 = vpop.permute.xlu0 %7419
      %7421 = vrot.lane.b32.xlu0 %v7354, 80
      %v7422 = vpop.permute.xlu0 %7421
      %7423 = vrot.lane.b32.xlu0 %v7355, 80
      %v7424 = vpop.permute.xlu0 %7423
      %7425 = vrot.lane.b32.xlu0 %v7356, 80
      %v7426 = vpop.permute.xlu0 %7425
      %7427 = vrot.lane.b32.xlu0 %v7357, 80
      %v7428 = vpop.permute.xlu0 %7427
      %7429 = vrot.lane.b32.xlu0 %v7358, 80
      %v7430 = vpop.permute.xlu0 %7429
      %7431 = vrot.lane.b32.xlu0 %v7359, 80
      %v7432 = vpop.permute.xlu0 %7431
      %7433 = vrot.lane.b32.xlu0 %v7360, 80
      %v7434 = vpop.permute.xlu0 %7433
      %7435 = vrot.lane.b32.xlu0 %v7361, 80
      %v7436 = vpop.permute.xlu0 %7435
      %7437 = vrot.lane.b32.xlu0 %v7362, 80
      %v7438 = vpop.permute.xlu0 %7437
      %7439 = vrot.lane.b32.xlu0 %v7363, 80
      %v7440 = vpop.permute.xlu0 %7439
      %7441 = vrot.lane.b32.xlu0 %v7364, 80
      %v7442 = vpop.permute.xlu0 %7441
      %7443 = vrot.lane.b32.xlu0 %v7365, 80
      %v7444 = vpop.permute.xlu0 %7443
      %7445 = vrot.lane.b32.xlu0 %v7366, 80
      %v7446 = vpop.permute.xlu0 %7445
      %7447 = vrot.lane.b32.xlu0 %v7367, 80
      %v7448 = vpop.permute.xlu0 %7447
      %7449 = vrot.lane.b32.xlu0 %v7368, 80
      %v7450 = vpop.permute.xlu0 %7449
      %7451 = vrot.lane.b32.xlu0 %v7369, 80
      %v7452 = vpop.permute.xlu0 %7451
      %7453 = vrot.lane.b32.xlu0 %v7370, 80
      %v7454 = vpop.permute.xlu0 %7453
      %7455 = vrot.lane.b32.xlu0 %v7371, 80
      %v7456 = vpop.permute.xlu0 %7455
      %7457 = vrot.lane.b32.xlu0 %v7372, 80
      %v7458 = vpop.permute.xlu0 %7457
      %7459 = vrot.lane.b32.xlu0 %v7373, 80
      %v7460 = vpop.permute.xlu0 %7459
      %7461 = vrot.lane.b32.xlu0 %v7374, 80
      %v7462 = vpop.permute.xlu0 %7461
      %7463 = vrot.lane.b32.xlu0 %v7375, 80
      %v7464 = vpop.permute.xlu0 %7463
      %7465 = vrot.lane.b32.xlu0 %v7376, 80
      %v7466 = vpop.permute.xlu0 %7465
      %7467 = vrot.lane.b32.xlu0 %v7377, 80
      %v7468 = vpop.permute.xlu0 %7467
      %7469 = vrot.lane.b32.xlu0 %v7378, 80
      %v7470 = vpop.permute.xlu0 %7469
      %7471 = vrot.lane.b32.xlu0 %v7379, 80
      %v7472 = vpop.permute.xlu0 %7471
      %7473 = vrot.lane.b32.xlu0 %v7380, 80
      %v7474 = vpop.permute.xlu0 %7473
      %7475 = vrot.lane.b32.xlu0 %v7381, 80
      %v7476 = vpop.permute.xlu0 %7475
      %7477 = vrot.lane.b32.xlu0 %v7382, 80
      %v7478 = vpop.permute.xlu0 %7477
      %7511 = vst.msk [vmem:[#allocation4] sm:$0xff] %vm3469, %v7416
      %7512 = vst.msk [vmem:[#allocation4 + $0x10] sm:$0xff] %vm3469, %v7418
      %7513 = vst.msk [vmem:[#allocation4 + $0x20] sm:$0xff] %vm3469, %v7420
      %7514 = vst.msk [vmem:[#allocation4 + $0x30] sm:$0xff] %vm3469, %v7422
      %7515 = vst.msk [vmem:[#allocation4 + $0x40] sm:$0xff] %vm3469, %v7424
      %7516 = vst.msk [vmem:[#allocation4 + $0x50] sm:$0xff] %vm3469, %v7426
      %7517 = vst.msk [vmem:[#allocation4 + $0x60] sm:$0xff] %vm3469, %v7428
      %7518 = vst.msk [vmem:[#allocation4 + $0x70] sm:$0xff] %vm3469, %v7430
      %7519 = vst.msk [vmem:[#allocation4 + $0x80] sm:$0xff] %vm3469, %v7432
      %7520 = vst.msk [vmem:[#allocation4 + $0x90] sm:$0xff] %vm3469, %v7434
      %7521 = vst.msk [vmem:[#allocation4 + $0xa0] sm:$0xff] %vm3469, %v7436
      %7522 = vst.msk [vmem:[#allocation4 + $0xb0] sm:$0xff] %vm3469, %v7438
      %7523 = vst.msk [vmem:[#allocation4 + $0xc0] sm:$0xff] %vm3469, %v7440
      %7524 = vst.msk [vmem:[#allocation4 + $0xd0] sm:$0xff] %vm3469, %v7442
      %7525 = vst.msk [vmem:[#allocation4 + $0xe0] sm:$0xff] %vm3469, %v7444
      %7526 = vst.msk [vmem:[#allocation4 + $0xf0] sm:$0xff] %vm3469, %v7446
      %7527 = vst.msk [vmem:[#allocation4 + $0x100] sm:$0xff] %vm3469, %v7448
      %7528 = vst.msk [vmem:[#allocation4 + $0x110] sm:$0xff] %vm3469, %v7450
      %7529 = vst.msk [vmem:[#allocation4 + $0x120] sm:$0xff] %vm3469, %v7452
      %7530 = vst.msk [vmem:[#allocation4 + $0x130] sm:$0xff] %vm3469, %v7454
      %7531 = vst.msk [vmem:[#allocation4 + $0x140] sm:$0xff] %vm3469, %v7456
      %7532 = vst.msk [vmem:[#allocation4 + $0x150] sm:$0xff] %vm3469, %v7458
      %7533 = vst.msk [vmem:[#allocation4 + $0x160] sm:$0xff] %vm3469, %v7460
      %7534 = vst.msk [vmem:[#allocation4 + $0x170] sm:$0xff] %vm3469, %v7462
      %7535 = vst.msk [vmem:[#allocation4 + $0x180] sm:$0xff] %vm3469, %v7464
      %7536 = vst.msk [vmem:[#allocation4 + $0x190] sm:$0xff] %vm3469, %v7466
      %7537 = vst.msk [vmem:[#allocation4 + $0x1a0] sm:$0xff] %vm3469, %v7468
      %7538 = vst.msk [vmem:[#allocation4 + $0x1b0] sm:$0xff] %vm3469, %v7470
      %7539 = vst.msk [vmem:[#allocation4 + $0x1c0] sm:$0xff] %vm3469, %v7472
      %7540 = vst.msk [vmem:[#allocation4 + $0x1d0] sm:$0xff] %vm3469, %v7474
      %7541 = vst.msk [vmem:[#allocation4 + $0x1e0] sm:$0xff] %vm3469, %v7476
      %7542 = vst.msk [vmem:[#allocation4 + $0x1f0] sm:$0xff] %vm3469, %v7478
      %v7543 = vld [vmem:[%s3502] sm:$0xff]
      %v7544 = vld [vmem:[%s3502 + $0x8] sm:$0xff]
      %v7545 = vld [vmem:[%s3502 + $0x18] sm:$0xff]
      %v7546 = vld [vmem:[%s3502 + $0x20] sm:$0xff]
      %v7547 = vld [vmem:[%s3502 + $0x30] sm:$0xff]
      %v7548 = vld [vmem:[%s3502 + $0x38] sm:$0xff]
      %v7549 = vld [vmem:[%s3502 + $0x48] sm:$0xff]
      %v7550 = vld [vmem:[%s3502 + $0x50] sm:$0xff]
      %v7551 = vld [vmem:[%s3502 + $0x60] sm:$0xff]
      %v7552 = vld [vmem:[%s3502 + $0x68] sm:$0xff]
      %v7553 = vld [vmem:[%s3502 + $0x78] sm:$0xff]
      %v7554 = vld [vmem:[%s3502 + $0x80] sm:$0xff]
      %v7555 = vld [vmem:[%s3502 + $0x90] sm:$0xff]
      %v7556 = vld [vmem:[%s3502 + $0x98] sm:$0xff]
      %v7557 = vld [vmem:[%s3502 + $0xa8] sm:$0xff]
      %v7558 = vld [vmem:[%s3502 + $0xb0] sm:$0xff]
      %v7559 = vld [vmem:[%s3502 + $0xc0] sm:$0xff]
      %v7560 = vld [vmem:[%s3502 + $0xc8] sm:$0xff]
      %v7561 = vld [vmem:[%s3502 + $0xd8] sm:$0xff]
      %v7562 = vld [vmem:[%s3502 + $0xe0] sm:$0xff]
      %v7563 = vld [vmem:[%s3502 + $0xf0] sm:$0xff]
      %v7564 = vld [vmem:[%s3502 + $0xf8] sm:$0xff]
      %v7565 = vld [vmem:[%s3502 + $0x108] sm:$0xff]
      %v7566 = vld [vmem:[%s3502 + $0x110] sm:$0xff]
      %v7567 = vld [vmem:[%s3502 + $0x120] sm:$0xff]
      %v7568 = vld [vmem:[%s3502 + $0x128] sm:$0xff]
      %v7569 = vld [vmem:[%s3502 + $0x138] sm:$0xff]
      %v7570 = vld [vmem:[%s3502 + $0x140] sm:$0xff]
      %v7571 = vld [vmem:[%s3502 + $0x150] sm:$0xff]
      %v7572 = vld [vmem:[%s3502 + $0x158] sm:$0xff]
      %v7573 = vld [vmem:[%s3502 + $0x168] sm:$0xff]
      %v7574 = vld [vmem:[%s3502 + $0x170] sm:$0xff]
      %7607 = vrot.lane.b32.xlu0 %v7543, 96
      %v7608 = vpop.permute.xlu0 %7607
      %7609 = vrot.lane.b32.xlu0 %v7544, 96
      %v7610 = vpop.permute.xlu0 %7609
      %7611 = vrot.lane.b32.xlu0 %v7545, 96
      %v7612 = vpop.permute.xlu0 %7611
      %7613 = vrot.lane.b32.xlu0 %v7546, 96
      %v7614 = vpop.permute.xlu0 %7613
      %7615 = vrot.lane.b32.xlu0 %v7547, 96
      %v7616 = vpop.permute.xlu0 %7615
      %7617 = vrot.lane.b32.xlu0 %v7548, 96
      %v7618 = vpop.permute.xlu0 %7617
      %7619 = vrot.lane.b32.xlu0 %v7549, 96
      %v7620 = vpop.permute.xlu0 %7619
      %7621 = vrot.lane.b32.xlu0 %v7550, 96
      %v7622 = vpop.permute.xlu0 %7621
      %7623 = vrot.lane.b32.xlu0 %v7551, 96
      %v7624 = vpop.permute.xlu0 %7623
      %7625 = vrot.lane.b32.xlu0 %v7552, 96
      %v7626 = vpop.permute.xlu0 %7625
      %7627 = vrot.lane.b32.xlu0 %v7553, 96
      %v7628 = vpop.permute.xlu0 %7627
      %7629 = vrot.lane.b32.xlu0 %v7554, 96
      %v7630 = vpop.permute.xlu0 %7629
      %7631 = vrot.lane.b32.xlu0 %v7555, 96
      %v7632 = vpop.permute.xlu0 %7631
      %7633 = vrot.lane.b32.xlu0 %v7556, 96
      %v7634 = vpop.permute.xlu0 %7633
      %7635 = vrot.lane.b32.xlu0 %v7557, 96
      %v7636 = vpop.permute.xlu0 %7635
      %7637 = vrot.lane.b32.xlu0 %v7558, 96
      %v7638 = vpop.permute.xlu0 %7637
      %7639 = vrot.lane.b32.xlu0 %v7559, 96
      %v7640 = vpop.permute.xlu0 %7639
      %7641 = vrot.lane.b32.xlu0 %v7560, 96
      %v7642 = vpop.permute.xlu0 %7641
      %7643 = vrot.lane.b32.xlu0 %v7561, 96
      %v7644 = vpop.permute.xlu0 %7643
      %7645 = vrot.lane.b32.xlu0 %v7562, 96
      %v7646 = vpop.permute.xlu0 %7645
      %7647 = vrot.lane.b32.xlu0 %v7563, 96
      %v7648 = vpop.permute.xlu0 %7647
      %7649 = vrot.lane.b32.xlu0 %v7564, 96
      %v7650 = vpop.permute.xlu0 %7649
      %7651 = vrot.lane.b32.xlu0 %v7565, 96
      %v7652 = vpop.permute.xlu0 %7651
      %7653 = vrot.lane.b32.xlu0 %v7566, 96
      %v7654 = vpop.permute.xlu0 %7653
      %7655 = vrot.lane.b32.xlu0 %v7567, 96
      %v7656 = vpop.permute.xlu0 %7655
      %7657 = vrot.lane.b32.xlu0 %v7568, 96
      %v7658 = vpop.permute.xlu0 %7657
      %7659 = vrot.lane.b32.xlu0 %v7569, 96
      %v7660 = vpop.permute.xlu0 %7659
      %7661 = vrot.lane.b32.xlu0 %v7570, 96
      %v7662 = vpop.permute.xlu0 %7661
      %7663 = vrot.lane.b32.xlu0 %v7571, 96
      %v7664 = vpop.permute.xlu0 %7663
      %7665 = vrot.lane.b32.xlu0 %v7572, 96
      %v7666 = vpop.permute.xlu0 %7665
      %7667 = vrot.lane.b32.xlu0 %v7573, 96
      %v7668 = vpop.permute.xlu0 %7667
      %7669 = vrot.lane.b32.xlu0 %v7574, 96
      %v7670 = vpop.permute.xlu0 %7669
      %7703 = vst.msk [vmem:[#allocation4] sm:$0xff] %vm3663, %v7608
      %7704 = vst.msk [vmem:[#allocation4 + $0x10] sm:$0xff] %vm3663, %v7610
      %7705 = vst.msk [vmem:[#allocation4 + $0x20] sm:$0xff] %vm3663, %v7612
      %7706 = vst.msk [vmem:[#allocation4 + $0x30] sm:$0xff] %vm3663, %v7614
      %7707 = vst.msk [vmem:[#allocation4 + $0x40] sm:$0xff] %vm3663, %v7616
      %7708 = vst.msk [vmem:[#allocation4 + $0x50] sm:$0xff] %vm3663, %v7618
      %7709 = vst.msk [vmem:[#allocation4 + $0x60] sm:$0xff] %vm3663, %v7620
      %7710 = vst.msk [vmem:[#allocation4 + $0x70] sm:$0xff] %vm3663, %v7622
      %7711 = vst.msk [vmem:[#allocation4 + $0x80] sm:$0xff] %vm3663, %v7624
      %7712 = vst.msk [vmem:[#allocation4 + $0x90] sm:$0xff] %vm3663, %v7626
      %7713 = vst.msk [vmem:[#allocation4 + $0xa0] sm:$0xff] %vm3663, %v7628
      %7714 = vst.msk [vmem:[#allocation4 + $0xb0] sm:$0xff] %vm3663, %v7630
      %7715 = vst.msk [vmem:[#allocation4 + $0xc0] sm:$0xff] %vm3663, %v7632
      %7716 = vst.msk [vmem:[#allocation4 + $0xd0] sm:$0xff] %vm3663, %v7634
      %7717 = vst.msk [vmem:[#allocation4 + $0xe0] sm:$0xff] %vm3663, %v7636
      %7718 = vst.msk [vmem:[#allocation4 + $0xf0] sm:$0xff] %vm3663, %v7638
      %7719 = vst.msk [vmem:[#allocation4 + $0x100] sm:$0xff] %vm3663, %v7640
      %7720 = vst.msk [vmem:[#allocation4 + $0x110] sm:$0xff] %vm3663, %v7642
      %7721 = vst.msk [vmem:[#allocation4 + $0x120] sm:$0xff] %vm3663, %v7644
      %7722 = vst.msk [vmem:[#allocation4 + $0x130] sm:$0xff] %vm3663, %v7646
      %7723 = vst.msk [vmem:[#allocation4 + $0x140] sm:$0xff] %vm3663, %v7648
      %7724 = vst.msk [vmem:[#allocation4 + $0x150] sm:$0xff] %vm3663, %v7650
      %7725 = vst.msk [vmem:[#allocation4 + $0x160] sm:$0xff] %vm3663, %v7652
      %7726 = vst.msk [vmem:[#allocation4 + $0x170] sm:$0xff] %vm3663, %v7654
      %7727 = vst.msk [vmem:[#allocation4 + $0x180] sm:$0xff] %vm3663, %v7656
      %7728 = vst.msk [vmem:[#allocation4 + $0x190] sm:$0xff] %vm3663, %v7658
      %7729 = vst.msk [vmem:[#allocation4 + $0x1a0] sm:$0xff] %vm3663, %v7660
      %7730 = vst.msk [vmem:[#allocation4 + $0x1b0] sm:$0xff] %vm3663, %v7662
      %7731 = vst.msk [vmem:[#allocation4 + $0x1c0] sm:$0xff] %vm3663, %v7664
      %7732 = vst.msk [vmem:[#allocation4 + $0x1d0] sm:$0xff] %vm3663, %v7666
      %7733 = vst.msk [vmem:[#allocation4 + $0x1e0] sm:$0xff] %vm3663, %v7668
      %7734 = vst.msk [vmem:[#allocation4 + $0x1f0] sm:$0xff] %vm3663, %v7670
      %v7735 = vld [vmem:[%s3502 + $0x1] sm:$0xff]
      %v7736 = vld [vmem:[%s3502 + $0x9] sm:$0xff]
      %v7737 = vld [vmem:[%s3502 + $0x19] sm:$0xff]
      %v7738 = vld [vmem:[%s3502 + $0x21] sm:$0xff]
      %v7739 = vld [vmem:[%s3502 + $0x31] sm:$0xff]
      %v7740 = vld [vmem:[%s3502 + $0x39] sm:$0xff]
      %v7741 = vld [vmem:[%s3502 + $0x49] sm:$0xff]
      %v7742 = vld [vmem:[%s3502 + $0x51] sm:$0xff]
      %v7743 = vld [vmem:[%s3502 + $0x61] sm:$0xff]
      %v7744 = vld [vmem:[%s3502 + $0x69] sm:$0xff]
      %v7745 = vld [vmem:[%s3502 + $0x79] sm:$0xff]
      %v7746 = vld [vmem:[%s3502 + $0x81] sm:$0xff]
      %v7747 = vld [vmem:[%s3502 + $0x91] sm:$0xff]
      %v7748 = vld [vmem:[%s3502 + $0x99] sm:$0xff]
      %v7749 = vld [vmem:[%s3502 + $0xa9] sm:$0xff]
      %v7750 = vld [vmem:[%s3502 + $0xb1] sm:$0xff]
      %v7751 = vld [vmem:[%s3502 + $0xc1] sm:$0xff]
      %v7752 = vld [vmem:[%s3502 + $0xc9] sm:$0xff]
      %v7753 = vld [vmem:[%s3502 + $0xd9] sm:$0xff]
      %v7754 = vld [vmem:[%s3502 + $0xe1] sm:$0xff]
      %v7755 = vld [vmem:[%s3502 + $0xf1] sm:$0xff]
      %v7756 = vld [vmem:[%s3502 + $0xf9] sm:$0xff]
      %v7757 = vld [vmem:[%s3502 + $0x109] sm:$0xff]
      %v7758 = vld [vmem:[%s3502 + $0x111] sm:$0xff]
      %v7759 = vld [vmem:[%s3502 + $0x121] sm:$0xff]
      %v7760 = vld [vmem:[%s3502 + $0x129] sm:$0xff]
      %v7761 = vld [vmem:[%s3502 + $0x139] sm:$0xff]
      %v7762 = vld [vmem:[%s3502 + $0x141] sm:$0xff]
      %v7763 = vld [vmem:[%s3502 + $0x151] sm:$0xff]
      %v7764 = vld [vmem:[%s3502 + $0x159] sm:$0xff]
      %v7765 = vld [vmem:[%s3502 + $0x169] sm:$0xff]
      %v7766 = vld [vmem:[%s3502 + $0x171] sm:$0xff]
      %7799 = vrot.lane.b32.xlu0 %v7735, 112
      %v7800 = vpop.permute.xlu0 %7799
      %7801 = vrot.lane.b32.xlu0 %v7736, 112
      %v7802 = vpop.permute.xlu0 %7801
      %7803 = vrot.lane.b32.xlu0 %v7737, 112
      %v7804 = vpop.permute.xlu0 %7803
      %7805 = vrot.lane.b32.xlu0 %v7738, 112
      %v7806 = vpop.permute.xlu0 %7805
      %7807 = vrot.lane.b32.xlu0 %v7739, 112
      %v7808 = vpop.permute.xlu0 %7807
      %7809 = vrot.lane.b32.xlu0 %v7740, 112
      %v7810 = vpop.permute.xlu0 %7809
      %7811 = vrot.lane.b32.xlu0 %v7741, 112
      %v7812 = vpop.permute.xlu0 %7811
      %7813 = vrot.lane.b32.xlu0 %v7742, 112
      %v7814 = vpop.permute.xlu0 %7813
      %7815 = vrot.lane.b32.xlu0 %v7743, 112
      %v7816 = vpop.permute.xlu0 %7815
      %7817 = vrot.lane.b32.xlu0 %v7744, 112
      %v7818 = vpop.permute.xlu0 %7817
      %7819 = vrot.lane.b32.xlu0 %v7745, 112
      %v7820 = vpop.permute.xlu0 %7819
      %7821 = vrot.lane.b32.xlu0 %v7746, 112
      %v7822 = vpop.permute.xlu0 %7821
      %7823 = vrot.lane.b32.xlu0 %v7747, 112
      %v7824 = vpop.permute.xlu0 %7823
      %7825 = vrot.lane.b32.xlu0 %v7748, 112
      %v7826 = vpop.permute.xlu0 %7825
      %7827 = vrot.lane.b32.xlu0 %v7749, 112
      %v7828 = vpop.permute.xlu0 %7827
      %7829 = vrot.lane.b32.xlu0 %v7750, 112
      %v7830 = vpop.permute.xlu0 %7829
      %7831 = vrot.lane.b32.xlu0 %v7751, 112
      %v7832 = vpop.permute.xlu0 %7831
      %7833 = vrot.lane.b32.xlu0 %v7752, 112
      %v7834 = vpop.permute.xlu0 %7833
      %7835 = vrot.lane.b32.xlu0 %v7753, 112
      %v7836 = vpop.permute.xlu0 %7835
      %7837 = vrot.lane.b32.xlu0 %v7754, 112
      %v7838 = vpop.permute.xlu0 %7837
      %7839 = vrot.lane.b32.xlu0 %v7755, 112
      %v7840 = vpop.permute.xlu0 %7839
      %7841 = vrot.lane.b32.xlu0 %v7756, 112
      %v7842 = vpop.permute.xlu0 %7841
      %7843 = vrot.lane.b32.xlu0 %v7757, 112
      %v7844 = vpop.permute.xlu0 %7843
      %7845 = vrot.lane.b32.xlu0 %v7758, 112
      %v7846 = vpop.permute.xlu0 %7845
      %7847 = vrot.lane.b32.xlu0 %v7759, 112
      %v7848 = vpop.permute.xlu0 %7847
      %7849 = vrot.lane.b32.xlu0 %v7760, 112
      %v7850 = vpop.permute.xlu0 %7849
      %7851 = vrot.lane.b32.xlu0 %v7761, 112
      %v7852 = vpop.permute.xlu0 %7851
      %7853 = vrot.lane.b32.xlu0 %v7762, 112
      %v7854 = vpop.permute.xlu0 %7853
      %7855 = vrot.lane.b32.xlu0 %v7763, 112
      %v7856 = vpop.permute.xlu0 %7855
      %7857 = vrot.lane.b32.xlu0 %v7764, 112
      %v7858 = vpop.permute.xlu0 %7857
      %7859 = vrot.lane.b32.xlu0 %v7765, 112
      %v7860 = vpop.permute.xlu0 %7859
      %7861 = vrot.lane.b32.xlu0 %v7766, 112
      %v7862 = vpop.permute.xlu0 %7861
      %7895 = vst.msk [vmem:[#allocation4] sm:$0xff] %vm3856, %v7800
      %7896 = vst.msk [vmem:[#allocation4 + $0x10] sm:$0xff] %vm3856, %v7802
      %7897 = vst.msk [vmem:[#allocation4 + $0x20] sm:$0xff] %vm3856, %v7804
      %7898 = vst.msk [vmem:[#allocation4 + $0x30] sm:$0xff] %vm3856, %v7806
      %7899 = vst.msk [vmem:[#allocation4 + $0x40] sm:$0xff] %vm3856, %v7808
      %7900 = vst.msk [vmem:[#allocation4 + $0x50] sm:$0xff] %vm3856, %v7810
      %7901 = vst.msk [vmem:[#allocation4 + $0x60] sm:$0xff] %vm3856, %v7812
      %7902 = vst.msk [vmem:[#allocation4 + $0x70] sm:$0xff] %vm3856, %v7814
      %7903 = vst.msk [vmem:[#allocation4 + $0x80] sm:$0xff] %vm3856, %v7816
      %7904 = vst.msk [vmem:[#allocation4 + $0x90] sm:$0xff] %vm3856, %v7818
      %7905 = vst.msk [vmem:[#allocation4 + $0xa0] sm:$0xff] %vm3856, %v7820
      %7906 = vst.msk [vmem:[#allocation4 + $0xb0] sm:$0xff] %vm3856, %v7822
      %7907 = vst.msk [vmem:[#allocation4 + $0xc0] sm:$0xff] %vm3856, %v7824
      %7908 = vst.msk [vmem:[#allocation4 + $0xd0] sm:$0xff] %vm3856, %v7826
      %7909 = vst.msk [vmem:[#allocation4 + $0xe0] sm:$0xff] %vm3856, %v7828
      %7910 = vst.msk [vmem:[#allocation4 + $0xf0] sm:$0xff] %vm3856, %v7830
      %7911 = vst.msk [vmem:[#allocation4 + $0x100] sm:$0xff] %vm3856, %v7832
      %7912 = vst.msk [vmem:[#allocation4 + $0x110] sm:$0xff] %vm3856, %v7834
      %7913 = vst.msk [vmem:[#allocation4 + $0x120] sm:$0xff] %vm3856, %v7836
      %7914 = vst.msk [vmem:[#allocation4 + $0x130] sm:$0xff] %vm3856, %v7838
      %7915 = vst.msk [vmem:[#allocation4 + $0x140] sm:$0xff] %vm3856, %v7840
      %7916 = vst.msk [vmem:[#allocation4 + $0x150] sm:$0xff] %vm3856, %v7842
      %7917 = vst.msk [vmem:[#allocation4 + $0x160] sm:$0xff] %vm3856, %v7844
      %7918 = vst.msk [vmem:[#allocation4 + $0x170] sm:$0xff] %vm3856, %v7846
      %7919 = vst.msk [vmem:[#allocation4 + $0x180] sm:$0xff] %vm3856, %v7848
      %7920 = vst.msk [vmem:[#allocation4 + $0x190] sm:$0xff] %vm3856, %v7850
      %7921 = vst.msk [vmem:[#allocation4 + $0x1a0] sm:$0xff] %vm3856, %v7852
      %7922 = vst.msk [vmem:[#allocation4 + $0x1b0] sm:$0xff] %vm3856, %v7854
      %7923 = vst.msk [vmem:[#allocation4 + $0x1c0] sm:$0xff] %vm3856, %v7856
      %7924 = vst.msk [vmem:[#allocation4 + $0x1d0] sm:$0xff] %vm3856, %v7858
      %7925 = vst.msk [vmem:[#allocation4 + $0x1e0] sm:$0xff] %vm3856, %v7860
      %7926 = vst.msk [vmem:[#allocation4 + $0x1f0] sm:$0xff] %vm3856, %v7862
      %v7927 = vld [vmem:[%s3502 + $0x2] sm:$0xff]
      %v7928 = vld [vmem:[%s3502 + $0xa] sm:$0xff]
      %v7929 = vld [vmem:[%s3502 + $0x1a] sm:$0xff]
      %v7930 = vld [vmem:[%s3502 + $0x22] sm:$0xff]
      %v7931 = vld [vmem:[%s3502 + $0x32] sm:$0xff]
      %v7932 = vld [vmem:[%s3502 + $0x3a] sm:$0xff]
      %v7933 = vld [vmem:[%s3502 + $0x4a] sm:$0xff]
      %v7934 = vld [vmem:[%s3502 + $0x52] sm:$0xff]
      %v7935 = vld [vmem:[%s3502 + $0x62] sm:$0xff]
      %v7936 = vld [vmem:[%s3502 + $0x6a] sm:$0xff]
      %v7937 = vld [vmem:[%s3502 + $0x7a] sm:$0xff]
      %v7938 = vld [vmem:[%s3502 + $0x82] sm:$0xff]
      %v7939 = vld [vmem:[%s3502 + $0x92] sm:$0xff]
      %v7940 = vld [vmem:[%s3502 + $0x9a] sm:$0xff]
      %v7941 = vld [vmem:[%s3502 + $0xaa] sm:$0xff]
      %v7942 = vld [vmem:[%s3502 + $0xb2] sm:$0xff]
      %v7943 = vld [vmem:[%s3502 + $0xc2] sm:$0xff]
      %v7944 = vld [vmem:[%s3502 + $0xca] sm:$0xff]
      %v7945 = vld [vmem:[%s3502 + $0xda] sm:$0xff]
      %v7946 = vld [vmem:[%s3502 + $0xe2] sm:$0xff]
      %v7947 = vld [vmem:[%s3502 + $0xf2] sm:$0xff]
      %v7948 = vld [vmem:[%s3502 + $0xfa] sm:$0xff]
      %v7949 = vld [vmem:[%s3502 + $0x10a] sm:$0xff]
      %v7950 = vld [vmem:[%s3502 + $0x112] sm:$0xff]
      %v7951 = vld [vmem:[%s3502 + $0x122] sm:$0xff]
      %v7952 = vld [vmem:[%s3502 + $0x12a] sm:$0xff]
      %v7953 = vld [vmem:[%s3502 + $0x13a] sm:$0xff]
      %v7954 = vld [vmem:[%s3502 + $0x142] sm:$0xff]
      %v7955 = vld [vmem:[%s3502 + $0x152] sm:$0xff]
      %v7956 = vld [vmem:[%s3502 + $0x15a] sm:$0xff]
      %v7957 = vld [vmem:[%s3502 + $0x16a] sm:$0xff]
      %v7958 = vld [vmem:[%s3502 + $0x172] sm:$0xff]
      %7959 = vst.msk [vmem:[#allocation4 + $0x8] sm:$0xff] %vm2384, %v7927
      %7960 = vst.msk [vmem:[#allocation4 + $0x18] sm:$0xff] %vm2384, %v7928
      %7961 = vst.msk [vmem:[#allocation4 + $0x28] sm:$0xff] %vm2384, %v7929
      %7962 = vst.msk [vmem:[#allocation4 + $0x38] sm:$0xff] %vm2384, %v7930
      %7963 = vst.msk [vmem:[#allocation4 + $0x48] sm:$0xff] %vm2384, %v7931
      %7964 = vst.msk [vmem:[#allocation4 + $0x58] sm:$0xff] %vm2384, %v7932
      %7965 = vst.msk [vmem:[#allocation4 + $0x68] sm:$0xff] %vm2384, %v7933
      %7966 = vst.msk [vmem:[#allocation4 + $0x78] sm:$0xff] %vm2384, %v7934
      %7967 = vst.msk [vmem:[#allocation4 + $0x88] sm:$0xff] %vm2384, %v7935
      %7968 = vst.msk [vmem:[#allocation4 + $0x98] sm:$0xff] %vm2384, %v7936
      %7969 = vst.msk [vmem:[#allocation4 + $0xa8] sm:$0xff] %vm2384, %v7937
      %7970 = vst.msk [vmem:[#allocation4 + $0xb8] sm:$0xff] %vm2384, %v7938
      %7971 = vst.msk [vmem:[#allocation4 + $0xc8] sm:$0xff] %vm2384, %v7939
      %7972 = vst.msk [vmem:[#allocation4 + $0xd8] sm:$0xff] %vm2384, %v7940
      %7973 = vst.msk [vmem:[#allocation4 + $0xe8] sm:$0xff] %vm2384, %v7941
      %7974 = vst.msk [vmem:[#allocation4 + $0xf8] sm:$0xff] %vm2384, %v7942
      %7975 = vst.msk [vmem:[#allocation4 + $0x108] sm:$0xff] %vm2384, %v7943
      %7976 = vst.msk [vmem:[#allocation4 + $0x118] sm:$0xff] %vm2384, %v7944
      %7977 = vst.msk [vmem:[#allocation4 + $0x128] sm:$0xff] %vm2384, %v7945
      %7978 = vst.msk [vmem:[#allocation4 + $0x138] sm:$0xff] %vm2384, %v7946
      %7979 = vst.msk [vmem:[#allocation4 + $0x148] sm:$0xff] %vm2384, %v7947
      %7980 = vst.msk [vmem:[#allocation4 + $0x158] sm:$0xff] %vm2384, %v7948
      %7981 = vst.msk [vmem:[#allocation4 + $0x168] sm:$0xff] %vm2384, %v7949
      %7982 = vst.msk [vmem:[#allocation4 + $0x178] sm:$0xff] %vm2384, %v7950
      %7983 = vst.msk [vmem:[#allocation4 + $0x188] sm:$0xff] %vm2384, %v7951
      %7984 = vst.msk [vmem:[#allocation4 + $0x198] sm:$0xff] %vm2384, %v7952
      %7985 = vst.msk [vmem:[#allocation4 + $0x1a8] sm:$0xff] %vm2384, %v7953
      %7986 = vst.msk [vmem:[#allocation4 + $0x1b8] sm:$0xff] %vm2384, %v7954
      %7987 = vst.msk [vmem:[#allocation4 + $0x1c8] sm:$0xff] %vm2384, %v7955
      %7988 = vst.msk [vmem:[#allocation4 + $0x1d8] sm:$0xff] %vm2384, %v7956
      %7989 = vst.msk [vmem:[#allocation4 + $0x1e8] sm:$0xff] %vm2384, %v7957
      %7990 = vst.msk [vmem:[#allocation4 + $0x1f8] sm:$0xff] %vm2384, %v7958
      %v7991 = vld [vmem:[#allocation4] sm:$0xff]
      %v7992 = vld [vmem:[#allocation4 + $0x8] sm:$0xff]
      %v7993 = vld [vmem:[#allocation4 + $0x10] sm:$0xff]
      %v7994 = vld [vmem:[#allocation4 + $0x18] sm:$0xff]
      %v7995 = vld [vmem:[#allocation4 + $0x20] sm:$0xff]
      %v7996 = vld [vmem:[#allocation4 + $0x28] sm:$0xff]
      %v7997 = vld [vmem:[#allocation4 + $0x30] sm:$0xff]
      %v7998 = vld [vmem:[#allocation4 + $0x38] sm:$0xff]
      %v7999 = vld [vmem:[#allocation4 + $0x40] sm:$0xff]
      %v8000 = vld [vmem:[#allocation4 + $0x48] sm:$0xff]
      %v8001 = vld [vmem:[#allocation4 + $0x50] sm:$0xff]
      %v8002 = vld [vmem:[#allocation4 + $0x58] sm:$0xff]
      %v8003 = vld [vmem:[#allocation4 + $0x60] sm:$0xff]
      %v8004 = vld [vmem:[#allocation4 + $0x68] sm:$0xff]
      %v8005 = vld [vmem:[#allocation4 + $0x70] sm:$0xff]
      %v8006 = vld [vmem:[#allocation4 + $0x78] sm:$0xff]
      %v8007 = vld [vmem:[#allocation4 + $0x80] sm:$0xff]
      %v8008 = vld [vmem:[#allocation4 + $0x88] sm:$0xff]
      %v8009 = vld [vmem:[#allocation4 + $0x90] sm:$0xff]
      %v8010 = vld [vmem:[#allocation4 + $0x98] sm:$0xff]
      %v8011 = vld [vmem:[#allocation4 + $0xa0] sm:$0xff]
      %v8012 = vld [vmem:[#allocation4 + $0xa8] sm:$0xff]
      %v8013 = vld [vmem:[#allocation4 + $0xb0] sm:$0xff]
      %v8014 = vld [vmem:[#allocation4 + $0xb8] sm:$0xff]
      %v8015 = vld [vmem:[#allocation4 + $0xc0] sm:$0xff]
      %v8016 = vld [vmem:[#allocation4 + $0xc8] sm:$0xff]
      %v8017 = vld [vmem:[#allocation4 + $0xd0] sm:$0xff]
      %v8018 = vld [vmem:[#allocation4 + $0xd8] sm:$0xff]
      %v8019 = vld [vmem:[#allocation4 + $0xe0] sm:$0xff]
      %v8020 = vld [vmem:[#allocation4 + $0xe8] sm:$0xff]
      %v8021 = vld [vmem:[#allocation4 + $0xf0] sm:$0xff]
      %v8022 = vld [vmem:[#allocation4 + $0xf8] sm:$0xff]
      %v8023 = vld [vmem:[#allocation4 + $0x100] sm:$0xff]
      %v8024 = vld [vmem:[#allocation4 + $0x108] sm:$0xff]
      %v8025 = vld [vmem:[#allocation4 + $0x110] sm:$0xff]
      %v8026 = vld [vmem:[#allocation4 + $0x118] sm:$0xff]
      %v8027 = vld [vmem:[#allocation4 + $0x120] sm:$0xff]
      %v8028 = vld [vmem:[#allocation4 + $0x128] sm:$0xff]
      %v8029 = vld [vmem:[#allocation4 + $0x130] sm:$0xff]
      %v8030 = vld [vmem:[#allocation4 + $0x138] sm:$0xff]
      %v8031 = vld [vmem:[#allocation4 + $0x140] sm:$0xff]
      %v8032 = vld [vmem:[#allocation4 + $0x148] sm:$0xff]
      %v8033 = vld [vmem:[#allocation4 + $0x150] sm:$0xff]
      %v8034 = vld [vmem:[#allocation4 + $0x158] sm:$0xff]
      %v8035 = vld [vmem:[#allocation4 + $0x160] sm:$0xff]
      %v8036 = vld [vmem:[#allocation4 + $0x168] sm:$0xff]
      %v8037 = vld [vmem:[#allocation4 + $0x170] sm:$0xff]
      %v8038 = vld [vmem:[#allocation4 + $0x178] sm:$0xff]
      %v8039 = vld [vmem:[#allocation4 + $0x180] sm:$0xff]
      %v8040 = vld [vmem:[#allocation4 + $0x188] sm:$0xff]
      %v8041 = vld [vmem:[#allocation4 + $0x190] sm:$0xff]
      %v8042 = vld [vmem:[#allocation4 + $0x198] sm:$0xff]
      %v8043 = vld [vmem:[#allocation4 + $0x1a0] sm:$0xff]
      %v8044 = vld [vmem:[#allocation4 + $0x1a8] sm:$0xff]
      %v8045 = vld [vmem:[#allocation4 + $0x1b0] sm:$0xff]
      %v8046 = vld [vmem:[#allocation4 + $0x1b8] sm:$0xff]
      %v8047 = vld [vmem:[#allocation4 + $0x1c0] sm:$0xff]
      %v8048 = vld [vmem:[#allocation4 + $0x1c8] sm:$0xff]
      %v8049 = vld [vmem:[#allocation4 + $0x1d0] sm:$0xff]
      %v8050 = vld [vmem:[#allocation4 + $0x1d8] sm:$0xff]
      %v8051 = vld [vmem:[#allocation4 + $0x1e0] sm:$0xff]
      %v8052 = vld [vmem:[#allocation4 + $0x1e8] sm:$0xff]
      %v8053 = vld [vmem:[#allocation4 + $0x1f0] sm:$0xff]
      %v8054 = vld [vmem:[#allocation4 + $0x1f8] sm:$0xff]
      %v8055 = vpack.c.bf16 %v7993, %v7991
      %v8056 = vpack.c.bf16 %v7994, %v7992
      %v8057 = vpack.c.bf16 %v7997, %v7995
      %v8058 = vpack.c.bf16 %v7998, %v7996
      %v8059 = vpack.c.bf16 %v8001, %v7999
      %v8060 = vpack.c.bf16 %v8002, %v8000
      %v8061 = vpack.c.bf16 %v8005, %v8003
      %v8062 = vpack.c.bf16 %v8006, %v8004
      %v8063 = vpack.c.bf16 %v8009, %v8007
      %v8064 = vpack.c.bf16 %v8010, %v8008
      %v8065 = vpack.c.bf16 %v8013, %v8011
      %v8066 = vpack.c.bf16 %v8014, %v8012
      %v8067 = vpack.c.bf16 %v8017, %v8015
      %v8068 = vpack.c.bf16 %v8018, %v8016
      %v8069 = vpack.c.bf16 %v8021, %v8019
      %v8070 = vpack.c.bf16 %v8022, %v8020
      %v8071 = vpack.c.bf16 %v8025, %v8023
      %v8072 = vpack.c.bf16 %v8026, %v8024
      %v8073 = vpack.c.bf16 %v8029, %v8027
      %v8074 = vpack.c.bf16 %v8030, %v8028
      %v8075 = vpack.c.bf16 %v8033, %v8031
      %v8076 = vpack.c.bf16 %v8034, %v8032
      %v8077 = vpack.c.bf16 %v8037, %v8035
      %v8078 = vpack.c.bf16 %v8038, %v8036
      %v8079 = vpack.c.bf16 %v8041, %v8039
      %v8080 = vpack.c.bf16 %v8042, %v8040
      %v8081 = vpack.c.bf16 %v8045, %v8043
      %v8082 = vpack.c.bf16 %v8046, %v8044
      %v8083 = vpack.c.bf16 %v8049, %v8047
      %v8084 = vpack.c.bf16 %v8050, %v8048
      %v8085 = vpack.c.bf16 %v8053, %v8051
      %v8086 = vpack.c.bf16 %v8054, %v8052
      %v8087 = vld [vmem:[%s5] sm:$0xf]
      %v8088 = vld [vmem:[%s5 + $0x4] sm:$0xf]
      %v8089 = vld [vmem:[%s5 + $0x8] sm:$0xf]
      %v8090 = vld [vmem:[%s5 + $0xc] sm:$0xf]
      %v8091 = vld [vmem:[%s5 + $0x10] sm:$0xf]
      %v8092 = vld [vmem:[%s5 + $0x14] sm:$0xf]
      %v8093 = vld [vmem:[%s5 + $0x18] sm:$0xf]
      %v8094 = vld [vmem:[%s5 + $0x1c] sm:$0xf]
      %v8095 = vld [vmem:[%s5 + $0x20] sm:$0xf]
      %v8096 = vld [vmem:[%s5 + $0x24] sm:$0xf]
      %v8097 = vld [vmem:[%s5 + $0x28] sm:$0xf]
      %v8098 = vld [vmem:[%s5 + $0x2c] sm:$0xf]
      %v8099 = vld [vmem:[%s5 + $0x30] sm:$0xf]
      %v8100 = vld [vmem:[%s5 + $0x34] sm:$0xf]
      %v8101 = vld [vmem:[%s5 + $0x38] sm:$0xf]
      %v8102 = vld [vmem:[%s5 + $0x3c] sm:$0xf]
      %v8103 = vld [vmem:[%s5 + $0x40] sm:$0xf]
      %v8104 = vld [vmem:[%s5 + $0x44] sm:$0xf]
      %v8105 = vld [vmem:[%s6] sm:$0x1]
      %v8107 = vlaneseq
      %v8108 = vshrl.u32 %v8107, 7
      %v8109 = vsub.s32 0, %v8108
      %v8110 = vrot.slane %v8105, %v8109
      %v8130 = vunpack.c.l.b16 %v8087
      %v8131 = vunpack.c.l.b16 %v8088
      %v8132 = vunpack.c.l.b16 %v8089
      %v8133 = vunpack.c.l.b16 %v8090
      %v8134 = vunpack.c.l.b16 %v8091
      %v8135 = vunpack.c.l.b16 %v8092
      %v8136 = vunpack.c.l.b16 %v8093
      %v8137 = vunpack.c.l.b16 %v8094
      %v8138 = vunpack.c.l.b16 %v8095
      %v8139 = vunpack.c.l.b16 %v8096
      %v8140 = vunpack.c.l.b16 %v8097
      %v8141 = vunpack.c.l.b16 %v8098
      %v8142 = vunpack.c.l.b16 %v8099
      %v8143 = vunpack.c.l.b16 %v8100
      %v8144 = vunpack.c.l.b16 %v8101
      %v8145 = vunpack.c.l.b16 %v8102
      %v8146 = vunpack.c.l.b16 %v8103
      %v8147 = vunpack.c.l.b16 %v8104
      %v8148 = vpack.c.b16 %v8131, %v8130
      %v8149 = vpack.c.b16 %v8133, %v8132
      %v8150 = vpack.c.b16 %v8135, %v8134
      %v8151 = vpack.c.b16 %v8137, %v8136
      %v8152 = vpack.c.b16 %v8139, %v8138
      %v8153 = vpack.c.b16 %v8141, %v8140
      %v8154 = vpack.c.b16 %v8143, %v8142
      %v8155 = vpack.c.b16 %v8145, %v8144
      %v8156 = vpack.c.b16 %v8147, %v8146
      %v8167 = vsel %vm2384, %v8056, 0
      %v8170 = vsel %vm2384, %v8058, 0
      %v8173 = vsel %vm2384, %v8060, 0
      %v8176 = vsel %vm2384, %v8062, 0
      %v8179 = vsel %vm2384, %v8064, 0
      %v8182 = vsel %vm2384, %v8066, 0
      %v8185 = vsel %vm2384, %v8068, 0
      %v8188 = vsel %vm2384, %v8070, 0
      %v8191 = vsel %vm2384, %v8072, 0
      %v8194 = vsel %vm2384, %v8074, 0
      %v8197 = vsel %vm2384, %v8076, 0
      %v8200 = vsel %vm2384, %v8078, 0
      %v8203 = vsel %vm2384, %v8080, 0
      %v8206 = vsel %vm2384, %v8082, 0
      %v8209 = vsel %vm2384, %v8084, 0
      %v8212 = vsel %vm2384, %v8086, 0
      %8214 = vmatprep.subr.bf16.mxu0 0
      %8215 = vmatpush1.bf16.msra.mxu0 %v8148
      %8216 = vmatprep.subr.bf16.mxu0 0
      %8217 = vmatpush1.bf16.msra.mxu0 %v8149
      %8218 = vmatprep.subr.bf16.mxu0 0
      %8219 = vmatpush1.bf16.msra.mxu0 %v8150
      %8220 = vmatprep.subr.bf16.mxu0 0
      %8221 = vmatpush1.bf16.msra.mxu0 %v8151
      %8222 = vmatprep.subr.bf16.mxu0 0
      %8223 = vmatpush1.bf16.msra.mxu0 %v8152
      %8224 = vmatprep.subr.bf16.mxu0 0
      %8225 = vmatpush1.bf16.msra.mxu0 %v8153
      %8226 = vmatprep.subr.bf16.mxu0 0
      %8227 = vmatpush1.bf16.msra.mxu0 %v8154
      %8228 = vmatprep.subr.bf16.mxu0 0
      %8229 = vmatpush1.bf16.msra.mxu0 %v8155
      %8230 = vmatprep.subr.bf16.mxu0 0
      %8231 = vmatpush1.bf16.msra.mxu0 %v8156
      %8232 = vmatprep.subr.bf16.mxu0 0
      %8233 = vmatpush1.bf16.msra.mxu0 0
      %8234 = vmatprep.subr.bf16.mxu0 0
      %8235 = vmatpush1.bf16.msra.mxu0 0
      %8236 = vmatprep.subr.bf16.mxu0 0
      %8237 = vmatpush1.bf16.msra.mxu0 0
      %8238 = vmatprep.subr.bf16.mxu0 0
      %8239 = vmatpush1.bf16.msra.mxu0 0
      %8240 = vmatprep.subr.bf16.mxu0 0
      %8241 = vmatpush1.bf16.msra.mxu0 0
      %8242 = vmatprep.subr.bf16.mxu0 0
      %8243 = vmatpush1.bf16.msra.mxu0 0
      %8244 = vmatprep.subr.bf16.mxu0 0
      %8245 = vmatpush1.bf16.msra.mxu0 0
      %8246 = vmatprep.mubr.bf16.mxu0 %v8167
      %8247 = vmatmul.mubr.bf16.gmra.mrb[0].mxu0 %v8055
      %v8248 = vpop.f32.mrb[0].mxu0
      %v8249 = vadd.f32 %v8110, %v8248
      %v8250 = vpop.f32.mrb[0].mxu0
      %v8251 = vpop.f32.mrb[0].mxu0
      %v8252 = vadd.f32 %v8110, %v8251
      %v8253 = vpop.f32.mrb[0].mxu0
      %8254 = vmatprep.mubr.bf16.mxu0 %v8170
      %8255 = vmatmul.mubr.bf16.gmra.mrb[0].mxu0 %v8057
      %v8256 = vpop.f32.mrb[0].mxu0
      %v8257 = vadd.f32 %v8110, %v8256
      %v8258 = vpop.f32.mrb[0].mxu0
      %v8259 = vpop.f32.mrb[0].mxu0
      %v8260 = vadd.f32 %v8110, %v8259
      %v8261 = vpop.f32.mrb[0].mxu0
      %8262 = vmatprep.mubr.bf16.mxu0 %v8173
      %8263 = vmatmul.mubr.bf16.gmra.mrb[0].mxu0 %v8059
      %v8264 = vpop.f32.mrb[0].mxu0
      %v8265 = vadd.f32 %v8110, %v8264
      %v8266 = vpop.f32.mrb[0].mxu0
      %v8267 = vpop.f32.mrb[0].mxu0
      %v8268 = vadd.f32 %v8110, %v8267
      %v8269 = vpop.f32.mrb[0].mxu0
      %8270 = vmatprep.mubr.bf16.mxu0 %v8176
      %8271 = vmatmul.mubr.bf16.gmra.mrb[0].mxu0 %v8061
      %v8272 = vpop.f32.mrb[0].mxu0
      %v8273 = vadd.f32 %v8110, %v8272
      %v8274 = vpop.f32.mrb[0].mxu0
      %v8275 = vpop.f32.mrb[0].mxu0
      %v8276 = vadd.f32 %v8110, %v8275
      %v8277 = vpop.f32.mrb[0].mxu0
      %8278 = vmatprep.mubr.bf16.mxu0 %v8179
      %8279 = vmatmul.mubr.bf16.gmra.mrb[0].mxu0 %v8063
      %v8280 = vpop.f32.mrb[0].mxu0
      %v8281 = vadd.f32 %v8110, %v8280
      %v8282 = vpop.f32.mrb[0].mxu0
      %v8283 = vpop.f32.mrb[0].mxu0
      %v8284 = vadd.f32 %v8110, %v8283
      %v8285 = vpop.f32.mrb[0].mxu0
      %8286 = vmatprep.mubr.bf16.mxu0 %v8182
      %8287 = vmatmul.mubr.bf16.gmra.mrb[0].mxu0 %v8065
      %v8288 = vpop.f32.mrb[0].mxu0
      %v8289 = vadd.f32 %v8110, %v8288
      %v8290 = vpop.f32.mrb[0].mxu0
      %v8291 = vpop.f32.mrb[0].mxu0
      %v8292 = vadd.f32 %v8110, %v8291
      %v8293 = vpop.f32.mrb[0].mxu0
      %8294 = vmatprep.mubr.bf16.mxu0 %v8185
      %8295 = vmatmul.mubr.bf16.gmra.mrb[0].mxu0 %v8067
      %v8296 = vpop.f32.mrb[0].mxu0
      %v8297 = vadd.f32 %v8110, %v8296
      %v8298 = vpop.f32.mrb[0].mxu0
      %v8299 = vpop.f32.mrb[0].mxu0
      %v8300 = vadd.f32 %v8110, %v8299
      %v8301 = vpop.f32.mrb[0].mxu0
      %8302 = vmatprep.mubr.bf16.mxu0 %v8188
      %8303 = vmatmul.mubr.bf16.gmra.mrb[0].mxu0 %v8069
      %v8304 = vpop.f32.mrb[0].mxu0
      %v8305 = vadd.f32 %v8110, %v8304
      %v8306 = vpop.f32.mrb[0].mxu0
      %v8307 = vpop.f32.mrb[0].mxu0
      %v8308 = vadd.f32 %v8110, %v8307
      %v8309 = vpop.f32.mrb[0].mxu0
      %8310 = vmatprep.mubr.bf16.mxu0 %v8191
      %8311 = vmatmul.mubr.bf16.gmra.mrb[0].mxu0 %v8071
      %v8312 = vpop.f32.mrb[0].mxu0
      %v8313 = vadd.f32 %v8110, %v8312
      %v8314 = vpop.f32.mrb[0].mxu0
      %v8315 = vpop.f32.mrb[0].mxu0
      %v8316 = vadd.f32 %v8110, %v8315
      %v8317 = vpop.f32.mrb[0].mxu0
      %8318 = vmatprep.mubr.bf16.mxu0 %v8194
      %8319 = vmatmul.mubr.bf16.gmra.mrb[0].mxu0 %v8073
      %v8320 = vpop.f32.mrb[0].mxu0
      %v8321 = vadd.f32 %v8110, %v8320
      %v8322 = vpop.f32.mrb[0].mxu0
      %v8323 = vpop.f32.mrb[0].mxu0
      %v8324 = vadd.f32 %v8110, %v8323
      %v8325 = vpop.f32.mrb[0].mxu0
      %8326 = vmatprep.mubr.bf16.mxu0 %v8197
      %8327 = vmatmul.mubr.bf16.gmra.mrb[0].mxu0 %v8075
      %v8328 = vpop.f32.mrb[0].mxu0
      %v8329 = vadd.f32 %v8110, %v8328
      %v8330 = vpop.f32.mrb[0].mxu0
      %v8331 = vpop.f32.mrb[0].mxu0
      %v8332 = vadd.f32 %v8110, %v8331
      %v8333 = vpop.f32.mrb[0].mxu0
      %8334 = vmatprep.mubr.bf16.mxu0 %v8200
      %8335 = vmatmul.mubr.bf16.gmra.mrb[0].mxu0 %v8077
      %v8336 = vpop.f32.mrb[0].mxu0
      %v8337 = vadd.f32 %v8110, %v8336
      %v8338 = vpop.f32.mrb[0].mxu0
      %v8339 = vpop.f32.mrb[0].mxu0
      %v8340 = vadd.f32 %v8110, %v8339
      %v8341 = vpop.f32.mrb[0].mxu0
      %8342 = vmatprep.mubr.bf16.mxu0 %v8203
      %8343 = vmatmul.mubr.bf16.gmra.mrb[0].mxu0 %v8079
      %v8344 = vpop.f32.mrb[0].mxu0
      %v8345 = vadd.f32 %v8110, %v8344
      %v8346 = vpop.f32.mrb[0].mxu0
      %v8347 = vpop.f32.mrb[0].mxu0
      %v8348 = vadd.f32 %v8110, %v8347
      %v8349 = vpop.f32.mrb[0].mxu0
      %8350 = vmatprep.mubr.bf16.mxu0 %v8206
      %8351 = vmatmul.mubr.bf16.gmra.mrb[0].mxu0 %v8081
      %v8352 = vpop.f32.mrb[0].mxu0
      %v8353 = vadd.f32 %v8110, %v8352
      %v8354 = vpop.f32.mrb[0].mxu0
      %v8355 = vpop.f32.mrb[0].mxu0
      %v8356 = vadd.f32 %v8110, %v8355
      %v8357 = vpop.f32.mrb[0].mxu0
      %8358 = vmatprep.mubr.bf16.mxu0 %v8209
      %8359 = vmatmul.mubr.bf16.gmra.mrb[0].mxu0 %v8083
      %v8360 = vpop.f32.mrb[0].mxu0
      %v8361 = vadd.f32 %v8110, %v8360
      %v8362 = vpop.f32.mrb[0].mxu0
      %v8363 = vpop.f32.mrb[0].mxu0
      %v8364 = vadd.f32 %v8110, %v8363
      %v8365 = vpop.f32.mrb[0].mxu0
      %8366 = vmatprep.mubr.bf16.mxu0 %v8212
      %8367 = vmatmul.mubr.bf16.gmra.mrb[0].mxu0 %v8085
      %v8368 = vpop.f32.mrb[0].mxu0
      %v8369 = vadd.f32 %v8110, %v8368
      %v8370 = vpop.f32.mrb[0].mxu0
      %v8371 = vpop.f32.mrb[0].mxu0
      %v8372 = vadd.f32 %v8110, %v8371
      %v8373 = vpop.f32.mrb[0].mxu0
      %8374 = vdwg.mxu0
      %v8375 = vmax.f32 %v8249, 0.0
      %v8376 = vmax.f32 %v8252, 0.0
      %v8377 = vmax.f32 %v8257, 0.0
      %v8378 = vmax.f32 %v8260, 0.0
      %v8379 = vmax.f32 %v8265, 0.0
      %v8380 = vmax.f32 %v8268, 0.0
      %v8381 = vmax.f32 %v8273, 0.0
      %v8382 = vmax.f32 %v8276, 0.0
      %v8383 = vmax.f32 %v8281, 0.0
      %v8384 = vmax.f32 %v8284, 0.0
      %v8385 = vmax.f32 %v8289, 0.0
      %v8386 = vmax.f32 %v8292, 0.0
      %v8387 = vmax.f32 %v8297, 0.0
      %v8388 = vmax.f32 %v8300, 0.0
      %v8389 = vmax.f32 %v8305, 0.0
      %v8390 = vmax.f32 %v8308, 0.0
      %v8391 = vmax.f32 %v8313, 0.0
      %v8392 = vmax.f32 %v8316, 0.0
      %v8393 = vmax.f32 %v8321, 0.0
      %v8394 = vmax.f32 %v8324, 0.0
      %v8395 = vmax.f32 %v8329, 0.0
      %v8396 = vmax.f32 %v8332, 0.0
      %v8397 = vmax.f32 %v8337, 0.0
      %v8398 = vmax.f32 %v8340, 0.0
      %v8399 = vmax.f32 %v8345, 0.0
      %v8400 = vmax.f32 %v8348, 0.0
      %v8401 = vmax.f32 %v8353, 0.0
      %v8402 = vmax.f32 %v8356, 0.0
      %v8403 = vmax.f32 %v8361, 0.0
      %v8404 = vmax.f32 %v8364, 0.0
      %v8405 = vmax.f32 %v8369, 0.0
      %v8406 = vmax.f32 %v8372, 0.0
      %v8407 = vsub.f32 %v4337, %v8375
      %v8408 = vsub.f32 %v4338, %v8376
      %v8409 = vsub.f32 %v4339, %v8377
      %v8410 = vsub.f32 %v4340, %v8378
      %v8411 = vsub.f32 %v4341, %v8379
      %v8412 = vsub.f32 %v4342, %v8380
      %v8413 = vsub.f32 %v4343, %v8381
      %v8414 = vsub.f32 %v4344, %v8382
      %v8415 = vsub.f32 %v4345, %v8383
      %v8416 = vsub.f32 %v4346, %v8384
      %v8417 = vsub.f32 %v4347, %v8385
      %v8418 = vsub.f32 %v4348, %v8386
      %v8419 = vsub.f32 %v4349, %v8387
      %v8420 = vsub.f32 %v4350, %v8388
      %v8421 = vsub.f32 %v4351, %v8389
      %v8422 = vsub.f32 %v4352, %v8390
      %v8423 = vsub.f32 %v4353, %v8391
      %v8424 = vsub.f32 %v4354, %v8392
      %v8425 = vsub.f32 %v4355, %v8393
      %v8426 = vsub.f32 %v4356, %v8394
      %v8427 = vsub.f32 %v4357, %v8395
      %v8428 = vsub.f32 %v4358, %v8396
      %v8429 = vsub.f32 %v4359, %v8397
      %v8430 = vsub.f32 %v4360, %v8398
      %v8431 = vsub.f32 %v4361, %v8399
      %v8432 = vsub.f32 %v4362, %v8400
      %v8433 = vsub.f32 %v4363, %v8401
      %v8434 = vsub.f32 %v4364, %v8402
      %v8435 = vsub.f32 %v4365, %v8403
      %v8436 = vsub.f32 %v4366, %v8404
      %v8437 = vsub.f32 %v4367, %v8405
      %v8438 = vsub.f32 %v4368, %v8406
      %v8439 = vand.u32 2147483647, %v8407
      %v8440 = vand.u32 2147483647, %v8408
      %v8441 = vand.u32 2147483647, %v8409
      %v8442 = vand.u32 2147483647, %v8410
      %v8443 = vand.u32 2147483647, %v8411
      %v8444 = vand.u32 2147483647, %v8412
      %v8445 = vand.u32 2147483647, %v8413
      %v8446 = vand.u32 2147483647, %v8414
      %v8447 = vand.u32 2147483647, %v8415
      %v8448 = vand.u32 2147483647, %v8416
      %v8449 = vand.u32 2147483647, %v8417
      %v8450 = vand.u32 2147483647, %v8418
      %v8451 = vand.u32 2147483647, %v8419
      %v8452 = vand.u32 2147483647, %v8420
      %v8453 = vand.u32 2147483647, %v8421
      %v8454 = vand.u32 2147483647, %v8422
      %v8455 = vand.u32 2147483647, %v8423
      %v8456 = vand.u32 2147483647, %v8424
      %v8457 = vand.u32 2147483647, %v8425
      %v8458 = vand.u32 2147483647, %v8426
      %v8459 = vand.u32 2147483647, %v8427
      %v8460 = vand.u32 2147483647, %v8428
      %v8461 = vand.u32 2147483647, %v8429
      %v8462 = vand.u32 2147483647, %v8430
      %v8463 = vand.u32 2147483647, %v8431
      %v8464 = vand.u32 2147483647, %v8432
      %v8465 = vand.u32 2147483647, %v8433
      %v8466 = vand.u32 2147483647, %v8434
      %v8467 = vand.u32 2147483647, %v8435
      %v8468 = vand.u32 2147483647, %v8436
      %v8469 = vand.u32 2147483647, %v8437
      %v8470 = vand.u32 2147483647, %v8438
      %vm8471 = vcmask 261120
      %v8472 = vsel %vm8471, %v8439, 0.0
      %v8473 = vsel %vm8471, %v8440, 0.0
      %v8474 = vadd.f32 %v8472, %v8473
      %v8475 = vsel %vm8471, %v8441, 0.0
      %v8476 = vadd.f32 %v8474, %v8475
      %v8477 = vsel %vm8471, %v8442, 0.0
      %v8478 = vadd.f32 %v8476, %v8477
      %v8479 = vsel %vm8471, %v8443, 0.0
      %v8480 = vadd.f32 %v8478, %v8479
      %v8481 = vsel %vm8471, %v8444, 0.0
      %v8482 = vadd.f32 %v8480, %v8481
      %v8483 = vsel %vm8471, %v8445, 0.0
      %v8484 = vadd.f32 %v8482, %v8483
      %v8485 = vsel %vm8471, %v8446, 0.0
      %v8486 = vadd.f32 %v8484, %v8485
      %v8487 = vsel %vm8471, %v8447, 0.0
      %v8488 = vadd.f32 %v8486, %v8487
      %v8489 = vsel %vm8471, %v8448, 0.0
      %v8490 = vadd.f32 %v8488, %v8489
      %v8491 = vsel %vm8471, %v8449, 0.0
      %v8492 = vadd.f32 %v8490, %v8491
      %v8493 = vsel %vm8471, %v8450, 0.0
      %v8494 = vadd.f32 %v8492, %v8493
      %v8495 = vsel %vm8471, %v8451, 0.0
      %v8496 = vadd.f32 %v8494, %v8495
      %v8497 = vsel %vm8471, %v8452, 0.0
      %v8498 = vadd.f32 %v8496, %v8497
      %v8499 = vsel %vm8471, %v8453, 0.0
      %v8500 = vadd.f32 %v8498, %v8499
      %v8501 = vsel %vm8471, %v8454, 0.0
      %v8502 = vadd.f32 %v8500, %v8501
      %v8503 = vsel %vm8471, %v8455, 0.0
      %v8504 = vadd.f32 %v8502, %v8503
      %v8505 = vsel %vm8471, %v8456, 0.0
      %v8506 = vadd.f32 %v8504, %v8505
      %v8507 = vsel %vm8471, %v8457, 0.0
      %v8508 = vadd.f32 %v8506, %v8507
      %v8509 = vsel %vm8471, %v8458, 0.0
      %v8510 = vadd.f32 %v8508, %v8509
      %v8511 = vsel %vm8471, %v8459, 0.0
      %v8512 = vadd.f32 %v8510, %v8511
      %v8513 = vsel %vm8471, %v8460, 0.0
      %v8514 = vadd.f32 %v8512, %v8513
      %v8515 = vsel %vm8471, %v8461, 0.0
      %v8516 = vadd.f32 %v8514, %v8515
      %v8517 = vsel %vm8471, %v8462, 0.0
      %v8518 = vadd.f32 %v8516, %v8517
      %v8519 = vsel %vm8471, %v8463, 0.0
      %v8520 = vadd.f32 %v8518, %v8519
      %v8521 = vsel %vm8471, %v8464, 0.0
      %v8522 = vadd.f32 %v8520, %v8521
      %v8523 = vsel %vm8471, %v8465, 0.0
      %v8524 = vadd.f32 %v8522, %v8523
      %v8525 = vsel %vm8471, %v8466, 0.0
      %v8526 = vadd.f32 %v8524, %v8525
      %v8527 = vsel %vm8471, %v8467, 0.0
      %v8528 = vadd.f32 %v8526, %v8527
      %v8529 = vsel %vm8471, %v8468, 0.0
      %v8530 = vadd.f32 %v8528, %v8529
      %v8531 = vsel %vm8471, %v8469, 0.0
      %v8532 = vadd.f32 %v8530, %v8531
      %v8533 = vsel %vm8471, %v8470, 0.0
      %v8534 = vadd.f32 %v8532, %v8533
      %8535 = vadd.xlane.f32.xlu0 %v8534
      %v8536 = vpop.xlane.xlu0 %8535
      %v8537 = vrot.slane %v8536, 4
      %v8538 = vadd.f32 %v8536, %v8537
      %v8539 = vrot.slane %v8538, 2
      %v8540 = vadd.f32 %v8538, %v8539
      %v8541 = vrot.slane %v8540, 1
      %v8542 = vadd.f32 %v8540, %v8541
      %s8543 = vtos %v8542
      %v8544 = vstv %s8543
      %vm8545 = vcmask 0
      %8546 = vst.msk [vmem:[%s294] sm:$0x1] %vm8545, %v8544
      %p8547 = scmp.lt.s32.totalorder %s18, 1
      %s8548 = scalar_select %p8547, %s18, 1
      %s8549 = scalar_lea.vmem %s7, %s8548
      // Predicated region
      $region49: #{content_l1_loss.1} parent=47 // pred_check
        %p8550 = pneg %p193
      $region50: #{content_l1_loss.1} parent=47 // pred_check_branch
        %8552 = sbr.rel (%p8550) target = $region52
      $region51: #{content_l1_loss.1} parent=47 // pred_region
        _
      $region52: #{content_l1_loss.1} parent=47 // pred_fallthru
        _
    $region48: #{content_l1_loss.1} parent=5 // pred_fallthru
      _
    %p8553 = scmp.le.s32.totalorder 2, %s13
    // Predicated region
    $region53: #{content_l1_loss.1} parent=5 // pred_check
      %p8554 = pneg %p8553
    $region54: #{content_l1_loss.1} parent=5 // pred_check_branch
      %8556 = sbr.rel (%p8554) target = $region56
    $region55: #{content_l1_loss.1} parent=5 // pred_region
      %s8557 = ssub.s32 %s13, 2
      // Predicated region
      $region57: #{content_l1_loss.1} parent=55 // pred_check
        %p8558 = pneg %p199
      $region58: #{content_l1_loss.1} parent=55 // pred_check_branch
        %8560 = sbr.rel (%p8558) target = $region60
      $region59: #{content_l1_loss.1} parent=55 // pred_region
        %p8561 = scmp.lt.s32.totalorder %s19, 1
        %s8562 = scalar_select %p8561, %s19, 1
        %s8563 = scalar_lea.vmem %s7, %s8562
      $region60: #{content_l1_loss.1} parent=55 // pred_fallthru
        _
    $region56: #{content_l1_loss.1} parent=5 // pred_fallthru
      _
  $region6: #{content_l1_loss.1} parent=0 // loop_footer
    %s17 = sadd.s32 1, %s13
  $region7: #{content_l1_loss.1} parent=0 // loop_footer_branch
    %12 = sbr.rel target = $region3
  $region8: #{content_l1_loss.1} parent=0 // loop_exit
    _

</llo_original>
